<compile_context>
chip_gen: v7x
topology: tpu7x:2x2x1
jax: 0.10.0
libtpu: 0.0.40
codegen_flags: <defaults>
</compile_context>

<pallas_src>
import functools

import jax
import jax.numpy as jnp
from jax import lax
from jax.experimental import pallas as pl
from jax.experimental.pallas import tpu as pltpu

D_MODEL = 256        # fixed by the module config
NUM_HEADS = 8        # fixed by the module config
HEAD_DIM = D_MODEL // NUM_HEADS
DIM_FFN = 1024
NUM_LEVELS = 3       # mask decoder uses hw_lvl[:3]


def _layer_norm(x, w, b, eps=1e-5):
    mu = jnp.mean(x, axis=-1, keepdims=True)
    var = jnp.mean(jnp.square(x - mu), axis=-1, keepdims=True)
    return (x - mu) * lax.rsqrt(var + eps) * w + b


# BlockSpec helpers for the (B, n_layers) grid --------------------------------------------
def _rep_spec(shape):
    """Replicated across the whole grid (whole array, block index 0)."""
    return pl.BlockSpec(shape, lambda b, l: (0,) * len(shape))


def _batch_spec(shape):
    """Indexed by batch only (constant across layers -> DMA'd once per batch element)."""
    nd = len(shape)
    return pl.BlockSpec((None,) + shape, lambda b, l: (b,) + (0,) * nd)


def _layer_spec(shape):
    """Per-layer stacked weight, selected by the layer grid axis."""
    nd = len(shape)
    return pl.BlockSpec((None,) + shape, lambda b, l: (l,) + (0,) * nd)


# --------------------------------------------------------------------------
# Single fused kernel: all decoder layers (optional self-attn + cross-attn +
# mask weighted-sum + FFN).  Grid = (batch, layer); query carried in VMEM scratch.
# --------------------------------------------------------------------------
def _mask_decoder_kernel(q0_ref, qp_ref, mem_ref, bias_ref, maskw_ref,
                         wq_ref, bq_ref, wkv_ref, bkv_ref, wo_ref, bo_ref,
                         ln1w_ref, ln1b_ref, w1_ref, b1_ref, w2_ref, b2_ref,
                         ln2w_ref, ln2b_ref, *rest,
                         num_heads, head_dim, scale, self_attn):
    if self_attn:
        (swqk_ref, sbqk_ref, swv_ref, sbv_ref, swo_ref, sbo_ref,
         slnw_ref, slnb_ref, qout_ref, mask_ref, qstate) = rest
    else:
        qout_ref, mask_ref, qstate = rest

    f32, bf16 = jnp.float32, jnp.bfloat16
    layer = pl.program_id(1)

    @pl.when(layer == 0)
    def _():
        qstate[...] = q0_ref[...]

    q = qstate[...]                       # (Q, C) f32, carried across layers in VMEM
    qp = qp_ref[...]                      # (Q, C) f32
    c = q.shape[-1]
    nq = q.shape[0]

    # ---- optional self-attention block (DETR-style: q,k get pos embed, v does not) ----
    if self_attn:
        qk_in = (q + qp).astype(bf16)
        qk = jnp.dot(qk_in, swqk_ref[...], preferred_element_type=f32) + sbqk_ref[...]
        v_s = jnp.dot(q.astype(bf16), swv_ref[...], preferred_element_type=f32) + sbv_ref[...]
        qproj_s = qk[:, :c] * scale       # scale folded once
        kproj_s = qk[:, c:]
        outs = []
        for h in range(num_heads):        # static unrolled head loop
            sl = slice(h * head_dim, (h + 1) * head_dim)
            s = lax.dot_general(qproj_s[:, sl].astype(bf16), kproj_s[:, sl].astype(bf16),
                                (((1,), (1,)), ((), ())), preferred_element_type=f32)
            m = jnp.max(s, axis=-1, keepdims=True)
            p = jnp.exp(s - m)
            p = p / jnp.sum(p, axis=-1, keepdims=True)
            outs.append(jnp.dot(p.astype(bf16), v_s[:, sl].astype(bf16),
                                preferred_element_type=f32))
        sa = jnp.concatenate(outs, axis=-1)
        sa = jnp.dot(sa.astype(bf16), swo_ref[...], preferred_element_type=f32) + sbo_ref[...]
        q = _layer_norm(q + sa, slnw_ref[...], slnb_ref[...])

    # ---- cross-attention over (padded, bf16) memory keys + per-head mask weighted sum ----
    mem = mem_ref[...]                    # (Lp, C) bf16
    maskw = maskw_ref[...]                # (H, Lp) f32 per-head/per-position fc weights
    lp_keys = mem.shape[0]

    q_in = (q + qp).astype(bf16)
    q_proj = jnp.dot(q_in, wq_ref[...], preferred_element_type=f32) + bq_ref[...]
    q_proj = q_proj * scale               # 1/sqrt(Dh) applied once, not per head
    kv = jnp.dot(mem, wkv_ref[...], preferred_element_type=f32) + bkv_ref[...]
    k, v = kv[:, :c], kv[:, c:]

    # hoisted out of the unrolled head loop (JAX does not CSE broadcasts inside it)
    bias_full = jnp.broadcast_to(bias_ref[...], (nq, lp_keys))   # (Q, Lp) f32

    # TODO(synk): head-major batched dot_general (avoids 32-lane slices / lane concat) is the
    # next MXU-efficiency step at production Q/L; kept per-head here for lowering robustness.
    head_outs = []
    mask_acc = jnp.zeros((nq, lp_keys), f32)                     # (Q, Lp) lane-dense
    for h in range(num_heads):
        sl = slice(h * head_dim, (h + 1) * head_dim)
        s = lax.dot_general(q_proj[:, sl].astype(bf16), k[:, sl].astype(bf16),
                            (((1,), (1,)), ((), ())), preferred_element_type=f32)
        s = s + bias_full
        m = jnp.max(s, axis=-1, keepdims=True)                   # softmax strictly in f32
        p = jnp.exp(s - m)
        p = p / jnp.sum(p, axis=-1, keepdims=True)               # exact division (mask path)
        mask_acc = mask_acc + maskw[h:h + 1, :] * p              # VPU weighted sum over heads
        head_outs.append(jnp.dot(p.astype(bf16), v[:, sl].astype(bf16),
                                 preferred_element_type=f32))
    attn = jnp.concatenate(head_outs, axis=-1)                   # (Q, C)
    attn = jnp.dot(attn.astype(bf16), wo_ref[...], preferred_element_type=f32) + bo_ref[...]

    # ---- residual + LN1, FFN, residual + LN2 ----
    x = _layer_norm(q + attn, ln1w_ref[...], ln1b_ref[...])
    h1 = jnp.dot(x.astype(bf16), w1_ref[...], preferred_element_type=f32) + b1_ref[...]
    h1 = jnp.maximum(h1, 0.0)
    h2 = jnp.dot(h1.astype(bf16), w2_ref[...], preferred_element_type=f32) + b2_ref[...]
    x2 = _layer_norm(x + h2, ln2w_ref[...], ln2b_ref[...])

    qstate[...] = x2
    qout_ref[...] = x2
    mask_ref[...] = mask_acc


def fused_mask_decoder(query, query_pos, memory_bf16, bias_p, maskw, stacked, sa_stacked):
    """query/query_pos: (B, Qp, C) f32; memory_bf16: (B, Lp, C) bf16; bias_p: (B, 1, Lp);
    maskw: (H, Lp); stacked / sa_stacked: per-layer weight stacks (leading axis = n_layers)."""
    B, Qp, C = query.shape
    Lp = memory_bf16.shape[1]
    NL = stacked["wq"].shape[0]
    kernel = functools.partial(_mask_decoder_kernel, num_heads=NUM_HEADS, head_dim=HEAD_DIM,
                               scale=HEAD_DIM ** -0.5, self_attn=sa_stacked is not None)

    in_specs = [
        _batch_spec((Qp, C)),                                   # initial query
        _batch_spec((Qp, C)),                                   # query_pos
        _batch_spec((Lp, C)),                                   # memory (bf16, padded keys)
        _batch_spec((1, Lp)),                                   # key-padding bias
        _rep_spec((NUM_HEADS, Lp)),                             # mask fc weights
        _layer_spec((C, C)), _layer_spec((1, C)),               # wq, bq
        _layer_spec((C, 2 * C)), _layer_spec((1, 2 * C)),       # wkv, bkv
        _layer_spec((C, C)), _layer_spec((1, C)),               # wo, bo
        _layer_spec((1, C)), _layer_spec((1, C)),               # ln1 w/b
        _layer_spec((C, DIM_FFN)), _layer_spec((1, DIM_FFN)),   # ffn w1, b1
        _layer_spec((DIM_FFN, C)), _layer_spec((1, C)),         # ffn w2, b2
        _layer_spec((1, C)), _layer_spec((1, C)),               # ln2 w/b
    ]
    args = [query, query_pos, memory_bf16, bias_p, maskw,
            stacked["wq"], stacked["bq"], stacked["wkv"], stacked["bkv"],
            stacked["wo"], stacked["bo"], stacked["ln1_w"], stacked["ln1_b"],
            stacked["w1"], stacked["b1"], stacked["w2"], stacked["b2"],
            stacked["ln2_w"], stacked["ln2_b"]]
    if sa_stacked is not None:
        in_specs += [_layer_spec((C, 2 * C)), _layer_spec((1, 2 * C)),
                     _layer_spec((C, C)), _layer_spec((1, C)),
                     _layer_spec((C, C)), _layer_spec((1, C)),
                     _layer_spec((1, C)), _layer_spec((1, C))]
        args += [sa_stacked[k] for k in ("wqk", "bqk", "wv", "bv", "wo", "bo", "ln_w", "ln_b")]

    q_all, mask_all = pl.pallas_call(
        kernel,
        out_shape=(jax.ShapeDtypeStruct((B, NL, Qp, C), jnp.float32),
                   jax.ShapeDtypeStruct((B, NL, Qp, Lp), jnp.float32)),
        grid=(B, NL),
        in_specs=in_specs,
        out_specs=(pl.BlockSpec((None, None, Qp, C), lambda b, l: (b, l, 0, 0)),
                   pl.BlockSpec((None, None, Qp, Lp), lambda b, l: (b, l, 0, 0))),
        scratch_shapes=[pltpu.VMEM((Qp, C), jnp.float32)],      # query carried across layers
        compiler_params=pltpu.CompilerParams(
            dimension_semantics=("parallel", "arbitrary"),
            vmem_limit_bytes=32 * 1024 * 1024),
    )(*args)
    return q_all, mask_all


# --------------------------------------------------------------------------
# Mask assembly glue (linear ops only; the head/level weighted sum is already in-kernel).
# Runs ONCE after the fused decoder call, stacked over layers.
# --------------------------------------------------------------------------
def build_mask_weights(fc_w, hw_lvl3, Lp):
    """fc_w: (3H, 1), level-major channel order -> per-head/per-position weights (H, Lp)."""
    parts = []
    for l, (h, w) in enumerate(hw_lvl3):
        wl = fc_w[l * NUM_HEADS:(l + 1) * NUM_HEADS, 0:1]       # (H, 1)
        parts.append(jnp.broadcast_to(wl, (NUM_HEADS, h * w)))
    maskw = jnp.concatenate(parts, axis=1)                      # (H, L3)
    return jnp.pad(maskw, ((0, 0), (0, Lp - maskw.shape[1])))


def masks_from_raw_all(mask_raw, hw_lvl3, fc_b):
    """mask_raw: (B, NL, Q, L3) per-level weighted attention sums -> (B, NL, Q, H0, W0)."""
    B, NL, Q, _ = mask_raw.shape
    h0, w0 = hw_lvl3[0]
    out, start = None, 0
    for (h, w) in hw_lvl3:
        m = mask_raw[..., start:start + h * w].reshape(B, NL, Q, h, w)
        start += h * w
        if (h, w) != (h0, w0):
            # TODO(synk): bilinear upsample kept in XLA (no clean Pallas equivalent); it is
            # linear, so it commutes with the in-kernel head/level weighted sum.
            m = jax.image.resize(m, (B, NL, Q, h0, w0), method="bilinear")
        out = m if out is None else out + m
    return out + fc_b[0]


# --------------------------------------------------------------------------
# PanformerMaskDecoder (reconstruction) and the wrapper forward
# --------------------------------------------------------------------------
def _stack_layer_params(layers):
    keys = ("wq", "bq", "wkv", "bkv", "wo", "bo", "ln1_w", "ln1_b",
            "w1", "b1", "w2", "b2", "ln2_w", "ln2_b")
    return {k: jnp.stack([lp[k] for lp in layers]) for k in keys}


def _stack_self_attn_params(layers):
    keys = ("wqk", "bqk", "wv", "bv", "wo", "bo", "ln_w", "ln_b")
    return {k: jnp.stack([lp["self_attn"][k] for lp in layers]) for k in keys}


def panformer_mask_decoder(params, memory, memory_mask, query, query_pos, hw_lvl3):
    """memory: (L, B, C) seq-first, query/query_pos: (Q, B, C), memory_mask: (B, L) bool."""
    B = memory.shape[1]
    memory_bf = jnp.swapaxes(memory, 0, 1)                      # (B, L, C)
    query_bf = jnp.swapaxes(query, 0, 1)                        # (B, Q, C)
    qp_bf = (jnp.swapaxes(query_pos, 0, 1) if query_pos is not None
             else jnp.zeros_like(query_bf))

    # Pad queries to a multiple of 16 so bf16 rows pack cleanly in every matmul / store.
    Q = query_bf.shape[1]
    Qp = ((Q + 15) // 16) * 16
    if Qp != Q:
        query_bf = jnp.pad(query_bf, ((0, 0), (0, Qp - Q), (0, 0)))
        qp_bf = jnp.pad(qp_bf, ((0, 0), (0, Qp - Q), (0, 0)))

    # Only the first 3 pyramid levels feed the mask decoder; pad keys to a multiple of 128
    # so every score / attention / mask tile is lane-dense.  Memory passed in bf16.
    L3 = sum(h * w for h, w in hw_lvl3)
    Lp = ((L3 + 127) // 128) * 128
    mem_p = jnp.pad(memory_bf[:, :L3], ((0, 0), (0, Lp - L3), (0, 0))).astype(jnp.bfloat16)
    key_mask = jnp.pad(memory_mask[:, :L3], ((0, 0), (0, Lp - L3)), constant_values=True)
    bias_p = jnp.where(key_mask, jnp.float32(-1e9), jnp.float32(0.0)).reshape(B, 1, Lp)

    maskw = build_mask_weights(params["fc_w"], hw_lvl3, Lp)
    stacked = _stack_layer_params(params["layers"])
    sa_stacked = _stack_self_attn_params(params["layers"]) if params["self_attn"] else None

    # One fused pallas_call for all layers and all batch elements.
    q_all, mask_all = fused_mask_decoder(query_bf, qp_bf, mem_p, bias_p, maskw,
                                         stacked, sa_stacked)

    q_all = q_all[:, :, :Q, :]                                  # drop padded queries
    mask_raw = mask_all[:, :, :Q, :L3]                          # drop padded queries/keys
    masks = masks_from_raw_all(mask_raw, hw_lvl3, params["fc_b"])  # (B, NL, Q, H0, W0)

    NL = q_all.shape[1]
    all_query = [jnp.swapaxes(q_all[:, l], 0, 1) for l in range(NL)]   # (Q, B, C) seq-first
    all_mask = [masks[:, l] for l in range(NL)]                        # (B, Q, H0, W0)
    return all_query, all_mask


def mask_transformer_wrapper_forward(params, memory, memory_mask, placeholder1,
                                     query, placeholder2, query_pos, hw_lvl):
    assert memory_mask.shape[0] == memory.shape[0], (memory_mask.shape, memory.shape)
    memory_t = jnp.swapaxes(memory, 0, 1)                       # (L, B, C)
    query_t = jnp.swapaxes(query, 0, 1)                         # (Q, B, C)
    qp_t = jnp.swapaxes(query_pos, 0, 1) if query_pos is not None else None
    assert len(hw_lvl) == 4, hw_lvl
    hw_lvl3 = hw_lvl[:3]

    all_query, all_mask = panformer_mask_decoder(
        params, memory_t, memory_mask, query_t, qp_t, hw_lvl3)

    assert all_query[0].shape[1] == memory_t.shape[1], (
        [x.shape for x in all_query], memory_t.shape)
    all_query = [jnp.swapaxes(x, 0, 1) for x in all_query]      # back to (B, Q, C)
    mask_final = all_mask[-1]
    inter_masks = all_mask[:-1]
    return mask_final, inter_masks, all_query


# --------------------------------------------------------------------------
# Deterministic synthetic parameters (shapes from the module cfg); MXU weights in bf16.
# --------------------------------------------------------------------------
def init_params(key, num_layers, self_attn=False):
    keys = iter(jax.random.split(key, num_layers * 16 + 8))

    def dense(shape, scale=0.02):
        return (jax.random.normal(next(keys), shape, jnp.float32) * scale).astype(jnp.bfloat16)

    def zeros_row(n): return jnp.zeros((1, n), jnp.float32)
    def ones_row(n): return jnp.ones((1, n), jnp.float32)

    layers = []
    for _ in range(num_layers):
        lp = dict(
            wq=dense((D_MODEL, D_MODEL)), bq=zeros_row(D_MODEL),
            wkv=dense((D_MODEL, 2 * D_MODEL)), bkv=zeros_row(2 * D_MODEL),
            wo=dense((D_MODEL, D_MODEL)), bo=zeros_row(D_MODEL),
            ln1_w=ones_row(D_MODEL), ln1_b=zeros_row(D_MODEL),
            w1=dense((D_MODEL, DIM_FFN)), b1=zeros_row(DIM_FFN),
            w2=dense((DIM_FFN, D_MODEL)), b2=zeros_row(D_MODEL),
            ln2_w=ones_row(D_MODEL), ln2_b=zeros_row(D_MODEL),
        )
        if self_attn:
            lp["self_attn"] = dict(
                wqk=dense((D_MODEL, 2 * D_MODEL)), bqk=zeros_row(2 * D_MODEL),
                wv=dense((D_MODEL, D_MODEL)), bv=zeros_row(D_MODEL),
                wo=dense((D_MODEL, D_MODEL)), bo=zeros_row(D_MODEL),
                ln_w=ones_row(D_MODEL), ln_b=zeros_row(D_MODEL),
            )
        layers.append(lp)

    fc_w = jax.random.normal(next(keys), (NUM_LEVELS * NUM_HEADS, 1), jnp.float32) * 0.02
    return dict(layers=layers, self_attn=self_attn,
                fc_w=fc_w, fc_b=jnp.zeros((1,), jnp.float32))


if __name__ == "__main__":
    key = jax.random.PRNGKey(0)
    B, Q = 2, 8
    hw_lvl = [(16, 16), (8, 8), (4, 4), (2, 2)]          # 4 pyramid levels
    L = sum(h * w for h, w in hw_lvl)                    # 340

    k1, k2, k3, kp, kp2 = jax.random.split(key, 5)
    memory = jax.random.normal(k1, (B, L, D_MODEL), jnp.float32)
    query = jax.random.normal(k2, (B, Q, D_MODEL), jnp.float32)
    query_pos = jax.random.normal(k3, (B, Q, D_MODEL), jnp.float32)
    memory_mask = jnp.zeros((B, L), dtype=bool).at[1, -20:].set(True)

    # Default configuration: 2 layers, no self-attention (matches the wrapper default use).
    params = init_params(kp, num_layers=2, self_attn=False)
    fwd = jax.jit(lambda mem, mm, q, qp: mask_transformer_wrapper_forward(
        params, mem, mm, None, q, None, qp, hw_lvl))
    mask_final, inter_masks, all_query = fwd(memory, memory_mask, query, query_pos)
    jax.block_until_ready(mask_final)
    for m in inter_masks:
        jax.block_until_ready(m)
    for q_ in all_query:
        jax.block_until_ready(q_)

    assert mask_final.shape == (B, Q, hw_lvl[0][0], hw_lvl[0][1])
    assert len(inter_masks) == 1 and len(all_query) == 2
    assert all_query[0].shape == (B, Q, D_MODEL)
    assert bool(jnp.all(jnp.isfinite(mask_final)))
    assert bool(jnp.all(jnp.isfinite(all_query[-1])))

    # Self-attention variant (exercises the fused self-attn path in the same kernel).
    params_sa = init_params(kp2, num_layers=1, self_attn=True)
    fwd_sa = jax.jit(lambda mem, mm, q, qp: mask_transformer_wrapper_forward(
        params_sa, mem, mm, None, q, None, qp, hw_lvl))
    mask_sa, inter_sa, all_q_sa = fwd_sa(memory, memory_mask, query, query_pos)
    jax.block_until_ready(mask_sa)
    assert mask_sa.shape == (B, Q, hw_lvl[0][0], hw_lvl[0][1])
    assert len(inter_sa) == 0 and len(all_q_sa) == 1
    assert bool(jnp.all(jnp.isfinite(mask_sa)))
    assert bool(jnp.all(jnp.isfinite(all_q_sa[0])))

    print("KERNEL_OK")
</pallas_src>

<mosaic_0001>
module attributes {stable_mosaic.version = 11 : i64} {
  func.func @_mask_decoder_kernel(%arg0: i32, %arg1: i32, %arg2: memref<1x16x256xf32, #tpu.memory_space<vmem>>, %arg3: memref<1x16x256xf32, #tpu.memory_space<vmem>>, %arg4: memref<1x384x256xbf16, #tpu.memory_space<vmem>>, %arg5: memref<1x1x384xf32, #tpu.memory_space<vmem>>, %arg6: memref<8x384xf32, #tpu.memory_space<vmem>>, %arg7: memref<1x256x256xbf16, #tpu.memory_space<vmem>>, %arg8: memref<1x1x256xf32, #tpu.memory_space<vmem>>, %arg9: memref<1x256x512xbf16, #tpu.memory_space<vmem>>, %arg10: memref<1x1x512xf32, #tpu.memory_space<vmem>>, %arg11: memref<1x256x256xbf16, #tpu.memory_space<vmem>>, %arg12: memref<1x1x256xf32, #tpu.memory_space<vmem>>, %arg13: memref<1x1x256xf32, #tpu.memory_space<vmem>>, %arg14: memref<1x1x256xf32, #tpu.memory_space<vmem>>, %arg15: memref<1x256x1024xbf16, #tpu.memory_space<vmem>>, %arg16: memref<1x1x1024xf32, #tpu.memory_space<vmem>>, %arg17: memref<1x1024x256xbf16, #tpu.memory_space<vmem>>, %arg18: memref<1x1x256xf32, #tpu.memory_space<vmem>>, %arg19: memref<1x1x256xf32, #tpu.memory_space<vmem>>, %arg20: memref<1x1x256xf32, #tpu.memory_space<vmem>>, %arg21: memref<1x1x16x256xf32, #tpu.memory_space<vmem>>, %arg22: memref<1x1x16x384xf32, #tpu.memory_space<vmem>>, %arg23: memref<16x256xf32, #tpu.memory_space<vmem>>) attributes {dimension_semantics = [#tpu.dimension_semantics<parallel>, #tpu.dimension_semantics<arbitrary>], iteration_bounds = array<i64: 2, 2>, scalar_prefetch = 0 : i64, scratch_operands = 1 : i64, tpu.core_type = #tpu.core_type<tc>, window_params = [{transform_indices = @transform_0, window_bounds = array<i64: 1, 16, 256>}, {transform_indices = @transform_1, window_bounds = array<i64: 1, 16, 256>}, {transform_indices = @transform_2, window_bounds = array<i64: 1, 384, 256>}, {transform_indices = @transform_3, window_bounds = array<i64: 1, 1, 384>}, {pipeline_mode = #tpu.pipeline_mode<synchronous>, transform_indices = @transform_4, window_bounds = array<i64: 8, 384>}, {transform_indices = @transform_5, window_bounds = array<i64: 1, 256, 256>}, {transform_indices = @transform_6, window_bounds = array<i64: 1, 1, 256>}, {transform_indices = @transform_7, window_bounds = array<i64: 1, 256, 512>}, {transform_indices = @transform_8, window_bounds = array<i64: 1, 1, 512>}, {transform_indices = @transform_9, window_bounds = array<i64: 1, 256, 256>}, {transform_indices = @transform_10, window_bounds = array<i64: 1, 1, 256>}, {transform_indices = @transform_11, window_bounds = array<i64: 1, 1, 256>}, {transform_indices = @transform_12, window_bounds = array<i64: 1, 1, 256>}, {transform_indices = @transform_13, window_bounds = array<i64: 1, 256, 1024>}, {transform_indices = @transform_14, window_bounds = array<i64: 1, 1, 1024>}, {transform_indices = @transform_15, window_bounds = array<i64: 1, 1024, 256>}, {transform_indices = @transform_16, window_bounds = array<i64: 1, 1, 256>}, {transform_indices = @transform_17, window_bounds = array<i64: 1, 1, 256>}, {transform_indices = @transform_18, window_bounds = array<i64: 1, 1, 256>}, {transform_indices = @transform_19, window_bounds = array<i64: 1, 1, 16, 256>}, {transform_indices = @transform_20, window_bounds = array<i64: 1, 1, 16, 384>}]} {
    %c0_i32 = arith.constant 0 : i32
    %0 = arith.cmpi eq, %arg1, %c0_i32 : i32
    %1 = arith.extui %0 : i1 to i32
    %c0_i32_0 = arith.constant 0 : i32
    %2 = arith.cmpi ne, %1, %c0_i32_0 : i32
    scf.if %2 {
      %c0_114 = arith.constant 0 : index
      %c0_115 = arith.constant 0 : index
      %c0_116 = arith.constant 0 : index
      %306 = vector.load %arg2[%c0_114, %c0_115, %c0_116] : memref<1x16x256xf32, #tpu.memory_space<vmem>>, vector<1x16x256xf32>
      %307 = vector.shape_cast %306 : vector<1x16x256xf32> to vector<16x256xf32>
      %c0_117 = arith.constant 0 : index
      %c0_118 = arith.constant 0 : index
      %308 = vector.load %arg23[%c0_117, %c0_118] : memref<16x256xf32, #tpu.memory_space<vmem>>, vector<16x256xf32>
      tpu.vector_store %arg23[%c0_117, %c0_118], %307 {strides = array<i32>} : memref<16x256xf32, #tpu.memory_space<vmem>>, vector<16x256xf32>,
    } else {
    }
    %c0 = arith.constant 0 : index
    %c0_1 = arith.constant 0 : index
    %3 = vector.load %arg23[%c0, %c0_1] : memref<16x256xf32, #tpu.memory_space<vmem>>, vector<16x256xf32>
    %c0_2 = arith.constant 0 : index
    %c0_3 = arith.constant 0 : index
    %c0_4 = arith.constant 0 : index
    %4 = vector.load %arg3[%c0_2, %c0_3, %c0_4] : memref<1x16x256xf32, #tpu.memory_space<vmem>>, vector<1x16x256xf32>
    %5 = vector.shape_cast %4 : vector<1x16x256xf32> to vector<16x256xf32>
    %c0_5 = arith.constant 0 : index
    %c0_6 = arith.constant 0 : index
    %c0_7 = arith.constant 0 : index
    %6 = vector.load %arg4[%c0_5, %c0_6, %c0_7] : memref<1x384x256xbf16, #tpu.memory_space<vmem>>, vector<1x384x256xbf16>
    %7 = vector.shape_cast %6 : vector<1x384x256xbf16> to vector<384x256xbf16>
    %c0_8 = arith.constant 0 : index
    %c0_9 = arith.constant 0 : index
    %8 = vector.load %arg6[%c0_8, %c0_9] : memref<8x384xf32, #tpu.memory_space<vmem>>, vector<8x384xf32>
    %9 = arith.addf %3, %5 : vector<16x256xf32>
    %10 = arith.truncf %9 : vector<16x256xf32> to vector<16x256xbf16>
    %c0_10 = arith.constant 0 : index
    %c0_11 = arith.constant 0 : index
    %c0_12 = arith.constant 0 : index
    %11 = vector.load %arg7[%c0_10, %c0_11, %c0_12] : memref<1x256x256xbf16, #tpu.memory_space<vmem>>, vector<1x256x256xbf16>
    %12 = vector.shape_cast %11 : vector<1x256x256xbf16> to vector<256x256xbf16>
    %cst = arith.constant dense<0.000000e+00> : vector<16x256xf32>
    %13 = tpu.matmul %10, %12, %cst {dimension_numbers = #tpu.dot_dimension_numbers<[1], [0], [0], [1], [0, 0, 1, 1], [], []>} : vector<16x256xbf16>, vector<256x256xbf16>, vector<16x256xf32> -> vector<16x256xf32>
    %c0_13 = arith.constant 0 : index
    %c0_14 = arith.constant 0 : index
    %c0_15 = arith.constant 0 : index
    %14 = vector.load %arg8[%c0_13, %c0_14, %c0_15] : memref<1x1x256xf32, #tpu.memory_space<vmem>>, vector<1x1x256xf32>
    %15 = vector.shape_cast %14 : vector<1x1x256xf32> to vector<1x256xf32>
    %16 = vector.broadcast %15 : vector<1x256xf32> to vector<16x256xf32>
    %17 = arith.addf %13, %16 : vector<16x256xf32>
    %cst_16 = arith.constant 0.176776692 : f32
    %18 = vector.broadcast %cst_16 : f32 to vector<16x256xf32>
    %19 = arith.mulf %17, %18 : vector<16x256xf32>
    %c0_17 = arith.constant 0 : index
    %c0_18 = arith.constant 0 : index
    %c0_19 = arith.constant 0 : index
    %20 = vector.load %arg9[%c0_17, %c0_18, %c0_19] : memref<1x256x512xbf16, #tpu.memory_space<vmem>>, vector<1x256x512xbf16>
    %21 = vector.shape_cast %20 : vector<1x256x512xbf16> to vector<256x512xbf16>
    %cst_20 = arith.constant dense<0.000000e+00> : vector<384x512xf32>
    %22 = tpu.matmul %7, %21, %cst_20 {dimension_numbers = #tpu.dot_dimension_numbers<[1], [0], [0], [1], [0, 0, 1, 1], [], []>} : vector<384x256xbf16>, vector<256x512xbf16>, vector<384x512xf32> -> vector<384x512xf32>
    %c0_21 = arith.constant 0 : index
    %c0_22 = arith.constant 0 : index
    %c0_23 = arith.constant 0 : index
    %23 = vector.load %arg10[%c0_21, %c0_22, %c0_23] : memref<1x1x512xf32, #tpu.memory_space<vmem>>, vector<1x1x512xf32>
    %24 = vector.shape_cast %23 : vector<1x1x512xf32> to vector<1x512xf32>
    %25 = vector.broadcast %24 : vector<1x512xf32> to vector<384x512xf32>
    %26 = arith.addf %22, %25 : vector<384x512xf32>
    %27 = vector.extract_strided_slice %26 {offsets = [0, 0], sizes = [384, 256], strides = [1, 1]} : vector<384x512xf32> to vector<384x256xf32>
    %28 = vector.extract_strided_slice %26 {offsets = [0, 256], sizes = [384, 256], strides = [1, 1]} : vector<384x512xf32> to vector<384x256xf32>
    %c0_24 = arith.constant 0 : index
    %c0_25 = arith.constant 0 : index
    %c0_26 = arith.constant 0 : index
    %29 = vector.load %arg5[%c0_24, %c0_25, %c0_26] : memref<1x1x384xf32, #tpu.memory_space<vmem>>, vector<1x1x384xf32>
    %30 = vector.shape_cast %29 : vector<1x1x384xf32> to vector<1x384xf32>
    %31 = vector.shape_cast %30 : vector<1x384xf32> to vector<1x384xf32>
    %32 = vector.broadcast %31 : vector<1x384xf32> to vector<16x384xf32>
    %cst_27 = arith.constant 0.000000e+00 : f32
    %33 = vector.broadcast %cst_27 : f32 to vector<16x384xf32>
    %34 = vector.extract_strided_slice %19 {offsets = [0, 0], sizes = [16, 32], strides = [1, 1]} : vector<16x256xf32> to vector<16x32xf32>
    %35 = arith.truncf %34 : vector<16x32xf32> to vector<16x32xbf16>
    %36 = vector.extract_strided_slice %27 {offsets = [0, 0], sizes = [384, 32], strides = [1, 1]} : vector<384x256xf32> to vector<384x32xf32>
    %37 = arith.truncf %36 : vector<384x32xf32> to vector<384x32xbf16>
    %cst_28 = arith.constant dense<0.000000e+00> : vector<16x384xf32>
    %38 = tpu.matmul %35, %37, %cst_28 {dimension_numbers = #tpu.dot_dimension_numbers<[1], [1], [0], [0], [0, 0, 1, 0], [], []>} : vector<16x32xbf16>, vector<384x32xbf16>, vector<16x384xf32> -> vector<16x384xf32>
    %39 = arith.addf %38, %32 : vector<16x384xf32>
    %cst_29 = arith.constant dense<0xFF800000> : vector<16xf32>
    %40 = vector.multi_reduction <maximumf>, %39, %cst_29 [1] : vector<16x384xf32> to vector<16xf32>
    %41 = vector.shape_cast %40 : vector<16xf32> to vector<16x1xf32>
    %42 = vector.broadcast %41 : vector<16x1xf32> to vector<16x384xf32>
    %43 = arith.subf %39, %42 : vector<16x384xf32>
    %44 = math.exp %43 : vector<16x384xf32>
    %cst_30 = arith.constant dense<0.000000e+00> : vector<16xf32>
    %45 = vector.multi_reduction <add>, %44, %cst_30 [1] : vector<16x384xf32> to vector<16xf32>
    %46 = vector.shape_cast %45 : vector<16xf32> to vector<16x1xf32>
    %47 = vector.broadcast %46 : vector<16x1xf32> to vector<16x384xf32>
    %48 = arith.divf %44, %47 : vector<16x384xf32>
    %49 = vector.extract_strided_slice %8 {offsets = [0, 0], sizes = [1, 384], strides = [1, 1]} : vector<8x384xf32> to vector<1x384xf32>
    %50 = vector.broadcast %49 : vector<1x384xf32> to vector<16x384xf32>
    %51 = arith.mulf %50, %48 : vector<16x384xf32>
    %52 = arith.addf %33, %51 : vector<16x384xf32>
    %53 = arith.truncf %48 : vector<16x384xf32> to vector<16x384xbf16>
    %54 = vector.extract_strided_slice %28 {offsets = [0, 0], sizes = [384, 32], strides = [1, 1]} : vector<384x256xf32> to vector<384x32xf32>
    %55 = arith.truncf %54 : vector<384x32xf32> to vector<384x32xbf16>
    %cst_31 = arith.constant dense<0.000000e+00> : vector<16x32xf32>
    %56 = tpu.matmul %53, %55, %cst_31 {dimension_numbers = #tpu.dot_dimension_numbers<[1], [0], [0], [1], [0, 0, 1, 1], [], []>} : vector<16x384xbf16>, vector<384x32xbf16>, vector<16x32xf32> -> vector<16x32xf32>
    %57 = vector.extract_strided_slice %19 {offsets = [0, 32], sizes = [16, 32], strides = [1, 1]} : vector<16x256xf32> to vector<16x32xf32>
    %58 = arith.truncf %57 : vector<16x32xf32> to vector<16x32xbf16>
    %59 = vector.extract_strided_slice %27 {offsets = [0, 32], sizes = [384, 32], strides = [1, 1]} : vector<384x256xf32> to vector<384x32xf32>
    %60 = arith.truncf %59 : vector<384x32xf32> to vector<384x32xbf16>
    %cst_32 = arith.constant dense<0.000000e+00> : vector<16x384xf32>
    %61 = tpu.matmul %58, %60, %cst_32 {dimension_numbers = #tpu.dot_dimension_numbers<[1], [1], [0], [0], [0, 0, 1, 0], [], []>} : vector<16x32xbf16>, vector<384x32xbf16>, vector<16x384xf32> -> vector<16x384xf32>
    %62 = arith.addf %61, %32 : vector<16x384xf32>
    %cst_33 = arith.constant dense<0xFF800000> : vector<16xf32>
    %63 = vector.multi_reduction <maximumf>, %62, %cst_33 [1] : vector<16x384xf32> to vector<16xf32>
    %64 = vector.shape_cast %63 : vector<16xf32> to vector<16x1xf32>
    %65 = vector.broadcast %64 : vector<16x1xf32> to vector<16x384xf32>
    %66 = arith.subf %62, %65 : vector<16x384xf32>
    %67 = math.exp %66 : vector<16x384xf32>
    %cst_34 = arith.constant dense<0.000000e+00> : vector<16xf32>
    %68 = vector.multi_reduction <add>, %67, %cst_34 [1] : vector<16x384xf32> to vector<16xf32>
    %69 = vector.shape_cast %68 : vector<16xf32> to vector<16x1xf32>
    %70 = vector.broadcast %69 : vector<16x1xf32> to vector<16x384xf32>
    %71 = arith.divf %67, %70 : vector<16x384xf32>
    %72 = vector.extract_strided_slice %8 {offsets = [1, 0], sizes = [1, 384], strides = [1, 1]} : vector<8x384xf32> to vector<1x384xf32>
    %73 = vector.broadcast %72 : vector<1x384xf32> to vector<16x384xf32>
    %74 = arith.mulf %73, %71 : vector<16x384xf32>
    %75 = arith.addf %52, %74 : vector<16x384xf32>
    %76 = arith.truncf %71 : vector<16x384xf32> to vector<16x384xbf16>
    %77 = vector.extract_strided_slice %28 {offsets = [0, 32], sizes = [384, 32], strides = [1, 1]} : vector<384x256xf32> to vector<384x32xf32>
    %78 = arith.truncf %77 : vector<384x32xf32> to vector<384x32xbf16>
    %cst_35 = arith.constant dense<0.000000e+00> : vector<16x32xf32>
    %79 = tpu.matmul %76, %78, %cst_35 {dimension_numbers = #tpu.dot_dimension_numbers<[1], [0], [0], [1], [0, 0, 1, 1], [], []>} : vector<16x384xbf16>, vector<384x32xbf16>, vector<16x32xf32> -> vector<16x32xf32>
    %80 = vector.extract_strided_slice %19 {offsets = [0, 64], sizes = [16, 32], strides = [1, 1]} : vector<16x256xf32> to vector<16x32xf32>
    %81 = arith.truncf %80 : vector<16x32xf32> to vector<16x32xbf16>
    %82 = vector.extract_strided_slice %27 {offsets = [0, 64], sizes = [384, 32], strides = [1, 1]} : vector<384x256xf32> to vector<384x32xf32>
    %83 = arith.truncf %82 : vector<384x32xf32> to vector<384x32xbf16>
    %cst_36 = arith.constant dense<0.000000e+00> : vector<16x384xf32>
    %84 = tpu.matmul %81, %83, %cst_36 {dimension_numbers = #tpu.dot_dimension_numbers<[1], [1], [0], [0], [0, 0, 1, 0], [], []>} : vector<16x32xbf16>, vector<384x32xbf16>, vector<16x384xf32> -> vector<16x384xf32>
    %85 = arith.addf %84, %32 : vector<16x384xf32>
    %cst_37 = arith.constant dense<0xFF800000> : vector<16xf32>
    %86 = vector.multi_reduction <maximumf>, %85, %cst_37 [1] : vector<16x384xf32> to vector<16xf32>
    %87 = vector.shape_cast %86 : vector<16xf32> to vector<16x1xf32>
    %88 = vector.broadcast %87 : vector<16x1xf32> to vector<16x384xf32>
    %89 = arith.subf %85, %88 : vector<16x384xf32>
    %90 = math.exp %89 : vector<16x384xf32>
    %cst_38 = arith.constant dense<0.000000e+00> : vector<16xf32>
    %91 = vector.multi_reduction <add>, %90, %cst_38 [1] : vector<16x384xf32> to vector<16xf32>
    %92 = vector.shape_cast %91 : vector<16xf32> to vector<16x1xf32>
    %93 = vector.broadcast %92 : vector<16x1xf32> to vector<16x384xf32>
    %94 = arith.divf %90, %93 : vector<16x384xf32>
    %95 = vector.extract_strided_slice %8 {offsets = [2, 0], sizes = [1, 384], strides = [1, 1]} : vector<8x384xf32> to vector<1x384xf32>
    %96 = vector.broadcast %95 : vector<1x384xf32> to vector<16x384xf32>
    %97 = arith.mulf %96, %94 : vector<16x384xf32>
    %98 = arith.addf %75, %97 : vector<16x384xf32>
    %99 = arith.truncf %94 : vector<16x384xf32> to vector<16x384xbf16>
    %100 = vector.extract_strided_slice %28 {offsets = [0, 64], sizes = [384, 32], strides = [1, 1]} : vector<384x256xf32> to vector<384x32xf32>
    %101 = arith.truncf %100 : vector<384x32xf32> to vector<384x32xbf16>
    %cst_39 = arith.constant dense<0.000000e+00> : vector<16x32xf32>
    %102 = tpu.matmul %99, %101, %cst_39 {dimension_numbers = #tpu.dot_dimension_numbers<[1], [0], [0], [1], [0, 0, 1, 1], [], []>} : vector<16x384xbf16>, vector<384x32xbf16>, vector<16x32xf32> -> vector<16x32xf32>
    %103 = vector.extract_strided_slice %19 {offsets = [0, 96], sizes = [16, 32], strides = [1, 1]} : vector<16x256xf32> to vector<16x32xf32>
    %104 = arith.truncf %103 : vector<16x32xf32> to vector<16x32xbf16>
    %105 = vector.extract_strided_slice %27 {offsets = [0, 96], sizes = [384, 32], strides = [1, 1]} : vector<384x256xf32> to vector<384x32xf32>
    %106 = arith.truncf %105 : vector<384x32xf32> to vector<384x32xbf16>
    %cst_40 = arith.constant dense<0.000000e+00> : vector<16x384xf32>
    %107 = tpu.matmul %104, %106, %cst_40 {dimension_numbers = #tpu.dot_dimension_numbers<[1], [1], [0], [0], [0, 0, 1, 0], [], []>} : vector<16x32xbf16>, vector<384x32xbf16>, vector<16x384xf32> -> vector<16x384xf32>
    %108 = arith.addf %107, %32 : vector<16x384xf32>
    %cst_41 = arith.constant dense<0xFF800000> : vector<16xf32>
    %109 = vector.multi_reduction <maximumf>, %108, %cst_41 [1] : vector<16x384xf32> to vector<16xf32>
    %110 = vector.shape_cast %109 : vector<16xf32> to vector<16x1xf32>
    %111 = vector.broadcast %110 : vector<16x1xf32> to vector<16x384xf32>
    %112 = arith.subf %108, %111 : vector<16x384xf32>
    %113 = math.exp %112 : vector<16x384xf32>
    %cst_42 = arith.constant dense<0.000000e+00> : vector<16xf32>
    %114 = vector.multi_reduction <add>, %113, %cst_42 [1] : vector<16x384xf32> to vector<16xf32>
    %115 = vector.shape_cast %114 : vector<16xf32> to vector<16x1xf32>
    %116 = vector.broadcast %115 : vector<16x1xf32> to vector<16x384xf32>
    %117 = arith.divf %113, %116 : vector<16x384xf32>
    %118 = vector.extract_strided_slice %8 {offsets = [3, 0], sizes = [1, 384], strides = [1, 1]} : vector<8x384xf32> to vector<1x384xf32>
    %119 = vector.broadcast %118 : vector<1x384xf32> to vector<16x384xf32>
    %120 = arith.mulf %119, %117 : vector<16x384xf32>
    %121 = arith.addf %98, %120 : vector<16x384xf32>
    %122 = arith.truncf %117 : vector<16x384xf32> to vector<16x384xbf16>
    %123 = vector.extract_strided_slice %28 {offsets = [0, 96], sizes = [384, 32], strides = [1, 1]} : vector<384x256xf32> to vector<384x32xf32>
    %124 = arith.truncf %123 : vector<384x32xf32> to vector<384x32xbf16>
    %cst_43 = arith.constant dense<0.000000e+00> : vector<16x32xf32>
    %125 = tpu.matmul %122, %124, %cst_43 {dimension_numbers = #tpu.dot_dimension_numbers<[1], [0], [0], [1], [0, 0, 1, 1], [], []>} : vector<16x384xbf16>, vector<384x32xbf16>, vector<16x32xf32> -> vector<16x32xf32>
    %126 = vector.extract_strided_slice %19 {offsets = [0, 128], sizes = [16, 32], strides = [1, 1]} : vector<16x256xf32> to vector<16x32xf32>
    %127 = arith.truncf %126 : vector<16x32xf32> to vector<16x32xbf16>
    %128 = vector.extract_strided_slice %27 {offsets = [0, 128], sizes = [384, 32], strides = [1, 1]} : vector<384x256xf32> to vector<384x32xf32>
    %129 = arith.truncf %128 : vector<384x32xf32> to vector<384x32xbf16>
    %cst_44 = arith.constant dense<0.000000e+00> : vector<16x384xf32>
    %130 = tpu.matmul %127, %129, %cst_44 {dimension_numbers = #tpu.dot_dimension_numbers<[1], [1], [0], [0], [0, 0, 1, 0], [], []>} : vector<16x32xbf16>, vector<384x32xbf16>, vector<16x384xf32> -> vector<16x384xf32>
    %131 = arith.addf %130, %32 : vector<16x384xf32>
    %cst_45 = arith.constant dense<0xFF800000> : vector<16xf32>
    %132 = vector.multi_reduction <maximumf>, %131, %cst_45 [1] : vector<16x384xf32> to vector<16xf32>
    %133 = vector.shape_cast %132 : vector<16xf32> to vector<16x1xf32>
    %134 = vector.broadcast %133 : vector<16x1xf32> to vector<16x384xf32>
    %135 = arith.subf %131, %134 : vector<16x384xf32>
    %136 = math.exp %135 : vector<16x384xf32>
    %cst_46 = arith.constant dense<0.000000e+00> : vector<16xf32>
    %137 = vector.multi_reduction <add>, %136, %cst_46 [1] : vector<16x384xf32> to vector<16xf32>
    %138 = vector.shape_cast %137 : vector<16xf32> to vector<16x1xf32>
    %139 = vector.broadcast %138 : vector<16x1xf32> to vector<16x384xf32>
    %140 = arith.divf %136, %139 : vector<16x384xf32>
    %141 = vector.extract_strided_slice %8 {offsets = [4, 0], sizes = [1, 384], strides = [1, 1]} : vector<8x384xf32> to vector<1x384xf32>
    %142 = vector.broadcast %141 : vector<1x384xf32> to vector<16x384xf32>
    %143 = arith.mulf %142, %140 : vector<16x384xf32>
    %144 = arith.addf %121, %143 : vector<16x384xf32>
    %145 = arith.truncf %140 : vector<16x384xf32> to vector<16x384xbf16>
    %146 = vector.extract_strided_slice %28 {offsets = [0, 128], sizes = [384, 32], strides = [1, 1]} : vector<384x256xf32> to vector<384x32xf32>
    %147 = arith.truncf %146 : vector<384x32xf32> to vector<384x32xbf16>
    %cst_47 = arith.constant dense<0.000000e+00> : vector<16x32xf32>
    %148 = tpu.matmul %145, %147, %cst_47 {dimension_numbers = #tpu.dot_dimension_numbers<[1], [0], [0], [1], [0, 0, 1, 1], [], []>} : vector<16x384xbf16>, vector<384x32xbf16>, vector<16x32xf32> -> vector<16x32xf32>
    %149 = vector.extract_strided_slice %19 {offsets = [0, 160], sizes = [16, 32], strides = [1, 1]} : vector<16x256xf32> to vector<16x32xf32>
    %150 = arith.truncf %149 : vector<16x32xf32> to vector<16x32xbf16>
    %151 = vector.extract_strided_slice %27 {offsets = [0, 160], sizes = [384, 32], strides = [1, 1]} : vector<384x256xf32> to vector<384x32xf32>
    %152 = arith.truncf %151 : vector<384x32xf32> to vector<384x32xbf16>
    %cst_48 = arith.constant dense<0.000000e+00> : vector<16x384xf32>
    %153 = tpu.matmul %150, %152, %cst_48 {dimension_numbers = #tpu.dot_dimension_numbers<[1], [1], [0], [0], [0, 0, 1, 0], [], []>} : vector<16x32xbf16>, vector<384x32xbf16>, vector<16x384xf32> -> vector<16x384xf32>
    %154 = arith.addf %153, %32 : vector<16x384xf32>
    %cst_49 = arith.constant dense<0xFF800000> : vector<16xf32>
    %155 = vector.multi_reduction <maximumf>, %154, %cst_49 [1] : vector<16x384xf32> to vector<16xf32>
    %156 = vector.shape_cast %155 : vector<16xf32> to vector<16x1xf32>
    %157 = vector.broadcast %156 : vector<16x1xf32> to vector<16x384xf32>
    %158 = arith.subf %154, %157 : vector<16x384xf32>
    %159 = math.exp %158 : vector<16x384xf32>
    %cst_50 = arith.constant dense<0.000000e+00> : vector<16xf32>
    %160 = vector.multi_reduction <add>, %159, %cst_50 [1] : vector<16x384xf32> to vector<16xf32>
    %161 = vector.shape_cast %160 : vector<16xf32> to vector<16x1xf32>
    %162 = vector.broadcast %161 : vector<16x1xf32> to vector<16x384xf32>
    %163 = arith.divf %159, %162 : vector<16x384xf32>
    %164 = vector.extract_strided_slice %8 {offsets = [5, 0], sizes = [1, 384], strides = [1, 1]} : vector<8x384xf32> to vector<1x384xf32>
    %165 = vector.broadcast %164 : vector<1x384xf32> to vector<16x384xf32>
    %166 = arith.mulf %165, %163 : vector<16x384xf32>
    %167 = arith.addf %144, %166 : vector<16x384xf32>
    %168 = arith.truncf %163 : vector<16x384xf32> to vector<16x384xbf16>
    %169 = vector.extract_strided_slice %28 {offsets = [0, 160], sizes = [384, 32], strides = [1, 1]} : vector<384x256xf32> to vector<384x32xf32>
    %170 = arith.truncf %169 : vector<384x32xf32> to vector<384x32xbf16>
    %cst_51 = arith.constant dense<0.000000e+00> : vector<16x32xf32>
    %171 = tpu.matmul %168, %170, %cst_51 {dimension_numbers = #tpu.dot_dimension_numbers<[1], [0], [0], [1], [0, 0, 1, 1], [], []>} : vector<16x384xbf16>, vector<384x32xbf16>, vector<16x32xf32> -> vector<16x32xf32>
    %172 = vector.extract_strided_slice %19 {offsets = [0, 192], sizes = [16, 32], strides = [1, 1]} : vector<16x256xf32> to vector<16x32xf32>
    %173 = arith.truncf %172 : vector<16x32xf32> to vector<16x32xbf16>
    %174 = vector.extract_strided_slice %27 {offsets = [0, 192], sizes = [384, 32], strides = [1, 1]} : vector<384x256xf32> to vector<384x32xf32>
    %175 = arith.truncf %174 : vector<384x32xf32> to vector<384x32xbf16>
    %cst_52 = arith.constant dense<0.000000e+00> : vector<16x384xf32>
    %176 = tpu.matmul %173, %175, %cst_52 {dimension_numbers = #tpu.dot_dimension_numbers<[1], [1], [0], [0], [0, 0, 1, 0], [], []>} : vector<16x32xbf16>, vector<384x32xbf16>, vector<16x384xf32> -> vector<16x384xf32>
    %177 = arith.addf %176, %32 : vector<16x384xf32>
    %cst_53 = arith.constant dense<0xFF800000> : vector<16xf32>
    %178 = vector.multi_reduction <maximumf>, %177, %cst_53 [1] : vector<16x384xf32> to vector<16xf32>
    %179 = vector.shape_cast %178 : vector<16xf32> to vector<16x1xf32>
    %180 = vector.broadcast %179 : vector<16x1xf32> to vector<16x384xf32>
    %181 = arith.subf %177, %180 : vector<16x384xf32>
    %182 = math.exp %181 : vector<16x384xf32>
    %cst_54 = arith.constant dense<0.000000e+00> : vector<16xf32>
    %183 = vector.multi_reduction <add>, %182, %cst_54 [1] : vector<16x384xf32> to vector<16xf32>
    %184 = vector.shape_cast %183 : vector<16xf32> to vector<16x1xf32>
    %185 = vector.broadcast %184 : vector<16x1xf32> to vector<16x384xf32>
    %186 = arith.divf %182, %185 : vector<16x384xf32>
    %187 = vector.extract_strided_slice %8 {offsets = [6, 0], sizes = [1, 384], strides = [1, 1]} : vector<8x384xf32> to vector<1x384xf32>
    %188 = vector.broadcast %187 : vector<1x384xf32> to vector<16x384xf32>
    %189 = arith.mulf %188, %186 : vector<16x384xf32>
    %190 = arith.addf %167, %189 : vector<16x384xf32>
    %191 = arith.truncf %186 : vector<16x384xf32> to vector<16x384xbf16>
    %192 = vector.extract_strided_slice %28 {offsets = [0, 192], sizes = [384, 32], strides = [1, 1]} : vector<384x256xf32> to vector<384x32xf32>
    %193 = arith.truncf %192 : vector<384x32xf32> to vector<384x32xbf16>
    %cst_55 = arith.constant dense<0.000000e+00> : vector<16x32xf32>
    %194 = tpu.matmul %191, %193, %cst_55 {dimension_numbers = #tpu.dot_dimension_numbers<[1], [0], [0], [1], [0, 0, 1, 1], [], []>} : vector<16x384xbf16>, vector<384x32xbf16>, vector<16x32xf32> -> vector<16x32xf32>
    %195 = vector.extract_strided_slice %19 {offsets = [0, 224], sizes = [16, 32], strides = [1, 1]} : vector<16x256xf32> to vector<16x32xf32>
    %196 = arith.truncf %195 : vector<16x32xf32> to vector<16x32xbf16>
    %197 = vector.extract_strided_slice %27 {offsets = [0, 224], sizes = [384, 32], strides = [1, 1]} : vector<384x256xf32> to vector<384x32xf32>
    %198 = arith.truncf %197 : vector<384x32xf32> to vector<384x32xbf16>
    %cst_56 = arith.constant dense<0.000000e+00> : vector<16x384xf32>
    %199 = tpu.matmul %196, %198, %cst_56 {dimension_numbers = #tpu.dot_dimension_numbers<[1], [1], [0], [0], [0, 0, 1, 0], [], []>} : vector<16x32xbf16>, vector<384x32xbf16>, vector<16x384xf32> -> vector<16x384xf32>
    %200 = arith.addf %199, %32 : vector<16x384xf32>
    %cst_57 = arith.constant dense<0xFF800000> : vector<16xf32>
    %201 = vector.multi_reduction <maximumf>, %200, %cst_57 [1] : vector<16x384xf32> to vector<16xf32>
    %202 = vector.shape_cast %201 : vector<16xf32> to vector<16x1xf32>
    %203 = vector.broadcast %202 : vector<16x1xf32> to vector<16x384xf32>
    %204 = arith.subf %200, %203 : vector<16x384xf32>
    %205 = math.exp %204 : vector<16x384xf32>
    %cst_58 = arith.constant dense<0.000000e+00> : vector<16xf32>
    %206 = vector.multi_reduction <add>, %205, %cst_58 [1] : vector<16x384xf32> to vector<16xf32>
    %207 = vector.shape_cast %206 : vector<16xf32> to vector<16x1xf32>
    %208 = vector.broadcast %207 : vector<16x1xf32> to vector<16x384xf32>
    %209 = arith.divf %205, %208 : vector<16x384xf32>
    %210 = vector.extract_strided_slice %8 {offsets = [7, 0], sizes = [1, 384], strides = [1, 1]} : vector<8x384xf32> to vector<1x384xf32>
    %211 = vector.broadcast %210 : vector<1x384xf32> to vector<16x384xf32>
    %212 = arith.mulf %211, %209 : vector<16x384xf32>
    %213 = arith.addf %190, %212 : vector<16x384xf32>
    %214 = arith.truncf %209 : vector<16x384xf32> to vector<16x384xbf16>
    %215 = vector.extract_strided_slice %28 {offsets = [0, 224], sizes = [384, 32], strides = [1, 1]} : vector<384x256xf32> to vector<384x32xf32>
    %216 = arith.truncf %215 : vector<384x32xf32> to vector<384x32xbf16>
    %cst_59 = arith.constant dense<0.000000e+00> : vector<16x32xf32>
    %217 = tpu.matmul %214, %216, %cst_59 {dimension_numbers = #tpu.dot_dimension_numbers<[1], [0], [0], [1], [0, 0, 1, 1], [], []>} : vector<16x384xbf16>, vector<384x32xbf16>, vector<16x32xf32> -> vector<16x32xf32>
    %218 = tpu.concatenate %56, %79, %102, %125, %148, %171, %194, %217 in 1 : vector<16x32xf32>, vector<16x32xf32>, vector<16x32xf32>, vector<16x32xf32>, vector<16x32xf32>, vector<16x32xf32>, vector<16x32xf32>, vector<16x32xf32> -> vector<16x256xf32>
    %219 = arith.truncf %218 : vector<16x256xf32> to vector<16x256xbf16>
    %c0_60 = arith.constant 0 : index
    %c0_61 = arith.constant 0 : index
    %c0_62 = arith.constant 0 : index
    %220 = vector.load %arg11[%c0_60, %c0_61, %c0_62] : memref<1x256x256xbf16, #tpu.memory_space<vmem>>, vector<1x256x256xbf16>
    %221 = vector.shape_cast %220 : vector<1x256x256xbf16> to vector<256x256xbf16>
    %cst_63 = arith.constant dense<0.000000e+00> : vector<16x256xf32>
    %222 = tpu.matmul %219, %221, %cst_63 {dimension_numbers = #tpu.dot_dimension_numbers<[1], [0], [0], [1], [0, 0, 1, 1], [], []>} : vector<16x256xbf16>, vector<256x256xbf16>, vector<16x256xf32> -> vector<16x256xf32>
    %c0_64 = arith.constant 0 : index
    %c0_65 = arith.constant 0 : index
    %c0_66 = arith.constant 0 : index
    %223 = vector.load %arg12[%c0_64, %c0_65, %c0_66] : memref<1x1x256xf32, #tpu.memory_space<vmem>>, vector<1x1x256xf32>
    %224 = vector.shape_cast %223 : vector<1x1x256xf32> to vector<1x256xf32>
    %225 = vector.broadcast %224 : vector<1x256xf32> to vector<16x256xf32>
    %226 = arith.addf %222, %225 : vector<16x256xf32>
    %227 = arith.addf %3, %226 : vector<16x256xf32>
    %c0_67 = arith.constant 0 : index
    %c0_68 = arith.constant 0 : index
    %c0_69 = arith.constant 0 : index
    %228 = vector.load %arg13[%c0_67, %c0_68, %c0_69] : memref<1x1x256xf32, #tpu.memory_space<vmem>>, vector<1x1x256xf32>
    %229 = vector.shape_cast %228 : vector<1x1x256xf32> to vector<1x256xf32>
    %c0_70 = arith.constant 0 : index
    %c0_71 = arith.constant 0 : index
    %c0_72 = arith.constant 0 : index
    %230 = vector.load %arg14[%c0_70, %c0_71, %c0_72] : memref<1x1x256xf32, #tpu.memory_space<vmem>>, vector<1x1x256xf32>
    %231 = vector.shape_cast %230 : vector<1x1x256xf32> to vector<1x256xf32>
    %cst_73 = arith.constant dense<0.000000e+00> : vector<16xf32>
    %232 = vector.multi_reduction <add>, %227, %cst_73 [1] : vector<16x256xf32> to vector<16xf32>
    %233 = vector.shape_cast %232 : vector<16xf32> to vector<16x1xf32>
    %cst_74 = arith.constant 2.560000e+02 : f32
    %234 = vector.broadcast %cst_74 : f32 to vector<16x1xf32>
    %235 = arith.divf %233, %234 : vector<16x1xf32>
    %236 = vector.broadcast %235 : vector<16x1xf32> to vector<16x256xf32>
    %237 = arith.subf %227, %236 : vector<16x256xf32>
    %238 = arith.mulf %237, %237 : vector<16x256xf32>
    %cst_75 = arith.constant dense<0.000000e+00> : vector<16xf32>
    %239 = vector.multi_reduction <add>, %238, %cst_75 [1] : vector<16x256xf32> to vector<16xf32>
    %240 = vector.shape_cast %239 : vector<16xf32> to vector<16x1xf32>
    %cst_76 = arith.constant 2.560000e+02 : f32
    %241 = vector.broadcast %cst_76 : f32 to vector<16x1xf32>
    %242 = arith.divf %240, %241 : vector<16x1xf32>
    %243 = vector.broadcast %235 : vector<16x1xf32> to vector<16x256xf32>
    %244 = arith.subf %227, %243 : vector<16x256xf32>
    %cst_77 = arith.constant 9.99999974E-6 : f32
    %245 = vector.broadcast %cst_77 : f32 to vector<16x1xf32>
    %246 = arith.addf %242, %245 : vector<16x1xf32>
    %247 = math.rsqrt %246 : vector<16x1xf32>
    %248 = vector.broadcast %247 : vector<16x1xf32> to vector<16x256xf32>
    %249 = arith.mulf %244, %248 : vector<16x256xf32>
    %250 = vector.broadcast %229 : vector<1x256xf32> to vector<16x256xf32>
    %251 = arith.mulf %249, %250 : vector<16x256xf32>
    %252 = vector.broadcast %231 : vector<1x256xf32> to vector<16x256xf32>
    %253 = arith.addf %251, %252 : vector<16x256xf32>
    %254 = arith.truncf %253 : vector<16x256xf32> to vector<16x256xbf16>
    %c0_78 = arith.constant 0 : index
    %c0_79 = arith.constant 0 : index
    %c0_80 = arith.constant 0 : index
    %255 = vector.load %arg15[%c0_78, %c0_79, %c0_80] : memref<1x256x1024xbf16, #tpu.memory_space<vmem>>, vector<1x256x1024xbf16>
    %256 = vector.shape_cast %255 : vector<1x256x1024xbf16> to vector<256x1024xbf16>
    %cst_81 = arith.constant dense<0.000000e+00> : vector<16x1024xf32>
    %257 = tpu.matmul %254, %256, %cst_81 {dimension_numbers = #tpu.dot_dimension_numbers<[1], [0], [0], [1], [0, 0, 1, 1], [], []>} : vector<16x256xbf16>, vector<256x1024xbf16>, vector<16x1024xf32> -> vector<16x1024xf32>
    %c0_82 = arith.constant 0 : index
    %c0_83 = arith.constant 0 : index
    %c0_84 = arith.constant 0 : index
    %258 = vector.load %arg16[%c0_82, %c0_83, %c0_84] : memref<1x1x1024xf32, #tpu.memory_space<vmem>>, vector<1x1x1024xf32>
    %259 = vector.shape_cast %258 : vector<1x1x1024xf32> to vector<1x1024xf32>
    %260 = vector.broadcast %259 : vector<1x1024xf32> to vector<16x1024xf32>
    %261 = arith.addf %257, %260 : vector<16x1024xf32>
    %cst_85 = arith.constant 0.000000e+00 : f32
    %262 = vector.broadcast %cst_85 : f32 to vector<16x1024xf32>
    %263 = arith.maximumf %261, %262 : vector<16x1024xf32>
    %264 = arith.truncf %263 : vector<16x1024xf32> to vector<16x1024xbf16>
    %c0_86 = arith.constant 0 : index
    %c0_87 = arith.constant 0 : index
    %c0_88 = arith.constant 0 : index
    %265 = vector.load %arg17[%c0_86, %c0_87, %c0_88] : memref<1x1024x256xbf16, #tpu.memory_space<vmem>>, vector<1x1024x256xbf16>
    %266 = vector.shape_cast %265 : vector<1x1024x256xbf16> to vector<1024x256xbf16>
    %cst_89 = arith.constant dense<0.000000e+00> : vector<16x256xf32>
    %267 = tpu.matmul %264, %266, %cst_89 {dimension_numbers = #tpu.dot_dimension_numbers<[1], [0], [0], [1], [0, 0, 1, 1], [], []>} : vector<16x1024xbf16>, vector<1024x256xbf16>, vector<16x256xf32> -> vector<16x256xf32>
    %c0_90 = arith.constant 0 : index
    %c0_91 = arith.constant 0 : index
    %c0_92 = arith.constant 0 : index
    %268 = vector.load %arg18[%c0_90, %c0_91, %c0_92] : memref<1x1x256xf32, #tpu.memory_space<vmem>>, vector<1x1x256xf32>
    %269 = vector.shape_cast %268 : vector<1x1x256xf32> to vector<1x256xf32>
    %270 = vector.broadcast %269 : vector<1x256xf32> to vector<16x256xf32>
    %271 = arith.addf %267, %270 : vector<16x256xf32>
    %272 = arith.addf %253, %271 : vector<16x256xf32>
    %c0_93 = arith.constant 0 : index
    %c0_94 = arith.constant 0 : index
    %c0_95 = arith.constant 0 : index
    %273 = vector.load %arg19[%c0_93, %c0_94, %c0_95] : memref<1x1x256xf32, #tpu.memory_space<vmem>>, vector<1x1x256xf32>
    %274 = vector.shape_cast %273 : vector<1x1x256xf32> to vector<1x256xf32>
    %c0_96 = arith.constant 0 : index
    %c0_97 = arith.constant 0 : index
    %c0_98 = arith.constant 0 : index
    %275 = vector.load %arg20[%c0_96, %c0_97, %c0_98] : memref<1x1x256xf32, #tpu.memory_space<vmem>>, vector<1x1x256xf32>
    %276 = vector.shape_cast %275 : vector<1x1x256xf32> to vector<1x256xf32>
    %cst_99 = arith.constant dense<0.000000e+00> : vector<16xf32>
    %277 = vector.multi_reduction <add>, %272, %cst_99 [1] : vector<16x256xf32> to vector<16xf32>
    %278 = vector.shape_cast %277 : vector<16xf32> to vector<16x1xf32>
    %cst_100 = arith.constant 2.560000e+02 : f32
    %279 = vector.broadcast %cst_100 : f32 to vector<16x1xf32>
    %280 = arith.divf %278, %279 : vector<16x1xf32>
    %281 = vector.broadcast %280 : vector<16x1xf32> to vector<16x256xf32>
    %282 = arith.subf %272, %281 : vector<16x256xf32>
    %283 = arith.mulf %282, %282 : vector<16x256xf32>
    %cst_101 = arith.constant dense<0.000000e+00> : vector<16xf32>
    %284 = vector.multi_reduction <add>, %283, %cst_101 [1] : vector<16x256xf32> to vector<16xf32>
    %285 = vector.shape_cast %284 : vector<16xf32> to vector<16x1xf32>
    %cst_102 = arith.constant 2.560000e+02 : f32
    %286 = vector.broadcast %cst_102 : f32 to vector<16x1xf32>
    %287 = arith.divf %285, %286 : vector<16x1xf32>
    %288 = vector.broadcast %280 : vector<16x1xf32> to vector<16x256xf32>
    %289 = arith.subf %272, %288 : vector<16x256xf32>
    %cst_103 = arith.constant 9.99999974E-6 : f32
    %290 = vector.broadcast %cst_103 : f32 to vector<16x1xf32>
    %291 = arith.addf %287, %290 : vector<16x1xf32>
    %292 = math.rsqrt %291 : vector<16x1xf32>
    %293 = vector.broadcast %292 : vector<16x1xf32> to vector<16x256xf32>
    %294 = arith.mulf %289, %293 : vector<16x256xf32>
    %295 = vector.broadcast %274 : vector<1x256xf32> to vector<16x256xf32>
    %296 = arith.mulf %294, %295 : vector<16x256xf32>
    %297 = vector.broadcast %276 : vector<1x256xf32> to vector<16x256xf32>
    %298 = arith.addf %296, %297 : vector<16x256xf32>
    %c0_104 = arith.constant 0 : index
    %c0_105 = arith.constant 0 : index
    %299 = vector.load %arg23[%c0_104, %c0_105] : memref<16x256xf32, #tpu.memory_space<vmem>>, vector<16x256xf32>
    tpu.vector_store %arg23[%c0_104, %c0_105], %298 {strides = array<i32>} : memref<16x256xf32, #tpu.memory_space<vmem>>, vector<16x256xf32>,
    %c0_106 = arith.constant 0 : index
    %c0_107 = arith.constant 0 : index
    %c0_108 = arith.constant 0 : index
    %c0_109 = arith.constant 0 : index
    %300 = vector.load %arg21[%c0_106, %c0_107, %c0_108, %c0_109] : memref<1x1x16x256xf32, #tpu.memory_space<vmem>>, vector<1x1x16x256xf32>
    %301 = vector.shape_cast %300 : vector<1x1x16x256xf32> to vector<16x256xf32>
    %302 = vector.shape_cast %298 : vector<16x256xf32> to vector<1x1x16x256xf32>
    tpu.vector_store %arg21[%c0_106, %c0_107, %c0_108, %c0_109], %302 {strides = array<i32>} : memref<1x1x16x256xf32, #tpu.memory_space<vmem>>, vector<1x1x16x256xf32>,
    %c0_110 = arith.constant 0 : index
    %c0_111 = arith.constant 0 : index
    %c0_112 = arith.constant 0 : index
    %c0_113 = arith.constant 0 : index
    %303 = vector.load %arg22[%c0_110, %c0_111, %c0_112, %c0_113] : memref<1x1x16x384xf32, #tpu.memory_space<vmem>>, vector<1x1x16x384xf32>
    %304 = vector.shape_cast %303 : vector<1x1x16x384xf32> to vector<16x384xf32>
    %305 = vector.shape_cast %213 : vector<16x384xf32> to vector<1x1x16x384xf32>
    tpu.vector_store %arg22[%c0_110, %c0_111, %c0_112, %c0_113], %305 {strides = array<i32>} : memref<1x1x16x384xf32, #tpu.memory_space<vmem>>, vector<1x1x16x384xf32>,
    return
  }
  func.func @transform_0(%arg0: i32, %arg1: i32) -> (i32, i32, i32) {
    %c0_i32 = arith.constant 0 : i32
    %c0_i32_0 = arith.constant 0 : i32
    %c0_i32_1 = arith.constant 0 : i32
    return %arg0, %c0_i32, %c0_i32_0 : i32, i32, i32
  }
  func.func @transform_1(%arg0: i32, %arg1: i32) -> (i32, i32, i32) {
    %c0_i32 = arith.constant 0 : i32
    %c0_i32_0 = arith.constant 0 : i32
    %c0_i32_1 = arith.constant 0 : i32
    return %arg0, %c0_i32, %c0_i32_0 : i32, i32, i32
  }
  func.func @transform_2(%arg0: i32, %arg1: i32) -> (i32, i32, i32) {
    %c0_i32 = arith.constant 0 : i32
    %c0_i32_0 = arith.constant 0 : i32
    %c0_i32_1 = arith.constant 0 : i32
    return %arg0, %c0_i32, %c0_i32_0 : i32, i32, i32
  }
  func.func @transform_3(%arg0: i32, %arg1: i32) -> (i32, i32, i32) {
    %c0_i32 = arith.constant 0 : i32
    %c0_i32_0 = arith.constant 0 : i32
    %c0_i32_1 = arith.constant 0 : i32
    return %arg0, %c0_i32, %c0_i32_0 : i32, i32, i32
  }
  func.func @transform_4(%arg0: i32, %arg1: i32) -> (i32, i32) {
    %c0_i32 = arith.constant 0 : i32
    %c0_i32_0 = arith.constant 0 : i32
    %c0_i32_1 = arith.constant 0 : i32
    return %c0_i32, %c0_i32_0 : i32, i32
  }
  func.func @transform_5(%arg0: i32, %arg1: i32) -> (i32, i32, i32) {
    %c0_i32 = arith.constant 0 : i32
    %c0_i32_0 = arith.constant 0 : i32
    %c0_i32_1 = arith.constant 0 : i32
    return %arg1, %c0_i32, %c0_i32_0 : i32, i32, i32
  }
  func.func @transform_6(%arg0: i32, %arg1: i32) -> (i32, i32, i32) {
    %c0_i32 = arith.constant 0 : i32
    %c0_i32_0 = arith.constant 0 : i32
    %c0_i32_1 = arith.constant 0 : i32
    return %arg1, %c0_i32, %c0_i32_0 : i32, i32, i32
  }
  func.func @transform_7(%arg0: i32, %arg1: i32) -> (i32, i32, i32) {
    %c0_i32 = arith.constant 0 : i32
    %c0_i32_0 = arith.constant 0 : i32
    %c0_i32_1 = arith.constant 0 : i32
    return %arg1, %c0_i32, %c0_i32_0 : i32, i32, i32
  }
  func.func @transform_8(%arg0: i32, %arg1: i32) -> (i32, i32, i32) {
    %c0_i32 = arith.constant 0 : i32
    %c0_i32_0 = arith.constant 0 : i32
    %c0_i32_1 = arith.constant 0 : i32
    return %arg1, %c0_i32, %c0_i32_0 : i32, i32, i32
  }
  func.func @transform_9(%arg0: i32, %arg1: i32) -> (i32, i32, i32) {
    %c0_i32 = arith.constant 0 : i32
    %c0_i32_0 = arith.constant 0 : i32
    %c0_i32_1 = arith.constant 0 : i32
    return %arg1, %c0_i32, %c0_i32_0 : i32, i32, i32
  }
  func.func @transform_10(%arg0: i32, %arg1: i32) -> (i32, i32, i32) {
    %c0_i32 = arith.constant 0 : i32
    %c0_i32_0 = arith.constant 0 : i32
    %c0_i32_1 = arith.constant 0 : i32
    return %arg1, %c0_i32, %c0_i32_0 : i32, i32, i32
  }
  func.func @transform_11(%arg0: i32, %arg1: i32) -> (i32, i32, i32) {
    %c0_i32 = arith.constant 0 : i32
    %c0_i32_0 = arith.constant 0 : i32
    %c0_i32_1 = arith.constant 0 : i32
    return %arg1, %c0_i32, %c0_i32_0 : i32, i32, i32
  }
  func.func @transform_12(%arg0: i32, %arg1: i32) -> (i32, i32, i32) {
    %c0_i32 = arith.constant 0 : i32
    %c0_i32_0 = arith.constant 0 : i32
    %c0_i32_1 = arith.constant 0 : i32
    return %arg1, %c0_i32, %c0_i32_0 : i32, i32, i32
  }
  func.func @transform_13(%arg0: i32, %arg1: i32) -> (i32, i32, i32) {
    %c0_i32 = arith.constant 0 : i32
    %c0_i32_0 = arith.constant 0 : i32
    %c0_i32_1 = arith.constant 0 : i32
    return %arg1, %c0_i32, %c0_i32_0 : i32, i32, i32
  }
  func.func @transform_14(%arg0: i32, %arg1: i32) -> (i32, i32, i32) {
    %c0_i32 = arith.constant 0 : i32
    %c0_i32_0 = arith.constant 0 : i32
    %c0_i32_1 = arith.constant 0 : i32
    return %arg1, %c0_i32, %c0_i32_0 : i32, i32, i32
  }
  func.func @transform_15(%arg0: i32, %arg1: i32) -> (i32, i32, i32) {
    %c0_i32 = arith.constant 0 : i32
    %c0_i32_0 = arith.constant 0 : i32
    %c0_i32_1 = arith.constant 0 : i32
    return %arg1, %c0_i32, %c0_i32_0 : i32, i32, i32
  }
  func.func @transform_16(%arg0: i32, %arg1: i32) -> (i32, i32, i32) {
    %c0_i32 = arith.constant 0 : i32
    %c0_i32_0 = arith.constant 0 : i32
    %c0_i32_1 = arith.constant 0 : i32
    return %arg1, %c0_i32, %c0_i32_0 : i32, i32, i32
  }
  func.func @transform_17(%arg0: i32, %arg1: i32) -> (i32, i32, i32) {
    %c0_i32 = arith.constant 0 : i32
    %c0_i32_0 = arith.constant 0 : i32
    %c0_i32_1 = arith.constant 0 : i32
    return %arg1, %c0_i32, %c0_i32_0 : i32, i32, i32
  }
  func.func @transform_18(%arg0: i32, %arg1: i32) -> (i32, i32, i32) {
    %c0_i32 = arith.constant 0 : i32
    %c0_i32_0 = arith.constant 0 : i32
    %c0_i32_1 = arith.constant 0 : i32
    return %arg1, %c0_i32, %c0_i32_0 : i32, i32, i32
  }
  func.func @transform_19(%arg0: i32, %arg1: i32) -> (i32, i32, i32, i32) {
    %c0_i32 = arith.constant 0 : i32
    %c0_i32_0 = arith.constant 0 : i32
    %c0_i32_1 = arith.constant 0 : i32
    return %arg0, %arg1, %c0_i32, %c0_i32_0 : i32, i32, i32, i32
  }
  func.func @transform_20(%arg0: i32, %arg1: i32) -> (i32, i32, i32, i32) {
    %c0_i32 = arith.constant 0 : i32
    %c0_i32_0 = arith.constant 0 : i32
    %c0_i32_1 = arith.constant 0 : i32
    return %arg0, %arg1, %c0_i32, %c0_i32_0 : i32, i32, i32, i32
  }
}

</mosaic_0001>

<llo_original>
// kernel: _lambda_.1
$region0: #{_lambda_.1}
  #allocation0 [shape = 'u32[]', space=smem, size = 0x4, offset = 0x4, fixed_abs, tag = 'smem constant byte address 0x4 - core index']
  #allocation1 [shape = 'u32[144,128]{1,0:T(1,128)}', space=vmem, size = 0x12000, scoped, tag = 'internal scratch']
  #allocation2 [shape = 'f32[16,256]{1,0:T(8,128)}', space=vmem, size = 0x4000, scoped, tag = 'scratch operand']
  %s0 = inlined_call_operand.vmem [shape: f32[2,16,256], index: 0, kind: input, shape index: {}]
  %s1 = inlined_call_operand.vmem [shape: f32[2,16,256], index: 1, kind: input, shape index: {}]
  %s2 = inlined_call_operand.vmem [shape: bf16[2,384,256], index: 2, kind: input, shape index: {}]
  %s3 = inlined_call_operand.vmem [shape: f32[2,1,384], index: 3, kind: input, shape index: {}]
  %s4 = inlined_call_operand.vmem [shape: f32[8,384], index: 4, kind: input, shape index: {}]
  %s5 = inlined_call_operand.vmem [shape: bf16[2,256,256], index: 5, kind: input, shape index: {}]
  %s6 = inlined_call_operand.vmem [shape: f32[2,1,256], index: 6, kind: input, shape index: {}, may-alias: {6,10,12,16,18}]
  %s7 = inlined_call_operand.vmem [shape: bf16[2,256,512], index: 7, kind: input, shape index: {}]
  %s8 = inlined_call_operand.vmem [shape: f32[2,1,512], index: 8, kind: input, shape index: {}]
  %s9 = inlined_call_operand.vmem [shape: bf16[2,256,256], index: 9, kind: input, shape index: {}]
  %s10 = inlined_call_operand.vmem [shape: f32[2,1,256], index: 10, kind: input, shape index: {}, may-alias: {6,10,12,16,18}]
  %s11 = inlined_call_operand.vmem [shape: f32[2,1,256], index: 11, kind: input, shape index: {}, may-alias: {11,17}]
  %s12 = inlined_call_operand.vmem [shape: f32[2,1,256], index: 12, kind: input, shape index: {}, may-alias: {6,10,12,16,18}]
  %s13 = inlined_call_operand.vmem [shape: bf16[2,256,1024], index: 13, kind: input, shape index: {}]
  %s14 = inlined_call_operand.vmem [shape: f32[2,1,1024], index: 14, kind: input, shape index: {}]
  %s15 = inlined_call_operand.vmem [shape: bf16[2,1024,256], index: 15, kind: input, shape index: {}]
  %s16 = inlined_call_operand.vmem [shape: f32[2,1,256], index: 16, kind: input, shape index: {}, may-alias: {6,10,12,16,18}]
  %s17 = inlined_call_operand.vmem [shape: f32[2,1,256], index: 17, kind: input, shape index: {}, may-alias: {11,17}]
  %s18 = inlined_call_operand.vmem [shape: f32[2,1,256], index: 18, kind: input, shape index: {}, may-alias: {6,10,12,16,18}]
  %s19 = inlined_call_operand.vmem [shape: f32[2,2,16,256], index: 19, kind: output, shape index: {0}]
  %s20 = inlined_call_operand.vmem [shape: f32[2,2,16,384], index: 20, kind: output, shape index: {1}]
  %21 = xla_tuple %s19, %s20
  %s22 = sld [smem:[#allocation0]]
  $region121: #{_lambda_.1} parent=0
    _
  %s24 = ssub.s32 1, %s22
  %s25 = scalar_select 0, %s24, %s22
  loop: start=0, step=1, limit=6
  $region2: #{_lambda_.1} parent=0 // loop_pre_header
    _
  $region3: #{_lambda_.1} parent=0 // loop_header
    %s27 = sphi 0, %s31
    %p28 = scmp.ge.s32.totalorder %s27, 6
    %s34 = sphi 0, %s46
    %s35 = sphi 0, %s42
    %s36 = sphi 0, %s34
    %s37 = sphi 0, %s35
    %s38 = sphi 0, %s36
    %s39 = sphi 0, %s37
    %s49 = sphi 0, %s51
    %s52 = sphi 0, %s49
    %s53 = sphi 0, %s52
    %s69 = sphi 0, %s53
    %s75 = sphi 0, %s77
    %s78 = sphi 0, %s75
    %s79 = sphi 0, %s78
    %s95 = sphi 0, %s79
    %s101 = sphi 0, %s103
    %s104 = sphi 0, %s101
    %s105 = sphi 0, %s104
    %s121 = sphi 0, %s105
    %s127 = sphi 0, %s129
    %s130 = sphi 0, %s127
    %s131 = sphi 0, %s130
    %s147 = sphi 0, %s131
    %s151 = sphi 0, %s151
    %s153 = sphi 0, %s151
    %s154 = sphi 0, %s153
    %s168 = sphi 0, %s154
    %s174 = sphi 0, %s176
    %s177 = sphi 0, %s174
    %s178 = sphi 0, %s177
    %s194 = sphi 0, %s178
    %s200 = sphi 0, %s202
    %s203 = sphi 0, %s200
    %s204 = sphi 0, %s203
    %s220 = sphi 0, %s204
    %s226 = sphi 0, %s228
    %s229 = sphi 0, %s226
    %s230 = sphi 0, %s229
    %s246 = sphi 0, %s230
    %s252 = sphi 0, %s254
    %s255 = sphi 0, %s252
    %s256 = sphi 0, %s255
    %s272 = sphi 0, %s256
    %s278 = sphi 0, %s280
    %s281 = sphi 0, %s278
    %s282 = sphi 0, %s281
    %s298 = sphi 0, %s282
    %s304 = sphi 0, %s306
    %s307 = sphi 0, %s304
    %s308 = sphi 0, %s307
    %s324 = sphi 0, %s308
    %s330 = sphi 0, %s332
    %s333 = sphi 0, %s330
    %s334 = sphi 0, %s333
    %s350 = sphi 0, %s334
    %s356 = sphi 0, %s358
    %s359 = sphi 0, %s356
    %s360 = sphi 0, %s359
    %s376 = sphi 0, %s360
    %s382 = sphi 0, %s384
    %s385 = sphi 0, %s382
    %s386 = sphi 0, %s385
    %s402 = sphi 0, %s386
    %s408 = sphi 0, %s410
    %s411 = sphi 0, %s408
    %s412 = sphi 0, %s411
    %s428 = sphi 0, %s412
    %s434 = sphi 0, %s436
    %s437 = sphi 0, %s434
    %s438 = sphi 0, %s437
    %s454 = sphi 0, %s438
    %s460 = sphi 0, %s462
    %s463 = sphi 0, %s460
    %s464 = sphi 0, %s463
    %s480 = sphi 0, %s464
    %s486 = sphi 0, %s488
    %s489 = sphi 0, %s486
    %s490 = sphi 0, %s489
    %s506 = sphi 0, %s490
    %s512 = sphi 0, %s514
    %s515 = sphi 0, %s512
    %s516 = sphi 0, %s515
    %s532 = sphi 0, %s516
    %s540 = sphi 0, %s542
    %s543 = sphi 0, %s540
    %s544 = sphi 0, %s543
    %s560 = sphi 0, %s544
    %s568 = sphi 0, %s570
    %s571 = sphi 0, %s568
    %s572 = sphi 0, %s571
    %s588 = sphi 0, %s572
  $region4: #{_lambda_.1} parent=0 // loop_header_branch
    %30 = sbr.rel (%p28) target = $region8
  $region5: #{_lambda_.1} parent=0 // loop_body
    %s32 = ssub.s32 %s27, 1
    %s33 = ssub.s32 %s27, 2
    %s40 = sadd.s32 1, %s35
    %p41 = scmp.ge.s32.totalorder %s40, 2
    %s42 = scalar_select %p41, 0, %s40
    %s43 = sadd.s32 1, %s34
    %s44 = scalar_select %p41, %s43, %s34
    %p45 = scmp.ge.s32.totalorder %s44, 2
    %s46 = scalar_select %p45, 0, %s44
    %s47 = ssub.s32 %s34, %s46
    %p48 = scmp.eq.s32.totalorder %s47, 0
    %s50 = sadd.s32 %s49, 1
    %s51 = scalar_select %p48, %s49, %s50
    %p54 = pneg %p48
    %p55 = scmp.eq.s32.totalorder %s27, 3
    %p56 = por %p54, %p55
    %p57 = scmp.ne.s32.totalorder %s49, %s52
    %p58 = scmp.eq.s32.totalorder %s27, 0
    %p59 = por %p57, %p58
    %p60 = scmp.ne.s32.totalorder %s49, %s52
    %p61 = scmp.eq.s32.totalorder %s32, 3
    %p62 = por %p60, %p61
    %p63 = scmp.ne.s32.totalorder %s52, %s53
    %p64 = scmp.eq.s32.totalorder %s32, 0
    %p65 = por %p63, %p64
    %p66 = scmp.ne.s32.totalorder %s52, %s53
    %p67 = scmp.eq.s32.totalorder %s33, 3
    %p68 = por %p66, %p67
    %p70 = scmp.ne.s32.totalorder %s53, %s69
    %p71 = scmp.eq.s32.totalorder %s33, 0
    %p72 = por %p70, %p71
    %s73 = ssub.s32 %s34, %s46
    %p74 = scmp.eq.s32.totalorder %s73, 0
    %s76 = sadd.s32 %s75, 1
    %s77 = scalar_select %p74, %s75, %s76
    %p80 = pneg %p74
    %p81 = scmp.eq.s32.totalorder %s27, 3
    %p82 = por %p80, %p81
    %p83 = scmp.ne.s32.totalorder %s75, %s78
    %p84 = scmp.eq.s32.totalorder %s27, 0
    %p85 = por %p83, %p84
    %p86 = scmp.ne.s32.totalorder %s75, %s78
    %p87 = scmp.eq.s32.totalorder %s32, 3
    %p88 = por %p86, %p87
    %p89 = scmp.ne.s32.totalorder %s78, %s79
    %p90 = scmp.eq.s32.totalorder %s32, 0
    %p91 = por %p89, %p90
    %p92 = scmp.ne.s32.totalorder %s78, %s79
    %p93 = scmp.eq.s32.totalorder %s33, 3
    %p94 = por %p92, %p93
    %p96 = scmp.ne.s32.totalorder %s79, %s95
    %p97 = scmp.eq.s32.totalorder %s33, 0
    %p98 = por %p96, %p97
    %s99 = ssub.s32 %s34, %s46
    %p100 = scmp.eq.s32.totalorder %s99, 0
    %s102 = sadd.s32 %s101, 1
    %s103 = scalar_select %p100, %s101, %s102
    %p106 = pneg %p100
    %p107 = scmp.eq.s32.totalorder %s27, 3
    %p108 = por %p106, %p107
    %p109 = scmp.ne.s32.totalorder %s101, %s104
    %p110 = scmp.eq.s32.totalorder %s27, 0
    %p111 = por %p109, %p110
    %p112 = scmp.ne.s32.totalorder %s101, %s104
    %p113 = scmp.eq.s32.totalorder %s32, 3
    %p114 = por %p112, %p113
    %p115 = scmp.ne.s32.totalorder %s104, %s105
    %p116 = scmp.eq.s32.totalorder %s32, 0
    %p117 = por %p115, %p116
    %p118 = scmp.ne.s32.totalorder %s104, %s105
    %p119 = scmp.eq.s32.totalorder %s33, 3
    %p120 = por %p118, %p119
    %p122 = scmp.ne.s32.totalorder %s105, %s121
    %p123 = scmp.eq.s32.totalorder %s33, 0
    %p124 = por %p122, %p123
    %s125 = ssub.s32 %s34, %s46
    %p126 = scmp.eq.s32.totalorder %s125, 0
    %s128 = sadd.s32 %s127, 1
    %s129 = scalar_select %p126, %s127, %s128
    %p132 = pneg %p126
    %p133 = scmp.eq.s32.totalorder %s27, 3
    %p134 = por %p132, %p133
    %p135 = scmp.ne.s32.totalorder %s127, %s130
    %p136 = scmp.eq.s32.totalorder %s27, 0
    %p137 = por %p135, %p136
    %p138 = scmp.ne.s32.totalorder %s127, %s130
    %p139 = scmp.eq.s32.totalorder %s32, 3
    %p140 = por %p138, %p139
    %p141 = scmp.ne.s32.totalorder %s130, %s131
    %p142 = scmp.eq.s32.totalorder %s32, 0
    %p143 = por %p141, %p142
    %p144 = scmp.ne.s32.totalorder %s130, %s131
    %p145 = scmp.eq.s32.totalorder %s33, 3
    %p146 = por %p144, %p145
    %p148 = scmp.ne.s32.totalorder %s131, %s147
    %p149 = scmp.eq.s32.totalorder %s33, 0
    %p150 = por %p148, %p149
    %s152 = sadd.s32 %s151, 1
    %p155 = scmp.eq.s32.totalorder %s27, 3
    %p156 = scmp.ne.s32.totalorder %s151, %s153
    %p157 = scmp.eq.s32.totalorder %s27, 0
    %p158 = por %p156, %p157
    %p159 = scmp.ne.s32.totalorder %s151, %s153
    %p160 = scmp.eq.s32.totalorder %s32, 3
    %p161 = por %p159, %p160
    %p162 = scmp.ne.s32.totalorder %s153, %s154
    %p163 = scmp.eq.s32.totalorder %s32, 0
    %p164 = por %p162, %p163
    %p165 = scmp.ne.s32.totalorder %s153, %s154
    %p166 = scmp.eq.s32.totalorder %s33, 3
    %p167 = por %p165, %p166
    %p169 = scmp.ne.s32.totalorder %s154, %s168
    %p170 = scmp.eq.s32.totalorder %s33, 0
    %p171 = por %p169, %p170
    %s172 = ssub.s32 %s35, %s42
    %p173 = scmp.eq.s32.totalorder %s172, 0
    %s175 = sadd.s32 %s174, 1
    %s176 = scalar_select %p173, %s174, %s175
    %p179 = pneg %p173
    %p180 = scmp.eq.s32.totalorder %s27, 3
    %p181 = por %p179, %p180
    %p182 = scmp.ne.s32.totalorder %s174, %s177
    %p183 = scmp.eq.s32.totalorder %s27, 0
    %p184 = por %p182, %p183
    %p185 = scmp.ne.s32.totalorder %s174, %s177
    %p186 = scmp.eq.s32.totalorder %s32, 3
    %p187 = por %p185, %p186
    %p188 = scmp.ne.s32.totalorder %s177, %s178
    %p189 = scmp.eq.s32.totalorder %s32, 0
    %p190 = por %p188, %p189
    %p191 = scmp.ne.s32.totalorder %s177, %s178
    %p192 = scmp.eq.s32.totalorder %s33, 3
    %p193 = por %p191, %p192
    %p195 = scmp.ne.s32.totalorder %s178, %s194
    %p196 = scmp.eq.s32.totalorder %s33, 0
    %p197 = por %p195, %p196
    %s198 = ssub.s32 %s35, %s42
    %p199 = scmp.eq.s32.totalorder %s198, 0
    %s201 = sadd.s32 %s200, 1
    %s202 = scalar_select %p199, %s200, %s201
    %p205 = pneg %p199
    %p206 = scmp.eq.s32.totalorder %s27, 3
    %p207 = por %p205, %p206
    %p208 = scmp.ne.s32.totalorder %s200, %s203
    %p209 = scmp.eq.s32.totalorder %s27, 0
    %p210 = por %p208, %p209
    %p211 = scmp.ne.s32.totalorder %s200, %s203
    %p212 = scmp.eq.s32.totalorder %s32, 3
    %p213 = por %p211, %p212
    %p214 = scmp.ne.s32.totalorder %s203, %s204
    %p215 = scmp.eq.s32.totalorder %s32, 0
    %p216 = por %p214, %p215
    %p217 = scmp.ne.s32.totalorder %s203, %s204
    %p218 = scmp.eq.s32.totalorder %s33, 3
    %p219 = por %p217, %p218
    %p221 = scmp.ne.s32.totalorder %s204, %s220
    %p222 = scmp.eq.s32.totalorder %s33, 0
    %p223 = por %p221, %p222
    %s224 = ssub.s32 %s35, %s42
    %p225 = scmp.eq.s32.totalorder %s224, 0
    %s227 = sadd.s32 %s226, 1
    %s228 = scalar_select %p225, %s226, %s227
    %p231 = pneg %p225
    %p232 = scmp.eq.s32.totalorder %s27, 3
    %p233 = por %p231, %p232
    %p234 = scmp.ne.s32.totalorder %s226, %s229
    %p235 = scmp.eq.s32.totalorder %s27, 0
    %p236 = por %p234, %p235
    %p237 = scmp.ne.s32.totalorder %s226, %s229
    %p238 = scmp.eq.s32.totalorder %s32, 3
    %p239 = por %p237, %p238
    %p240 = scmp.ne.s32.totalorder %s229, %s230
    %p241 = scmp.eq.s32.totalorder %s32, 0
    %p242 = por %p240, %p241
    %p243 = scmp.ne.s32.totalorder %s229, %s230
    %p244 = scmp.eq.s32.totalorder %s33, 3
    %p245 = por %p243, %p244
    %p247 = scmp.ne.s32.totalorder %s230, %s246
    %p248 = scmp.eq.s32.totalorder %s33, 0
    %p249 = por %p247, %p248
    %s250 = ssub.s32 %s35, %s42
    %p251 = scmp.eq.s32.totalorder %s250, 0
    %s253 = sadd.s32 %s252, 1
    %s254 = scalar_select %p251, %s252, %s253
    %p257 = pneg %p251
    %p258 = scmp.eq.s32.totalorder %s27, 3
    %p259 = por %p257, %p258
    %p260 = scmp.ne.s32.totalorder %s252, %s255
    %p261 = scmp.eq.s32.totalorder %s27, 0
    %p262 = por %p260, %p261
    %p263 = scmp.ne.s32.totalorder %s252, %s255
    %p264 = scmp.eq.s32.totalorder %s32, 3
    %p265 = por %p263, %p264
    %p266 = scmp.ne.s32.totalorder %s255, %s256
    %p267 = scmp.eq.s32.totalorder %s32, 0
    %p268 = por %p266, %p267
    %p269 = scmp.ne.s32.totalorder %s255, %s256
    %p270 = scmp.eq.s32.totalorder %s33, 3
    %p271 = por %p269, %p270
    %p273 = scmp.ne.s32.totalorder %s256, %s272
    %p274 = scmp.eq.s32.totalorder %s33, 0
    %p275 = por %p273, %p274
    %s276 = ssub.s32 %s35, %s42
    %p277 = scmp.eq.s32.totalorder %s276, 0
    %s279 = sadd.s32 %s278, 1
    %s280 = scalar_select %p277, %s278, %s279
    %p283 = pneg %p277
    %p284 = scmp.eq.s32.totalorder %s27, 3
    %p285 = por %p283, %p284
    %p286 = scmp.ne.s32.totalorder %s278, %s281
    %p287 = scmp.eq.s32.totalorder %s27, 0
    %p288 = por %p286, %p287
    %p289 = scmp.ne.s32.totalorder %s278, %s281
    %p290 = scmp.eq.s32.totalorder %s32, 3
    %p291 = por %p289, %p290
    %p292 = scmp.ne.s32.totalorder %s281, %s282
    %p293 = scmp.eq.s32.totalorder %s32, 0
    %p294 = por %p292, %p293
    %p295 = scmp.ne.s32.totalorder %s281, %s282
    %p296 = scmp.eq.s32.totalorder %s33, 3
    %p297 = por %p295, %p296
    %p299 = scmp.ne.s32.totalorder %s282, %s298
    %p300 = scmp.eq.s32.totalorder %s33, 0
    %p301 = por %p299, %p300
    %s302 = ssub.s32 %s35, %s42
    %p303 = scmp.eq.s32.totalorder %s302, 0
    %s305 = sadd.s32 %s304, 1
    %s306 = scalar_select %p303, %s304, %s305
    %p309 = pneg %p303
    %p310 = scmp.eq.s32.totalorder %s27, 3
    %p311 = por %p309, %p310
    %p312 = scmp.ne.s32.totalorder %s304, %s307
    %p313 = scmp.eq.s32.totalorder %s27, 0
    %p314 = por %p312, %p313
    %p315 = scmp.ne.s32.totalorder %s304, %s307
    %p316 = scmp.eq.s32.totalorder %s32, 3
    %p317 = por %p315, %p316
    %p318 = scmp.ne.s32.totalorder %s307, %s308
    %p319 = scmp.eq.s32.totalorder %s32, 0
    %p320 = por %p318, %p319
    %p321 = scmp.ne.s32.totalorder %s307, %s308
    %p322 = scmp.eq.s32.totalorder %s33, 3
    %p323 = por %p321, %p322
    %p325 = scmp.ne.s32.totalorder %s308, %s324
    %p326 = scmp.eq.s32.totalorder %s33, 0
    %p327 = por %p325, %p326
    %s328 = ssub.s32 %s35, %s42
    %p329 = scmp.eq.s32.totalorder %s328, 0
    %s331 = sadd.s32 %s330, 1
    %s332 = scalar_select %p329, %s330, %s331
    %p335 = pneg %p329
    %p336 = scmp.eq.s32.totalorder %s27, 3
    %p337 = por %p335, %p336
    %p338 = scmp.ne.s32.totalorder %s330, %s333
    %p339 = scmp.eq.s32.totalorder %s27, 0
    %p340 = por %p338, %p339
    %p341 = scmp.ne.s32.totalorder %s330, %s333
    %p342 = scmp.eq.s32.totalorder %s32, 3
    %p343 = por %p341, %p342
    %p344 = scmp.ne.s32.totalorder %s333, %s334
    %p345 = scmp.eq.s32.totalorder %s32, 0
    %p346 = por %p344, %p345
    %p347 = scmp.ne.s32.totalorder %s333, %s334
    %p348 = scmp.eq.s32.totalorder %s33, 3
    %p349 = por %p347, %p348
    %p351 = scmp.ne.s32.totalorder %s334, %s350
    %p352 = scmp.eq.s32.totalorder %s33, 0
    %p353 = por %p351, %p352
    %s354 = ssub.s32 %s35, %s42
    %p355 = scmp.eq.s32.totalorder %s354, 0
    %s357 = sadd.s32 %s356, 1
    %s358 = scalar_select %p355, %s356, %s357
    %p361 = pneg %p355
    %p362 = scmp.eq.s32.totalorder %s27, 3
    %p363 = por %p361, %p362
    %p364 = scmp.ne.s32.totalorder %s356, %s359
    %p365 = scmp.eq.s32.totalorder %s27, 0
    %p366 = por %p364, %p365
    %p367 = scmp.ne.s32.totalorder %s356, %s359
    %p368 = scmp.eq.s32.totalorder %s32, 3
    %p369 = por %p367, %p368
    %p370 = scmp.ne.s32.totalorder %s359, %s360
    %p371 = scmp.eq.s32.totalorder %s32, 0
    %p372 = por %p370, %p371
    %p373 = scmp.ne.s32.totalorder %s359, %s360
    %p374 = scmp.eq.s32.totalorder %s33, 3
    %p375 = por %p373, %p374
    %p377 = scmp.ne.s32.totalorder %s360, %s376
    %p378 = scmp.eq.s32.totalorder %s33, 0
    %p379 = por %p377, %p378
    %s380 = ssub.s32 %s35, %s42
    %p381 = scmp.eq.s32.totalorder %s380, 0
    %s383 = sadd.s32 %s382, 1
    %s384 = scalar_select %p381, %s382, %s383
    %p387 = pneg %p381
    %p388 = scmp.eq.s32.totalorder %s27, 3
    %p389 = por %p387, %p388
    %p390 = scmp.ne.s32.totalorder %s382, %s385
    %p391 = scmp.eq.s32.totalorder %s27, 0
    %p392 = por %p390, %p391
    %p393 = scmp.ne.s32.totalorder %s382, %s385
    %p394 = scmp.eq.s32.totalorder %s32, 3
    %p395 = por %p393, %p394
    %p396 = scmp.ne.s32.totalorder %s385, %s386
    %p397 = scmp.eq.s32.totalorder %s32, 0
    %p398 = por %p396, %p397
    %p399 = scmp.ne.s32.totalorder %s385, %s386
    %p400 = scmp.eq.s32.totalorder %s33, 3
    %p401 = por %p399, %p400
    %p403 = scmp.ne.s32.totalorder %s386, %s402
    %p404 = scmp.eq.s32.totalorder %s33, 0
    %p405 = por %p403, %p404
    %s406 = ssub.s32 %s35, %s42
    %p407 = scmp.eq.s32.totalorder %s406, 0
    %s409 = sadd.s32 %s408, 1
    %s410 = scalar_select %p407, %s408, %s409
    %p413 = pneg %p407
    %p414 = scmp.eq.s32.totalorder %s27, 3
    %p415 = por %p413, %p414
    %p416 = scmp.ne.s32.totalorder %s408, %s411
    %p417 = scmp.eq.s32.totalorder %s27, 0
    %p418 = por %p416, %p417
    %p419 = scmp.ne.s32.totalorder %s408, %s411
    %p420 = scmp.eq.s32.totalorder %s32, 3
    %p421 = por %p419, %p420
    %p422 = scmp.ne.s32.totalorder %s411, %s412
    %p423 = scmp.eq.s32.totalorder %s32, 0
    %p424 = por %p422, %p423
    %p425 = scmp.ne.s32.totalorder %s411, %s412
    %p426 = scmp.eq.s32.totalorder %s33, 3
    %p427 = por %p425, %p426
    %p429 = scmp.ne.s32.totalorder %s412, %s428
    %p430 = scmp.eq.s32.totalorder %s33, 0
    %p431 = por %p429, %p430
    %s432 = ssub.s32 %s35, %s42
    %p433 = scmp.eq.s32.totalorder %s432, 0
    %s435 = sadd.s32 %s434, 1
    %s436 = scalar_select %p433, %s434, %s435
    %p439 = pneg %p433
    %p440 = scmp.eq.s32.totalorder %s27, 3
    %p441 = por %p439, %p440
    %p442 = scmp.ne.s32.totalorder %s434, %s437
    %p443 = scmp.eq.s32.totalorder %s27, 0
    %p444 = por %p442, %p443
    %p445 = scmp.ne.s32.totalorder %s434, %s437
    %p446 = scmp.eq.s32.totalorder %s32, 3
    %p447 = por %p445, %p446
    %p448 = scmp.ne.s32.totalorder %s437, %s438
    %p449 = scmp.eq.s32.totalorder %s32, 0
    %p450 = por %p448, %p449
    %p451 = scmp.ne.s32.totalorder %s437, %s438
    %p452 = scmp.eq.s32.totalorder %s33, 3
    %p453 = por %p451, %p452
    %p455 = scmp.ne.s32.totalorder %s438, %s454
    %p456 = scmp.eq.s32.totalorder %s33, 0
    %p457 = por %p455, %p456
    %s458 = ssub.s32 %s35, %s42
    %p459 = scmp.eq.s32.totalorder %s458, 0
    %s461 = sadd.s32 %s460, 1
    %s462 = scalar_select %p459, %s460, %s461
    %p465 = pneg %p459
    %p466 = scmp.eq.s32.totalorder %s27, 3
    %p467 = por %p465, %p466
    %p468 = scmp.ne.s32.totalorder %s460, %s463
    %p469 = scmp.eq.s32.totalorder %s27, 0
    %p470 = por %p468, %p469
    %p471 = scmp.ne.s32.totalorder %s460, %s463
    %p472 = scmp.eq.s32.totalorder %s32, 3
    %p473 = por %p471, %p472
    %p474 = scmp.ne.s32.totalorder %s463, %s464
    %p475 = scmp.eq.s32.totalorder %s32, 0
    %p476 = por %p474, %p475
    %p477 = scmp.ne.s32.totalorder %s463, %s464
    %p478 = scmp.eq.s32.totalorder %s33, 3
    %p479 = por %p477, %p478
    %p481 = scmp.ne.s32.totalorder %s464, %s480
    %p482 = scmp.eq.s32.totalorder %s33, 0
    %p483 = por %p481, %p482
    %s484 = ssub.s32 %s35, %s42
    %p485 = scmp.eq.s32.totalorder %s484, 0
    %s487 = sadd.s32 %s486, 1
    %s488 = scalar_select %p485, %s486, %s487
    %p491 = pneg %p485
    %p492 = scmp.eq.s32.totalorder %s27, 3
    %p493 = por %p491, %p492
    %p494 = scmp.ne.s32.totalorder %s486, %s489
    %p495 = scmp.eq.s32.totalorder %s27, 0
    %p496 = por %p494, %p495
    %p497 = scmp.ne.s32.totalorder %s486, %s489
    %p498 = scmp.eq.s32.totalorder %s32, 3
    %p499 = por %p497, %p498
    %p500 = scmp.ne.s32.totalorder %s489, %s490
    %p501 = scmp.eq.s32.totalorder %s32, 0
    %p502 = por %p500, %p501
    %p503 = scmp.ne.s32.totalorder %s489, %s490
    %p504 = scmp.eq.s32.totalorder %s33, 3
    %p505 = por %p503, %p504
    %p507 = scmp.ne.s32.totalorder %s490, %s506
    %p508 = scmp.eq.s32.totalorder %s33, 0
    %p509 = por %p507, %p508
    %s510 = ssub.s32 %s35, %s42
    %p511 = scmp.eq.s32.totalorder %s510, 0
    %s513 = sadd.s32 %s512, 1
    %s514 = scalar_select %p511, %s512, %s513
    %p517 = pneg %p511
    %p518 = scmp.eq.s32.totalorder %s27, 3
    %p519 = por %p517, %p518
    %p520 = scmp.ne.s32.totalorder %s512, %s515
    %p521 = scmp.eq.s32.totalorder %s27, 0
    %p522 = por %p520, %p521
    %p523 = scmp.ne.s32.totalorder %s512, %s515
    %p524 = scmp.eq.s32.totalorder %s32, 3
    %p525 = por %p523, %p524
    %p526 = scmp.ne.s32.totalorder %s515, %s516
    %p527 = scmp.eq.s32.totalorder %s32, 0
    %p528 = por %p526, %p527
    %p529 = scmp.ne.s32.totalorder %s515, %s516
    %p530 = scmp.eq.s32.totalorder %s33, 3
    %p531 = por %p529, %p530
    %p533 = scmp.ne.s32.totalorder %s516, %s532
    %p534 = scmp.eq.s32.totalorder %s33, 0
    %p535 = por %p533, %p534
    %s536 = ssub.s32 %s34, %s46
    %s537 = ssub.s32 %s35, %s42
    %s538 = sor.u32 %s536, %s537
    %p539 = scmp.eq.s32.totalorder %s538, 0
    %s541 = sadd.s32 %s540, 1
    %s542 = scalar_select %p539, %s540, %s541
    %p545 = pneg %p539
    %p546 = scmp.eq.s32.totalorder %s27, 3
    %p547 = por %p545, %p546
    %p548 = scmp.ne.s32.totalorder %s540, %s543
    %p549 = scmp.eq.s32.totalorder %s27, 0
    %p550 = por %p548, %p549
    %p551 = scmp.ne.s32.totalorder %s540, %s543
    %p552 = scmp.eq.s32.totalorder %s32, 3
    %p553 = por %p551, %p552
    %p554 = scmp.ne.s32.totalorder %s543, %s544
    %p555 = scmp.eq.s32.totalorder %s32, 0
    %p556 = por %p554, %p555
    %p557 = scmp.ne.s32.totalorder %s543, %s544
    %p558 = scmp.eq.s32.totalorder %s33, 3
    %p559 = por %p557, %p558
    %p561 = scmp.ne.s32.totalorder %s544, %s560
    %p562 = scmp.eq.s32.totalorder %s33, 0
    %p563 = por %p561, %p562
    %s564 = ssub.s32 %s34, %s46
    %s565 = ssub.s32 %s35, %s42
    %s566 = sor.u32 %s564, %s565
    %p567 = scmp.eq.s32.totalorder %s566, 0
    %s569 = sadd.s32 %s568, 1
    %s570 = scalar_select %p567, %s568, %s569
    %p573 = pneg %p567
    %p574 = scmp.eq.s32.totalorder %s27, 3
    %p575 = por %p573, %p574
    %p576 = scmp.ne.s32.totalorder %s568, %s571
    %p577 = scmp.eq.s32.totalorder %s27, 0
    %p578 = por %p576, %p577
    %p579 = scmp.ne.s32.totalorder %s568, %s571
    %p580 = scmp.eq.s32.totalorder %s32, 3
    %p581 = por %p579, %p580
    %p582 = scmp.ne.s32.totalorder %s571, %s572
    %p583 = scmp.eq.s32.totalorder %s32, 0
    %p584 = por %p582, %p583
    %p585 = scmp.ne.s32.totalorder %s571, %s572
    %p586 = scmp.eq.s32.totalorder %s33, 3
    %p587 = por %p585, %p586
    %p589 = scmp.ne.s32.totalorder %s572, %s588
    %p590 = scmp.eq.s32.totalorder %s33, 0
    %p591 = por %p589, %p590
    %p592 = scmp.le.s32.totalorder 1, %s27
    %p593 = scmp.lt.s32.totalorder %s27, 5
    %p594 = pnand %p592, %p593
    %p595 = pneg %p594
    // Predicated region
    $region9: #{_lambda_.1} parent=5 // pred_check
      _
    $region10: #{_lambda_.1} parent=5 // pred_check_branch
      %597 = sbr.rel (%p594) target = $region12
    $region11: #{_lambda_.1} parent=5 // pred_region
      %s598 = ssub.s32 %s27, 1
      // Predicated region
      $region13: #{_lambda_.1} parent=11 // pred_check
        %p599 = pneg %p164
      $region14: #{_lambda_.1} parent=11 // pred_check_branch
        %601 = sbr.rel (%p599) target = $region16
      $region15: #{_lambda_.1} parent=11 // pred_region
        _
      $region16: #{_lambda_.1} parent=11 // pred_fallthru
        _
    $region12: #{_lambda_.1} parent=5 // pred_fallthru
      _
    %p602 = scmp.lt.s32.totalorder %s27, 4
    // Predicated region
    $region17: #{_lambda_.1} parent=5 // pred_check
      %p603 = pneg %p602
    $region18: #{_lambda_.1} parent=5 // pred_check_branch
      %605 = sbr.rel (%p603) target = $region20
    $region19: #{_lambda_.1} parent=5 // pred_region
      // Predicated region
      $region21: #{_lambda_.1} parent=19 // pred_check
        %p606 = pneg %p59
      $region22: #{_lambda_.1} parent=19 // pred_check_branch
        %608 = sbr.rel (%p606) target = $region24
      $region23: #{_lambda_.1} parent=19 // pred_region
        %p609 = scmp.lt.s32.totalorder %s34, 1
        %s610 = scalar_select %p609, %s34, 1
        %s611 = smul.addr %s610, 4
        %s612 = smul.addr %s611, 8
        %s613 = scalar_lea.vmem %s0, %s612
      $region24: #{_lambda_.1} parent=19 // pred_fallthru
        _
      // Predicated region
      $region25: #{_lambda_.1} parent=19 // pred_check
        %p614 = pneg %p85
      $region26: #{_lambda_.1} parent=19 // pred_check_branch
        %616 = sbr.rel (%p614) target = $region28
      $region27: #{_lambda_.1} parent=19 // pred_region
        %p617 = scmp.lt.s32.totalorder %s34, 1
        %s618 = scalar_select %p617, %s34, 1
        %s619 = smul.addr %s618, 4
        %s620 = smul.addr %s619, 8
        %s621 = scalar_lea.vmem %s1, %s620
      $region28: #{_lambda_.1} parent=19 // pred_fallthru
        _
      // Predicated region
      $region29: #{_lambda_.1} parent=19 // pred_check
        %p622 = pneg %p111
      $region30: #{_lambda_.1} parent=19 // pred_check_branch
        %624 = sbr.rel (%p622) target = $region32
      $region31: #{_lambda_.1} parent=19 // pred_region
        %p625 = scmp.lt.s32.totalorder %s34, 1
        %s626 = scalar_select %p625, %s34, 1
        %s627 = smul.addr %s626, 96
        %s628 = smul.addr %s627, 4
        %s629 = scalar_lea.vmem %s2, %s628
      $region32: #{_lambda_.1} parent=19 // pred_fallthru
        _
      // Predicated region
      $region33: #{_lambda_.1} parent=19 // pred_check
        %p630 = pneg %p137
      $region34: #{_lambda_.1} parent=19 // pred_check_branch
        %632 = sbr.rel (%p630) target = $region36
      $region35: #{_lambda_.1} parent=19 // pred_region
        %p633 = scmp.lt.s32.totalorder %s34, 1
        %s634 = scalar_select %p633, %s34, 1
        %s635 = smul.addr %s634, 3
        %s636 = scalar_lea.vmem %s3, %s635
      $region36: #{_lambda_.1} parent=19 // pred_fallthru
        _
      // Predicated region
      $region37: #{_lambda_.1} parent=19 // pred_check
        %p637 = pneg %p184
      $region38: #{_lambda_.1} parent=19 // pred_check_branch
        %639 = sbr.rel (%p637) target = $region40
      $region39: #{_lambda_.1} parent=19 // pred_region
        %p640 = scmp.lt.s32.totalorder %s35, 1
        %s641 = scalar_select %p640, %s35, 1
        %s642 = smul.addr %s641, 64
        %s643 = smul.addr %s642, 4
        %s644 = scalar_lea.vmem %s5, %s643
      $region40: #{_lambda_.1} parent=19 // pred_fallthru
        _
      // Predicated region
      $region41: #{_lambda_.1} parent=19 // pred_check
        %p645 = pneg %p210
      $region42: #{_lambda_.1} parent=19 // pred_check_branch
        %647 = sbr.rel (%p645) target = $region44
      $region43: #{_lambda_.1} parent=19 // pred_region
        %p648 = scmp.lt.s32.totalorder %s35, 1
        %s649 = scalar_select %p648, %s35, 1
        %s650 = smul.addr %s649, 2
        %s651 = scalar_lea.vmem %s6, %s650
      $region44: #{_lambda_.1} parent=19 // pred_fallthru
        _
      // Predicated region
      $region45: #{_lambda_.1} parent=19 // pred_check
        %p652 = pneg %p236
      $region46: #{_lambda_.1} parent=19 // pred_check_branch
        %654 = sbr.rel (%p652) target = $region48
      $region47: #{_lambda_.1} parent=19 // pred_region
        %p655 = scmp.lt.s32.totalorder %s35, 1
        %s656 = scalar_select %p655, %s35, 1
        %s657 = smul.addr %s656, 128
        %s658 = smul.addr %s657, 4
        %s659 = scalar_lea.vmem %s7, %s658
      $region48: #{_lambda_.1} parent=19 // pred_fallthru
        _
      // Predicated region
      $region49: #{_lambda_.1} parent=19 // pred_check
        %p660 = pneg %p262
      $region50: #{_lambda_.1} parent=19 // pred_check_branch
        %662 = sbr.rel (%p660) target = $region52
      $region51: #{_lambda_.1} parent=19 // pred_region
        %p663 = scmp.lt.s32.totalorder %s35, 1
        %s664 = scalar_select %p663, %s35, 1
        %s665 = smul.addr %s664, 4
        %s666 = scalar_lea.vmem %s8, %s665
      $region52: #{_lambda_.1} parent=19 // pred_fallthru
        _
      // Predicated region
      $region53: #{_lambda_.1} parent=19 // pred_check
        %p667 = pneg %p288
      $region54: #{_lambda_.1} parent=19 // pred_check_branch
        %669 = sbr.rel (%p667) target = $region56
      $region55: #{_lambda_.1} parent=19 // pred_region
        %p670 = scmp.lt.s32.totalorder %s35, 1
        %s671 = scalar_select %p670, %s35, 1
        %s672 = smul.addr %s671, 64
        %s673 = smul.addr %s672, 4
        %s674 = scalar_lea.vmem %s9, %s673
      $region56: #{_lambda_.1} parent=19 // pred_fallthru
        _
      // Predicated region
      $region57: #{_lambda_.1} parent=19 // pred_check
        %p675 = pneg %p314
      $region58: #{_lambda_.1} parent=19 // pred_check_branch
        %677 = sbr.rel (%p675) target = $region60
      $region59: #{_lambda_.1} parent=19 // pred_region
        %p678 = scmp.lt.s32.totalorder %s35, 1
        %s679 = scalar_select %p678, %s35, 1
        %s680 = smul.addr %s679, 2
        %s681 = scalar_lea.vmem %s10, %s680
      $region60: #{_lambda_.1} parent=19 // pred_fallthru
        _
      // Predicated region
      $region61: #{_lambda_.1} parent=19 // pred_check
        %p682 = pneg %p340
      $region62: #{_lambda_.1} parent=19 // pred_check_branch
        %684 = sbr.rel (%p682) target = $region64
      $region63: #{_lambda_.1} parent=19 // pred_region
        %p685 = scmp.lt.s32.totalorder %s35, 1
        %s686 = scalar_select %p685, %s35, 1
        %s687 = smul.addr %s686, 2
        %s688 = scalar_lea.vmem %s11, %s687
      $region64: #{_lambda_.1} parent=19 // pred_fallthru
        _
      // Predicated region
      $region65: #{_lambda_.1} parent=19 // pred_check
        %p689 = pneg %p366
      $region66: #{_lambda_.1} parent=19 // pred_check_branch
        %691 = sbr.rel (%p689) target = $region68
      $region67: #{_lambda_.1} parent=19 // pred_region
        %p692 = scmp.lt.s32.totalorder %s35, 1
        %s693 = scalar_select %p692, %s35, 1
        %s694 = smul.addr %s693, 2
        %s695 = scalar_lea.vmem %s12, %s694
      $region68: #{_lambda_.1} parent=19 // pred_fallthru
        _
      // Predicated region
      $region69: #{_lambda_.1} parent=19 // pred_check
        %p696 = pneg %p392
      $region70: #{_lambda_.1} parent=19 // pred_check_branch
        %698 = sbr.rel (%p696) target = $region72
      $region71: #{_lambda_.1} parent=19 // pred_region
        %p699 = scmp.lt.s32.totalorder %s35, 1
        %s700 = scalar_select %p699, %s35, 1
        %s701 = smul.addr %s700, 256
        %s702 = smul.addr %s701, 4
        %s703 = scalar_lea.vmem %s13, %s702
      $region72: #{_lambda_.1} parent=19 // pred_fallthru
        _
      // Predicated region
      $region73: #{_lambda_.1} parent=19 // pred_check
        %p704 = pneg %p418
      $region74: #{_lambda_.1} parent=19 // pred_check_branch
        %706 = sbr.rel (%p704) target = $region76
      $region75: #{_lambda_.1} parent=19 // pred_region
        %p707 = scmp.lt.s32.totalorder %s35, 1
        %s708 = scalar_select %p707, %s35, 1
        %s709 = smul.addr %s708, 8
        %s710 = scalar_lea.vmem %s14, %s709
      $region76: #{_lambda_.1} parent=19 // pred_fallthru
        _
      // Predicated region
      $region77: #{_lambda_.1} parent=19 // pred_check
        %p711 = pneg %p444
      $region78: #{_lambda_.1} parent=19 // pred_check_branch
        %713 = sbr.rel (%p711) target = $region80
      $region79: #{_lambda_.1} parent=19 // pred_region
        %p714 = scmp.lt.s32.totalorder %s35, 1
        %s715 = scalar_select %p714, %s35, 1
        %s716 = smul.addr %s715, 256
        %s717 = smul.addr %s716, 4
        %s718 = scalar_lea.vmem %s15, %s717
      $region80: #{_lambda_.1} parent=19 // pred_fallthru
        _
      // Predicated region
      $region81: #{_lambda_.1} parent=19 // pred_check
        %p719 = pneg %p470
      $region82: #{_lambda_.1} parent=19 // pred_check_branch
        %721 = sbr.rel (%p719) target = $region84
      $region83: #{_lambda_.1} parent=19 // pred_region
        %p722 = scmp.lt.s32.totalorder %s35, 1
        %s723 = scalar_select %p722, %s35, 1
        %s724 = smul.addr %s723, 2
        %s725 = scalar_lea.vmem %s16, %s724
      $region84: #{_lambda_.1} parent=19 // pred_fallthru
        _
      // Predicated region
      $region85: #{_lambda_.1} parent=19 // pred_check
        %p726 = pneg %p496
      $region86: #{_lambda_.1} parent=19 // pred_check_branch
        %728 = sbr.rel (%p726) target = $region88
      $region87: #{_lambda_.1} parent=19 // pred_region
        %p729 = scmp.lt.s32.totalorder %s35, 1
        %s730 = scalar_select %p729, %s35, 1
        %s731 = smul.addr %s730, 2
        %s732 = scalar_lea.vmem %s17, %s731
      $region88: #{_lambda_.1} parent=19 // pred_fallthru
        _
      // Predicated region
      $region89: #{_lambda_.1} parent=19 // pred_check
        %p733 = pneg %p522
      $region90: #{_lambda_.1} parent=19 // pred_check_branch
        %735 = sbr.rel (%p733) target = $region92
      $region91: #{_lambda_.1} parent=19 // pred_region
        %p736 = scmp.lt.s32.totalorder %s35, 1
        %s737 = scalar_select %p736, %s35, 1
        %s738 = smul.addr %s737, 2
        %s739 = scalar_lea.vmem %s18, %s738
      $region92: #{_lambda_.1} parent=19 // pred_fallthru
        _
    $region20: #{_lambda_.1} parent=5 // pred_fallthru
      _
    %p740 = scmp.le.s32.totalorder 1, %s27
    %p741 = scmp.lt.s32.totalorder %s27, 5
    %p742 = pnand %p740, %p741
    %p743 = pneg %p742
    // Predicated region
    $region93: #{_lambda_.1} parent=5 // pred_check
      _
    $region94: #{_lambda_.1} parent=5 // pred_check_branch
      %745 = sbr.rel (%p742) target = $region96
    $region95: #{_lambda_.1} parent=5 // pred_region
      %s746 = ssub.s32 %s27, 1
      %p747 = scmp.lt.s32.totalorder %s36, 1
      %s748 = scalar_select %p747, %s36, 1
      %s749 = smul.addr %s748, 4
      %s750 = smul.addr %s749, 8
      %s751 = scalar_lea.vmem %s0, %s750
      %p752 = pneg %p65
      %p753 = pneg %p62
      %p754 = scmp.lt.s32.totalorder %s36, 1
      %s755 = scalar_select %p754, %s36, 1
      %s756 = smul.addr %s755, 4
      %s757 = smul.addr %s756, 8
      %s758 = scalar_lea.vmem %s1, %s757
      %p759 = pneg %p91
      %p760 = pneg %p88
      %p761 = scmp.lt.s32.totalorder %s36, 1
      %s762 = scalar_select %p761, %s36, 1
      %s763 = smul.addr %s762, 96
      %s764 = smul.addr %s763, 4
      %s765 = scalar_lea.vmem %s2, %s764
      %p766 = pneg %p117
      %p767 = pneg %p114
      %p768 = scmp.lt.s32.totalorder %s36, 1
      %s769 = scalar_select %p768, %s36, 1
      %s770 = smul.addr %s769, 3
      %s771 = scalar_lea.vmem %s3, %s770
      %p772 = pneg %p143
      %p773 = pneg %p140
      %p774 = pneg %p164
      %p775 = pneg %p161
      %p776 = scmp.lt.s32.totalorder %s37, 1
      %s777 = scalar_select %p776, %s37, 1
      %s778 = smul.addr %s777, 64
      %s779 = smul.addr %s778, 4
      %s780 = scalar_lea.vmem %s5, %s779
      %p781 = pneg %p190
      %p782 = pneg %p187
      %p783 = scmp.lt.s32.totalorder %s37, 1
      %s784 = scalar_select %p783, %s37, 1
      %s785 = smul.addr %s784, 2
      %s786 = scalar_lea.vmem %s6, %s785
      %p787 = pneg %p216
      %p788 = pneg %p213
      %p789 = scmp.lt.s32.totalorder %s37, 1
      %s790 = scalar_select %p789, %s37, 1
      %s791 = smul.addr %s790, 128
      %s792 = smul.addr %s791, 4
      %s793 = scalar_lea.vmem %s7, %s792
      %p794 = pneg %p242
      %p795 = pneg %p239
      %p796 = scmp.lt.s32.totalorder %s37, 1
      %s797 = scalar_select %p796, %s37, 1
      %s798 = smul.addr %s797, 4
      %s799 = scalar_lea.vmem %s8, %s798
      %p800 = pneg %p268
      %p801 = pneg %p265
      %p802 = scmp.lt.s32.totalorder %s37, 1
      %s803 = scalar_select %p802, %s37, 1
      %s804 = smul.addr %s803, 64
      %s805 = smul.addr %s804, 4
      %s806 = scalar_lea.vmem %s9, %s805
      %p807 = pneg %p294
      %p808 = pneg %p291
      %p809 = scmp.lt.s32.totalorder %s37, 1
      %s810 = scalar_select %p809, %s37, 1
      %s811 = smul.addr %s810, 2
      %s812 = scalar_lea.vmem %s10, %s811
      %p813 = pneg %p320
      %p814 = pneg %p317
      %p815 = scmp.lt.s32.totalorder %s37, 1
      %s816 = scalar_select %p815, %s37, 1
      %s817 = smul.addr %s816, 2
      %s818 = scalar_lea.vmem %s11, %s817
      %p819 = pneg %p346
      %p820 = pneg %p343
      %p821 = scmp.lt.s32.totalorder %s37, 1
      %s822 = scalar_select %p821, %s37, 1
      %s823 = smul.addr %s822, 2
      %s824 = scalar_lea.vmem %s12, %s823
      %p825 = pneg %p372
      %p826 = pneg %p369
      %p827 = scmp.lt.s32.totalorder %s37, 1
      %s828 = scalar_select %p827, %s37, 1
      %s829 = smul.addr %s828, 256
      %s830 = smul.addr %s829, 4
      %s831 = scalar_lea.vmem %s13, %s830
      %p832 = pneg %p398
      %p833 = pneg %p395
      %p834 = scmp.lt.s32.totalorder %s37, 1
      %s835 = scalar_select %p834, %s37, 1
      %s836 = smul.addr %s835, 8
      %s837 = scalar_lea.vmem %s14, %s836
      %p838 = pneg %p424
      %p839 = pneg %p421
      %p840 = scmp.lt.s32.totalorder %s37, 1
      %s841 = scalar_select %p840, %s37, 1
      %s842 = smul.addr %s841, 256
      %s843 = smul.addr %s842, 4
      %s844 = scalar_lea.vmem %s15, %s843
      %p845 = pneg %p450
      %p846 = pneg %p447
      %p847 = scmp.lt.s32.totalorder %s37, 1
      %s848 = scalar_select %p847, %s37, 1
      %s849 = smul.addr %s848, 2
      %s850 = scalar_lea.vmem %s16, %s849
      %p851 = pneg %p476
      %p852 = pneg %p473
      %p853 = scmp.lt.s32.totalorder %s37, 1
      %s854 = scalar_select %p853, %s37, 1
      %s855 = smul.addr %s854, 2
      %s856 = scalar_lea.vmem %s17, %s855
      %p857 = pneg %p502
      %p858 = pneg %p499
      %p859 = scmp.lt.s32.totalorder %s37, 1
      %s860 = scalar_select %p859, %s37, 1
      %s861 = smul.addr %s860, 2
      %s862 = scalar_lea.vmem %s18, %s861
      %p863 = pneg %p528
      %p864 = pneg %p525
      %p865 = pneg %p556
      %p866 = pneg %p553
      %p867 = scmp.lt.s32.totalorder %s36, 1
      %s868 = scalar_select %p867, %s36, 1
      %p869 = scmp.lt.s32.totalorder %s37, 1
      %s870 = scalar_select %p869, %s37, 1
      %s871 = smul.addr %s870, 4
      %s872 = smul.addr %s868, 8
      %s873 = sadd.s32 %s871, %s872
      %s874 = smul.addr %s873, 8
      %s875 = scalar_lea.vmem %s19, %s874
      %p876 = pneg %p584
      %p877 = pneg %p581
      %p878 = scmp.lt.s32.totalorder %s36, 1
      %s879 = scalar_select %p878, %s36, 1
      %p880 = scmp.lt.s32.totalorder %s37, 1
      %s881 = scalar_select %p880, %s37, 1
      %s882 = smul.addr %s881, 6
      %s883 = smul.addr %s879, 12
      %s884 = sadd.s32 %s882, %s883
      %s885 = smul.addr %s884, 8
      %s886 = scalar_lea.vmem %s20, %s885
      %p887 = scmp.lt.s32.totalorder %s36, 1
      %s888 = scalar_select %p887, %s36, 1
      %s889 = smul.addr %s888, 4
      %s890 = smul.addr %s889, 8
      %s891 = scalar_lea.vmem %s0, %s890
      %p892 = scmp.lt.s32.totalorder %s36, 1
      %s893 = scalar_select %p892, %s36, 1
      %s894 = smul.addr %s893, 4
      %s895 = smul.addr %s894, 8
      %s896 = scalar_lea.vmem %s1, %s895
      %p897 = scmp.lt.s32.totalorder %s36, 1
      %s898 = scalar_select %p897, %s36, 1
      %s899 = smul.addr %s898, 96
      %s900 = smul.addr %s899, 4
      %s901 = scalar_lea.vmem %s2, %s900
      %p902 = scmp.lt.s32.totalorder %s36, 1
      %s903 = scalar_select %p902, %s36, 1
      %s904 = smul.addr %s903, 3
      %s905 = scalar_lea.vmem %s3, %s904
      %p906 = scmp.lt.s32.totalorder %s37, 1
      %s907 = scalar_select %p906, %s37, 1
      %s908 = smul.addr %s907, 64
      %s909 = smul.addr %s908, 4
      %s910 = scalar_lea.vmem %s5, %s909
      %p911 = scmp.lt.s32.totalorder %s37, 1
      %s912 = scalar_select %p911, %s37, 1
      %s913 = smul.addr %s912, 2
      %s914 = scalar_lea.vmem %s6, %s913
      %p915 = scmp.lt.s32.totalorder %s37, 1
      %s916 = scalar_select %p915, %s37, 1
      %s917 = smul.addr %s916, 128
      %s918 = smul.addr %s917, 4
      %s919 = scalar_lea.vmem %s7, %s918
      %p920 = scmp.lt.s32.totalorder %s37, 1
      %s921 = scalar_select %p920, %s37, 1
      %s922 = smul.addr %s921, 4
      %s923 = scalar_lea.vmem %s8, %s922
      %p924 = scmp.lt.s32.totalorder %s37, 1
      %s925 = scalar_select %p924, %s37, 1
      %s926 = smul.addr %s925, 64
      %s927 = smul.addr %s926, 4
      %s928 = scalar_lea.vmem %s9, %s927
      %p929 = scmp.lt.s32.totalorder %s37, 1
      %s930 = scalar_select %p929, %s37, 1
      %s931 = smul.addr %s930, 2
      %s932 = scalar_lea.vmem %s10, %s931
      %p933 = scmp.lt.s32.totalorder %s37, 1
      %s934 = scalar_select %p933, %s37, 1
      %s935 = smul.addr %s934, 2
      %s936 = scalar_lea.vmem %s11, %s935
      %p937 = scmp.lt.s32.totalorder %s37, 1
      %s938 = scalar_select %p937, %s37, 1
      %s939 = smul.addr %s938, 2
      %s940 = scalar_lea.vmem %s12, %s939
      %p941 = scmp.lt.s32.totalorder %s37, 1
      %s942 = scalar_select %p941, %s37, 1
      %s943 = smul.addr %s942, 256
      %s944 = smul.addr %s943, 4
      %s945 = scalar_lea.vmem %s13, %s944
      %p946 = scmp.lt.s32.totalorder %s37, 1
      %s947 = scalar_select %p946, %s37, 1
      %s948 = smul.addr %s947, 8
      %s949 = scalar_lea.vmem %s14, %s948
      %p950 = scmp.lt.s32.totalorder %s37, 1
      %s951 = scalar_select %p950, %s37, 1
      %s952 = smul.addr %s951, 256
      %s953 = smul.addr %s952, 4
      %s954 = scalar_lea.vmem %s15, %s953
      %p955 = scmp.lt.s32.totalorder %s37, 1
      %s956 = scalar_select %p955, %s37, 1
      %s957 = smul.addr %s956, 2
      %s958 = scalar_lea.vmem %s16, %s957
      %p959 = scmp.lt.s32.totalorder %s37, 1
      %s960 = scalar_select %p959, %s37, 1
      %s961 = smul.addr %s960, 2
      %s962 = scalar_lea.vmem %s17, %s961
      %p963 = scmp.lt.s32.totalorder %s37, 1
      %s964 = scalar_select %p963, %s37, 1
      %s965 = smul.addr %s964, 2
      %s966 = scalar_lea.vmem %s18, %s965
      %p967 = scmp.lt.s32.totalorder %s36, 1
      %s968 = scalar_select %p967, %s36, 1
      %p969 = scmp.lt.s32.totalorder %s37, 1
      %s970 = scalar_select %p969, %s37, 1
      %s971 = smul.addr %s970, 4
      %s972 = smul.addr %s968, 8
      %s973 = sadd.s32 %s971, %s972
      %s974 = smul.addr %s973, 8
      %s975 = scalar_lea.vmem %s19, %s974
      %p976 = scmp.lt.s32.totalorder %s36, 1
      %s977 = scalar_select %p976, %s36, 1
      %p978 = scmp.lt.s32.totalorder %s37, 1
      %s979 = scalar_select %p978, %s37, 1
      %s980 = smul.addr %s979, 6
      %s981 = smul.addr %s977, 12
      %s982 = sadd.s32 %s980, %s981
      %s983 = smul.addr %s982, 8
      %s984 = scalar_lea.vmem %s20, %s983
      %p986 = scmp.eq.s32.totalorder %s37, 0
      // Predicated region
      $region97: #{_lambda_.1} parent=95 // pred_check
        %p987 = pneg %p986
      $region98: #{_lambda_.1} parent=95 // pred_check_branch
        %989 = sbr.rel (%p987) target = $region100
      $region99: #{_lambda_.1} parent=95 // pred_region
        %v990 = vld [vmem:[%s891] sm:$0xff]
        %v991 = vld [vmem:[%s891 + $0x8] sm:$0xff]
        %v992 = vld [vmem:[%s891 + $0x10] sm:$0xff]
        %v993 = vld [vmem:[%s891 + $0x18] sm:$0xff]
        %994 = vst [vmem:[#allocation2] sm:$0xff] %v990
        %995 = vst [vmem:[#allocation2 + $0x8] sm:$0xff] %v991
        %996 = vst [vmem:[#allocation2 + $0x10] sm:$0xff] %v992
        %997 = vst [vmem:[#allocation2 + $0x18] sm:$0xff] %v993
      $region100: #{_lambda_.1} parent=95 // pred_fallthru
        _
      %v998 = vld [vmem:[#allocation2] sm:$0xff]
      %v999 = vld [vmem:[#allocation2 + $0x8] sm:$0xff]
      %v1000 = vld [vmem:[#allocation2 + $0x10] sm:$0xff]
      %v1001 = vld [vmem:[#allocation2 + $0x18] sm:$0xff]
      %v1002 = vld [vmem:[%s896] sm:$0xff]
      %v1003 = vld [vmem:[%s896 + $0x8] sm:$0xff]
      %v1004 = vld [vmem:[%s896 + $0x10] sm:$0xff]
      %v1005 = vld [vmem:[%s896 + $0x18] sm:$0xff]
      %v1006 = vld [vmem:[%s901] sm:$0xff]
      %v1007 = vld [vmem:[%s901 + $0x8] sm:$0xff]
      %v1008 = vld [vmem:[%s901 + $0x10] sm:$0xff]
      %v1009 = vld [vmem:[%s901 + $0x18] sm:$0xff]
      %v1010 = vld [vmem:[%s901 + $0x20] sm:$0xff]
      %v1011 = vld [vmem:[%s901 + $0x28] sm:$0xff]
      %v1012 = vld [vmem:[%s901 + $0x30] sm:$0xff]
      %v1013 = vld [vmem:[%s901 + $0x38] sm:$0xff]
      %v1014 = vld [vmem:[%s901 + $0x40] sm:$0xff]
      %v1015 = vld [vmem:[%s901 + $0x48] sm:$0xff]
      %v1016 = vld [vmem:[%s901 + $0x50] sm:$0xff]
      %v1017 = vld [vmem:[%s901 + $0x58] sm:$0xff]
      %v1018 = vld [vmem:[%s901 + $0x60] sm:$0xff]
      %v1019 = vld [vmem:[%s901 + $0x68] sm:$0xff]
      %v1020 = vld [vmem:[%s901 + $0x70] sm:$0xff]
      %v1021 = vld [vmem:[%s901 + $0x78] sm:$0xff]
      %v1022 = vld [vmem:[%s901 + $0x80] sm:$0xff]
      %v1023 = vld [vmem:[%s901 + $0x88] sm:$0xff]
      %v1024 = vld [vmem:[%s901 + $0x90] sm:$0xff]
      %v1025 = vld [vmem:[%s901 + $0x98] sm:$0xff]
      %v1026 = vld [vmem:[%s901 + $0xa0] sm:$0xff]
      %v1027 = vld [vmem:[%s901 + $0xa8] sm:$0xff]
      %v1028 = vld [vmem:[%s901 + $0xb0] sm:$0xff]
      %v1029 = vld [vmem:[%s901 + $0xb8] sm:$0xff]
      %v1030 = vld [vmem:[%s901 + $0xc0] sm:$0xff]
      %v1031 = vld [vmem:[%s901 + $0xc8] sm:$0xff]
      %v1032 = vld [vmem:[%s901 + $0xd0] sm:$0xff]
      %v1033 = vld [vmem:[%s901 + $0xd8] sm:$0xff]
      %v1034 = vld [vmem:[%s901 + $0xe0] sm:$0xff]
      %v1035 = vld [vmem:[%s901 + $0xe8] sm:$0xff]
      %v1036 = vld [vmem:[%s901 + $0xf0] sm:$0xff]
      %v1037 = vld [vmem:[%s901 + $0xf8] sm:$0xff]
      %v1038 = vld [vmem:[%s901 + $0x100] sm:$0xff]
      %v1039 = vld [vmem:[%s901 + $0x108] sm:$0xff]
      %v1040 = vld [vmem:[%s901 + $0x110] sm:$0xff]
      %v1041 = vld [vmem:[%s901 + $0x118] sm:$0xff]
      %v1042 = vld [vmem:[%s901 + $0x120] sm:$0xff]
      %v1043 = vld [vmem:[%s901 + $0x128] sm:$0xff]
      %v1044 = vld [vmem:[%s901 + $0x130] sm:$0xff]
      %v1045 = vld [vmem:[%s901 + $0x138] sm:$0xff]
      %v1046 = vld [vmem:[%s901 + $0x140] sm:$0xff]
      %v1047 = vld [vmem:[%s901 + $0x148] sm:$0xff]
      %v1048 = vld [vmem:[%s901 + $0x150] sm:$0xff]
      %v1049 = vld [vmem:[%s901 + $0x158] sm:$0xff]
      %v1050 = vld [vmem:[%s901 + $0x160] sm:$0xff]
      %v1051 = vld [vmem:[%s901 + $0x168] sm:$0xff]
      %v1052 = vld [vmem:[%s901 + $0x170] sm:$0xff]
      %v1053 = vld [vmem:[%s901 + $0x178] sm:$0xff]
      %v1054 = vld [vmem:[%s4] sm:$0xff]
      %v1055 = vld [vmem:[%s4 + $0x8] sm:$0xff]
      %v1056 = vld [vmem:[%s4 + $0x10] sm:$0xff]
      %v1057 = vadd.f32 %v998, %v1002
      %v1058 = vadd.f32 %v999, %v1003
      %v1059 = vadd.f32 %v1000, %v1004
      %v1060 = vadd.f32 %v1001, %v1005
      %v1061 = vpack.c.bf16 %v1059, %v1057
      %v1062 = vpack.c.bf16 %v1060, %v1058
      %v1063 = vld [vmem:[%s910] sm:$0xff]
      %v1064 = vld [vmem:[%s910 + $0x8] sm:$0xff]
      %v1065 = vld [vmem:[%s910 + $0x10] sm:$0xff]
      %v1066 = vld [vmem:[%s910 + $0x18] sm:$0xff]
      %v1067 = vld [vmem:[%s910 + $0x20] sm:$0xff]
      %v1068 = vld [vmem:[%s910 + $0x28] sm:$0xff]
      %v1069 = vld [vmem:[%s910 + $0x30] sm:$0xff]
      %v1070 = vld [vmem:[%s910 + $0x38] sm:$0xff]
      %v1071 = vld [vmem:[%s910 + $0x40] sm:$0xff]
      %v1072 = vld [vmem:[%s910 + $0x48] sm:$0xff]
      %v1073 = vld [vmem:[%s910 + $0x50] sm:$0xff]
      %v1074 = vld [vmem:[%s910 + $0x58] sm:$0xff]
      %v1075 = vld [vmem:[%s910 + $0x60] sm:$0xff]
      %v1076 = vld [vmem:[%s910 + $0x68] sm:$0xff]
      %v1077 = vld [vmem:[%s910 + $0x70] sm:$0xff]
      %v1078 = vld [vmem:[%s910 + $0x78] sm:$0xff]
      %v1079 = vld [vmem:[%s910 + $0x80] sm:$0xff]
      %v1080 = vld [vmem:[%s910 + $0x88] sm:$0xff]
      %v1081 = vld [vmem:[%s910 + $0x90] sm:$0xff]
      %v1082 = vld [vmem:[%s910 + $0x98] sm:$0xff]
      %v1083 = vld [vmem:[%s910 + $0xa0] sm:$0xff]
      %v1084 = vld [vmem:[%s910 + $0xa8] sm:$0xff]
      %v1085 = vld [vmem:[%s910 + $0xb0] sm:$0xff]
      %v1086 = vld [vmem:[%s910 + $0xb8] sm:$0xff]
      %v1087 = vld [vmem:[%s910 + $0xc0] sm:$0xff]
      %v1088 = vld [vmem:[%s910 + $0xc8] sm:$0xff]
      %v1089 = vld [vmem:[%s910 + $0xd0] sm:$0xff]
      %v1090 = vld [vmem:[%s910 + $0xd8] sm:$0xff]
      %v1091 = vld [vmem:[%s910 + $0xe0] sm:$0xff]
      %v1092 = vld [vmem:[%s910 + $0xe8] sm:$0xff]
      %v1093 = vld [vmem:[%s910 + $0xf0] sm:$0xff]
      %v1094 = vld [vmem:[%s910 + $0xf8] sm:$0xff]
      %v1095 = vld [vmem:[%s914] sm:$0x3]
      %v1097 = vlaneseq
      %v1098 = vshrl.u32 %v1097, 7
      %v1099 = vsub.s32 0, %v1098
      %v1100 = vrot.slane %v1095, %v1099
      %v1101 = vlaneseq
      %v1102 = vshrl.u32 %v1101, 7
      %v1103 = vsub.s32 1, %v1102
      %v1104 = vrot.slane %v1095, %v1103
      %v1139 = vunpack.c.l.b16 %v1063
      %v1140 = vunpack.c.h.b16 %v1063
      %v1141 = vunpack.c.l.b16 %v1064
      %v1142 = vunpack.c.h.b16 %v1064
      %v1143 = vunpack.c.l.b16 %v1065
      %v1144 = vunpack.c.h.b16 %v1065
      %v1145 = vunpack.c.l.b16 %v1066
      %v1146 = vunpack.c.h.b16 %v1066
      %v1147 = vunpack.c.l.b16 %v1067
      %v1148 = vunpack.c.h.b16 %v1067
      %v1149 = vunpack.c.l.b16 %v1068
      %v1150 = vunpack.c.h.b16 %v1068
      %v1151 = vunpack.c.l.b16 %v1069
      %v1152 = vunpack.c.h.b16 %v1069
      %v1153 = vunpack.c.l.b16 %v1070
      %v1154 = vunpack.c.h.b16 %v1070
      %v1155 = vunpack.c.l.b16 %v1071
      %v1156 = vunpack.c.h.b16 %v1071
      %v1157 = vunpack.c.l.b16 %v1072
      %v1158 = vunpack.c.h.b16 %v1072
      %v1159 = vunpack.c.l.b16 %v1073
      %v1160 = vunpack.c.h.b16 %v1073
      %v1161 = vunpack.c.l.b16 %v1074
      %v1162 = vunpack.c.h.b16 %v1074
      %v1163 = vunpack.c.l.b16 %v1075
      %v1164 = vunpack.c.h.b16 %v1075
      %v1165 = vunpack.c.l.b16 %v1076
      %v1166 = vunpack.c.h.b16 %v1076
      %v1167 = vunpack.c.l.b16 %v1077
      %v1168 = vunpack.c.h.b16 %v1077
      %v1169 = vunpack.c.l.b16 %v1078
      %v1170 = vunpack.c.h.b16 %v1078
      %v1171 = vunpack.c.l.b16 %v1079
      %v1172 = vunpack.c.h.b16 %v1079
      %v1173 = vunpack.c.l.b16 %v1080
      %v1174 = vunpack.c.h.b16 %v1080
      %v1175 = vunpack.c.l.b16 %v1081
      %v1176 = vunpack.c.h.b16 %v1081
      %v1177 = vunpack.c.l.b16 %v1082
      %v1178 = vunpack.c.h.b16 %v1082
      %v1179 = vunpack.c.l.b16 %v1083
      %v1180 = vunpack.c.h.b16 %v1083
      %v1181 = vunpack.c.l.b16 %v1084
      %v1182 = vunpack.c.h.b16 %v1084
      %v1183 = vunpack.c.l.b16 %v1085
      %v1184 = vunpack.c.h.b16 %v1085
      %v1185 = vunpack.c.l.b16 %v1086
      %v1186 = vunpack.c.h.b16 %v1086
      %v1187 = vunpack.c.l.b16 %v1087
      %v1188 = vunpack.c.h.b16 %v1087
      %v1189 = vunpack.c.l.b16 %v1088
      %v1190 = vunpack.c.h.b16 %v1088
      %v1191 = vunpack.c.l.b16 %v1089
      %v1192 = vunpack.c.h.b16 %v1089
      %v1193 = vunpack.c.l.b16 %v1090
      %v1194 = vunpack.c.h.b16 %v1090
      %v1195 = vunpack.c.l.b16 %v1091
      %v1196 = vunpack.c.h.b16 %v1091
      %v1197 = vunpack.c.l.b16 %v1092
      %v1198 = vunpack.c.h.b16 %v1092
      %v1199 = vunpack.c.l.b16 %v1093
      %v1200 = vunpack.c.h.b16 %v1093
      %v1201 = vunpack.c.l.b16 %v1094
      %v1202 = vunpack.c.h.b16 %v1094
      %v1203 = vpack.c.b16 %v1141, %v1139
      %v1204 = vpack.c.b16 %v1142, %v1140
      %v1205 = vpack.c.b16 %v1145, %v1143
      %v1206 = vpack.c.b16 %v1146, %v1144
      %v1207 = vpack.c.b16 %v1149, %v1147
      %v1208 = vpack.c.b16 %v1150, %v1148
      %v1209 = vpack.c.b16 %v1153, %v1151
      %v1210 = vpack.c.b16 %v1154, %v1152
      %v1211 = vpack.c.b16 %v1157, %v1155
      %v1212 = vpack.c.b16 %v1158, %v1156
      %v1213 = vpack.c.b16 %v1161, %v1159
      %v1214 = vpack.c.b16 %v1162, %v1160
      %v1215 = vpack.c.b16 %v1165, %v1163
      %v1216 = vpack.c.b16 %v1166, %v1164
      %v1217 = vpack.c.b16 %v1169, %v1167
      %v1218 = vpack.c.b16 %v1170, %v1168
      %v1219 = vpack.c.b16 %v1173, %v1171
      %v1220 = vpack.c.b16 %v1174, %v1172
      %v1221 = vpack.c.b16 %v1177, %v1175
      %v1222 = vpack.c.b16 %v1178, %v1176
      %v1223 = vpack.c.b16 %v1181, %v1179
      %v1224 = vpack.c.b16 %v1182, %v1180
      %v1225 = vpack.c.b16 %v1185, %v1183
      %v1226 = vpack.c.b16 %v1186, %v1184
      %v1227 = vpack.c.b16 %v1189, %v1187
      %v1228 = vpack.c.b16 %v1190, %v1188
      %v1229 = vpack.c.b16 %v1193, %v1191
      %v1230 = vpack.c.b16 %v1194, %v1192
      %v1231 = vpack.c.b16 %v1197, %v1195
      %v1232 = vpack.c.b16 %v1198, %v1196
      %v1233 = vpack.c.b16 %v1201, %v1199
      %v1234 = vpack.c.b16 %v1202, %v1200
      %1267 = vmatprep.subr.bf16.mxu0 %v1204
      %1268 = vmatpush1.bf16.msra.mxu0 %v1203
      %1269 = vmatprep.subr.bf16.mxu0 %v1206
      %1270 = vmatpush1.bf16.msra.mxu0 %v1205
      %1271 = vmatprep.subr.bf16.mxu0 %v1208
      %1272 = vmatpush1.bf16.msra.mxu0 %v1207
      %1273 = vmatprep.subr.bf16.mxu0 %v1210
      %1274 = vmatpush1.bf16.msra.mxu0 %v1209
      %1275 = vmatprep.subr.bf16.mxu0 %v1212
      %1276 = vmatpush1.bf16.msra.mxu0 %v1211
      %1277 = vmatprep.subr.bf16.mxu0 %v1214
      %1278 = vmatpush1.bf16.msra.mxu0 %v1213
      %1279 = vmatprep.subr.bf16.mxu0 %v1216
      %1280 = vmatpush1.bf16.msra.mxu0 %v1215
      %1281 = vmatprep.subr.bf16.mxu0 %v1218
      %1282 = vmatpush1.bf16.msra.mxu0 %v1217
      %1283 = vmatprep.subr.bf16.mxu0 %v1220
      %1284 = vmatpush1.bf16.msra.mxu0 %v1219
      %1285 = vmatprep.subr.bf16.mxu0 %v1222
      %1286 = vmatpush1.bf16.msra.mxu0 %v1221
      %1287 = vmatprep.subr.bf16.mxu0 %v1224
      %1288 = vmatpush1.bf16.msra.mxu0 %v1223
      %1289 = vmatprep.subr.bf16.mxu0 %v1226
      %1290 = vmatpush1.bf16.msra.mxu0 %v1225
      %1291 = vmatprep.subr.bf16.mxu0 %v1228
      %1292 = vmatpush1.bf16.msra.mxu0 %v1227
      %1293 = vmatprep.subr.bf16.mxu0 %v1230
      %1294 = vmatpush1.bf16.msra.mxu0 %v1229
      %1295 = vmatprep.subr.bf16.mxu0 %v1232
      %1296 = vmatpush1.bf16.msra.mxu0 %v1231
      %1297 = vmatprep.subr.bf16.mxu0 %v1234
      %1298 = vmatpush1.bf16.msra.mxu0 %v1233
      %1299 = vmatprep.mubr.bf16.mxu0 %v1062
      %1300 = vmatmul.mubr.bf16.gmra.mrb[0].mxu0 %v1061
      %v1301 = vpop.f32.mrb[0].mxu0
      %v1302 = vadd.f32 %v1100, %v1301
      %v1303 = vpop.f32.mrb[0].mxu0
      %v1304 = vadd.f32 %v1104, %v1303
      %v1305 = vpop.f32.mrb[0].mxu0
      %v1306 = vadd.f32 %v1100, %v1305
      %v1307 = vpop.f32.mrb[0].mxu0
      %v1308 = vadd.f32 %v1104, %v1307
      %1309 = vdwg.mxu0
      %v1310 = vmul.f32 %v1302, 0.17677669
      %v1311 = vmul.f32 %v1304, 0.17677669
      %v1312 = vmul.f32 %v1306, 0.17677669
      %v1313 = vmul.f32 %v1308, 0.17677669
      %v1314 = vld [vmem:[%s919] sm:$0xff]
      %v1315 = vld [vmem:[%s919 + $0x8] sm:$0xff]
      %v1316 = vld [vmem:[%s919 + $0x10] sm:$0xff]
      %v1317 = vld [vmem:[%s919 + $0x18] sm:$0xff]
      %v1318 = vld [vmem:[%s919 + $0x20] sm:$0xff]
      %v1319 = vld [vmem:[%s919 + $0x28] sm:$0xff]
      %v1320 = vld [vmem:[%s919 + $0x30] sm:$0xff]
      %v1321 = vld [vmem:[%s919 + $0x38] sm:$0xff]
      %v1322 = vld [vmem:[%s919 + $0x40] sm:$0xff]
      %v1323 = vld [vmem:[%s919 + $0x48] sm:$0xff]
      %v1324 = vld [vmem:[%s919 + $0x50] sm:$0xff]
      %v1325 = vld [vmem:[%s919 + $0x58] sm:$0xff]
      %v1326 = vld [vmem:[%s919 + $0x60] sm:$0xff]
      %v1327 = vld [vmem:[%s919 + $0x68] sm:$0xff]
      %v1328 = vld [vmem:[%s919 + $0x70] sm:$0xff]
      %v1329 = vld [vmem:[%s919 + $0x78] sm:$0xff]
      %v1330 = vld [vmem:[%s919 + $0x80] sm:$0xff]
      %v1331 = vld [vmem:[%s919 + $0x88] sm:$0xff]
      %v1332 = vld [vmem:[%s919 + $0x90] sm:$0xff]
      %v1333 = vld [vmem:[%s919 + $0x98] sm:$0xff]
      %v1334 = vld [vmem:[%s919 + $0xa0] sm:$0xff]
      %v1335 = vld [vmem:[%s919 + $0xa8] sm:$0xff]
      %v1336 = vld [vmem:[%s919 + $0xb0] sm:$0xff]
      %v1337 = vld [vmem:[%s919 + $0xb8] sm:$0xff]
      %v1338 = vld [vmem:[%s919 + $0xc0] sm:$0xff]
      %v1339 = vld [vmem:[%s919 + $0xc8] sm:$0xff]
      %v1340 = vld [vmem:[%s919 + $0xd0] sm:$0xff]
      %v1341 = vld [vmem:[%s919 + $0xd8] sm:$0xff]
      %v1342 = vld [vmem:[%s919 + $0xe0] sm:$0xff]
      %v1343 = vld [vmem:[%s919 + $0xe8] sm:$0xff]
      %v1344 = vld [vmem:[%s919 + $0xf0] sm:$0xff]
      %v1345 = vld [vmem:[%s919 + $0xf8] sm:$0xff]
      %v1346 = vld [vmem:[%s919 + $0x100] sm:$0xff]
      %v1347 = vld [vmem:[%s919 + $0x108] sm:$0xff]
      %v1348 = vld [vmem:[%s919 + $0x110] sm:$0xff]
      %v1349 = vld [vmem:[%s919 + $0x118] sm:$0xff]
      %v1350 = vld [vmem:[%s919 + $0x120] sm:$0xff]
      %v1351 = vld [vmem:[%s919 + $0x128] sm:$0xff]
      %v1352 = vld [vmem:[%s919 + $0x130] sm:$0xff]
      %v1353 = vld [vmem:[%s919 + $0x138] sm:$0xff]
      %v1354 = vld [vmem:[%s919 + $0x140] sm:$0xff]
      %v1355 = vld [vmem:[%s919 + $0x148] sm:$0xff]
      %v1356 = vld [vmem:[%s919 + $0x150] sm:$0xff]
      %v1357 = vld [vmem:[%s919 + $0x158] sm:$0xff]
      %v1358 = vld [vmem:[%s919 + $0x160] sm:$0xff]
      %v1359 = vld [vmem:[%s919 + $0x168] sm:$0xff]
      %v1360 = vld [vmem:[%s919 + $0x170] sm:$0xff]
      %v1361 = vld [vmem:[%s919 + $0x178] sm:$0xff]
      %v1362 = vld [vmem:[%s919 + $0x180] sm:$0xff]
      %v1363 = vld [vmem:[%s919 + $0x188] sm:$0xff]
      %v1364 = vld [vmem:[%s919 + $0x190] sm:$0xff]
      %v1365 = vld [vmem:[%s919 + $0x198] sm:$0xff]
      %v1366 = vld [vmem:[%s919 + $0x1a0] sm:$0xff]
      %v1367 = vld [vmem:[%s919 + $0x1a8] sm:$0xff]
      %v1368 = vld [vmem:[%s919 + $0x1b0] sm:$0xff]
      %v1369 = vld [vmem:[%s919 + $0x1b8] sm:$0xff]
      %v1370 = vld [vmem:[%s919 + $0x1c0] sm:$0xff]
      %v1371 = vld [vmem:[%s919 + $0x1c8] sm:$0xff]
      %v1372 = vld [vmem:[%s919 + $0x1d0] sm:$0xff]
      %v1373 = vld [vmem:[%s919 + $0x1d8] sm:$0xff]
      %v1374 = vld [vmem:[%s919 + $0x1e0] sm:$0xff]
      %v1375 = vld [vmem:[%s919 + $0x1e8] sm:$0xff]
      %v1376 = vld [vmem:[%s919 + $0x1f0] sm:$0xff]
      %v1377 = vld [vmem:[%s919 + $0x1f8] sm:$0xff]
      %v1378 = vld [vmem:[%s923] sm:$0xf]
      %v1380 = vlaneseq
      %v1381 = vshrl.u32 %v1380, 7
      %v1382 = vsub.s32 0, %v1381
      %v1383 = vrot.slane %v1378, %v1382
      %v1384 = vlaneseq
      %v1385 = vshrl.u32 %v1384, 7
      %v1386 = vsub.s32 1, %v1385
      %v1387 = vrot.slane %v1378, %v1386
      %v1388 = vlaneseq
      %v1389 = vshrl.u32 %v1388, 7
      %v1390 = vsub.s32 2, %v1389
      %v1391 = vrot.slane %v1378, %v1390
      %v1392 = vlaneseq
      %v1393 = vshrl.u32 %v1392, 7
      %v1394 = vsub.s32 3, %v1393
      %v1395 = vrot.slane %v1378, %v1394
      %v1448 = vunpack.c.l.b16 %v1006
      %v1449 = vunpack.c.h.b16 %v1006
      %v1450 = vunpack.c.l.b16 %v1007
      %v1451 = vunpack.c.h.b16 %v1007
      %v1452 = vunpack.c.l.b16 %v1008
      %v1453 = vunpack.c.h.b16 %v1008
      %v1454 = vunpack.c.l.b16 %v1009
      %v1455 = vunpack.c.h.b16 %v1009
      %v1456 = vunpack.c.l.b16 %v1010
      %v1457 = vunpack.c.h.b16 %v1010
      %v1458 = vunpack.c.l.b16 %v1011
      %v1459 = vunpack.c.h.b16 %v1011
      %v1460 = vunpack.c.l.b16 %v1012
      %v1461 = vunpack.c.h.b16 %v1012
      %v1462 = vunpack.c.l.b16 %v1013
      %v1463 = vunpack.c.h.b16 %v1013
      %v1464 = vunpack.c.l.b16 %v1014
      %v1465 = vunpack.c.h.b16 %v1014
      %v1466 = vunpack.c.l.b16 %v1015
      %v1467 = vunpack.c.h.b16 %v1015
      %v1468 = vunpack.c.l.b16 %v1016
      %v1469 = vunpack.c.h.b16 %v1016
      %v1470 = vunpack.c.l.b16 %v1017
      %v1471 = vunpack.c.h.b16 %v1017
      %v1472 = vunpack.c.l.b16 %v1018
      %v1473 = vunpack.c.h.b16 %v1018
      %v1474 = vunpack.c.l.b16 %v1019
      %v1475 = vunpack.c.h.b16 %v1019
      %v1476 = vunpack.c.l.b16 %v1020
      %v1477 = vunpack.c.h.b16 %v1020
      %v1478 = vunpack.c.l.b16 %v1021
      %v1479 = vunpack.c.h.b16 %v1021
      %v1480 = vunpack.c.l.b16 %v1022
      %v1481 = vunpack.c.h.b16 %v1022
      %v1482 = vunpack.c.l.b16 %v1023
      %v1483 = vunpack.c.h.b16 %v1023
      %v1484 = vunpack.c.l.b16 %v1024
      %v1485 = vunpack.c.h.b16 %v1024
      %v1486 = vunpack.c.l.b16 %v1025
      %v1487 = vunpack.c.h.b16 %v1025
      %v1488 = vunpack.c.l.b16 %v1026
      %v1489 = vunpack.c.h.b16 %v1026
      %v1490 = vunpack.c.l.b16 %v1027
      %v1491 = vunpack.c.h.b16 %v1027
      %v1492 = vunpack.c.l.b16 %v1028
      %v1493 = vunpack.c.h.b16 %v1028
      %v1494 = vunpack.c.l.b16 %v1029
      %v1495 = vunpack.c.h.b16 %v1029
      %v1496 = vunpack.c.l.b16 %v1030
      %v1497 = vunpack.c.h.b16 %v1030
      %v1498 = vunpack.c.l.b16 %v1031
      %v1499 = vunpack.c.h.b16 %v1031
      %v1500 = vunpack.c.l.b16 %v1032
      %v1501 = vunpack.c.h.b16 %v1032
      %v1502 = vunpack.c.l.b16 %v1033
      %v1503 = vunpack.c.h.b16 %v1033
      %v1504 = vunpack.c.l.b16 %v1034
      %v1505 = vunpack.c.h.b16 %v1034
      %v1506 = vunpack.c.l.b16 %v1035
      %v1507 = vunpack.c.h.b16 %v1035
      %v1508 = vunpack.c.l.b16 %v1036
      %v1509 = vunpack.c.h.b16 %v1036
      %v1510 = vunpack.c.l.b16 %v1037
      %v1511 = vunpack.c.h.b16 %v1037
      %v1512 = vunpack.c.l.b16 %v1038
      %v1513 = vunpack.c.h.b16 %v1038
      %v1514 = vunpack.c.l.b16 %v1039
      %v1515 = vunpack.c.h.b16 %v1039
      %v1516 = vunpack.c.l.b16 %v1040
      %v1517 = vunpack.c.h.b16 %v1040
      %v1518 = vunpack.c.l.b16 %v1041
      %v1519 = vunpack.c.h.b16 %v1041
      %v1520 = vunpack.c.l.b16 %v1042
      %v1521 = vunpack.c.h.b16 %v1042
      %v1522 = vunpack.c.l.b16 %v1043
      %v1523 = vunpack.c.h.b16 %v1043
      %v1524 = vunpack.c.l.b16 %v1044
      %v1525 = vunpack.c.h.b16 %v1044
      %v1526 = vunpack.c.l.b16 %v1045
      %v1527 = vunpack.c.h.b16 %v1045
      %v1528 = vunpack.c.l.b16 %v1046
      %v1529 = vunpack.c.h.b16 %v1046
      %v1530 = vunpack.c.l.b16 %v1047
      %v1531 = vunpack.c.h.b16 %v1047
      %v1532 = vunpack.c.l.b16 %v1048
      %v1533 = vunpack.c.h.b16 %v1048
      %v1534 = vunpack.c.l.b16 %v1049
      %v1535 = vunpack.c.h.b16 %v1049
      %v1536 = vunpack.c.l.b16 %v1050
      %v1537 = vunpack.c.h.b16 %v1050
      %v1538 = vunpack.c.l.b16 %v1051
      %v1539 = vunpack.c.h.b16 %v1051
      %v1540 = vunpack.c.l.b16 %v1052
      %v1541 = vunpack.c.h.b16 %v1052
      %v1542 = vunpack.c.l.b16 %v1053
      %v1543 = vunpack.c.h.b16 %v1053
      %v1544 = vpack.c.b16 %v1450, %v1448
      %v1545 = vpack.c.b16 %v1451, %v1449
      %v1546 = vpack.c.b16 %v1454, %v1452
      %v1547 = vpack.c.b16 %v1455, %v1453
      %v1548 = vpack.c.b16 %v1458, %v1456
      %v1549 = vpack.c.b16 %v1459, %v1457
      %v1550 = vpack.c.b16 %v1462, %v1460
      %v1551 = vpack.c.b16 %v1463, %v1461
      %v1552 = vpack.c.b16 %v1466, %v1464
      %v1553 = vpack.c.b16 %v1467, %v1465
      %v1554 = vpack.c.b16 %v1470, %v1468
      %v1555 = vpack.c.b16 %v1471, %v1469
      %v1556 = vpack.c.b16 %v1474, %v1472
      %v1557 = vpack.c.b16 %v1475, %v1473
      %v1558 = vpack.c.b16 %v1478, %v1476
      %v1559 = vpack.c.b16 %v1479, %v1477
      %v1560 = vpack.c.b16 %v1482, %v1480
      %v1561 = vpack.c.b16 %v1483, %v1481
      %v1562 = vpack.c.b16 %v1486, %v1484
      %v1563 = vpack.c.b16 %v1487, %v1485
      %v1564 = vpack.c.b16 %v1490, %v1488
      %v1565 = vpack.c.b16 %v1491, %v1489
      %v1566 = vpack.c.b16 %v1494, %v1492
      %v1567 = vpack.c.b16 %v1495, %v1493
      %v1568 = vpack.c.b16 %v1498, %v1496
      %v1569 = vpack.c.b16 %v1499, %v1497
      %v1570 = vpack.c.b16 %v1502, %v1500
      %v1571 = vpack.c.b16 %v1503, %v1501
      %v1572 = vpack.c.b16 %v1506, %v1504
      %v1573 = vpack.c.b16 %v1507, %v1505
      %v1574 = vpack.c.b16 %v1510, %v1508
      %v1575 = vpack.c.b16 %v1511, %v1509
      %v1576 = vpack.c.b16 %v1514, %v1512
      %v1577 = vpack.c.b16 %v1515, %v1513
      %v1578 = vpack.c.b16 %v1518, %v1516
      %v1579 = vpack.c.b16 %v1519, %v1517
      %v1580 = vpack.c.b16 %v1522, %v1520
      %v1581 = vpack.c.b16 %v1523, %v1521
      %v1582 = vpack.c.b16 %v1526, %v1524
      %v1583 = vpack.c.b16 %v1527, %v1525
      %v1584 = vpack.c.b16 %v1530, %v1528
      %v1585 = vpack.c.b16 %v1531, %v1529
      %v1586 = vpack.c.b16 %v1534, %v1532
      %v1587 = vpack.c.b16 %v1535, %v1533
      %v1588 = vpack.c.b16 %v1538, %v1536
      %v1589 = vpack.c.b16 %v1539, %v1537
      %v1590 = vpack.c.b16 %v1542, %v1540
      %v1591 = vpack.c.b16 %v1543, %v1541
      %v1704 = vunpack.c.l.b16 %v1314
      %v1705 = vunpack.c.h.b16 %v1314
      %v1706 = vunpack.c.l.b16 %v1315
      %v1707 = vunpack.c.h.b16 %v1315
      %v1708 = vunpack.c.l.b16 %v1316
      %v1709 = vunpack.c.h.b16 %v1316
      %v1710 = vunpack.c.l.b16 %v1317
      %v1711 = vunpack.c.h.b16 %v1317
      %v1712 = vunpack.c.l.b16 %v1318
      %v1713 = vunpack.c.h.b16 %v1318
      %v1714 = vunpack.c.l.b16 %v1319
      %v1715 = vunpack.c.h.b16 %v1319
      %v1716 = vunpack.c.l.b16 %v1320
      %v1717 = vunpack.c.h.b16 %v1320
      %v1718 = vunpack.c.l.b16 %v1321
      %v1719 = vunpack.c.h.b16 %v1321
      %v1720 = vunpack.c.l.b16 %v1322
      %v1721 = vunpack.c.h.b16 %v1322
      %v1722 = vunpack.c.l.b16 %v1323
      %v1723 = vunpack.c.h.b16 %v1323
      %v1724 = vunpack.c.l.b16 %v1324
      %v1725 = vunpack.c.h.b16 %v1324
      %v1726 = vunpack.c.l.b16 %v1325
      %v1727 = vunpack.c.h.b16 %v1325
      %v1728 = vunpack.c.l.b16 %v1326
      %v1729 = vunpack.c.h.b16 %v1326
      %v1730 = vunpack.c.l.b16 %v1327
      %v1731 = vunpack.c.h.b16 %v1327
      %v1732 = vunpack.c.l.b16 %v1328
      %v1733 = vunpack.c.h.b16 %v1328
      %v1734 = vunpack.c.l.b16 %v1329
      %v1735 = vunpack.c.h.b16 %v1329
      %v1736 = vunpack.c.l.b16 %v1330
      %v1737 = vunpack.c.h.b16 %v1330
      %v1738 = vunpack.c.l.b16 %v1331
      %v1739 = vunpack.c.h.b16 %v1331
      %v1740 = vunpack.c.l.b16 %v1332
      %v1741 = vunpack.c.h.b16 %v1332
      %v1742 = vunpack.c.l.b16 %v1333
      %v1743 = vunpack.c.h.b16 %v1333
      %v1744 = vunpack.c.l.b16 %v1334
      %v1745 = vunpack.c.h.b16 %v1334
      %v1746 = vunpack.c.l.b16 %v1335
      %v1747 = vunpack.c.h.b16 %v1335
      %v1748 = vunpack.c.l.b16 %v1336
      %v1749 = vunpack.c.h.b16 %v1336
      %v1750 = vunpack.c.l.b16 %v1337
      %v1751 = vunpack.c.h.b16 %v1337
      %v1752 = vunpack.c.l.b16 %v1338
      %v1753 = vunpack.c.h.b16 %v1338
      %v1754 = vunpack.c.l.b16 %v1339
      %v1755 = vunpack.c.h.b16 %v1339
      %v1756 = vunpack.c.l.b16 %v1340
      %v1757 = vunpack.c.h.b16 %v1340
      %v1758 = vunpack.c.l.b16 %v1341
      %v1759 = vunpack.c.h.b16 %v1341
      %v1760 = vunpack.c.l.b16 %v1342
      %v1761 = vunpack.c.h.b16 %v1342
      %v1762 = vunpack.c.l.b16 %v1343
      %v1763 = vunpack.c.h.b16 %v1343
      %v1764 = vunpack.c.l.b16 %v1344
      %v1765 = vunpack.c.h.b16 %v1344
      %v1766 = vunpack.c.l.b16 %v1345
      %v1767 = vunpack.c.h.b16 %v1345
      %v1768 = vunpack.c.l.b16 %v1346
      %v1769 = vunpack.c.h.b16 %v1346
      %v1770 = vunpack.c.l.b16 %v1347
      %v1771 = vunpack.c.h.b16 %v1347
      %v1772 = vunpack.c.l.b16 %v1348
      %v1773 = vunpack.c.h.b16 %v1348
      %v1774 = vunpack.c.l.b16 %v1349
      %v1775 = vunpack.c.h.b16 %v1349
      %v1776 = vunpack.c.l.b16 %v1350
      %v1777 = vunpack.c.h.b16 %v1350
      %v1778 = vunpack.c.l.b16 %v1351
      %v1779 = vunpack.c.h.b16 %v1351
      %v1780 = vunpack.c.l.b16 %v1352
      %v1781 = vunpack.c.h.b16 %v1352
      %v1782 = vunpack.c.l.b16 %v1353
      %v1783 = vunpack.c.h.b16 %v1353
      %v1784 = vunpack.c.l.b16 %v1354
      %v1785 = vunpack.c.h.b16 %v1354
      %v1786 = vunpack.c.l.b16 %v1355
      %v1787 = vunpack.c.h.b16 %v1355
      %v1788 = vunpack.c.l.b16 %v1356
      %v1789 = vunpack.c.h.b16 %v1356
      %v1790 = vunpack.c.l.b16 %v1357
      %v1791 = vunpack.c.h.b16 %v1357
      %v1792 = vunpack.c.l.b16 %v1358
      %v1793 = vunpack.c.h.b16 %v1358
      %v1794 = vunpack.c.l.b16 %v1359
      %v1795 = vunpack.c.h.b16 %v1359
      %v1796 = vunpack.c.l.b16 %v1360
      %v1797 = vunpack.c.h.b16 %v1360
      %v1798 = vunpack.c.l.b16 %v1361
      %v1799 = vunpack.c.h.b16 %v1361
      %v1800 = vunpack.c.l.b16 %v1362
      %v1801 = vunpack.c.h.b16 %v1362
      %v1802 = vunpack.c.l.b16 %v1363
      %v1803 = vunpack.c.h.b16 %v1363
      %v1804 = vunpack.c.l.b16 %v1364
      %v1805 = vunpack.c.h.b16 %v1364
      %v1806 = vunpack.c.l.b16 %v1365
      %v1807 = vunpack.c.h.b16 %v1365
      %v1808 = vunpack.c.l.b16 %v1366
      %v1809 = vunpack.c.h.b16 %v1366
      %v1810 = vunpack.c.l.b16 %v1367
      %v1811 = vunpack.c.h.b16 %v1367
      %v1812 = vunpack.c.l.b16 %v1368
      %v1813 = vunpack.c.h.b16 %v1368
      %v1814 = vunpack.c.l.b16 %v1369
      %v1815 = vunpack.c.h.b16 %v1369
      %v1816 = vunpack.c.l.b16 %v1370
      %v1817 = vunpack.c.h.b16 %v1370
      %v1818 = vunpack.c.l.b16 %v1371
      %v1819 = vunpack.c.h.b16 %v1371
      %v1820 = vunpack.c.l.b16 %v1372
      %v1821 = vunpack.c.h.b16 %v1372
      %v1822 = vunpack.c.l.b16 %v1373
      %v1823 = vunpack.c.h.b16 %v1373
      %v1824 = vunpack.c.l.b16 %v1374
      %v1825 = vunpack.c.h.b16 %v1374
      %v1826 = vunpack.c.l.b16 %v1375
      %v1827 = vunpack.c.h.b16 %v1375
      %v1828 = vunpack.c.l.b16 %v1376
      %v1829 = vunpack.c.h.b16 %v1376
      %v1830 = vunpack.c.l.b16 %v1377
      %v1831 = vunpack.c.h.b16 %v1377
      %v1832 = vpack.c.b16 %v1708, %v1704
      %v1833 = vpack.c.b16 %v1709, %v1705
      %v1834 = vpack.c.b16 %v1710, %v1706
      %v1835 = vpack.c.b16 %v1711, %v1707
      %v1836 = vpack.c.b16 %v1716, %v1712
      %v1837 = vpack.c.b16 %v1717, %v1713
      %v1838 = vpack.c.b16 %v1718, %v1714
      %v1839 = vpack.c.b16 %v1719, %v1715
      %v1840 = vpack.c.b16 %v1724, %v1720
      %v1841 = vpack.c.b16 %v1725, %v1721
      %v1842 = vpack.c.b16 %v1726, %v1722
      %v1843 = vpack.c.b16 %v1727, %v1723
      %v1844 = vpack.c.b16 %v1732, %v1728
      %v1845 = vpack.c.b16 %v1733, %v1729
      %v1846 = vpack.c.b16 %v1734, %v1730
      %v1847 = vpack.c.b16 %v1735, %v1731
      %v1848 = vpack.c.b16 %v1740, %v1736
      %v1849 = vpack.c.b16 %v1741, %v1737
      %v1850 = vpack.c.b16 %v1742, %v1738
      %v1851 = vpack.c.b16 %v1743, %v1739
      %v1852 = vpack.c.b16 %v1748, %v1744
      %v1853 = vpack.c.b16 %v1749, %v1745
      %v1854 = vpack.c.b16 %v1750, %v1746
      %v1855 = vpack.c.b16 %v1751, %v1747
      %v1856 = vpack.c.b16 %v1756, %v1752
      %v1857 = vpack.c.b16 %v1757, %v1753
      %v1858 = vpack.c.b16 %v1758, %v1754
      %v1859 = vpack.c.b16 %v1759, %v1755
      %v1860 = vpack.c.b16 %v1764, %v1760
      %v1861 = vpack.c.b16 %v1765, %v1761
      %v1862 = vpack.c.b16 %v1766, %v1762
      %v1863 = vpack.c.b16 %v1767, %v1763
      %v1864 = vpack.c.b16 %v1772, %v1768
      %v1865 = vpack.c.b16 %v1773, %v1769
      %v1866 = vpack.c.b16 %v1774, %v1770
      %v1867 = vpack.c.b16 %v1775, %v1771
      %v1868 = vpack.c.b16 %v1780, %v1776
      %v1869 = vpack.c.b16 %v1781, %v1777
      %v1870 = vpack.c.b16 %v1782, %v1778
      %v1871 = vpack.c.b16 %v1783, %v1779
      %v1872 = vpack.c.b16 %v1788, %v1784
      %v1873 = vpack.c.b16 %v1789, %v1785
      %v1874 = vpack.c.b16 %v1790, %v1786
      %v1875 = vpack.c.b16 %v1791, %v1787
      %v1876 = vpack.c.b16 %v1796, %v1792
      %v1877 = vpack.c.b16 %v1797, %v1793
      %v1878 = vpack.c.b16 %v1798, %v1794
      %v1879 = vpack.c.b16 %v1799, %v1795
      %v1880 = vpack.c.b16 %v1804, %v1800
      %v1881 = vpack.c.b16 %v1805, %v1801
      %v1882 = vpack.c.b16 %v1806, %v1802
      %v1883 = vpack.c.b16 %v1807, %v1803
      %v1884 = vpack.c.b16 %v1812, %v1808
      %v1885 = vpack.c.b16 %v1813, %v1809
      %v1886 = vpack.c.b16 %v1814, %v1810
      %v1887 = vpack.c.b16 %v1815, %v1811
      %v1888 = vpack.c.b16 %v1820, %v1816
      %v1889 = vpack.c.b16 %v1821, %v1817
      %v1890 = vpack.c.b16 %v1822, %v1818
      %v1891 = vpack.c.b16 %v1823, %v1819
      %v1892 = vpack.c.b16 %v1828, %v1824
      %v1893 = vpack.c.b16 %v1829, %v1825
      %v1894 = vpack.c.b16 %v1830, %v1826
      %v1895 = vpack.c.b16 %v1831, %v1827
      %1960 = vmatprep.subr.bf16.mxu0 %v1833
      %1961 = vmatpush1.bf16.msra.mxu0 %v1832
      %1962 = vmatprep.subr.bf16.mxu0 %v1837
      %1963 = vmatpush1.bf16.msra.mxu0 %v1836
      %1964 = vmatprep.subr.bf16.mxu0 %v1841
      %1965 = vmatpush1.bf16.msra.mxu0 %v1840
      %1966 = vmatprep.subr.bf16.mxu0 %v1845
      %1967 = vmatpush1.bf16.msra.mxu0 %v1844
      %1968 = vmatprep.subr.bf16.mxu0 %v1849
      %1969 = vmatpush1.bf16.msra.mxu0 %v1848
      %1970 = vmatprep.subr.bf16.mxu0 %v1853
      %1971 = vmatpush1.bf16.msra.mxu0 %v1852
      %1972 = vmatprep.subr.bf16.mxu0 %v1857
      %1973 = vmatpush1.bf16.msra.mxu0 %v1856
      %1974 = vmatprep.subr.bf16.mxu0 %v1861
      %1975 = vmatpush1.bf16.msra.mxu0 %v1860
      %1976 = vmatprep.subr.bf16.mxu0 %v1865
      %1977 = vmatpush1.bf16.msra.mxu0 %v1864
      %1978 = vmatprep.subr.bf16.mxu0 %v1869
      %1979 = vmatpush1.bf16.msra.mxu0 %v1868
      %1980 = vmatprep.subr.bf16.mxu0 %v1873
      %1981 = vmatpush1.bf16.msra.mxu0 %v1872
      %1982 = vmatprep.subr.bf16.mxu0 %v1877
      %1983 = vmatpush1.bf16.msra.mxu0 %v1876
      %1984 = vmatprep.subr.bf16.mxu0 %v1881
      %1985 = vmatpush1.bf16.msra.mxu0 %v1880
      %1986 = vmatprep.subr.bf16.mxu0 %v1885
      %1987 = vmatpush1.bf16.msra.mxu0 %v1884
      %1988 = vmatprep.subr.bf16.mxu0 %v1889
      %1989 = vmatpush1.bf16.msra.mxu0 %v1888
      %1990 = vmatprep.subr.bf16.mxu0 %v1893
      %1991 = vmatpush1.bf16.msra.mxu0 %v1892
      %1992 = vmatprep.mubr.bf16.mxu0 %v1545
      %1993 = vmatmul.mubr.bf16.gmra.mrb[0].mxu0 %v1544
      %v1994 = vpop.f32.mrb[0].mxu0
      %v1995 = vadd.f32 %v1383, %v1994
      %v1996 = vpop.f32.mrb[0].mxu0
      %v1997 = vadd.f32 %v1387, %v1996
      %v1998 = vpop.f32.mrb[0].mxu0
      %v1999 = vadd.f32 %v1383, %v1998
      %v2000 = vpop.f32.mrb[0].mxu0
      %v2001 = vadd.f32 %v1387, %v2000
      %2002 = vmatprep.mubr.bf16.mxu0 %v1547
      %2003 = vmatmul.mubr.bf16.gmra.mrb[0].mxu0 %v1546
      %v2004 = vpop.f32.mrb[0].mxu0
      %v2005 = vadd.f32 %v1383, %v2004
      %v2006 = vpop.f32.mrb[0].mxu0
      %v2007 = vadd.f32 %v1387, %v2006
      %v2008 = vpop.f32.mrb[0].mxu0
      %v2009 = vadd.f32 %v1383, %v2008
      %v2010 = vpop.f32.mrb[0].mxu0
      %v2011 = vadd.f32 %v1387, %v2010
      %2012 = vmatprep.mubr.bf16.mxu0 %v1549
      %2013 = vmatmul.mubr.bf16.gmra.mrb[0].mxu0 %v1548
      %v2014 = vpop.f32.mrb[0].mxu0
      %v2015 = vadd.f32 %v1383, %v2014
      %v2016 = vpop.f32.mrb[0].mxu0
      %v2017 = vadd.f32 %v1387, %v2016
      %v2018 = vpop.f32.mrb[0].mxu0
      %v2019 = vadd.f32 %v1383, %v2018
      %v2020 = vpop.f32.mrb[0].mxu0
      %v2021 = vadd.f32 %v1387, %v2020
      %2022 = vmatprep.mubr.bf16.mxu0 %v1551
      %2023 = vmatmul.mubr.bf16.gmra.mrb[0].mxu0 %v1550
      %v2024 = vpop.f32.mrb[0].mxu0
      %v2025 = vadd.f32 %v1383, %v2024
      %v2026 = vpop.f32.mrb[0].mxu0
      %v2027 = vadd.f32 %v1387, %v2026
      %v2028 = vpop.f32.mrb[0].mxu0
      %v2029 = vadd.f32 %v1383, %v2028
      %v2030 = vpop.f32.mrb[0].mxu0
      %v2031 = vadd.f32 %v1387, %v2030
      %2032 = vmatprep.mubr.bf16.mxu0 %v1553
      %2033 = vmatmul.mubr.bf16.gmra.mrb[0].mxu0 %v1552
      %v2034 = vpop.f32.mrb[0].mxu0
      %v2035 = vadd.f32 %v1383, %v2034
      %v2036 = vpop.f32.mrb[0].mxu0
      %v2037 = vadd.f32 %v1387, %v2036
      %v2038 = vpop.f32.mrb[0].mxu0
      %v2039 = vadd.f32 %v1383, %v2038
      %v2040 = vpop.f32.mrb[0].mxu0
      %v2041 = vadd.f32 %v1387, %v2040
      %2042 = vmatprep.mubr.bf16.mxu0 %v1555
      %2043 = vmatmul.mubr.bf16.gmra.mrb[0].mxu0 %v1554
      %v2044 = vpop.f32.mrb[0].mxu0
      %v2045 = vadd.f32 %v1383, %v2044
      %v2046 = vpop.f32.mrb[0].mxu0
      %v2047 = vadd.f32 %v1387, %v2046
      %v2048 = vpop.f32.mrb[0].mxu0
      %v2049 = vadd.f32 %v1383, %v2048
      %v2050 = vpop.f32.mrb[0].mxu0
      %v2051 = vadd.f32 %v1387, %v2050
      %2052 = vmatprep.mubr.bf16.mxu0 %v1557
      %2053 = vmatmul.mubr.bf16.gmra.mrb[0].mxu0 %v1556
      %v2054 = vpop.f32.mrb[0].mxu0
      %v2055 = vadd.f32 %v1383, %v2054
      %v2056 = vpop.f32.mrb[0].mxu0
      %v2057 = vadd.f32 %v1387, %v2056
      %v2058 = vpop.f32.mrb[0].mxu0
      %v2059 = vadd.f32 %v1383, %v2058
      %v2060 = vpop.f32.mrb[0].mxu0
      %v2061 = vadd.f32 %v1387, %v2060
      %2062 = vmatprep.mubr.bf16.mxu0 %v1559
      %2063 = vmatmul.mubr.bf16.gmra.mrb[0].mxu0 %v1558
      %v2064 = vpop.f32.mrb[0].mxu0
      %v2065 = vadd.f32 %v1383, %v2064
      %v2066 = vpop.f32.mrb[0].mxu0
      %v2067 = vadd.f32 %v1387, %v2066
      %v2068 = vpop.f32.mrb[0].mxu0
      %v2069 = vadd.f32 %v1383, %v2068
      %v2070 = vpop.f32.mrb[0].mxu0
      %v2071 = vadd.f32 %v1387, %v2070
      %2072 = vmatprep.mubr.bf16.mxu0 %v1561
      %2073 = vmatmul.mubr.bf16.gmra.mrb[0].mxu0 %v1560
      %v2074 = vpop.f32.mrb[0].mxu0
      %v2075 = vadd.f32 %v1383, %v2074
      %v2076 = vpop.f32.mrb[0].mxu0
      %v2077 = vadd.f32 %v1387, %v2076
      %v2078 = vpop.f32.mrb[0].mxu0
      %v2079 = vadd.f32 %v1383, %v2078
      %v2080 = vpop.f32.mrb[0].mxu0
      %v2081 = vadd.f32 %v1387, %v2080
      %2082 = vmatprep.mubr.bf16.mxu0 %v1563
      %2083 = vmatmul.mubr.bf16.gmra.mrb[0].mxu0 %v1562
      %v2084 = vpop.f32.mrb[0].mxu0
      %v2085 = vadd.f32 %v1383, %v2084
      %v2086 = vpop.f32.mrb[0].mxu0
      %v2087 = vadd.f32 %v1387, %v2086
      %v2088 = vpop.f32.mrb[0].mxu0
      %v2089 = vadd.f32 %v1383, %v2088
      %v2090 = vpop.f32.mrb[0].mxu0
      %v2091 = vadd.f32 %v1387, %v2090
      %2092 = vmatprep.mubr.bf16.mxu0 %v1565
      %2093 = vmatmul.mubr.bf16.gmra.mrb[0].mxu0 %v1564
      %v2094 = vpop.f32.mrb[0].mxu0
      %v2095 = vadd.f32 %v1383, %v2094
      %v2096 = vpop.f32.mrb[0].mxu0
      %v2097 = vadd.f32 %v1387, %v2096
      %v2098 = vpop.f32.mrb[0].mxu0
      %v2099 = vadd.f32 %v1383, %v2098
      %v2100 = vpop.f32.mrb[0].mxu0
      %v2101 = vadd.f32 %v1387, %v2100
      %2102 = vmatprep.mubr.bf16.mxu0 %v1567
      %2103 = vmatmul.mubr.bf16.gmra.mrb[0].mxu0 %v1566
      %v2104 = vpop.f32.mrb[0].mxu0
      %v2105 = vadd.f32 %v1383, %v2104
      %v2106 = vpop.f32.mrb[0].mxu0
      %v2107 = vadd.f32 %v1387, %v2106
      %v2108 = vpop.f32.mrb[0].mxu0
      %v2109 = vadd.f32 %v1383, %v2108
      %v2110 = vpop.f32.mrb[0].mxu0
      %v2111 = vadd.f32 %v1387, %v2110
      %2112 = vmatprep.mubr.bf16.mxu0 %v1569
      %2113 = vmatmul.mubr.bf16.gmra.mrb[0].mxu0 %v1568
      %v2114 = vpop.f32.mrb[0].mxu0
      %v2115 = vadd.f32 %v1383, %v2114
      %v2116 = vpop.f32.mrb[0].mxu0
      %v2117 = vadd.f32 %v1387, %v2116
      %v2118 = vpop.f32.mrb[0].mxu0
      %v2119 = vadd.f32 %v1383, %v2118
      %v2120 = vpop.f32.mrb[0].mxu0
      %v2121 = vadd.f32 %v1387, %v2120
      %2122 = vmatprep.mubr.bf16.mxu0 %v1571
      %2123 = vmatmul.mubr.bf16.gmra.mrb[0].mxu0 %v1570
      %v2124 = vpop.f32.mrb[0].mxu0
      %v2125 = vadd.f32 %v1383, %v2124
      %v2126 = vpop.f32.mrb[0].mxu0
      %v2127 = vadd.f32 %v1387, %v2126
      %v2128 = vpop.f32.mrb[0].mxu0
      %v2129 = vadd.f32 %v1383, %v2128
      %v2130 = vpop.f32.mrb[0].mxu0
      %v2131 = vadd.f32 %v1387, %v2130
      %2132 = vmatprep.mubr.bf16.mxu0 %v1573
      %2133 = vmatmul.mubr.bf16.gmra.mrb[0].mxu0 %v1572
      %v2134 = vpop.f32.mrb[0].mxu0
      %v2135 = vadd.f32 %v1383, %v2134
      %v2136 = vpop.f32.mrb[0].mxu0
      %v2137 = vadd.f32 %v1387, %v2136
      %v2138 = vpop.f32.mrb[0].mxu0
      %v2139 = vadd.f32 %v1383, %v2138
      %v2140 = vpop.f32.mrb[0].mxu0
      %v2141 = vadd.f32 %v1387, %v2140
      %2142 = vmatprep.mubr.bf16.mxu0 %v1575
      %2143 = vmatmul.mubr.bf16.gmra.mrb[0].mxu0 %v1574
      %v2144 = vpop.f32.mrb[0].mxu0
      %v2145 = vadd.f32 %v1383, %v2144
      %v2146 = vpop.f32.mrb[0].mxu0
      %v2147 = vadd.f32 %v1387, %v2146
      %v2148 = vpop.f32.mrb[0].mxu0
      %v2149 = vadd.f32 %v1383, %v2148
      %v2150 = vpop.f32.mrb[0].mxu0
      %v2151 = vadd.f32 %v1387, %v2150
      %2152 = vmatprep.mubr.bf16.mxu0 %v1577
      %2153 = vmatmul.mubr.bf16.gmra.mrb[0].mxu0 %v1576
      %v2154 = vpop.f32.mrb[0].mxu0
      %v2155 = vadd.f32 %v1383, %v2154
      %v2156 = vpop.f32.mrb[0].mxu0
      %v2157 = vadd.f32 %v1387, %v2156
      %v2158 = vpop.f32.mrb[0].mxu0
      %v2159 = vadd.f32 %v1383, %v2158
      %v2160 = vpop.f32.mrb[0].mxu0
      %v2161 = vadd.f32 %v1387, %v2160
      %2162 = vmatprep.mubr.bf16.mxu0 %v1579
      %2163 = vmatmul.mubr.bf16.gmra.mrb[0].mxu0 %v1578
      %v2164 = vpop.f32.mrb[0].mxu0
      %v2165 = vadd.f32 %v1383, %v2164
      %v2166 = vpop.f32.mrb[0].mxu0
      %v2167 = vadd.f32 %v1387, %v2166
      %v2168 = vpop.f32.mrb[0].mxu0
      %v2169 = vadd.f32 %v1383, %v2168
      %v2170 = vpop.f32.mrb[0].mxu0
      %v2171 = vadd.f32 %v1387, %v2170
      %2172 = vmatprep.mubr.bf16.mxu0 %v1581
      %2173 = vmatmul.mubr.bf16.gmra.mrb[0].mxu0 %v1580
      %v2174 = vpop.f32.mrb[0].mxu0
      %v2175 = vadd.f32 %v1383, %v2174
      %v2176 = vpop.f32.mrb[0].mxu0
      %v2177 = vadd.f32 %v1387, %v2176
      %v2178 = vpop.f32.mrb[0].mxu0
      %v2179 = vadd.f32 %v1383, %v2178
      %v2180 = vpop.f32.mrb[0].mxu0
      %v2181 = vadd.f32 %v1387, %v2180
      %2182 = vmatprep.mubr.bf16.mxu0 %v1583
      %2183 = vmatmul.mubr.bf16.gmra.mrb[0].mxu0 %v1582
      %v2184 = vpop.f32.mrb[0].mxu0
      %v2185 = vadd.f32 %v1383, %v2184
      %v2186 = vpop.f32.mrb[0].mxu0
      %v2187 = vadd.f32 %v1387, %v2186
      %v2188 = vpop.f32.mrb[0].mxu0
      %v2189 = vadd.f32 %v1383, %v2188
      %v2190 = vpop.f32.mrb[0].mxu0
      %v2191 = vadd.f32 %v1387, %v2190
      %2192 = vmatprep.mubr.bf16.mxu0 %v1585
      %2193 = vmatmul.mubr.bf16.gmra.mrb[0].mxu0 %v1584
      %v2194 = vpop.f32.mrb[0].mxu0
      %v2195 = vadd.f32 %v1383, %v2194
      %v2196 = vpop.f32.mrb[0].mxu0
      %v2197 = vadd.f32 %v1387, %v2196
      %v2198 = vpop.f32.mrb[0].mxu0
      %v2199 = vadd.f32 %v1383, %v2198
      %v2200 = vpop.f32.mrb[0].mxu0
      %v2201 = vadd.f32 %v1387, %v2200
      %2202 = vmatprep.mubr.bf16.mxu0 %v1587
      %2203 = vmatmul.mubr.bf16.gmra.mrb[0].mxu0 %v1586
      %v2204 = vpop.f32.mrb[0].mxu0
      %v2205 = vadd.f32 %v1383, %v2204
      %v2206 = vpop.f32.mrb[0].mxu0
      %v2207 = vadd.f32 %v1387, %v2206
      %v2208 = vpop.f32.mrb[0].mxu0
      %v2209 = vadd.f32 %v1383, %v2208
      %v2210 = vpop.f32.mrb[0].mxu0
      %v2211 = vadd.f32 %v1387, %v2210
      %2212 = vmatprep.mubr.bf16.mxu0 %v1589
      %2213 = vmatmul.mubr.bf16.gmra.mrb[0].mxu0 %v1588
      %v2214 = vpop.f32.mrb[0].mxu0
      %v2215 = vadd.f32 %v1383, %v2214
      %v2216 = vpop.f32.mrb[0].mxu0
      %v2217 = vadd.f32 %v1387, %v2216
      %v2218 = vpop.f32.mrb[0].mxu0
      %v2219 = vadd.f32 %v1383, %v2218
      %v2220 = vpop.f32.mrb[0].mxu0
      %v2221 = vadd.f32 %v1387, %v2220
      %2222 = vmatprep.mubr.bf16.mxu0 %v1591
      %2223 = vmatmul.mubr.bf16.gmra.mrb[0].mxu0 %v1590
      %v2224 = vpop.f32.mrb[0].mxu0
      %v2225 = vadd.f32 %v1383, %v2224
      %v2226 = vpop.f32.mrb[0].mxu0
      %v2227 = vadd.f32 %v1387, %v2226
      %v2228 = vpop.f32.mrb[0].mxu0
      %v2229 = vadd.f32 %v1383, %v2228
      %v2230 = vpop.f32.mrb[0].mxu0
      %v2231 = vadd.f32 %v1387, %v2230
      %2232 = vdwg.mxu0
      %2233 = vmatprep.subr.bf16.mxu0 %v1835
      %2234 = vmatpush1.bf16.msra.mxu0 %v1834
      %2235 = vmatprep.subr.bf16.mxu0 %v1839
      %2236 = vmatpush1.bf16.msra.mxu0 %v1838
      %2237 = vmatprep.subr.bf16.mxu0 %v1843
      %2238 = vmatpush1.bf16.msra.mxu0 %v1842
      %2239 = vmatprep.subr.bf16.mxu0 %v1847
      %2240 = vmatpush1.bf16.msra.mxu0 %v1846
      %2241 = vmatprep.subr.bf16.mxu0 %v1851
      %2242 = vmatpush1.bf16.msra.mxu0 %v1850
      %2243 = vmatprep.subr.bf16.mxu0 %v1855
      %2244 = vmatpush1.bf16.msra.mxu0 %v1854
      %2245 = vmatprep.subr.bf16.mxu0 %v1859
      %2246 = vmatpush1.bf16.msra.mxu0 %v1858
      %2247 = vmatprep.subr.bf16.mxu0 %v1863
      %2248 = vmatpush1.bf16.msra.mxu0 %v1862
      %2249 = vmatprep.subr.bf16.mxu0 %v1867
      %2250 = vmatpush1.bf16.msra.mxu0 %v1866
      %2251 = vmatprep.subr.bf16.mxu0 %v1871
      %2252 = vmatpush1.bf16.msra.mxu0 %v1870
      %2253 = vmatprep.subr.bf16.mxu0 %v1875
      %2254 = vmatpush1.bf16.msra.mxu0 %v1874
      %2255 = vmatprep.subr.bf16.mxu0 %v1879
      %2256 = vmatpush1.bf16.msra.mxu0 %v1878
      %2257 = vmatprep.subr.bf16.mxu0 %v1883
      %2258 = vmatpush1.bf16.msra.mxu0 %v1882
      %2259 = vmatprep.subr.bf16.mxu0 %v1887
      %2260 = vmatpush1.bf16.msra.mxu0 %v1886
      %2261 = vmatprep.subr.bf16.mxu0 %v1891
      %2262 = vmatpush1.bf16.msra.mxu0 %v1890
      %2263 = vmatprep.subr.bf16.mxu0 %v1895
      %2264 = vmatpush1.bf16.msra.mxu0 %v1894
      %2265 = vmatprep.mubr.bf16.mxu0 %v1545
      %2266 = vmatmul.mubr.bf16.gmra.mrb[0].mxu0 %v1544
      %v2267 = vpop.f32.mrb[0].mxu0
      %v2268 = vadd.f32 %v1391, %v2267
      %v2269 = vpop.f32.mrb[0].mxu0
      %v2270 = vadd.f32 %v1395, %v2269
      %v2271 = vpop.f32.mrb[0].mxu0
      %v2272 = vadd.f32 %v1391, %v2271
      %v2273 = vpop.f32.mrb[0].mxu0
      %v2274 = vadd.f32 %v1395, %v2273
      %2275 = vmatprep.mubr.bf16.mxu0 %v1547
      %2276 = vmatmul.mubr.bf16.gmra.mrb[0].mxu0 %v1546
      %v2277 = vpop.f32.mrb[0].mxu0
      %v2278 = vadd.f32 %v1391, %v2277
      %v2279 = vpop.f32.mrb[0].mxu0
      %v2280 = vadd.f32 %v1395, %v2279
      %v2281 = vpop.f32.mrb[0].mxu0
      %v2282 = vadd.f32 %v1391, %v2281
      %v2283 = vpop.f32.mrb[0].mxu0
      %v2284 = vadd.f32 %v1395, %v2283
      %2285 = vmatprep.mubr.bf16.mxu0 %v1549
      %2286 = vmatmul.mubr.bf16.gmra.mrb[0].mxu0 %v1548
      %v2287 = vpop.f32.mrb[0].mxu0
      %v2288 = vadd.f32 %v1391, %v2287
      %v2289 = vpop.f32.mrb[0].mxu0
      %v2290 = vadd.f32 %v1395, %v2289
      %v2291 = vpop.f32.mrb[0].mxu0
      %v2292 = vadd.f32 %v1391, %v2291
      %v2293 = vpop.f32.mrb[0].mxu0
      %v2294 = vadd.f32 %v1395, %v2293
      %2295 = vmatprep.mubr.bf16.mxu0 %v1551
      %2296 = vmatmul.mubr.bf16.gmra.mrb[0].mxu0 %v1550
      %v2297 = vpop.f32.mrb[0].mxu0
      %v2298 = vadd.f32 %v1391, %v2297
      %v2299 = vpop.f32.mrb[0].mxu0
      %v2300 = vadd.f32 %v1395, %v2299
      %v2301 = vpop.f32.mrb[0].mxu0
      %v2302 = vadd.f32 %v1391, %v2301
      %v2303 = vpop.f32.mrb[0].mxu0
      %v2304 = vadd.f32 %v1395, %v2303
      %2305 = vmatprep.mubr.bf16.mxu0 %v1553
      %2306 = vmatmul.mubr.bf16.gmra.mrb[0].mxu0 %v1552
      %v2307 = vpop.f32.mrb[0].mxu0
      %v2308 = vadd.f32 %v1391, %v2307
      %v2309 = vpop.f32.mrb[0].mxu0
      %v2310 = vadd.f32 %v1395, %v2309
      %v2311 = vpop.f32.mrb[0].mxu0
      %v2312 = vadd.f32 %v1391, %v2311
      %v2313 = vpop.f32.mrb[0].mxu0
      %v2314 = vadd.f32 %v1395, %v2313
      %2315 = vmatprep.mubr.bf16.mxu0 %v1555
      %2316 = vmatmul.mubr.bf16.gmra.mrb[0].mxu0 %v1554
      %v2317 = vpop.f32.mrb[0].mxu0
      %v2318 = vadd.f32 %v1391, %v2317
      %v2319 = vpop.f32.mrb[0].mxu0
      %v2320 = vadd.f32 %v1395, %v2319
      %v2321 = vpop.f32.mrb[0].mxu0
      %v2322 = vadd.f32 %v1391, %v2321
      %v2323 = vpop.f32.mrb[0].mxu0
      %v2324 = vadd.f32 %v1395, %v2323
      %2325 = vmatprep.mubr.bf16.mxu0 %v1557
      %2326 = vmatmul.mubr.bf16.gmra.mrb[0].mxu0 %v1556
      %v2327 = vpop.f32.mrb[0].mxu0
      %v2328 = vadd.f32 %v1391, %v2327
      %v2329 = vpop.f32.mrb[0].mxu0
      %v2330 = vadd.f32 %v1395, %v2329
      %v2331 = vpop.f32.mrb[0].mxu0
      %v2332 = vadd.f32 %v1391, %v2331
      %v2333 = vpop.f32.mrb[0].mxu0
      %v2334 = vadd.f32 %v1395, %v2333
      %2335 = vmatprep.mubr.bf16.mxu0 %v1559
      %2336 = vmatmul.mubr.bf16.gmra.mrb[0].mxu0 %v1558
      %v2337 = vpop.f32.mrb[0].mxu0
      %v2338 = vadd.f32 %v1391, %v2337
      %v2339 = vpop.f32.mrb[0].mxu0
      %v2340 = vadd.f32 %v1395, %v2339
      %v2341 = vpop.f32.mrb[0].mxu0
      %v2342 = vadd.f32 %v1391, %v2341
      %v2343 = vpop.f32.mrb[0].mxu0
      %v2344 = vadd.f32 %v1395, %v2343
      %2345 = vmatprep.mubr.bf16.mxu0 %v1561
      %2346 = vmatmul.mubr.bf16.gmra.mrb[0].mxu0 %v1560
      %v2347 = vpop.f32.mrb[0].mxu0
      %v2348 = vadd.f32 %v1391, %v2347
      %v2349 = vpop.f32.mrb[0].mxu0
      %v2350 = vadd.f32 %v1395, %v2349
      %v2351 = vpop.f32.mrb[0].mxu0
      %v2352 = vadd.f32 %v1391, %v2351
      %v2353 = vpop.f32.mrb[0].mxu0
      %v2354 = vadd.f32 %v1395, %v2353
      %2355 = vmatprep.mubr.bf16.mxu0 %v1563
      %2356 = vmatmul.mubr.bf16.gmra.mrb[0].mxu0 %v1562
      %v2357 = vpop.f32.mrb[0].mxu0
      %v2358 = vadd.f32 %v1391, %v2357
      %v2359 = vpop.f32.mrb[0].mxu0
      %v2360 = vadd.f32 %v1395, %v2359
      %v2361 = vpop.f32.mrb[0].mxu0
      %v2362 = vadd.f32 %v1391, %v2361
      %v2363 = vpop.f32.mrb[0].mxu0
      %v2364 = vadd.f32 %v1395, %v2363
      %2365 = vmatprep.mubr.bf16.mxu0 %v1565
      %2366 = vmatmul.mubr.bf16.gmra.mrb[0].mxu0 %v1564
      %v2367 = vpop.f32.mrb[0].mxu0
      %v2368 = vadd.f32 %v1391, %v2367
      %v2369 = vpop.f32.mrb[0].mxu0
      %v2370 = vadd.f32 %v1395, %v2369
      %v2371 = vpop.f32.mrb[0].mxu0
      %v2372 = vadd.f32 %v1391, %v2371
      %v2373 = vpop.f32.mrb[0].mxu0
      %v2374 = vadd.f32 %v1395, %v2373
      %2375 = vmatprep.mubr.bf16.mxu0 %v1567
      %2376 = vmatmul.mubr.bf16.gmra.mrb[0].mxu0 %v1566
      %v2377 = vpop.f32.mrb[0].mxu0
      %v2378 = vadd.f32 %v1391, %v2377
      %v2379 = vpop.f32.mrb[0].mxu0
      %v2380 = vadd.f32 %v1395, %v2379
      %v2381 = vpop.f32.mrb[0].mxu0
      %v2382 = vadd.f32 %v1391, %v2381
      %v2383 = vpop.f32.mrb[0].mxu0
      %v2384 = vadd.f32 %v1395, %v2383
      %2385 = vmatprep.mubr.bf16.mxu0 %v1569
      %2386 = vmatmul.mubr.bf16.gmra.mrb[0].mxu0 %v1568
      %v2387 = vpop.f32.mrb[0].mxu0
      %v2388 = vadd.f32 %v1391, %v2387
      %v2389 = vpop.f32.mrb[0].mxu0
      %v2390 = vadd.f32 %v1395, %v2389
      %v2391 = vpop.f32.mrb[0].mxu0
      %v2392 = vadd.f32 %v1391, %v2391
      %v2393 = vpop.f32.mrb[0].mxu0
      %v2394 = vadd.f32 %v1395, %v2393
      %2395 = vmatprep.mubr.bf16.mxu0 %v1571
      %2396 = vmatmul.mubr.bf16.gmra.mrb[0].mxu0 %v1570
      %v2397 = vpop.f32.mrb[0].mxu0
      %v2398 = vadd.f32 %v1391, %v2397
      %v2399 = vpop.f32.mrb[0].mxu0
      %v2400 = vadd.f32 %v1395, %v2399
      %v2401 = vpop.f32.mrb[0].mxu0
      %v2402 = vadd.f32 %v1391, %v2401
      %v2403 = vpop.f32.mrb[0].mxu0
      %v2404 = vadd.f32 %v1395, %v2403
      %2405 = vmatprep.mubr.bf16.mxu0 %v1573
      %2406 = vmatmul.mubr.bf16.gmra.mrb[0].mxu0 %v1572
      %v2407 = vpop.f32.mrb[0].mxu0
      %v2408 = vadd.f32 %v1391, %v2407
      %v2409 = vpop.f32.mrb[0].mxu0
      %v2410 = vadd.f32 %v1395, %v2409
      %v2411 = vpop.f32.mrb[0].mxu0
      %v2412 = vadd.f32 %v1391, %v2411
      %v2413 = vpop.f32.mrb[0].mxu0
      %v2414 = vadd.f32 %v1395, %v2413
      %2415 = vmatprep.mubr.bf16.mxu0 %v1575
      %2416 = vmatmul.mubr.bf16.gmra.mrb[0].mxu0 %v1574
      %v2417 = vpop.f32.mrb[0].mxu0
      %v2418 = vadd.f32 %v1391, %v2417
      %v2419 = vpop.f32.mrb[0].mxu0
      %v2420 = vadd.f32 %v1395, %v2419
      %v2421 = vpop.f32.mrb[0].mxu0
      %v2422 = vadd.f32 %v1391, %v2421
      %v2423 = vpop.f32.mrb[0].mxu0
      %v2424 = vadd.f32 %v1395, %v2423
      %2425 = vmatprep.mubr.bf16.mxu0 %v1577
      %2426 = vmatmul.mubr.bf16.gmra.mrb[0].mxu0 %v1576
      %v2427 = vpop.f32.mrb[0].mxu0
      %v2428 = vadd.f32 %v1391, %v2427
      %v2429 = vpop.f32.mrb[0].mxu0
      %v2430 = vadd.f32 %v1395, %v2429
      %v2431 = vpop.f32.mrb[0].mxu0
      %v2432 = vadd.f32 %v1391, %v2431
      %v2433 = vpop.f32.mrb[0].mxu0
      %v2434 = vadd.f32 %v1395, %v2433
      %2435 = vmatprep.mubr.bf16.mxu0 %v1579
      %2436 = vmatmul.mubr.bf16.gmra.mrb[0].mxu0 %v1578
      %v2437 = vpop.f32.mrb[0].mxu0
      %v2438 = vadd.f32 %v1391, %v2437
      %v2439 = vpop.f32.mrb[0].mxu0
      %v2440 = vadd.f32 %v1395, %v2439
      %v2441 = vpop.f32.mrb[0].mxu0
      %v2442 = vadd.f32 %v1391, %v2441
      %v2443 = vpop.f32.mrb[0].mxu0
      %v2444 = vadd.f32 %v1395, %v2443
      %2445 = vmatprep.mubr.bf16.mxu0 %v1581
      %2446 = vmatmul.mubr.bf16.gmra.mrb[0].mxu0 %v1580
      %v2447 = vpop.f32.mrb[0].mxu0
      %v2448 = vadd.f32 %v1391, %v2447
      %v2449 = vpop.f32.mrb[0].mxu0
      %v2450 = vadd.f32 %v1395, %v2449
      %v2451 = vpop.f32.mrb[0].mxu0
      %v2452 = vadd.f32 %v1391, %v2451
      %v2453 = vpop.f32.mrb[0].mxu0
      %v2454 = vadd.f32 %v1395, %v2453
      %2455 = vmatprep.mubr.bf16.mxu0 %v1583
      %2456 = vmatmul.mubr.bf16.gmra.mrb[0].mxu0 %v1582
      %v2457 = vpop.f32.mrb[0].mxu0
      %v2458 = vadd.f32 %v1391, %v2457
      %v2459 = vpop.f32.mrb[0].mxu0
      %v2460 = vadd.f32 %v1395, %v2459
      %v2461 = vpop.f32.mrb[0].mxu0
      %v2462 = vadd.f32 %v1391, %v2461
      %v2463 = vpop.f32.mrb[0].mxu0
      %v2464 = vadd.f32 %v1395, %v2463
      %2465 = vmatprep.mubr.bf16.mxu0 %v1585
      %2466 = vmatmul.mubr.bf16.gmra.mrb[0].mxu0 %v1584
      %v2467 = vpop.f32.mrb[0].mxu0
      %v2468 = vadd.f32 %v1391, %v2467
      %v2469 = vpop.f32.mrb[0].mxu0
      %v2470 = vadd.f32 %v1395, %v2469
      %v2471 = vpop.f32.mrb[0].mxu0
      %v2472 = vadd.f32 %v1391, %v2471
      %v2473 = vpop.f32.mrb[0].mxu0
      %v2474 = vadd.f32 %v1395, %v2473
      %2475 = vmatprep.mubr.bf16.mxu0 %v1587
      %2476 = vmatmul.mubr.bf16.gmra.mrb[0].mxu0 %v1586
      %v2477 = vpop.f32.mrb[0].mxu0
      %v2478 = vadd.f32 %v1391, %v2477
      %v2479 = vpop.f32.mrb[0].mxu0
      %v2480 = vadd.f32 %v1395, %v2479
      %v2481 = vpop.f32.mrb[0].mxu0
      %v2482 = vadd.f32 %v1391, %v2481
      %v2483 = vpop.f32.mrb[0].mxu0
      %v2484 = vadd.f32 %v1395, %v2483
      %2485 = vmatprep.mubr.bf16.mxu0 %v1589
      %2486 = vmatmul.mubr.bf16.gmra.mrb[0].mxu0 %v1588
      %v2487 = vpop.f32.mrb[0].mxu0
      %v2488 = vadd.f32 %v1391, %v2487
      %v2489 = vpop.f32.mrb[0].mxu0
      %v2490 = vadd.f32 %v1395, %v2489
      %v2491 = vpop.f32.mrb[0].mxu0
      %v2492 = vadd.f32 %v1391, %v2491
      %v2493 = vpop.f32.mrb[0].mxu0
      %v2494 = vadd.f32 %v1395, %v2493
      %2495 = vmatprep.mubr.bf16.mxu0 %v1591
      %2496 = vmatmul.mubr.bf16.gmra.mrb[0].mxu0 %v1590
      %v2497 = vpop.f32.mrb[0].mxu0
      %v2498 = vadd.f32 %v1391, %v2497
      %v2499 = vpop.f32.mrb[0].mxu0
      %v2500 = vadd.f32 %v1395, %v2499
      %v2501 = vpop.f32.mrb[0].mxu0
      %v2502 = vadd.f32 %v1391, %v2501
      %v2503 = vpop.f32.mrb[0].mxu0
      %v2504 = vadd.f32 %v1395, %v2503
      %2505 = vdwg.mxu0
      %v2506 = vld [vmem:[%s905] sm:$0x7]
      %v2508 = vlaneseq
      %v2509 = vshrl.u32 %v2508, 7
      %v2510 = vsub.s32 0, %v2509
      %v2511 = vrot.slane %v2506, %v2510
      %v2512 = vlaneseq
      %v2513 = vshrl.u32 %v2512, 7
      %v2514 = vsub.s32 1, %v2513
      %v2515 = vrot.slane %v2506, %v2514
      %v2516 = vlaneseq
      %v2517 = vshrl.u32 %v2516, 7
      %v2518 = vsub.s32 2, %v2517
      %v2519 = vrot.slane %v2506, %v2518
      %v2523 = vpack.c.bf16 %v1312, %v1310
      %v2524 = vpack.c.bf16 %v1999, %v1995
      %v2525 = vpack.c.bf16 %v2009, %v2005
      %v2526 = vpack.c.bf16 %v2019, %v2015
      %v2527 = vpack.c.bf16 %v2029, %v2025
      %v2528 = vpack.c.bf16 %v2039, %v2035
      %v2529 = vpack.c.bf16 %v2049, %v2045
      %v2530 = vpack.c.bf16 %v2059, %v2055
      %v2531 = vpack.c.bf16 %v2069, %v2065
      %v2532 = vpack.c.bf16 %v2079, %v2075
      %v2533 = vpack.c.bf16 %v2089, %v2085
      %v2534 = vpack.c.bf16 %v2099, %v2095
      %v2535 = vpack.c.bf16 %v2109, %v2105
      %v2536 = vpack.c.bf16 %v2119, %v2115
      %v2537 = vpack.c.bf16 %v2129, %v2125
      %v2538 = vpack.c.bf16 %v2139, %v2135
      %v2539 = vpack.c.bf16 %v2149, %v2145
      %v2540 = vpack.c.bf16 %v2159, %v2155
      %v2541 = vpack.c.bf16 %v2169, %v2165
      %v2542 = vpack.c.bf16 %v2179, %v2175
      %v2543 = vpack.c.bf16 %v2189, %v2185
      %v2544 = vpack.c.bf16 %v2199, %v2195
      %v2545 = vpack.c.bf16 %v2209, %v2205
      %v2546 = vpack.c.bf16 %v2219, %v2215
      %v2547 = vpack.c.bf16 %v2229, %v2225
      %vm2548 = vcmask 261120
      %v2550 = vsel %vm2548, %v2523, 0
      %v2553 = vsel %vm2548, %v2524, 0
      %v2556 = vsel %vm2548, %v2525, 0
      %v2559 = vsel %vm2548, %v2526, 0
      %v2562 = vsel %vm2548, %v2527, 0
      %v2565 = vsel %vm2548, %v2528, 0
      %v2568 = vsel %vm2548, %v2529, 0
      %v2571 = vsel %vm2548, %v2530, 0
      %v2574 = vsel %vm2548, %v2531, 0
      %v2577 = vsel %vm2548, %v2532, 0
      %v2580 = vsel %vm2548, %v2533, 0
      %v2583 = vsel %vm2548, %v2534, 0
      %v2586 = vsel %vm2548, %v2535, 0
      %v2589 = vsel %vm2548, %v2536, 0
      %v2592 = vsel %vm2548, %v2537, 0
      %v2595 = vsel %vm2548, %v2538, 0
      %v2598 = vsel %vm2548, %v2539, 0
      %v2601 = vsel %vm2548, %v2540, 0
      %v2604 = vsel %vm2548, %v2541, 0
      %v2607 = vsel %vm2548, %v2542, 0
      %v2610 = vsel %vm2548, %v2543, 0
      %v2613 = vsel %vm2548, %v2544, 0
      %v2616 = vsel %vm2548, %v2545, 0
      %v2619 = vsel %vm2548, %v2546, 0
      %v2622 = vsel %vm2548, %v2547, 0
      %2624 = vmatprep.subr.bf16.mxu0 0
      %2625 = vmatpush1.bf16.xpose.msra.mxu0 %v2553
      %2626 = vmatprep.subr.bf16.mxu0 0
      %2627 = vmatpush1.bf16.xpose.msra.mxu0 %v2556
      %2628 = vmatprep.subr.bf16.mxu0 0
      %2629 = vmatpush1.bf16.xpose.msra.mxu0 %v2559
      %2630 = vmatprep.subr.bf16.mxu0 0
      %2631 = vmatpush1.bf16.xpose.msra.mxu0 %v2562
      %2632 = vmatprep.subr.bf16.mxu0 0
      %2633 = vmatpush1.bf16.xpose.msra.mxu0 %v2565
      %2634 = vmatprep.subr.bf16.mxu0 0
      %2635 = vmatpush1.bf16.xpose.msra.mxu0 %v2568
      %2636 = vmatprep.subr.bf16.mxu0 0
      %2637 = vmatpush1.bf16.xpose.msra.mxu0 %v2571
      %2638 = vmatprep.subr.bf16.mxu0 0
      %2639 = vmatpush1.bf16.xpose.msra.mxu0 %v2574
      %2640 = vmatprep.subr.bf16.mxu0 0
      %2641 = vmatpush1.bf16.xpose.msra.mxu0 %v2577
      %2642 = vmatprep.subr.bf16.mxu0 0
      %2643 = vmatpush1.bf16.xpose.msra.mxu0 %v2580
      %2644 = vmatprep.subr.bf16.mxu0 0
      %2645 = vmatpush1.bf16.xpose.msra.mxu0 %v2583
      %2646 = vmatprep.subr.bf16.mxu0 0
      %2647 = vmatpush1.bf16.xpose.msra.mxu0 %v2586
      %2648 = vmatprep.subr.bf16.mxu0 0
      %2649 = vmatpush1.bf16.xpose.msra.mxu0 %v2589
      %2650 = vmatprep.subr.bf16.mxu0 0
      %2651 = vmatpush1.bf16.xpose.msra.mxu0 %v2592
      %2652 = vmatprep.subr.bf16.mxu0 0
      %2653 = vmatpush1.bf16.xpose.msra.mxu0 %v2595
      %2654 = vmatprep.subr.bf16.mxu0 0
      %2655 = vmatpush1.bf16.xpose.msra.mxu0 %v2598
      %2656 = vmatprep.mubr.bf16.mxu0 0
      %2657 = vmatmul.mubr.bf16.gmra.mrb[0].mxu0 %v2550
      %v2658 = vpop.f32.mrb[0].mxu0
      %v2659 = vadd.f32 %v2511, %v2658
      %v2660 = vpop.f32.mrb[0].mxu0
      %v2661 = vadd.f32 %v2515, %v2660
      %v2662 = vpop.f32.mrb[0].mxu0
      %v2663 = vadd.f32 %v2511, %v2662
      %v2664 = vpop.f32.mrb[0].mxu0
      %v2665 = vadd.f32 %v2515, %v2664
      %2666 = vdwg.mxu0
      %2667 = vmatprep.subr.bf16.mxu0 0
      %2668 = vmatpush1.bf16.xpose.msra.mxu0 %v2601
      %2669 = vmatprep.subr.bf16.mxu0 0
      %2670 = vmatpush1.bf16.xpose.msra.mxu0 %v2604
      %2671 = vmatprep.subr.bf16.mxu0 0
      %2672 = vmatpush1.bf16.xpose.msra.mxu0 %v2607
      %2673 = vmatprep.subr.bf16.mxu0 0
      %2674 = vmatpush1.bf16.xpose.msra.mxu0 %v2610
      %2675 = vmatprep.subr.bf16.mxu0 0
      %2676 = vmatpush1.bf16.xpose.msra.mxu0 %v2613
      %2677 = vmatprep.subr.bf16.mxu0 0
      %2678 = vmatpush1.bf16.xpose.msra.mxu0 %v2616
      %2679 = vmatprep.subr.bf16.mxu0 0
      %2680 = vmatpush1.bf16.xpose.msra.mxu0 %v2619
      %2681 = vmatprep.subr.bf16.mxu0 0
      %2682 = vmatpush1.bf16.xpose.msra.mxu0 %v2622
      %2683 = vmatprep.subr.bf16.mxu0 0
      %2684 = vmatpush1.bf16.xpose.msra.mxu0 0
      %2685 = vmatprep.subr.bf16.mxu0 0
      %2686 = vmatpush1.bf16.xpose.msra.mxu0 0
      %2687 = vmatprep.subr.bf16.mxu0 0
      %2688 = vmatpush1.bf16.xpose.msra.mxu0 0
      %2689 = vmatprep.subr.bf16.mxu0 0
      %2690 = vmatpush1.bf16.xpose.msra.mxu0 0
      %2691 = vmatprep.subr.bf16.mxu0 0
      %2692 = vmatpush1.bf16.xpose.msra.mxu0 0
      %2693 = vmatprep.subr.bf16.mxu0 0
      %2694 = vmatpush1.bf16.xpose.msra.mxu0 0
      %2695 = vmatprep.subr.bf16.mxu0 0
      %2696 = vmatpush1.bf16.xpose.msra.mxu0 0
      %2697 = vmatprep.subr.bf16.mxu0 0
      %2698 = vmatpush1.bf16.xpose.msra.mxu0 0
      %2699 = vmatprep.mubr.bf16.mxu0 0
      %2700 = vmatmul.mubr.bf16.gmra.mrb[0].mxu0 %v2550
      %v2701 = vpop.f32.mrb[0].mxu0
      %v2702 = vadd.f32 %v2519, %v2701
      %v2703 = vpop.f32.mrb[0].mxu0
      %v2704 = vpop.f32.mrb[0].mxu0
      %v2705 = vadd.f32 %v2519, %v2704
      %v2706 = vpop.f32.mrb[0].mxu0
      %2707 = vdwg.mxu0
      %v2708 = vmax.f32 %v2659, %v2702
      %v2709 = vmax.f32 %v2708, %v2661
      %2710 = vmax.xlane.f32.xlu0 %v2709
      %v2711 = vpop.xlane.xlu0 %2710
      %v2712 = vmax.f32 %v2663, %v2705
      %v2713 = vmax.f32 %v2712, %v2665
      %2714 = vmax.xlane.f32.xlu0 %v2713
      %v2715 = vpop.xlane.xlu0 %2714
      %v2716 = vsub.f32 %v2659, %v2711
      %v2717 = vsub.f32 %v2661, %v2711
      %v2718 = vsub.f32 %v2702, %v2711
      %v2719 = vsub.f32 %v2663, %v2715
      %v2720 = vsub.f32 %v2665, %v2715
      %v2721 = vsub.f32 %v2705, %v2715
      %v2722 = vmul.f32 %v2716, 1.442695
      %v2723 = vpow.pop %v2722
      %v2724 = vmul.f32 %v2717, 1.442695
      %v2725 = vpow.pop %v2724
      %v2726 = vmul.f32 %v2718, 1.442695
      %v2727 = vpow.pop %v2726
      %v2728 = vmul.f32 %v2719, 1.442695
      %v2729 = vpow.pop %v2728
      %v2730 = vmul.f32 %v2720, 1.442695
      %v2731 = vpow.pop %v2730
      %v2732 = vmul.f32 %v2721, 1.442695
      %v2733 = vpow.pop %v2732
      %v2734 = vadd.f32 %v2723, %v2725
      %v2735 = vadd.f32 %v2734, %v2727
      %2736 = vadd.xlane.f32.xlu0 %v2735
      %v2737 = vpop.xlane.xlu0 %2736
      %v2738 = vadd.f32 %v2729, %v2731
      %v2739 = vadd.f32 %v2738, %v2733
      %2740 = vadd.xlane.f32.xlu0 %v2739
      %v2741 = vpop.xlane.xlu0 %2740
      %v2742 = vrcp.pop %v2737
      %v2743 = vmul.f32 %v2723, %v2742
      %v2744 = vmul.f32 %v2725, %v2742
      %v2745 = vmul.f32 %v2727, %v2742
      %v2746 = vrcp.pop %v2741
      %v2747 = vmul.f32 %v2729, %v2746
      %v2748 = vmul.f32 %v2731, %v2746
      %v2749 = vmul.f32 %v2733, %v2746
      %v2750 = vlaneseq
      %v2751 = vshrl.u32 %v2750, 7
      %v2752 = vsub.s32 0, %v2751
      %v2753 = vrot.slane %v1054, %v2752
      %v2754 = vlaneseq
      %v2755 = vshrl.u32 %v2754, 7
      %v2756 = vsub.s32 0, %v2755
      %v2757 = vrot.slane %v1055, %v2756
      %v2758 = vlaneseq
      %v2759 = vshrl.u32 %v2758, 7
      %v2760 = vsub.s32 0, %v2759
      %v2761 = vrot.slane %v1056, %v2760
      %v2762 = vmul.f32 %v2753, %v2743
      %v2763 = vmul.f32 %v2757, %v2744
      %v2764 = vmul.f32 %v2761, %v2745
      %v2765 = vmul.f32 %v2753, %v2747
      %v2766 = vmul.f32 %v2757, %v2748
      %v2767 = vmul.f32 %v2761, %v2749
      %v2768 = vadd.f32 %v2762, 0.0
      %v2769 = vadd.f32 %v2763, 0.0
      %v2770 = vadd.f32 %v2764, 0.0
      %v2771 = vadd.f32 %v2765, 0.0
      %v2772 = vadd.f32 %v2766, 0.0
      %v2773 = vadd.f32 %v2767, 0.0
      %v2774 = vpack.c.bf16 %v2747, %v2743
      %v2775 = vpack.c.bf16 %v2748, %v2744
      %v2776 = vpack.c.bf16 %v2749, %v2745
      %v2777 = vpack.c.bf16 %v2272, %v2268
      %v2778 = vpack.c.bf16 %v2282, %v2278
      %v2779 = vpack.c.bf16 %v2292, %v2288
      %v2780 = vpack.c.bf16 %v2302, %v2298
      %v2781 = vpack.c.bf16 %v2312, %v2308
      %v2782 = vpack.c.bf16 %v2322, %v2318
      %v2783 = vpack.c.bf16 %v2332, %v2328
      %v2784 = vpack.c.bf16 %v2342, %v2338
      %v2785 = vpack.c.bf16 %v2352, %v2348
      %v2786 = vpack.c.bf16 %v2362, %v2358
      %v2787 = vpack.c.bf16 %v2372, %v2368
      %v2788 = vpack.c.bf16 %v2382, %v2378
      %v2789 = vpack.c.bf16 %v2392, %v2388
      %v2790 = vpack.c.bf16 %v2402, %v2398
      %v2791 = vpack.c.bf16 %v2412, %v2408
      %v2792 = vpack.c.bf16 %v2422, %v2418
      %v2793 = vpack.c.bf16 %v2432, %v2428
      %v2794 = vpack.c.bf16 %v2442, %v2438
      %v2795 = vpack.c.bf16 %v2452, %v2448
      %v2796 = vpack.c.bf16 %v2462, %v2458
      %v2797 = vpack.c.bf16 %v2472, %v2468
      %v2798 = vpack.c.bf16 %v2482, %v2478
      %v2799 = vpack.c.bf16 %v2492, %v2488
      %v2800 = vpack.c.bf16 %v2502, %v2498
      %2801 = vmatprep.subr.bf16.mxu0 0
      %2802 = vmatpush1.bf16.msra.mxu0 %v2777
      %2803 = vmatprep.subr.bf16.mxu0 0
      %2804 = vmatpush1.bf16.msra.mxu0 %v2778
      %2805 = vmatprep.subr.bf16.mxu0 0
      %2806 = vmatpush1.bf16.msra.mxu0 %v2779
      %2807 = vmatprep.subr.bf16.mxu0 0
      %2808 = vmatpush1.bf16.msra.mxu0 %v2780
      %2809 = vmatprep.subr.bf16.mxu0 0
      %2810 = vmatpush1.bf16.msra.mxu0 %v2781
      %2811 = vmatprep.subr.bf16.mxu0 0
      %2812 = vmatpush1.bf16.msra.mxu0 %v2782
      %2813 = vmatprep.subr.bf16.mxu0 0
      %2814 = vmatpush1.bf16.msra.mxu0 %v2783
      %2815 = vmatprep.subr.bf16.mxu0 0
      %2816 = vmatpush1.bf16.msra.mxu0 %v2784
      %2817 = vmatprep.subr.bf16.mxu0 0
      %2818 = vmatpush1.bf16.msra.mxu0 %v2785
      %2819 = vmatprep.subr.bf16.mxu0 0
      %2820 = vmatpush1.bf16.msra.mxu0 %v2786
      %2821 = vmatprep.subr.bf16.mxu0 0
      %2822 = vmatpush1.bf16.msra.mxu0 %v2787
      %2823 = vmatprep.subr.bf16.mxu0 0
      %2824 = vmatpush1.bf16.msra.mxu0 %v2788
      %2825 = vmatprep.subr.bf16.mxu0 0
      %2826 = vmatpush1.bf16.msra.mxu0 %v2789
      %2827 = vmatprep.subr.bf16.mxu0 0
      %2828 = vmatpush1.bf16.msra.mxu0 %v2790
      %2829 = vmatprep.subr.bf16.mxu0 0
      %2830 = vmatpush1.bf16.msra.mxu0 %v2791
      %2831 = vmatprep.subr.bf16.mxu0 0
      %2832 = vmatpush1.bf16.msra.mxu0 %v2792
      %2833 = vmatprep.mubr.bf16.mxu0 %v2775
      %2834 = vmatmul.mubr.bf16.gmra.mrb[0].mxu0 %v2774
      %v2835 = vpop.f32.mrb[0].mxu0
      %v2836 = vadd.f32 0.0, %v2835
      %v2837 = vpop.f32.mrb[0].mxu0
      %v2838 = vpop.f32.mrb[0].mxu0
      %v2839 = vadd.f32 0.0, %v2838
      %v2840 = vpop.f32.mrb[0].mxu0
      %2841 = vdwg.mxu0
      %2842 = vmatprep.subr.bf16.mxu0 0
      %2843 = vmatpush1.bf16.msra.mxu0 %v2793
      %2844 = vmatprep.subr.bf16.mxu0 0
      %2845 = vmatpush1.bf16.msra.mxu0 %v2794
      %2846 = vmatprep.subr.bf16.mxu0 0
      %2847 = vmatpush1.bf16.msra.mxu0 %v2795
      %2848 = vmatprep.subr.bf16.mxu0 0
      %2849 = vmatpush1.bf16.msra.mxu0 %v2796
      %2850 = vmatprep.subr.bf16.mxu0 0
      %2851 = vmatpush1.bf16.msra.mxu0 %v2797
      %2852 = vmatprep.subr.bf16.mxu0 0
      %2853 = vmatpush1.bf16.msra.mxu0 %v2798
      %2854 = vmatprep.subr.bf16.mxu0 0
      %2855 = vmatpush1.bf16.msra.mxu0 %v2799
      %2856 = vmatprep.subr.bf16.mxu0 0
      %2857 = vmatpush1.bf16.msra.mxu0 %v2800
      %2858 = vmatprep.subr.bf16.mxu0 0
      %2859 = vmatpush1.bf16.msra.mxu0 0
      %2860 = vmatprep.subr.bf16.mxu0 0
      %2861 = vmatpush1.bf16.msra.mxu0 0
      %2862 = vmatprep.subr.bf16.mxu0 0
      %2863 = vmatpush1.bf16.msra.mxu0 0
      %2864 = vmatprep.subr.bf16.mxu0 0
      %2865 = vmatpush1.bf16.msra.mxu0 0
      %2866 = vmatprep.subr.bf16.mxu0 0
      %2867 = vmatpush1.bf16.msra.mxu0 0
      %2868 = vmatprep.subr.bf16.mxu0 0
      %2869 = vmatpush1.bf16.msra.mxu0 0
      %2870 = vmatprep.subr.bf16.mxu0 0
      %2871 = vmatpush1.bf16.msra.mxu0 0
      %2872 = vmatprep.subr.bf16.mxu0 0
      %2873 = vmatpush1.bf16.msra.mxu0 0
      %2874 = vmatprep.mubr.bf16.mxu0 0
      %2875 = vmatmul.mubr.bf16.gmra.mrb[0].mxu0 %v2776
      %v2876 = vpop.f32.mrb[0].mxu0
      %v2877 = vadd.f32 %v2836, %v2876
      %v2878 = vpop.f32.mrb[0].mxu0
      %v2879 = vpop.f32.mrb[0].mxu0
      %v2880 = vadd.f32 %v2839, %v2879
      %v2881 = vpop.f32.mrb[0].mxu0
      %2882 = vdwg.mxu0
      %2884 = vrot.lane.b32.xlu0 %v2523, 96
      %v2885 = vpop.permute.xlu0 %2884
      %2910 = vrot.lane.b32.xlu0 %v2524, 96
      %v2911 = vpop.permute.xlu0 %2910
      %2912 = vrot.lane.b32.xlu0 %v2525, 96
      %v2913 = vpop.permute.xlu0 %2912
      %2914 = vrot.lane.b32.xlu0 %v2526, 96
      %v2915 = vpop.permute.xlu0 %2914
      %2916 = vrot.lane.b32.xlu0 %v2527, 96
      %v2917 = vpop.permute.xlu0 %2916
      %2918 = vrot.lane.b32.xlu0 %v2528, 96
      %v2919 = vpop.permute.xlu0 %2918
      %2920 = vrot.lane.b32.xlu0 %v2529, 96
      %v2921 = vpop.permute.xlu0 %2920
      %2922 = vrot.lane.b32.xlu0 %v2530, 96
      %v2923 = vpop.permute.xlu0 %2922
      %2924 = vrot.lane.b32.xlu0 %v2531, 96
      %v2925 = vpop.permute.xlu0 %2924
      %2926 = vrot.lane.b32.xlu0 %v2532, 96
      %v2927 = vpop.permute.xlu0 %2926
      %2928 = vrot.lane.b32.xlu0 %v2533, 96
      %v2929 = vpop.permute.xlu0 %2928
      %2930 = vrot.lane.b32.xlu0 %v2534, 96
      %v2931 = vpop.permute.xlu0 %2930
      %2932 = vrot.lane.b32.xlu0 %v2535, 96
      %v2933 = vpop.permute.xlu0 %2932
      %2934 = vrot.lane.b32.xlu0 %v2536, 96
      %v2935 = vpop.permute.xlu0 %2934
      %2936 = vrot.lane.b32.xlu0 %v2537, 96
      %v2937 = vpop.permute.xlu0 %2936
      %2938 = vrot.lane.b32.xlu0 %v2538, 96
      %v2939 = vpop.permute.xlu0 %2938
      %2940 = vrot.lane.b32.xlu0 %v2539, 96
      %v2941 = vpop.permute.xlu0 %2940
      %2942 = vrot.lane.b32.xlu0 %v2540, 96
      %v2943 = vpop.permute.xlu0 %2942
      %2944 = vrot.lane.b32.xlu0 %v2541, 96
      %v2945 = vpop.permute.xlu0 %2944
      %2946 = vrot.lane.b32.xlu0 %v2542, 96
      %v2947 = vpop.permute.xlu0 %2946
      %2948 = vrot.lane.b32.xlu0 %v2543, 96
      %v2949 = vpop.permute.xlu0 %2948
      %2950 = vrot.lane.b32.xlu0 %v2544, 96
      %v2951 = vpop.permute.xlu0 %2950
      %2952 = vrot.lane.b32.xlu0 %v2545, 96
      %v2953 = vpop.permute.xlu0 %2952
      %2954 = vrot.lane.b32.xlu0 %v2546, 96
      %v2955 = vpop.permute.xlu0 %2954
      %2956 = vrot.lane.b32.xlu0 %v2547, 96
      %v2957 = vpop.permute.xlu0 %2956
      %v2959 = vsel %vm2548, %v2885, 0
      %v2962 = vsel %vm2548, %v2911, 0
      %v2965 = vsel %vm2548, %v2913, 0
      %v2968 = vsel %vm2548, %v2915, 0
      %v2971 = vsel %vm2548, %v2917, 0
      %v2974 = vsel %vm2548, %v2919, 0
      %v2977 = vsel %vm2548, %v2921, 0
      %v2980 = vsel %vm2548, %v2923, 0
      %v2983 = vsel %vm2548, %v2925, 0
      %v2986 = vsel %vm2548, %v2927, 0
      %v2989 = vsel %vm2548, %v2929, 0
      %v2992 = vsel %vm2548, %v2931, 0
      %v2995 = vsel %vm2548, %v2933, 0
      %v2998 = vsel %vm2548, %v2935, 0
      %v3001 = vsel %vm2548, %v2937, 0
      %v3004 = vsel %vm2548, %v2939, 0
      %v3007 = vsel %vm2548, %v2941, 0
      %v3010 = vsel %vm2548, %v2943, 0
      %v3013 = vsel %vm2548, %v2945, 0
      %v3016 = vsel %vm2548, %v2947, 0
      %v3019 = vsel %vm2548, %v2949, 0
      %v3022 = vsel %vm2548, %v2951, 0
      %v3025 = vsel %vm2548, %v2953, 0
      %v3028 = vsel %vm2548, %v2955, 0
      %v3031 = vsel %vm2548, %v2957, 0
      %3033 = vmatprep.subr.bf16.mxu0 0
      %3034 = vmatpush1.bf16.xpose.msra.mxu0 %v2962
      %3035 = vmatprep.subr.bf16.mxu0 0
      %3036 = vmatpush1.bf16.xpose.msra.mxu0 %v2965
      %3037 = vmatprep.subr.bf16.mxu0 0
      %3038 = vmatpush1.bf16.xpose.msra.mxu0 %v2968
      %3039 = vmatprep.subr.bf16.mxu0 0
      %3040 = vmatpush1.bf16.xpose.msra.mxu0 %v2971
      %3041 = vmatprep.subr.bf16.mxu0 0
      %3042 = vmatpush1.bf16.xpose.msra.mxu0 %v2974
      %3043 = vmatprep.subr.bf16.mxu0 0
      %3044 = vmatpush1.bf16.xpose.msra.mxu0 %v2977
      %3045 = vmatprep.subr.bf16.mxu0 0
      %3046 = vmatpush1.bf16.xpose.msra.mxu0 %v2980
      %3047 = vmatprep.subr.bf16.mxu0 0
      %3048 = vmatpush1.bf16.xpose.msra.mxu0 %v2983
      %3049 = vmatprep.subr.bf16.mxu0 0
      %3050 = vmatpush1.bf16.xpose.msra.mxu0 %v2986
      %3051 = vmatprep.subr.bf16.mxu0 0
      %3052 = vmatpush1.bf16.xpose.msra.mxu0 %v2989
      %3053 = vmatprep.subr.bf16.mxu0 0
      %3054 = vmatpush1.bf16.xpose.msra.mxu0 %v2992
      %3055 = vmatprep.subr.bf16.mxu0 0
      %3056 = vmatpush1.bf16.xpose.msra.mxu0 %v2995
      %3057 = vmatprep.subr.bf16.mxu0 0
      %3058 = vmatpush1.bf16.xpose.msra.mxu0 %v2998
      %3059 = vmatprep.subr.bf16.mxu0 0
      %3060 = vmatpush1.bf16.xpose.msra.mxu0 %v3001
      %3061 = vmatprep.subr.bf16.mxu0 0
      %3062 = vmatpush1.bf16.xpose.msra.mxu0 %v3004
      %3063 = vmatprep.subr.bf16.mxu0 0
      %3064 = vmatpush1.bf16.xpose.msra.mxu0 %v3007
      %3065 = vmatprep.mubr.bf16.mxu0 0
      %3066 = vmatmul.mubr.bf16.gmra.mrb[0].mxu0 %v2959
      %v3067 = vpop.f32.mrb[0].mxu0
      %v3068 = vadd.f32 %v2511, %v3067
      %v3069 = vpop.f32.mrb[0].mxu0
      %v3070 = vadd.f32 %v2515, %v3069
      %v3071 = vpop.f32.mrb[0].mxu0
      %v3072 = vadd.f32 %v2511, %v3071
      %v3073 = vpop.f32.mrb[0].mxu0
      %v3074 = vadd.f32 %v2515, %v3073
      %3075 = vdwg.mxu0
      %3076 = vmatprep.subr.bf16.mxu0 0
      %3077 = vmatpush1.bf16.xpose.msra.mxu0 %v3010
      %3078 = vmatprep.subr.bf16.mxu0 0
      %3079 = vmatpush1.bf16.xpose.msra.mxu0 %v3013
      %3080 = vmatprep.subr.bf16.mxu0 0
      %3081 = vmatpush1.bf16.xpose.msra.mxu0 %v3016
      %3082 = vmatprep.subr.bf16.mxu0 0
      %3083 = vmatpush1.bf16.xpose.msra.mxu0 %v3019
      %3084 = vmatprep.subr.bf16.mxu0 0
      %3085 = vmatpush1.bf16.xpose.msra.mxu0 %v3022
      %3086 = vmatprep.subr.bf16.mxu0 0
      %3087 = vmatpush1.bf16.xpose.msra.mxu0 %v3025
      %3088 = vmatprep.subr.bf16.mxu0 0
      %3089 = vmatpush1.bf16.xpose.msra.mxu0 %v3028
      %3090 = vmatprep.subr.bf16.mxu0 0
      %3091 = vmatpush1.bf16.xpose.msra.mxu0 %v3031
      %3092 = vmatprep.subr.bf16.mxu0 0
      %3093 = vmatpush1.bf16.xpose.msra.mxu0 0
      %3094 = vmatprep.subr.bf16.mxu0 0
      %3095 = vmatpush1.bf16.xpose.msra.mxu0 0
      %3096 = vmatprep.subr.bf16.mxu0 0
      %3097 = vmatpush1.bf16.xpose.msra.mxu0 0
      %3098 = vmatprep.subr.bf16.mxu0 0
      %3099 = vmatpush1.bf16.xpose.msra.mxu0 0
      %3100 = vmatprep.subr.bf16.mxu0 0
      %3101 = vmatpush1.bf16.xpose.msra.mxu0 0
      %3102 = vmatprep.subr.bf16.mxu0 0
      %3103 = vmatpush1.bf16.xpose.msra.mxu0 0
      %3104 = vmatprep.subr.bf16.mxu0 0
      %3105 = vmatpush1.bf16.xpose.msra.mxu0 0
      %3106 = vmatprep.subr.bf16.mxu0 0
      %3107 = vmatpush1.bf16.xpose.msra.mxu0 0
      %3108 = vmatprep.mubr.bf16.mxu0 0
      %3109 = vmatmul.mubr.bf16.gmra.mrb[0].mxu0 %v2959
      %v3110 = vpop.f32.mrb[0].mxu0
      %v3111 = vadd.f32 %v2519, %v3110
      %v3112 = vpop.f32.mrb[0].mxu0
      %v3113 = vpop.f32.mrb[0].mxu0
      %v3114 = vadd.f32 %v2519, %v3113
      %v3115 = vpop.f32.mrb[0].mxu0
      %3116 = vdwg.mxu0
      %v3117 = vmax.f32 %v3068, %v3111
      %v3118 = vmax.f32 %v3117, %v3070
      %3119 = vmax.xlane.f32.xlu0 %v3118
      %v3120 = vpop.xlane.xlu0 %3119
      %v3121 = vmax.f32 %v3072, %v3114
      %v3122 = vmax.f32 %v3121, %v3074
      %3123 = vmax.xlane.f32.xlu0 %v3122
      %v3124 = vpop.xlane.xlu0 %3123
      %v3125 = vsub.f32 %v3068, %v3120
      %v3126 = vsub.f32 %v3070, %v3120
      %v3127 = vsub.f32 %v3111, %v3120
      %v3128 = vsub.f32 %v3072, %v3124
      %v3129 = vsub.f32 %v3074, %v3124
      %v3130 = vsub.f32 %v3114, %v3124
      %v3131 = vmul.f32 %v3125, 1.442695
      %v3132 = vpow.pop %v3131
      %v3133 = vmul.f32 %v3126, 1.442695
      %v3134 = vpow.pop %v3133
      %v3135 = vmul.f32 %v3127, 1.442695
      %v3136 = vpow.pop %v3135
      %v3137 = vmul.f32 %v3128, 1.442695
      %v3138 = vpow.pop %v3137
      %v3139 = vmul.f32 %v3129, 1.442695
      %v3140 = vpow.pop %v3139
      %v3141 = vmul.f32 %v3130, 1.442695
      %v3142 = vpow.pop %v3141
      %v3143 = vadd.f32 %v3132, %v3134
      %v3144 = vadd.f32 %v3143, %v3136
      %3145 = vadd.xlane.f32.xlu0 %v3144
      %v3146 = vpop.xlane.xlu0 %3145
      %v3147 = vadd.f32 %v3138, %v3140
      %v3148 = vadd.f32 %v3147, %v3142
      %3149 = vadd.xlane.f32.xlu0 %v3148
      %v3150 = vpop.xlane.xlu0 %3149
      %v3151 = vrcp.pop %v3146
      %v3152 = vmul.f32 %v3132, %v3151
      %v3153 = vmul.f32 %v3134, %v3151
      %v3154 = vmul.f32 %v3136, %v3151
      %v3155 = vrcp.pop %v3150
      %v3156 = vmul.f32 %v3138, %v3155
      %v3157 = vmul.f32 %v3140, %v3155
      %v3158 = vmul.f32 %v3142, %v3155
      %v3159 = vlaneseq
      %v3160 = vshrl.u32 %v3159, 7
      %v3161 = vsub.s32 1, %v3160
      %v3162 = vrot.slane %v1054, %v3161
      %v3163 = vlaneseq
      %v3164 = vshrl.u32 %v3163, 7
      %v3165 = vsub.s32 1, %v3164
      %v3166 = vrot.slane %v1055, %v3165
      %v3167 = vlaneseq
      %v3168 = vshrl.u32 %v3167, 7
      %v3169 = vsub.s32 1, %v3168
      %v3170 = vrot.slane %v1056, %v3169
      %v3171 = vmul.f32 %v3162, %v3152
      %v3172 = vmul.f32 %v3166, %v3153
      %v3173 = vmul.f32 %v3170, %v3154
      %v3174 = vmul.f32 %v3162, %v3156
      %v3175 = vmul.f32 %v3166, %v3157
      %v3176 = vmul.f32 %v3170, %v3158
      %v3177 = vadd.f32 %v2768, %v3171
      %v3178 = vadd.f32 %v2769, %v3172
      %v3179 = vadd.f32 %v2770, %v3173
      %v3180 = vadd.f32 %v2771, %v3174
      %v3181 = vadd.f32 %v2772, %v3175
      %v3182 = vadd.f32 %v2773, %v3176
      %v3183 = vpack.c.bf16 %v3156, %v3152
      %v3184 = vpack.c.bf16 %v3157, %v3153
      %v3185 = vpack.c.bf16 %v3158, %v3154
      %3210 = vrot.lane.b32.xlu0 %v2777, 96
      %v3211 = vpop.permute.xlu0 %3210
      %3212 = vrot.lane.b32.xlu0 %v2778, 96
      %v3213 = vpop.permute.xlu0 %3212
      %3214 = vrot.lane.b32.xlu0 %v2779, 96
      %v3215 = vpop.permute.xlu0 %3214
      %3216 = vrot.lane.b32.xlu0 %v2780, 96
      %v3217 = vpop.permute.xlu0 %3216
      %3218 = vrot.lane.b32.xlu0 %v2781, 96
      %v3219 = vpop.permute.xlu0 %3218
      %3220 = vrot.lane.b32.xlu0 %v2782, 96
      %v3221 = vpop.permute.xlu0 %3220
      %3222 = vrot.lane.b32.xlu0 %v2783, 96
      %v3223 = vpop.permute.xlu0 %3222
      %3224 = vrot.lane.b32.xlu0 %v2784, 96
      %v3225 = vpop.permute.xlu0 %3224
      %3226 = vrot.lane.b32.xlu0 %v2785, 96
      %v3227 = vpop.permute.xlu0 %3226
      %3228 = vrot.lane.b32.xlu0 %v2786, 96
      %v3229 = vpop.permute.xlu0 %3228
      %3230 = vrot.lane.b32.xlu0 %v2787, 96
      %v3231 = vpop.permute.xlu0 %3230
      %3232 = vrot.lane.b32.xlu0 %v2788, 96
      %v3233 = vpop.permute.xlu0 %3232
      %3234 = vrot.lane.b32.xlu0 %v2789, 96
      %v3235 = vpop.permute.xlu0 %3234
      %3236 = vrot.lane.b32.xlu0 %v2790, 96
      %v3237 = vpop.permute.xlu0 %3236
      %3238 = vrot.lane.b32.xlu0 %v2791, 96
      %v3239 = vpop.permute.xlu0 %3238
      %3240 = vrot.lane.b32.xlu0 %v2792, 96
      %v3241 = vpop.permute.xlu0 %3240
      %3242 = vrot.lane.b32.xlu0 %v2793, 96
      %v3243 = vpop.permute.xlu0 %3242
      %3244 = vrot.lane.b32.xlu0 %v2794, 96
      %v3245 = vpop.permute.xlu0 %3244
      %3246 = vrot.lane.b32.xlu0 %v2795, 96
      %v3247 = vpop.permute.xlu0 %3246
      %3248 = vrot.lane.b32.xlu0 %v2796, 96
      %v3249 = vpop.permute.xlu0 %3248
      %3250 = vrot.lane.b32.xlu0 %v2797, 96
      %v3251 = vpop.permute.xlu0 %3250
      %3252 = vrot.lane.b32.xlu0 %v2798, 96
      %v3253 = vpop.permute.xlu0 %3252
      %3254 = vrot.lane.b32.xlu0 %v2799, 96
      %v3255 = vpop.permute.xlu0 %3254
      %3256 = vrot.lane.b32.xlu0 %v2800, 96
      %v3257 = vpop.permute.xlu0 %3256
      %3282 = vmatprep.subr.bf16.mxu0 0
      %3283 = vmatpush1.bf16.msra.mxu0 %v3211
      %3284 = vmatprep.subr.bf16.mxu0 0
      %3285 = vmatpush1.bf16.msra.mxu0 %v3213
      %3286 = vmatprep.subr.bf16.mxu0 0
      %3287 = vmatpush1.bf16.msra.mxu0 %v3215
      %3288 = vmatprep.subr.bf16.mxu0 0
      %3289 = vmatpush1.bf16.msra.mxu0 %v3217
      %3290 = vmatprep.subr.bf16.mxu0 0
      %3291 = vmatpush1.bf16.msra.mxu0 %v3219
      %3292 = vmatprep.subr.bf16.mxu0 0
      %3293 = vmatpush1.bf16.msra.mxu0 %v3221
      %3294 = vmatprep.subr.bf16.mxu0 0
      %3295 = vmatpush1.bf16.msra.mxu0 %v3223
      %3296 = vmatprep.subr.bf16.mxu0 0
      %3297 = vmatpush1.bf16.msra.mxu0 %v3225
      %3298 = vmatprep.subr.bf16.mxu0 0
      %3299 = vmatpush1.bf16.msra.mxu0 %v3227
      %3300 = vmatprep.subr.bf16.mxu0 0
      %3301 = vmatpush1.bf16.msra.mxu0 %v3229
      %3302 = vmatprep.subr.bf16.mxu0 0
      %3303 = vmatpush1.bf16.msra.mxu0 %v3231
      %3304 = vmatprep.subr.bf16.mxu0 0
      %3305 = vmatpush1.bf16.msra.mxu0 %v3233
      %3306 = vmatprep.subr.bf16.mxu0 0
      %3307 = vmatpush1.bf16.msra.mxu0 %v3235
      %3308 = vmatprep.subr.bf16.mxu0 0
      %3309 = vmatpush1.bf16.msra.mxu0 %v3237
      %3310 = vmatprep.subr.bf16.mxu0 0
      %3311 = vmatpush1.bf16.msra.mxu0 %v3239
      %3312 = vmatprep.subr.bf16.mxu0 0
      %3313 = vmatpush1.bf16.msra.mxu0 %v3241
      %3314 = vmatprep.mubr.bf16.mxu0 %v3184
      %3315 = vmatmul.mubr.bf16.gmra.mrb[0].mxu0 %v3183
      %v3316 = vpop.f32.mrb[0].mxu0
      %v3317 = vadd.f32 0.0, %v3316
      %v3318 = vpop.f32.mrb[0].mxu0
      %v3319 = vpop.f32.mrb[0].mxu0
      %v3320 = vadd.f32 0.0, %v3319
      %v3321 = vpop.f32.mrb[0].mxu0
      %3322 = vdwg.mxu0
      %3323 = vmatprep.subr.bf16.mxu0 0
      %3324 = vmatpush1.bf16.msra.mxu0 %v3243
      %3325 = vmatprep.subr.bf16.mxu0 0
      %3326 = vmatpush1.bf16.msra.mxu0 %v3245
      %3327 = vmatprep.subr.bf16.mxu0 0
      %3328 = vmatpush1.bf16.msra.mxu0 %v3247
      %3329 = vmatprep.subr.bf16.mxu0 0
      %3330 = vmatpush1.bf16.msra.mxu0 %v3249
      %3331 = vmatprep.subr.bf16.mxu0 0
      %3332 = vmatpush1.bf16.msra.mxu0 %v3251
      %3333 = vmatprep.subr.bf16.mxu0 0
      %3334 = vmatpush1.bf16.msra.mxu0 %v3253
      %3335 = vmatprep.subr.bf16.mxu0 0
      %3336 = vmatpush1.bf16.msra.mxu0 %v3255
      %3337 = vmatprep.subr.bf16.mxu0 0
      %3338 = vmatpush1.bf16.msra.mxu0 %v3257
      %3339 = vmatprep.subr.bf16.mxu0 0
      %3340 = vmatpush1.bf16.msra.mxu0 0
      %3341 = vmatprep.subr.bf16.mxu0 0
      %3342 = vmatpush1.bf16.msra.mxu0 0
      %3343 = vmatprep.subr.bf16.mxu0 0
      %3344 = vmatpush1.bf16.msra.mxu0 0
      %3345 = vmatprep.subr.bf16.mxu0 0
      %3346 = vmatpush1.bf16.msra.mxu0 0
      %3347 = vmatprep.subr.bf16.mxu0 0
      %3348 = vmatpush1.bf16.msra.mxu0 0
      %3349 = vmatprep.subr.bf16.mxu0 0
      %3350 = vmatpush1.bf16.msra.mxu0 0
      %3351 = vmatprep.subr.bf16.mxu0 0
      %3352 = vmatpush1.bf16.msra.mxu0 0
      %3353 = vmatprep.subr.bf16.mxu0 0
      %3354 = vmatpush1.bf16.msra.mxu0 0
      %3355 = vmatprep.mubr.bf16.mxu0 0
      %3356 = vmatmul.mubr.bf16.gmra.mrb[0].mxu0 %v3185
      %v3357 = vpop.f32.mrb[0].mxu0
      %v3358 = vadd.f32 %v3317, %v3357
      %v3359 = vpop.f32.mrb[0].mxu0
      %v3360 = vpop.f32.mrb[0].mxu0
      %v3361 = vadd.f32 %v3320, %v3360
      %v3362 = vpop.f32.mrb[0].mxu0
      %3363 = vdwg.mxu0
      %3364 = vrot.lane.b32.xlu0 %v2523, 64
      %v3365 = vpop.permute.xlu0 %3364
      %3366 = vrot.lane.b32.xlu0 %v2524, 64
      %v3367 = vpop.permute.xlu0 %3366
      %3368 = vrot.lane.b32.xlu0 %v2525, 64
      %v3369 = vpop.permute.xlu0 %3368
      %3370 = vrot.lane.b32.xlu0 %v2526, 64
      %v3371 = vpop.permute.xlu0 %3370
      %3372 = vrot.lane.b32.xlu0 %v2527, 64
      %v3373 = vpop.permute.xlu0 %3372
      %3374 = vrot.lane.b32.xlu0 %v2528, 64
      %v3375 = vpop.permute.xlu0 %3374
      %3376 = vrot.lane.b32.xlu0 %v2529, 64
      %v3377 = vpop.permute.xlu0 %3376
      %3378 = vrot.lane.b32.xlu0 %v2530, 64
      %v3379 = vpop.permute.xlu0 %3378
      %3380 = vrot.lane.b32.xlu0 %v2531, 64
      %v3381 = vpop.permute.xlu0 %3380
      %3382 = vrot.lane.b32.xlu0 %v2532, 64
      %v3383 = vpop.permute.xlu0 %3382
      %3384 = vrot.lane.b32.xlu0 %v2533, 64
      %v3385 = vpop.permute.xlu0 %3384
      %3386 = vrot.lane.b32.xlu0 %v2534, 64
      %v3387 = vpop.permute.xlu0 %3386
      %3388 = vrot.lane.b32.xlu0 %v2535, 64
      %v3389 = vpop.permute.xlu0 %3388
      %3390 = vrot.lane.b32.xlu0 %v2536, 64
      %v3391 = vpop.permute.xlu0 %3390
      %3392 = vrot.lane.b32.xlu0 %v2537, 64
      %v3393 = vpop.permute.xlu0 %3392
      %3394 = vrot.lane.b32.xlu0 %v2538, 64
      %v3395 = vpop.permute.xlu0 %3394
      %3396 = vrot.lane.b32.xlu0 %v2539, 64
      %v3397 = vpop.permute.xlu0 %3396
      %3398 = vrot.lane.b32.xlu0 %v2540, 64
      %v3399 = vpop.permute.xlu0 %3398
      %3400 = vrot.lane.b32.xlu0 %v2541, 64
      %v3401 = vpop.permute.xlu0 %3400
      %3402 = vrot.lane.b32.xlu0 %v2542, 64
      %v3403 = vpop.permute.xlu0 %3402
      %3404 = vrot.lane.b32.xlu0 %v2543, 64
      %v3405 = vpop.permute.xlu0 %3404
      %3406 = vrot.lane.b32.xlu0 %v2544, 64
      %v3407 = vpop.permute.xlu0 %3406
      %3408 = vrot.lane.b32.xlu0 %v2545, 64
      %v3409 = vpop.permute.xlu0 %3408
      %3410 = vrot.lane.b32.xlu0 %v2546, 64
      %v3411 = vpop.permute.xlu0 %3410
      %3412 = vrot.lane.b32.xlu0 %v2547, 64
      %v3413 = vpop.permute.xlu0 %3412
      %v3415 = vsel %vm2548, %v3365, 0
      %v3418 = vsel %vm2548, %v3367, 0
      %v3421 = vsel %vm2548, %v3369, 0
      %v3424 = vsel %vm2548, %v3371, 0
      %v3427 = vsel %vm2548, %v3373, 0
      %v3430 = vsel %vm2548, %v3375, 0
      %v3433 = vsel %vm2548, %v3377, 0
      %v3436 = vsel %vm2548, %v3379, 0
      %v3439 = vsel %vm2548, %v3381, 0
      %v3442 = vsel %vm2548, %v3383, 0
      %v3445 = vsel %vm2548, %v3385, 0
      %v3448 = vsel %vm2548, %v3387, 0
      %v3451 = vsel %vm2548, %v3389, 0
      %v3454 = vsel %vm2548, %v3391, 0
      %v3457 = vsel %vm2548, %v3393, 0
      %v3460 = vsel %vm2548, %v3395, 0
      %v3463 = vsel %vm2548, %v3397, 0
      %v3466 = vsel %vm2548, %v3399, 0
      %v3469 = vsel %vm2548, %v3401, 0
      %v3472 = vsel %vm2548, %v3403, 0
      %v3475 = vsel %vm2548, %v3405, 0
      %v3478 = vsel %vm2548, %v3407, 0
      %v3481 = vsel %vm2548, %v3409, 0
      %v3484 = vsel %vm2548, %v3411, 0
      %v3487 = vsel %vm2548, %v3413, 0
      %3489 = vmatprep.subr.bf16.mxu0 0
      %3490 = vmatpush1.bf16.xpose.msra.mxu0 %v3418
      %3491 = vmatprep.subr.bf16.mxu0 0
      %3492 = vmatpush1.bf16.xpose.msra.mxu0 %v3421
      %3493 = vmatprep.subr.bf16.mxu0 0
      %3494 = vmatpush1.bf16.xpose.msra.mxu0 %v3424
      %3495 = vmatprep.subr.bf16.mxu0 0
      %3496 = vmatpush1.bf16.xpose.msra.mxu0 %v3427
      %3497 = vmatprep.subr.bf16.mxu0 0
      %3498 = vmatpush1.bf16.xpose.msra.mxu0 %v3430
      %3499 = vmatprep.subr.bf16.mxu0 0
      %3500 = vmatpush1.bf16.xpose.msra.mxu0 %v3433
      %3501 = vmatprep.subr.bf16.mxu0 0
      %3502 = vmatpush1.bf16.xpose.msra.mxu0 %v3436
      %3503 = vmatprep.subr.bf16.mxu0 0
      %3504 = vmatpush1.bf16.xpose.msra.mxu0 %v3439
      %3505 = vmatprep.subr.bf16.mxu0 0
      %3506 = vmatpush1.bf16.xpose.msra.mxu0 %v3442
      %3507 = vmatprep.subr.bf16.mxu0 0
      %3508 = vmatpush1.bf16.xpose.msra.mxu0 %v3445
      %3509 = vmatprep.subr.bf16.mxu0 0
      %3510 = vmatpush1.bf16.xpose.msra.mxu0 %v3448
      %3511 = vmatprep.subr.bf16.mxu0 0
      %3512 = vmatpush1.bf16.xpose.msra.mxu0 %v3451
      %3513 = vmatprep.subr.bf16.mxu0 0
      %3514 = vmatpush1.bf16.xpose.msra.mxu0 %v3454
      %3515 = vmatprep.subr.bf16.mxu0 0
      %3516 = vmatpush1.bf16.xpose.msra.mxu0 %v3457
      %3517 = vmatprep.subr.bf16.mxu0 0
      %3518 = vmatpush1.bf16.xpose.msra.mxu0 %v3460
      %3519 = vmatprep.subr.bf16.mxu0 0
      %3520 = vmatpush1.bf16.xpose.msra.mxu0 %v3463
      %3521 = vmatprep.mubr.bf16.mxu0 0
      %3522 = vmatmul.mubr.bf16.gmra.mrb[0].mxu0 %v3415
      %v3523 = vpop.f32.mrb[0].mxu0
      %v3524 = vadd.f32 %v2511, %v3523
      %v3525 = vpop.f32.mrb[0].mxu0
      %v3526 = vadd.f32 %v2515, %v3525
      %v3527 = vpop.f32.mrb[0].mxu0
      %v3528 = vadd.f32 %v2511, %v3527
      %v3529 = vpop.f32.mrb[0].mxu0
      %v3530 = vadd.f32 %v2515, %v3529
      %3531 = vdwg.mxu0
      %3532 = vmatprep.subr.bf16.mxu0 0
      %3533 = vmatpush1.bf16.xpose.msra.mxu0 %v3466
      %3534 = vmatprep.subr.bf16.mxu0 0
      %3535 = vmatpush1.bf16.xpose.msra.mxu0 %v3469
      %3536 = vmatprep.subr.bf16.mxu0 0
      %3537 = vmatpush1.bf16.xpose.msra.mxu0 %v3472
      %3538 = vmatprep.subr.bf16.mxu0 0
      %3539 = vmatpush1.bf16.xpose.msra.mxu0 %v3475
      %3540 = vmatprep.subr.bf16.mxu0 0
      %3541 = vmatpush1.bf16.xpose.msra.mxu0 %v3478
      %3542 = vmatprep.subr.bf16.mxu0 0
      %3543 = vmatpush1.bf16.xpose.msra.mxu0 %v3481
      %3544 = vmatprep.subr.bf16.mxu0 0
      %3545 = vmatpush1.bf16.xpose.msra.mxu0 %v3484
      %3546 = vmatprep.subr.bf16.mxu0 0
      %3547 = vmatpush1.bf16.xpose.msra.mxu0 %v3487
      %3548 = vmatprep.subr.bf16.mxu0 0
      %3549 = vmatpush1.bf16.xpose.msra.mxu0 0
      %3550 = vmatprep.subr.bf16.mxu0 0
      %3551 = vmatpush1.bf16.xpose.msra.mxu0 0
      %3552 = vmatprep.subr.bf16.mxu0 0
      %3553 = vmatpush1.bf16.xpose.msra.mxu0 0
      %3554 = vmatprep.subr.bf16.mxu0 0
      %3555 = vmatpush1.bf16.xpose.msra.mxu0 0
      %3556 = vmatprep.subr.bf16.mxu0 0
      %3557 = vmatpush1.bf16.xpose.msra.mxu0 0
      %3558 = vmatprep.subr.bf16.mxu0 0
      %3559 = vmatpush1.bf16.xpose.msra.mxu0 0
      %3560 = vmatprep.subr.bf16.mxu0 0
      %3561 = vmatpush1.bf16.xpose.msra.mxu0 0
      %3562 = vmatprep.subr.bf16.mxu0 0
      %3563 = vmatpush1.bf16.xpose.msra.mxu0 0
      %3564 = vmatprep.mubr.bf16.mxu0 0
      %3565 = vmatmul.mubr.bf16.gmra.mrb[0].mxu0 %v3415
      %v3566 = vpop.f32.mrb[0].mxu0
      %v3567 = vadd.f32 %v2519, %v3566
      %v3568 = vpop.f32.mrb[0].mxu0
      %v3569 = vpop.f32.mrb[0].mxu0
      %v3570 = vadd.f32 %v2519, %v3569
      %v3571 = vpop.f32.mrb[0].mxu0
      %3572 = vdwg.mxu0
      %v3573 = vmax.f32 %v3524, %v3567
      %v3574 = vmax.f32 %v3573, %v3526
      %3575 = vmax.xlane.f32.xlu0 %v3574
      %v3576 = vpop.xlane.xlu0 %3575
      %v3577 = vmax.f32 %v3528, %v3570
      %v3578 = vmax.f32 %v3577, %v3530
      %3579 = vmax.xlane.f32.xlu0 %v3578
      %v3580 = vpop.xlane.xlu0 %3579
      %v3581 = vsub.f32 %v3524, %v3576
      %v3582 = vsub.f32 %v3526, %v3576
      %v3583 = vsub.f32 %v3567, %v3576
      %v3584 = vsub.f32 %v3528, %v3580
      %v3585 = vsub.f32 %v3530, %v3580
      %v3586 = vsub.f32 %v3570, %v3580
      %v3587 = vmul.f32 %v3581, 1.442695
      %v3588 = vpow.pop %v3587
      %v3589 = vmul.f32 %v3582, 1.442695
      %v3590 = vpow.pop %v3589
      %v3591 = vmul.f32 %v3583, 1.442695
      %v3592 = vpow.pop %v3591
      %v3593 = vmul.f32 %v3584, 1.442695
      %v3594 = vpow.pop %v3593
      %v3595 = vmul.f32 %v3585, 1.442695
      %v3596 = vpow.pop %v3595
      %v3597 = vmul.f32 %v3586, 1.442695
      %v3598 = vpow.pop %v3597
      %v3599 = vadd.f32 %v3588, %v3590
      %v3600 = vadd.f32 %v3599, %v3592
      %3601 = vadd.xlane.f32.xlu0 %v3600
      %v3602 = vpop.xlane.xlu0 %3601
      %v3603 = vadd.f32 %v3594, %v3596
      %v3604 = vadd.f32 %v3603, %v3598
      %3605 = vadd.xlane.f32.xlu0 %v3604
      %v3606 = vpop.xlane.xlu0 %3605
      %v3607 = vrcp.pop %v3602
      %v3608 = vmul.f32 %v3588, %v3607
      %v3609 = vmul.f32 %v3590, %v3607
      %v3610 = vmul.f32 %v3592, %v3607
      %v3611 = vrcp.pop %v3606
      %v3612 = vmul.f32 %v3594, %v3611
      %v3613 = vmul.f32 %v3596, %v3611
      %v3614 = vmul.f32 %v3598, %v3611
      %v3615 = vlaneseq
      %v3616 = vshrl.u32 %v3615, 7
      %v3617 = vsub.s32 2, %v3616
      %v3618 = vrot.slane %v1054, %v3617
      %v3619 = vlaneseq
      %v3620 = vshrl.u32 %v3619, 7
      %v3621 = vsub.s32 2, %v3620
      %v3622 = vrot.slane %v1055, %v3621
      %v3623 = vlaneseq
      %v3624 = vshrl.u32 %v3623, 7
      %v3625 = vsub.s32 2, %v3624
      %v3626 = vrot.slane %v1056, %v3625
      %v3627 = vmul.f32 %v3618, %v3608
      %v3628 = vmul.f32 %v3622, %v3609
      %v3629 = vmul.f32 %v3626, %v3610
      %v3630 = vmul.f32 %v3618, %v3612
      %v3631 = vmul.f32 %v3622, %v3613
      %v3632 = vmul.f32 %v3626, %v3614
      %v3633 = vadd.f32 %v3177, %v3627
      %v3634 = vadd.f32 %v3178, %v3628
      %v3635 = vadd.f32 %v3179, %v3629
      %v3636 = vadd.f32 %v3180, %v3630
      %v3637 = vadd.f32 %v3181, %v3631
      %v3638 = vadd.f32 %v3182, %v3632
      %v3639 = vpack.c.bf16 %v3612, %v3608
      %v3640 = vpack.c.bf16 %v3613, %v3609
      %v3641 = vpack.c.bf16 %v3614, %v3610
      %3642 = vrot.lane.b32.xlu0 %v2777, 64
      %v3643 = vpop.permute.xlu0 %3642
      %3644 = vrot.lane.b32.xlu0 %v2778, 64
      %v3645 = vpop.permute.xlu0 %3644
      %3646 = vrot.lane.b32.xlu0 %v2779, 64
      %v3647 = vpop.permute.xlu0 %3646
      %3648 = vrot.lane.b32.xlu0 %v2780, 64
      %v3649 = vpop.permute.xlu0 %3648
      %3650 = vrot.lane.b32.xlu0 %v2781, 64
      %v3651 = vpop.permute.xlu0 %3650
      %3652 = vrot.lane.b32.xlu0 %v2782, 64
      %v3653 = vpop.permute.xlu0 %3652
      %3654 = vrot.lane.b32.xlu0 %v2783, 64
      %v3655 = vpop.permute.xlu0 %3654
      %3656 = vrot.lane.b32.xlu0 %v2784, 64
      %v3657 = vpop.permute.xlu0 %3656
      %3658 = vrot.lane.b32.xlu0 %v2785, 64
      %v3659 = vpop.permute.xlu0 %3658
      %3660 = vrot.lane.b32.xlu0 %v2786, 64
      %v3661 = vpop.permute.xlu0 %3660
      %3662 = vrot.lane.b32.xlu0 %v2787, 64
      %v3663 = vpop.permute.xlu0 %3662
      %3664 = vrot.lane.b32.xlu0 %v2788, 64
      %v3665 = vpop.permute.xlu0 %3664
      %3666 = vrot.lane.b32.xlu0 %v2789, 64
      %v3667 = vpop.permute.xlu0 %3666
      %3668 = vrot.lane.b32.xlu0 %v2790, 64
      %v3669 = vpop.permute.xlu0 %3668
      %3670 = vrot.lane.b32.xlu0 %v2791, 64
      %v3671 = vpop.permute.xlu0 %3670
      %3672 = vrot.lane.b32.xlu0 %v2792, 64
      %v3673 = vpop.permute.xlu0 %3672
      %3674 = vrot.lane.b32.xlu0 %v2793, 64
      %v3675 = vpop.permute.xlu0 %3674
      %3676 = vrot.lane.b32.xlu0 %v2794, 64
      %v3677 = vpop.permute.xlu0 %3676
      %3678 = vrot.lane.b32.xlu0 %v2795, 64
      %v3679 = vpop.permute.xlu0 %3678
      %3680 = vrot.lane.b32.xlu0 %v2796, 64
      %v3681 = vpop.permute.xlu0 %3680
      %3682 = vrot.lane.b32.xlu0 %v2797, 64
      %v3683 = vpop.permute.xlu0 %3682
      %3684 = vrot.lane.b32.xlu0 %v2798, 64
      %v3685 = vpop.permute.xlu0 %3684
      %3686 = vrot.lane.b32.xlu0 %v2799, 64
      %v3687 = vpop.permute.xlu0 %3686
      %3688 = vrot.lane.b32.xlu0 %v2800, 64
      %v3689 = vpop.permute.xlu0 %3688
      %3714 = vmatprep.subr.bf16.mxu0 0
      %3715 = vmatpush1.bf16.msra.mxu0 %v3643
      %3716 = vmatprep.subr.bf16.mxu0 0
      %3717 = vmatpush1.bf16.msra.mxu0 %v3645
      %3718 = vmatprep.subr.bf16.mxu0 0
      %3719 = vmatpush1.bf16.msra.mxu0 %v3647
      %3720 = vmatprep.subr.bf16.mxu0 0
      %3721 = vmatpush1.bf16.msra.mxu0 %v3649
      %3722 = vmatprep.subr.bf16.mxu0 0
      %3723 = vmatpush1.bf16.msra.mxu0 %v3651
      %3724 = vmatprep.subr.bf16.mxu0 0
      %3725 = vmatpush1.bf16.msra.mxu0 %v3653
      %3726 = vmatprep.subr.bf16.mxu0 0
      %3727 = vmatpush1.bf16.msra.mxu0 %v3655
      %3728 = vmatprep.subr.bf16.mxu0 0
      %3729 = vmatpush1.bf16.msra.mxu0 %v3657
      %3730 = vmatprep.subr.bf16.mxu0 0
      %3731 = vmatpush1.bf16.msra.mxu0 %v3659
      %3732 = vmatprep.subr.bf16.mxu0 0
      %3733 = vmatpush1.bf16.msra.mxu0 %v3661
      %3734 = vmatprep.subr.bf16.mxu0 0
      %3735 = vmatpush1.bf16.msra.mxu0 %v3663
      %3736 = vmatprep.subr.bf16.mxu0 0
      %3737 = vmatpush1.bf16.msra.mxu0 %v3665
      %3738 = vmatprep.subr.bf16.mxu0 0
      %3739 = vmatpush1.bf16.msra.mxu0 %v3667
      %3740 = vmatprep.subr.bf16.mxu0 0
      %3741 = vmatpush1.bf16.msra.mxu0 %v3669
      %3742 = vmatprep.subr.bf16.mxu0 0
      %3743 = vmatpush1.bf16.msra.mxu0 %v3671
      %3744 = vmatprep.subr.bf16.mxu0 0
      %3745 = vmatpush1.bf16.msra.mxu0 %v3673
      %3746 = vmatprep.mubr.bf16.mxu0 %v3640
      %3747 = vmatmul.mubr.bf16.gmra.mrb[0].mxu0 %v3639
      %v3748 = vpop.f32.mrb[0].mxu0
      %v3749 = vadd.f32 0.0, %v3748
      %v3750 = vpop.f32.mrb[0].mxu0
      %v3751 = vpop.f32.mrb[0].mxu0
      %v3752 = vadd.f32 0.0, %v3751
      %v3753 = vpop.f32.mrb[0].mxu0
      %3754 = vdwg.mxu0
      %3755 = vmatprep.subr.bf16.mxu0 0
      %3756 = vmatpush1.bf16.msra.mxu0 %v3675
      %3757 = vmatprep.subr.bf16.mxu0 0
      %3758 = vmatpush1.bf16.msra.mxu0 %v3677
      %3759 = vmatprep.subr.bf16.mxu0 0
      %3760 = vmatpush1.bf16.msra.mxu0 %v3679
      %3761 = vmatprep.subr.bf16.mxu0 0
      %3762 = vmatpush1.bf16.msra.mxu0 %v3681
      %3763 = vmatprep.subr.bf16.mxu0 0
      %3764 = vmatpush1.bf16.msra.mxu0 %v3683
      %3765 = vmatprep.subr.bf16.mxu0 0
      %3766 = vmatpush1.bf16.msra.mxu0 %v3685
      %3767 = vmatprep.subr.bf16.mxu0 0
      %3768 = vmatpush1.bf16.msra.mxu0 %v3687
      %3769 = vmatprep.subr.bf16.mxu0 0
      %3770 = vmatpush1.bf16.msra.mxu0 %v3689
      %3771 = vmatprep.subr.bf16.mxu0 0
      %3772 = vmatpush1.bf16.msra.mxu0 0
      %3773 = vmatprep.subr.bf16.mxu0 0
      %3774 = vmatpush1.bf16.msra.mxu0 0
      %3775 = vmatprep.subr.bf16.mxu0 0
      %3776 = vmatpush1.bf16.msra.mxu0 0
      %3777 = vmatprep.subr.bf16.mxu0 0
      %3778 = vmatpush1.bf16.msra.mxu0 0
      %3779 = vmatprep.subr.bf16.mxu0 0
      %3780 = vmatpush1.bf16.msra.mxu0 0
      %3781 = vmatprep.subr.bf16.mxu0 0
      %3782 = vmatpush1.bf16.msra.mxu0 0
      %3783 = vmatprep.subr.bf16.mxu0 0
      %3784 = vmatpush1.bf16.msra.mxu0 0
      %3785 = vmatprep.subr.bf16.mxu0 0
      %3786 = vmatpush1.bf16.msra.mxu0 0
      %3787 = vmatprep.mubr.bf16.mxu0 0
      %3788 = vmatmul.mubr.bf16.gmra.mrb[0].mxu0 %v3641
      %v3789 = vpop.f32.mrb[0].mxu0
      %v3790 = vadd.f32 %v3749, %v3789
      %v3791 = vpop.f32.mrb[0].mxu0
      %v3792 = vpop.f32.mrb[0].mxu0
      %v3793 = vadd.f32 %v3752, %v3792
      %v3794 = vpop.f32.mrb[0].mxu0
      %3795 = vdwg.mxu0
      %3796 = vrot.lane.b32.xlu0 %v2523, 32
      %v3797 = vpop.permute.xlu0 %3796
      %3798 = vrot.lane.b32.xlu0 %v2524, 32
      %v3799 = vpop.permute.xlu0 %3798
      %3800 = vrot.lane.b32.xlu0 %v2525, 32
      %v3801 = vpop.permute.xlu0 %3800
      %3802 = vrot.lane.b32.xlu0 %v2526, 32
      %v3803 = vpop.permute.xlu0 %3802
      %3804 = vrot.lane.b32.xlu0 %v2527, 32
      %v3805 = vpop.permute.xlu0 %3804
      %3806 = vrot.lane.b32.xlu0 %v2528, 32
      %v3807 = vpop.permute.xlu0 %3806
      %3808 = vrot.lane.b32.xlu0 %v2529, 32
      %v3809 = vpop.permute.xlu0 %3808
      %3810 = vrot.lane.b32.xlu0 %v2530, 32
      %v3811 = vpop.permute.xlu0 %3810
      %3812 = vrot.lane.b32.xlu0 %v2531, 32
      %v3813 = vpop.permute.xlu0 %3812
      %3814 = vrot.lane.b32.xlu0 %v2532, 32
      %v3815 = vpop.permute.xlu0 %3814
      %3816 = vrot.lane.b32.xlu0 %v2533, 32
      %v3817 = vpop.permute.xlu0 %3816
      %3818 = vrot.lane.b32.xlu0 %v2534, 32
      %v3819 = vpop.permute.xlu0 %3818
      %3820 = vrot.lane.b32.xlu0 %v2535, 32
      %v3821 = vpop.permute.xlu0 %3820
      %3822 = vrot.lane.b32.xlu0 %v2536, 32
      %v3823 = vpop.permute.xlu0 %3822
      %3824 = vrot.lane.b32.xlu0 %v2537, 32
      %v3825 = vpop.permute.xlu0 %3824
      %3826 = vrot.lane.b32.xlu0 %v2538, 32
      %v3827 = vpop.permute.xlu0 %3826
      %3828 = vrot.lane.b32.xlu0 %v2539, 32
      %v3829 = vpop.permute.xlu0 %3828
      %3830 = vrot.lane.b32.xlu0 %v2540, 32
      %v3831 = vpop.permute.xlu0 %3830
      %3832 = vrot.lane.b32.xlu0 %v2541, 32
      %v3833 = vpop.permute.xlu0 %3832
      %3834 = vrot.lane.b32.xlu0 %v2542, 32
      %v3835 = vpop.permute.xlu0 %3834
      %3836 = vrot.lane.b32.xlu0 %v2543, 32
      %v3837 = vpop.permute.xlu0 %3836
      %3838 = vrot.lane.b32.xlu0 %v2544, 32
      %v3839 = vpop.permute.xlu0 %3838
      %3840 = vrot.lane.b32.xlu0 %v2545, 32
      %v3841 = vpop.permute.xlu0 %3840
      %3842 = vrot.lane.b32.xlu0 %v2546, 32
      %v3843 = vpop.permute.xlu0 %3842
      %3844 = vrot.lane.b32.xlu0 %v2547, 32
      %v3845 = vpop.permute.xlu0 %3844
      %v3847 = vsel %vm2548, %v3797, 0
      %v3850 = vsel %vm2548, %v3799, 0
      %v3853 = vsel %vm2548, %v3801, 0
      %v3856 = vsel %vm2548, %v3803, 0
      %v3859 = vsel %vm2548, %v3805, 0
      %v3862 = vsel %vm2548, %v3807, 0
      %v3865 = vsel %vm2548, %v3809, 0
      %v3868 = vsel %vm2548, %v3811, 0
      %v3871 = vsel %vm2548, %v3813, 0
      %v3874 = vsel %vm2548, %v3815, 0
      %v3877 = vsel %vm2548, %v3817, 0
      %v3880 = vsel %vm2548, %v3819, 0
      %v3883 = vsel %vm2548, %v3821, 0
      %v3886 = vsel %vm2548, %v3823, 0
      %v3889 = vsel %vm2548, %v3825, 0
      %v3892 = vsel %vm2548, %v3827, 0
      %v3895 = vsel %vm2548, %v3829, 0
      %v3898 = vsel %vm2548, %v3831, 0
      %v3901 = vsel %vm2548, %v3833, 0
      %v3904 = vsel %vm2548, %v3835, 0
      %v3907 = vsel %vm2548, %v3837, 0
      %v3910 = vsel %vm2548, %v3839, 0
      %v3913 = vsel %vm2548, %v3841, 0
      %v3916 = vsel %vm2548, %v3843, 0
      %v3919 = vsel %vm2548, %v3845, 0
      %3921 = vmatprep.subr.bf16.mxu0 0
      %3922 = vmatpush1.bf16.xpose.msra.mxu0 %v3850
      %3923 = vmatprep.subr.bf16.mxu0 0
      %3924 = vmatpush1.bf16.xpose.msra.mxu0 %v3853
      %3925 = vmatprep.subr.bf16.mxu0 0
      %3926 = vmatpush1.bf16.xpose.msra.mxu0 %v3856
      %3927 = vmatprep.subr.bf16.mxu0 0
      %3928 = vmatpush1.bf16.xpose.msra.mxu0 %v3859
      %3929 = vmatprep.subr.bf16.mxu0 0
      %3930 = vmatpush1.bf16.xpose.msra.mxu0 %v3862
      %3931 = vmatprep.subr.bf16.mxu0 0
      %3932 = vmatpush1.bf16.xpose.msra.mxu0 %v3865
      %3933 = vmatprep.subr.bf16.mxu0 0
      %3934 = vmatpush1.bf16.xpose.msra.mxu0 %v3868
      %3935 = vmatprep.subr.bf16.mxu0 0
      %3936 = vmatpush1.bf16.xpose.msra.mxu0 %v3871
      %3937 = vmatprep.subr.bf16.mxu0 0
      %3938 = vmatpush1.bf16.xpose.msra.mxu0 %v3874
      %3939 = vmatprep.subr.bf16.mxu0 0
      %3940 = vmatpush1.bf16.xpose.msra.mxu0 %v3877
      %3941 = vmatprep.subr.bf16.mxu0 0
      %3942 = vmatpush1.bf16.xpose.msra.mxu0 %v3880
      %3943 = vmatprep.subr.bf16.mxu0 0
      %3944 = vmatpush1.bf16.xpose.msra.mxu0 %v3883
      %3945 = vmatprep.subr.bf16.mxu0 0
      %3946 = vmatpush1.bf16.xpose.msra.mxu0 %v3886
      %3947 = vmatprep.subr.bf16.mxu0 0
      %3948 = vmatpush1.bf16.xpose.msra.mxu0 %v3889
      %3949 = vmatprep.subr.bf16.mxu0 0
      %3950 = vmatpush1.bf16.xpose.msra.mxu0 %v3892
      %3951 = vmatprep.subr.bf16.mxu0 0
      %3952 = vmatpush1.bf16.xpose.msra.mxu0 %v3895
      %3953 = vmatprep.mubr.bf16.mxu0 0
      %3954 = vmatmul.mubr.bf16.gmra.mrb[0].mxu0 %v3847
      %v3955 = vpop.f32.mrb[0].mxu0
      %v3956 = vadd.f32 %v2511, %v3955
      %v3957 = vpop.f32.mrb[0].mxu0
      %v3958 = vadd.f32 %v2515, %v3957
      %v3959 = vpop.f32.mrb[0].mxu0
      %v3960 = vadd.f32 %v2511, %v3959
      %v3961 = vpop.f32.mrb[0].mxu0
      %v3962 = vadd.f32 %v2515, %v3961
      %3963 = vdwg.mxu0
      %3964 = vmatprep.subr.bf16.mxu0 0
      %3965 = vmatpush1.bf16.xpose.msra.mxu0 %v3898
      %3966 = vmatprep.subr.bf16.mxu0 0
      %3967 = vmatpush1.bf16.xpose.msra.mxu0 %v3901
      %3968 = vmatprep.subr.bf16.mxu0 0
      %3969 = vmatpush1.bf16.xpose.msra.mxu0 %v3904
      %3970 = vmatprep.subr.bf16.mxu0 0
      %3971 = vmatpush1.bf16.xpose.msra.mxu0 %v3907
      %3972 = vmatprep.subr.bf16.mxu0 0
      %3973 = vmatpush1.bf16.xpose.msra.mxu0 %v3910
      %3974 = vmatprep.subr.bf16.mxu0 0
      %3975 = vmatpush1.bf16.xpose.msra.mxu0 %v3913
      %3976 = vmatprep.subr.bf16.mxu0 0
      %3977 = vmatpush1.bf16.xpose.msra.mxu0 %v3916
      %3978 = vmatprep.subr.bf16.mxu0 0
      %3979 = vmatpush1.bf16.xpose.msra.mxu0 %v3919
      %3980 = vmatprep.subr.bf16.mxu0 0
      %3981 = vmatpush1.bf16.xpose.msra.mxu0 0
      %3982 = vmatprep.subr.bf16.mxu0 0
      %3983 = vmatpush1.bf16.xpose.msra.mxu0 0
      %3984 = vmatprep.subr.bf16.mxu0 0
      %3985 = vmatpush1.bf16.xpose.msra.mxu0 0
      %3986 = vmatprep.subr.bf16.mxu0 0
      %3987 = vmatpush1.bf16.xpose.msra.mxu0 0
      %3988 = vmatprep.subr.bf16.mxu0 0
      %3989 = vmatpush1.bf16.xpose.msra.mxu0 0
      %3990 = vmatprep.subr.bf16.mxu0 0
      %3991 = vmatpush1.bf16.xpose.msra.mxu0 0
      %3992 = vmatprep.subr.bf16.mxu0 0
      %3993 = vmatpush1.bf16.xpose.msra.mxu0 0
      %3994 = vmatprep.subr.bf16.mxu0 0
      %3995 = vmatpush1.bf16.xpose.msra.mxu0 0
      %3996 = vmatprep.mubr.bf16.mxu0 0
      %3997 = vmatmul.mubr.bf16.gmra.mrb[0].mxu0 %v3847
      %v3998 = vpop.f32.mrb[0].mxu0
      %v3999 = vadd.f32 %v2519, %v3998
      %v4000 = vpop.f32.mrb[0].mxu0
      %v4001 = vpop.f32.mrb[0].mxu0
      %v4002 = vadd.f32 %v2519, %v4001
      %v4003 = vpop.f32.mrb[0].mxu0
      %4004 = vdwg.mxu0
      %v4005 = vmax.f32 %v3956, %v3999
      %v4006 = vmax.f32 %v4005, %v3958
      %4007 = vmax.xlane.f32.xlu0 %v4006
      %v4008 = vpop.xlane.xlu0 %4007
      %v4009 = vmax.f32 %v3960, %v4002
      %v4010 = vmax.f32 %v4009, %v3962
      %4011 = vmax.xlane.f32.xlu0 %v4010
      %v4012 = vpop.xlane.xlu0 %4011
      %v4013 = vsub.f32 %v3956, %v4008
      %v4014 = vsub.f32 %v3958, %v4008
      %v4015 = vsub.f32 %v3999, %v4008
      %v4016 = vsub.f32 %v3960, %v4012
      %v4017 = vsub.f32 %v3962, %v4012
      %v4018 = vsub.f32 %v4002, %v4012
      %v4019 = vmul.f32 %v4013, 1.442695
      %v4020 = vpow.pop %v4019
      %v4021 = vmul.f32 %v4014, 1.442695
      %v4022 = vpow.pop %v4021
      %v4023 = vmul.f32 %v4015, 1.442695
      %v4024 = vpow.pop %v4023
      %v4025 = vmul.f32 %v4016, 1.442695
      %v4026 = vpow.pop %v4025
      %v4027 = vmul.f32 %v4017, 1.442695
      %v4028 = vpow.pop %v4027
      %v4029 = vmul.f32 %v4018, 1.442695
      %v4030 = vpow.pop %v4029
      %v4031 = vadd.f32 %v4020, %v4022
      %v4032 = vadd.f32 %v4031, %v4024
      %4033 = vadd.xlane.f32.xlu0 %v4032
      %v4034 = vpop.xlane.xlu0 %4033
      %v4035 = vadd.f32 %v4026, %v4028
      %v4036 = vadd.f32 %v4035, %v4030
      %4037 = vadd.xlane.f32.xlu0 %v4036
      %v4038 = vpop.xlane.xlu0 %4037
      %v4039 = vrcp.pop %v4034
      %v4040 = vmul.f32 %v4020, %v4039
      %v4041 = vmul.f32 %v4022, %v4039
      %v4042 = vmul.f32 %v4024, %v4039
      %v4043 = vrcp.pop %v4038
      %v4044 = vmul.f32 %v4026, %v4043
      %v4045 = vmul.f32 %v4028, %v4043
      %v4046 = vmul.f32 %v4030, %v4043
      %v4047 = vlaneseq
      %v4048 = vshrl.u32 %v4047, 7
      %v4049 = vsub.s32 3, %v4048
      %v4050 = vrot.slane %v1054, %v4049
      %v4051 = vlaneseq
      %v4052 = vshrl.u32 %v4051, 7
      %v4053 = vsub.s32 3, %v4052
      %v4054 = vrot.slane %v1055, %v4053
      %v4055 = vlaneseq
      %v4056 = vshrl.u32 %v4055, 7
      %v4057 = vsub.s32 3, %v4056
      %v4058 = vrot.slane %v1056, %v4057
      %v4059 = vmul.f32 %v4050, %v4040
      %v4060 = vmul.f32 %v4054, %v4041
      %v4061 = vmul.f32 %v4058, %v4042
      %v4062 = vmul.f32 %v4050, %v4044
      %v4063 = vmul.f32 %v4054, %v4045
      %v4064 = vmul.f32 %v4058, %v4046
      %v4065 = vadd.f32 %v3633, %v4059
      %v4066 = vadd.f32 %v3634, %v4060
      %v4067 = vadd.f32 %v3635, %v4061
      %v4068 = vadd.f32 %v3636, %v4062
      %v4069 = vadd.f32 %v3637, %v4063
      %v4070 = vadd.f32 %v3638, %v4064
      %v4071 = vpack.c.bf16 %v4044, %v4040
      %v4072 = vpack.c.bf16 %v4045, %v4041
      %v4073 = vpack.c.bf16 %v4046, %v4042
      %4074 = vrot.lane.b32.xlu0 %v2777, 32
      %v4075 = vpop.permute.xlu0 %4074
      %4076 = vrot.lane.b32.xlu0 %v2778, 32
      %v4077 = vpop.permute.xlu0 %4076
      %4078 = vrot.lane.b32.xlu0 %v2779, 32
      %v4079 = vpop.permute.xlu0 %4078
      %4080 = vrot.lane.b32.xlu0 %v2780, 32
      %v4081 = vpop.permute.xlu0 %4080
      %4082 = vrot.lane.b32.xlu0 %v2781, 32
      %v4083 = vpop.permute.xlu0 %4082
      %4084 = vrot.lane.b32.xlu0 %v2782, 32
      %v4085 = vpop.permute.xlu0 %4084
      %4086 = vrot.lane.b32.xlu0 %v2783, 32
      %v4087 = vpop.permute.xlu0 %4086
      %4088 = vrot.lane.b32.xlu0 %v2784, 32
      %v4089 = vpop.permute.xlu0 %4088
      %4090 = vrot.lane.b32.xlu0 %v2785, 32
      %v4091 = vpop.permute.xlu0 %4090
      %4092 = vrot.lane.b32.xlu0 %v2786, 32
      %v4093 = vpop.permute.xlu0 %4092
      %4094 = vrot.lane.b32.xlu0 %v2787, 32
      %v4095 = vpop.permute.xlu0 %4094
      %4096 = vrot.lane.b32.xlu0 %v2788, 32
      %v4097 = vpop.permute.xlu0 %4096
      %4098 = vrot.lane.b32.xlu0 %v2789, 32
      %v4099 = vpop.permute.xlu0 %4098
      %4100 = vrot.lane.b32.xlu0 %v2790, 32
      %v4101 = vpop.permute.xlu0 %4100
      %4102 = vrot.lane.b32.xlu0 %v2791, 32
      %v4103 = vpop.permute.xlu0 %4102
      %4104 = vrot.lane.b32.xlu0 %v2792, 32
      %v4105 = vpop.permute.xlu0 %4104
      %4106 = vrot.lane.b32.xlu0 %v2793, 32
      %v4107 = vpop.permute.xlu0 %4106
      %4108 = vrot.lane.b32.xlu0 %v2794, 32
      %v4109 = vpop.permute.xlu0 %4108
      %4110 = vrot.lane.b32.xlu0 %v2795, 32
      %v4111 = vpop.permute.xlu0 %4110
      %4112 = vrot.lane.b32.xlu0 %v2796, 32
      %v4113 = vpop.permute.xlu0 %4112
      %4114 = vrot.lane.b32.xlu0 %v2797, 32
      %v4115 = vpop.permute.xlu0 %4114
      %4116 = vrot.lane.b32.xlu0 %v2798, 32
      %v4117 = vpop.permute.xlu0 %4116
      %4118 = vrot.lane.b32.xlu0 %v2799, 32
      %v4119 = vpop.permute.xlu0 %4118
      %4120 = vrot.lane.b32.xlu0 %v2800, 32
      %v4121 = vpop.permute.xlu0 %4120
      %4146 = vmatprep.subr.bf16.mxu0 0
      %4147 = vmatpush1.bf16.msra.mxu0 %v4075
      %4148 = vmatprep.subr.bf16.mxu0 0
      %4149 = vmatpush1.bf16.msra.mxu0 %v4077
      %4150 = vmatprep.subr.bf16.mxu0 0
      %4151 = vmatpush1.bf16.msra.mxu0 %v4079
      %4152 = vmatprep.subr.bf16.mxu0 0
      %4153 = vmatpush1.bf16.msra.mxu0 %v4081
      %4154 = vmatprep.subr.bf16.mxu0 0
      %4155 = vmatpush1.bf16.msra.mxu0 %v4083
      %4156 = vmatprep.subr.bf16.mxu0 0
      %4157 = vmatpush1.bf16.msra.mxu0 %v4085
      %4158 = vmatprep.subr.bf16.mxu0 0
      %4159 = vmatpush1.bf16.msra.mxu0 %v4087
      %4160 = vmatprep.subr.bf16.mxu0 0
      %4161 = vmatpush1.bf16.msra.mxu0 %v4089
      %4162 = vmatprep.subr.bf16.mxu0 0
      %4163 = vmatpush1.bf16.msra.mxu0 %v4091
      %4164 = vmatprep.subr.bf16.mxu0 0
      %4165 = vmatpush1.bf16.msra.mxu0 %v4093
      %4166 = vmatprep.subr.bf16.mxu0 0
      %4167 = vmatpush1.bf16.msra.mxu0 %v4095
      %4168 = vmatprep.subr.bf16.mxu0 0
      %4169 = vmatpush1.bf16.msra.mxu0 %v4097
      %4170 = vmatprep.subr.bf16.mxu0 0
      %4171 = vmatpush1.bf16.msra.mxu0 %v4099
      %4172 = vmatprep.subr.bf16.mxu0 0
      %4173 = vmatpush1.bf16.msra.mxu0 %v4101
      %4174 = vmatprep.subr.bf16.mxu0 0
      %4175 = vmatpush1.bf16.msra.mxu0 %v4103
      %4176 = vmatprep.subr.bf16.mxu0 0
      %4177 = vmatpush1.bf16.msra.mxu0 %v4105
      %4178 = vmatprep.mubr.bf16.mxu0 %v4072
      %4179 = vmatmul.mubr.bf16.gmra.mrb[0].mxu0 %v4071
      %v4180 = vpop.f32.mrb[0].mxu0
      %v4181 = vadd.f32 0.0, %v4180
      %v4182 = vpop.f32.mrb[0].mxu0
      %v4183 = vpop.f32.mrb[0].mxu0
      %v4184 = vadd.f32 0.0, %v4183
      %v4185 = vpop.f32.mrb[0].mxu0
      %4186 = vdwg.mxu0
      %4187 = vmatprep.subr.bf16.mxu0 0
      %4188 = vmatpush1.bf16.msra.mxu0 %v4107
      %4189 = vmatprep.subr.bf16.mxu0 0
      %4190 = vmatpush1.bf16.msra.mxu0 %v4109
      %4191 = vmatprep.subr.bf16.mxu0 0
      %4192 = vmatpush1.bf16.msra.mxu0 %v4111
      %4193 = vmatprep.subr.bf16.mxu0 0
      %4194 = vmatpush1.bf16.msra.mxu0 %v4113
      %4195 = vmatprep.subr.bf16.mxu0 0
      %4196 = vmatpush1.bf16.msra.mxu0 %v4115
      %4197 = vmatprep.subr.bf16.mxu0 0
      %4198 = vmatpush1.bf16.msra.mxu0 %v4117
      %4199 = vmatprep.subr.bf16.mxu0 0
      %4200 = vmatpush1.bf16.msra.mxu0 %v4119
      %4201 = vmatprep.subr.bf16.mxu0 0
      %4202 = vmatpush1.bf16.msra.mxu0 %v4121
      %4203 = vmatprep.subr.bf16.mxu0 0
      %4204 = vmatpush1.bf16.msra.mxu0 0
      %4205 = vmatprep.subr.bf16.mxu0 0
      %4206 = vmatpush1.bf16.msra.mxu0 0
      %4207 = vmatprep.subr.bf16.mxu0 0
      %4208 = vmatpush1.bf16.msra.mxu0 0
      %4209 = vmatprep.subr.bf16.mxu0 0
      %4210 = vmatpush1.bf16.msra.mxu0 0
      %4211 = vmatprep.subr.bf16.mxu0 0
      %4212 = vmatpush1.bf16.msra.mxu0 0
      %4213 = vmatprep.subr.bf16.mxu0 0
      %4214 = vmatpush1.bf16.msra.mxu0 0
      %4215 = vmatprep.subr.bf16.mxu0 0
      %4216 = vmatpush1.bf16.msra.mxu0 0
      %4217 = vmatprep.subr.bf16.mxu0 0
      %4218 = vmatpush1.bf16.msra.mxu0 0
      %4219 = vmatprep.mubr.bf16.mxu0 0
      %4220 = vmatmul.mubr.bf16.gmra.mrb[0].mxu0 %v4073
      %v4221 = vpop.f32.mrb[0].mxu0
      %v4222 = vadd.f32 %v4181, %v4221
      %v4223 = vpop.f32.mrb[0].mxu0
      %v4224 = vpop.f32.mrb[0].mxu0
      %v4225 = vadd.f32 %v4184, %v4224
      %v4226 = vpop.f32.mrb[0].mxu0
      %4227 = vdwg.mxu0
      %v4228 = vpack.c.bf16 %v1313, %v1311
      %v4229 = vpack.c.bf16 %v2001, %v1997
      %v4230 = vpack.c.bf16 %v2011, %v2007
      %v4231 = vpack.c.bf16 %v2021, %v2017
      %v4232 = vpack.c.bf16 %v2031, %v2027
      %v4233 = vpack.c.bf16 %v2041, %v2037
      %v4234 = vpack.c.bf16 %v2051, %v2047
      %v4235 = vpack.c.bf16 %v2061, %v2057
      %v4236 = vpack.c.bf16 %v2071, %v2067
      %v4237 = vpack.c.bf16 %v2081, %v2077
      %v4238 = vpack.c.bf16 %v2091, %v2087
      %v4239 = vpack.c.bf16 %v2101, %v2097
      %v4240 = vpack.c.bf16 %v2111, %v2107
      %v4241 = vpack.c.bf16 %v2121, %v2117
      %v4242 = vpack.c.bf16 %v2131, %v2127
      %v4243 = vpack.c.bf16 %v2141, %v2137
      %v4244 = vpack.c.bf16 %v2151, %v2147
      %v4245 = vpack.c.bf16 %v2161, %v2157
      %v4246 = vpack.c.bf16 %v2171, %v2167
      %v4247 = vpack.c.bf16 %v2181, %v2177
      %v4248 = vpack.c.bf16 %v2191, %v2187
      %v4249 = vpack.c.bf16 %v2201, %v2197
      %v4250 = vpack.c.bf16 %v2211, %v2207
      %v4251 = vpack.c.bf16 %v2221, %v2217
      %v4252 = vpack.c.bf16 %v2231, %v2227
      %v4254 = vsel %vm2548, %v4228, 0
      %v4257 = vsel %vm2548, %v4229, 0
      %v4260 = vsel %vm2548, %v4230, 0
      %v4263 = vsel %vm2548, %v4231, 0
      %v4266 = vsel %vm2548, %v4232, 0
      %v4269 = vsel %vm2548, %v4233, 0
      %v4272 = vsel %vm2548, %v4234, 0
      %v4275 = vsel %vm2548, %v4235, 0
      %v4278 = vsel %vm2548, %v4236, 0
      %v4281 = vsel %vm2548, %v4237, 0
      %v4284 = vsel %vm2548, %v4238, 0
      %v4287 = vsel %vm2548, %v4239, 0
      %v4290 = vsel %vm2548, %v4240, 0
      %v4293 = vsel %vm2548, %v4241, 0
      %v4296 = vsel %vm2548, %v4242, 0
      %v4299 = vsel %vm2548, %v4243, 0
      %v4302 = vsel %vm2548, %v4244, 0
      %v4305 = vsel %vm2548, %v4245, 0
      %v4308 = vsel %vm2548, %v4246, 0
      %v4311 = vsel %vm2548, %v4247, 0
      %v4314 = vsel %vm2548, %v4248, 0
      %v4317 = vsel %vm2548, %v4249, 0
      %v4320 = vsel %vm2548, %v4250, 0
      %v4323 = vsel %vm2548, %v4251, 0
      %v4326 = vsel %vm2548, %v4252, 0
      %4328 = vmatprep.subr.bf16.mxu0 0
      %4329 = vmatpush1.bf16.xpose.msra.mxu0 %v4257
      %4330 = vmatprep.subr.bf16.mxu0 0
      %4331 = vmatpush1.bf16.xpose.msra.mxu0 %v4260
      %4332 = vmatprep.subr.bf16.mxu0 0
      %4333 = vmatpush1.bf16.xpose.msra.mxu0 %v4263
      %4334 = vmatprep.subr.bf16.mxu0 0
      %4335 = vmatpush1.bf16.xpose.msra.mxu0 %v4266
      %4336 = vmatprep.subr.bf16.mxu0 0
      %4337 = vmatpush1.bf16.xpose.msra.mxu0 %v4269
      %4338 = vmatprep.subr.bf16.mxu0 0
      %4339 = vmatpush1.bf16.xpose.msra.mxu0 %v4272
      %4340 = vmatprep.subr.bf16.mxu0 0
      %4341 = vmatpush1.bf16.xpose.msra.mxu0 %v4275
      %4342 = vmatprep.subr.bf16.mxu0 0
      %4343 = vmatpush1.bf16.xpose.msra.mxu0 %v4278
      %4344 = vmatprep.subr.bf16.mxu0 0
      %4345 = vmatpush1.bf16.xpose.msra.mxu0 %v4281
      %4346 = vmatprep.subr.bf16.mxu0 0
      %4347 = vmatpush1.bf16.xpose.msra.mxu0 %v4284
      %4348 = vmatprep.subr.bf16.mxu0 0
      %4349 = vmatpush1.bf16.xpose.msra.mxu0 %v4287
      %4350 = vmatprep.subr.bf16.mxu0 0
      %4351 = vmatpush1.bf16.xpose.msra.mxu0 %v4290
      %4352 = vmatprep.subr.bf16.mxu0 0
      %4353 = vmatpush1.bf16.xpose.msra.mxu0 %v4293
      %4354 = vmatprep.subr.bf16.mxu0 0
      %4355 = vmatpush1.bf16.xpose.msra.mxu0 %v4296
      %4356 = vmatprep.subr.bf16.mxu0 0
      %4357 = vmatpush1.bf16.xpose.msra.mxu0 %v4299
      %4358 = vmatprep.subr.bf16.mxu0 0
      %4359 = vmatpush1.bf16.xpose.msra.mxu0 %v4302
      %4360 = vmatprep.mubr.bf16.mxu0 0
      %4361 = vmatmul.mubr.bf16.gmra.mrb[0].mxu0 %v4254
      %v4362 = vpop.f32.mrb[0].mxu0
      %v4363 = vadd.f32 %v2511, %v4362
      %v4364 = vpop.f32.mrb[0].mxu0
      %v4365 = vadd.f32 %v2515, %v4364
      %v4366 = vpop.f32.mrb[0].mxu0
      %v4367 = vadd.f32 %v2511, %v4366
      %v4368 = vpop.f32.mrb[0].mxu0
      %v4369 = vadd.f32 %v2515, %v4368
      %4370 = vdwg.mxu0
      %4371 = vmatprep.subr.bf16.mxu0 0
      %4372 = vmatpush1.bf16.xpose.msra.mxu0 %v4305
      %4373 = vmatprep.subr.bf16.mxu0 0
      %4374 = vmatpush1.bf16.xpose.msra.mxu0 %v4308
      %4375 = vmatprep.subr.bf16.mxu0 0
      %4376 = vmatpush1.bf16.xpose.msra.mxu0 %v4311
      %4377 = vmatprep.subr.bf16.mxu0 0
      %4378 = vmatpush1.bf16.xpose.msra.mxu0 %v4314
      %4379 = vmatprep.subr.bf16.mxu0 0
      %4380 = vmatpush1.bf16.xpose.msra.mxu0 %v4317
      %4381 = vmatprep.subr.bf16.mxu0 0
      %4382 = vmatpush1.bf16.xpose.msra.mxu0 %v4320
      %4383 = vmatprep.subr.bf16.mxu0 0
      %4384 = vmatpush1.bf16.xpose.msra.mxu0 %v4323
      %4385 = vmatprep.subr.bf16.mxu0 0
      %4386 = vmatpush1.bf16.xpose.msra.mxu0 %v4326
      %4387 = vmatprep.subr.bf16.mxu0 0
      %4388 = vmatpush1.bf16.xpose.msra.mxu0 0
      %4389 = vmatprep.subr.bf16.mxu0 0
      %4390 = vmatpush1.bf16.xpose.msra.mxu0 0
      %4391 = vmatprep.subr.bf16.mxu0 0
      %4392 = vmatpush1.bf16.xpose.msra.mxu0 0
      %4393 = vmatprep.subr.bf16.mxu0 0
      %4394 = vmatpush1.bf16.xpose.msra.mxu0 0
      %4395 = vmatprep.subr.bf16.mxu0 0
      %4396 = vmatpush1.bf16.xpose.msra.mxu0 0
      %4397 = vmatprep.subr.bf16.mxu0 0
      %4398 = vmatpush1.bf16.xpose.msra.mxu0 0
      %4399 = vmatprep.subr.bf16.mxu0 0
      %4400 = vmatpush1.bf16.xpose.msra.mxu0 0
      %4401 = vmatprep.subr.bf16.mxu0 0
      %4402 = vmatpush1.bf16.xpose.msra.mxu0 0
      %4403 = vmatprep.mubr.bf16.mxu0 0
      %4404 = vmatmul.mubr.bf16.gmra.mrb[0].mxu0 %v4254
      %v4405 = vpop.f32.mrb[0].mxu0
      %v4406 = vadd.f32 %v2519, %v4405
      %v4407 = vpop.f32.mrb[0].mxu0
      %v4408 = vpop.f32.mrb[0].mxu0
      %v4409 = vadd.f32 %v2519, %v4408
      %v4410 = vpop.f32.mrb[0].mxu0
      %4411 = vdwg.mxu0
      %v4412 = vmax.f32 %v4363, %v4406
      %v4413 = vmax.f32 %v4412, %v4365
      %4414 = vmax.xlane.f32.xlu0 %v4413
      %v4415 = vpop.xlane.xlu0 %4414
      %v4416 = vmax.f32 %v4367, %v4409
      %v4417 = vmax.f32 %v4416, %v4369
      %4418 = vmax.xlane.f32.xlu0 %v4417
      %v4419 = vpop.xlane.xlu0 %4418
      %v4420 = vsub.f32 %v4363, %v4415
      %v4421 = vsub.f32 %v4365, %v4415
      %v4422 = vsub.f32 %v4406, %v4415
      %v4423 = vsub.f32 %v4367, %v4419
      %v4424 = vsub.f32 %v4369, %v4419
      %v4425 = vsub.f32 %v4409, %v4419
      %v4426 = vmul.f32 %v4420, 1.442695
      %v4427 = vpow.pop %v4426
      %v4428 = vmul.f32 %v4421, 1.442695
      %v4429 = vpow.pop %v4428
      %v4430 = vmul.f32 %v4422, 1.442695
      %v4431 = vpow.pop %v4430
      %v4432 = vmul.f32 %v4423, 1.442695
      %v4433 = vpow.pop %v4432
      %v4434 = vmul.f32 %v4424, 1.442695
      %v4435 = vpow.pop %v4434
      %v4436 = vmul.f32 %v4425, 1.442695
      %v4437 = vpow.pop %v4436
      %v4438 = vadd.f32 %v4427, %v4429
      %v4439 = vadd.f32 %v4438, %v4431
      %4440 = vadd.xlane.f32.xlu0 %v4439
      %v4441 = vpop.xlane.xlu0 %4440
      %v4442 = vadd.f32 %v4433, %v4435
      %v4443 = vadd.f32 %v4442, %v4437
      %4444 = vadd.xlane.f32.xlu0 %v4443
      %v4445 = vpop.xlane.xlu0 %4444
      %v4446 = vrcp.pop %v4441
      %v4447 = vmul.f32 %v4427, %v4446
      %v4448 = vmul.f32 %v4429, %v4446
      %v4449 = vmul.f32 %v4431, %v4446
      %v4450 = vrcp.pop %v4445
      %v4451 = vmul.f32 %v4433, %v4450
      %v4452 = vmul.f32 %v4435, %v4450
      %v4453 = vmul.f32 %v4437, %v4450
      %v4454 = vlaneseq
      %v4455 = vshrl.u32 %v4454, 7
      %v4456 = vsub.s32 4, %v4455
      %v4457 = vrot.slane %v1054, %v4456
      %v4458 = vlaneseq
      %v4459 = vshrl.u32 %v4458, 7
      %v4460 = vsub.s32 4, %v4459
      %v4461 = vrot.slane %v1055, %v4460
      %v4462 = vlaneseq
      %v4463 = vshrl.u32 %v4462, 7
      %v4464 = vsub.s32 4, %v4463
      %v4465 = vrot.slane %v1056, %v4464
      %v4466 = vmul.f32 %v4457, %v4447
      %v4467 = vmul.f32 %v4461, %v4448
      %v4468 = vmul.f32 %v4465, %v4449
      %v4469 = vmul.f32 %v4457, %v4451
      %v4470 = vmul.f32 %v4461, %v4452
      %v4471 = vmul.f32 %v4465, %v4453
      %v4472 = vadd.f32 %v4065, %v4466
      %v4473 = vadd.f32 %v4066, %v4467
      %v4474 = vadd.f32 %v4067, %v4468
      %v4475 = vadd.f32 %v4068, %v4469
      %v4476 = vadd.f32 %v4069, %v4470
      %v4477 = vadd.f32 %v4070, %v4471
      %v4478 = vpack.c.bf16 %v4451, %v4447
      %v4479 = vpack.c.bf16 %v4452, %v4448
      %v4480 = vpack.c.bf16 %v4453, %v4449
      %v4481 = vpack.c.bf16 %v2274, %v2270
      %v4482 = vpack.c.bf16 %v2284, %v2280
      %v4483 = vpack.c.bf16 %v2294, %v2290
      %v4484 = vpack.c.bf16 %v2304, %v2300
      %v4485 = vpack.c.bf16 %v2314, %v2310
      %v4486 = vpack.c.bf16 %v2324, %v2320
      %v4487 = vpack.c.bf16 %v2334, %v2330
      %v4488 = vpack.c.bf16 %v2344, %v2340
      %v4489 = vpack.c.bf16 %v2354, %v2350
      %v4490 = vpack.c.bf16 %v2364, %v2360
      %v4491 = vpack.c.bf16 %v2374, %v2370
      %v4492 = vpack.c.bf16 %v2384, %v2380
      %v4493 = vpack.c.bf16 %v2394, %v2390
      %v4494 = vpack.c.bf16 %v2404, %v2400
      %v4495 = vpack.c.bf16 %v2414, %v2410
      %v4496 = vpack.c.bf16 %v2424, %v2420
      %v4497 = vpack.c.bf16 %v2434, %v2430
      %v4498 = vpack.c.bf16 %v2444, %v2440
      %v4499 = vpack.c.bf16 %v2454, %v2450
      %v4500 = vpack.c.bf16 %v2464, %v2460
      %v4501 = vpack.c.bf16 %v2474, %v2470
      %v4502 = vpack.c.bf16 %v2484, %v2480
      %v4503 = vpack.c.bf16 %v2494, %v2490
      %v4504 = vpack.c.bf16 %v2504, %v2500
      %4505 = vmatprep.subr.bf16.mxu0 0
      %4506 = vmatpush1.bf16.msra.mxu0 %v4481
      %4507 = vmatprep.subr.bf16.mxu0 0
      %4508 = vmatpush1.bf16.msra.mxu0 %v4482
      %4509 = vmatprep.subr.bf16.mxu0 0
      %4510 = vmatpush1.bf16.msra.mxu0 %v4483
      %4511 = vmatprep.subr.bf16.mxu0 0
      %4512 = vmatpush1.bf16.msra.mxu0 %v4484
      %4513 = vmatprep.subr.bf16.mxu0 0
      %4514 = vmatpush1.bf16.msra.mxu0 %v4485
      %4515 = vmatprep.subr.bf16.mxu0 0
      %4516 = vmatpush1.bf16.msra.mxu0 %v4486
      %4517 = vmatprep.subr.bf16.mxu0 0
      %4518 = vmatpush1.bf16.msra.mxu0 %v4487
      %4519 = vmatprep.subr.bf16.mxu0 0
      %4520 = vmatpush1.bf16.msra.mxu0 %v4488
      %4521 = vmatprep.subr.bf16.mxu0 0
      %4522 = vmatpush1.bf16.msra.mxu0 %v4489
      %4523 = vmatprep.subr.bf16.mxu0 0
      %4524 = vmatpush1.bf16.msra.mxu0 %v4490
      %4525 = vmatprep.subr.bf16.mxu0 0
      %4526 = vmatpush1.bf16.msra.mxu0 %v4491
      %4527 = vmatprep.subr.bf16.mxu0 0
      %4528 = vmatpush1.bf16.msra.mxu0 %v4492
      %4529 = vmatprep.subr.bf16.mxu0 0
      %4530 = vmatpush1.bf16.msra.mxu0 %v4493
      %4531 = vmatprep.subr.bf16.mxu0 0
      %4532 = vmatpush1.bf16.msra.mxu0 %v4494
      %4533 = vmatprep.subr.bf16.mxu0 0
      %4534 = vmatpush1.bf16.msra.mxu0 %v4495
      %4535 = vmatprep.subr.bf16.mxu0 0
      %4536 = vmatpush1.bf16.msra.mxu0 %v4496
      %4537 = vmatprep.mubr.bf16.mxu0 %v4479
      %4538 = vmatmul.mubr.bf16.gmra.mrb[0].mxu0 %v4478
      %v4539 = vpop.f32.mrb[0].mxu0
      %v4540 = vadd.f32 0.0, %v4539
      %v4541 = vpop.f32.mrb[0].mxu0
      %v4542 = vpop.f32.mrb[0].mxu0
      %v4543 = vadd.f32 0.0, %v4542
      %v4544 = vpop.f32.mrb[0].mxu0
      %4545 = vdwg.mxu0
      %4546 = vmatprep.subr.bf16.mxu0 0
      %4547 = vmatpush1.bf16.msra.mxu0 %v4497
      %4548 = vmatprep.subr.bf16.mxu0 0
      %4549 = vmatpush1.bf16.msra.mxu0 %v4498
      %4550 = vmatprep.subr.bf16.mxu0 0
      %4551 = vmatpush1.bf16.msra.mxu0 %v4499
      %4552 = vmatprep.subr.bf16.mxu0 0
      %4553 = vmatpush1.bf16.msra.mxu0 %v4500
      %4554 = vmatprep.subr.bf16.mxu0 0
      %4555 = vmatpush1.bf16.msra.mxu0 %v4501
      %4556 = vmatprep.subr.bf16.mxu0 0
      %4557 = vmatpush1.bf16.msra.mxu0 %v4502
      %4558 = vmatprep.subr.bf16.mxu0 0
      %4559 = vmatpush1.bf16.msra.mxu0 %v4503
      %4560 = vmatprep.subr.bf16.mxu0 0
      %4561 = vmatpush1.bf16.msra.mxu0 %v4504
      %4562 = vmatprep.subr.bf16.mxu0 0
      %4563 = vmatpush1.bf16.msra.mxu0 0
      %4564 = vmatprep.subr.bf16.mxu0 0
      %4565 = vmatpush1.bf16.msra.mxu0 0
      %4566 = vmatprep.subr.bf16.mxu0 0
      %4567 = vmatpush1.bf16.msra.mxu0 0
      %4568 = vmatprep.subr.bf16.mxu0 0
      %4569 = vmatpush1.bf16.msra.mxu0 0
      %4570 = vmatprep.subr.bf16.mxu0 0
      %4571 = vmatpush1.bf16.msra.mxu0 0
      %4572 = vmatprep.subr.bf16.mxu0 0
      %4573 = vmatpush1.bf16.msra.mxu0 0
      %4574 = vmatprep.subr.bf16.mxu0 0
      %4575 = vmatpush1.bf16.msra.mxu0 0
      %4576 = vmatprep.subr.bf16.mxu0 0
      %4577 = vmatpush1.bf16.msra.mxu0 0
      %4578 = vmatprep.mubr.bf16.mxu0 0
      %4579 = vmatmul.mubr.bf16.gmra.mrb[0].mxu0 %v4480
      %v4580 = vpop.f32.mrb[0].mxu0
      %v4581 = vadd.f32 %v4540, %v4580
      %v4582 = vpop.f32.mrb[0].mxu0
      %v4583 = vpop.f32.mrb[0].mxu0
      %v4584 = vadd.f32 %v4543, %v4583
      %v4585 = vpop.f32.mrb[0].mxu0
      %4586 = vdwg.mxu0
      %4588 = vrot.lane.b32.xlu0 %v4228, 96
      %v4589 = vpop.permute.xlu0 %4588
      %4614 = vrot.lane.b32.xlu0 %v4229, 96
      %v4615 = vpop.permute.xlu0 %4614
      %4616 = vrot.lane.b32.xlu0 %v4230, 96
      %v4617 = vpop.permute.xlu0 %4616
      %4618 = vrot.lane.b32.xlu0 %v4231, 96
      %v4619 = vpop.permute.xlu0 %4618
      %4620 = vrot.lane.b32.xlu0 %v4232, 96
      %v4621 = vpop.permute.xlu0 %4620
      %4622 = vrot.lane.b32.xlu0 %v4233, 96
      %v4623 = vpop.permute.xlu0 %4622
      %4624 = vrot.lane.b32.xlu0 %v4234, 96
      %v4625 = vpop.permute.xlu0 %4624
      %4626 = vrot.lane.b32.xlu0 %v4235, 96
      %v4627 = vpop.permute.xlu0 %4626
      %4628 = vrot.lane.b32.xlu0 %v4236, 96
      %v4629 = vpop.permute.xlu0 %4628
      %4630 = vrot.lane.b32.xlu0 %v4237, 96
      %v4631 = vpop.permute.xlu0 %4630
      %4632 = vrot.lane.b32.xlu0 %v4238, 96
      %v4633 = vpop.permute.xlu0 %4632
      %4634 = vrot.lane.b32.xlu0 %v4239, 96
      %v4635 = vpop.permute.xlu0 %4634
      %4636 = vrot.lane.b32.xlu0 %v4240, 96
      %v4637 = vpop.permute.xlu0 %4636
      %4638 = vrot.lane.b32.xlu0 %v4241, 96
      %v4639 = vpop.permute.xlu0 %4638
      %4640 = vrot.lane.b32.xlu0 %v4242, 96
      %v4641 = vpop.permute.xlu0 %4640
      %4642 = vrot.lane.b32.xlu0 %v4243, 96
      %v4643 = vpop.permute.xlu0 %4642
      %4644 = vrot.lane.b32.xlu0 %v4244, 96
      %v4645 = vpop.permute.xlu0 %4644
      %4646 = vrot.lane.b32.xlu0 %v4245, 96
      %v4647 = vpop.permute.xlu0 %4646
      %4648 = vrot.lane.b32.xlu0 %v4246, 96
      %v4649 = vpop.permute.xlu0 %4648
      %4650 = vrot.lane.b32.xlu0 %v4247, 96
      %v4651 = vpop.permute.xlu0 %4650
      %4652 = vrot.lane.b32.xlu0 %v4248, 96
      %v4653 = vpop.permute.xlu0 %4652
      %4654 = vrot.lane.b32.xlu0 %v4249, 96
      %v4655 = vpop.permute.xlu0 %4654
      %4656 = vrot.lane.b32.xlu0 %v4250, 96
      %v4657 = vpop.permute.xlu0 %4656
      %4658 = vrot.lane.b32.xlu0 %v4251, 96
      %v4659 = vpop.permute.xlu0 %4658
      %4660 = vrot.lane.b32.xlu0 %v4252, 96
      %v4661 = vpop.permute.xlu0 %4660
      %v4663 = vsel %vm2548, %v4589, 0
      %v4666 = vsel %vm2548, %v4615, 0
      %v4669 = vsel %vm2548, %v4617, 0
      %v4672 = vsel %vm2548, %v4619, 0
      %v4675 = vsel %vm2548, %v4621, 0
      %v4678 = vsel %vm2548, %v4623, 0
      %v4681 = vsel %vm2548, %v4625, 0
      %v4684 = vsel %vm2548, %v4627, 0
      %v4687 = vsel %vm2548, %v4629, 0
      %v4690 = vsel %vm2548, %v4631, 0
      %v4693 = vsel %vm2548, %v4633, 0
      %v4696 = vsel %vm2548, %v4635, 0
      %v4699 = vsel %vm2548, %v4637, 0
      %v4702 = vsel %vm2548, %v4639, 0
      %v4705 = vsel %vm2548, %v4641, 0
      %v4708 = vsel %vm2548, %v4643, 0
      %v4711 = vsel %vm2548, %v4645, 0
      %v4714 = vsel %vm2548, %v4647, 0
      %v4717 = vsel %vm2548, %v4649, 0
      %v4720 = vsel %vm2548, %v4651, 0
      %v4723 = vsel %vm2548, %v4653, 0
      %v4726 = vsel %vm2548, %v4655, 0
      %v4729 = vsel %vm2548, %v4657, 0
      %v4732 = vsel %vm2548, %v4659, 0
      %v4735 = vsel %vm2548, %v4661, 0
      %4737 = vmatprep.subr.bf16.mxu0 0
      %4738 = vmatpush1.bf16.xpose.msra.mxu0 %v4666
      %4739 = vmatprep.subr.bf16.mxu0 0
      %4740 = vmatpush1.bf16.xpose.msra.mxu0 %v4669
      %4741 = vmatprep.subr.bf16.mxu0 0
      %4742 = vmatpush1.bf16.xpose.msra.mxu0 %v4672
      %4743 = vmatprep.subr.bf16.mxu0 0
      %4744 = vmatpush1.bf16.xpose.msra.mxu0 %v4675
      %4745 = vmatprep.subr.bf16.mxu0 0
      %4746 = vmatpush1.bf16.xpose.msra.mxu0 %v4678
      %4747 = vmatprep.subr.bf16.mxu0 0
      %4748 = vmatpush1.bf16.xpose.msra.mxu0 %v4681
      %4749 = vmatprep.subr.bf16.mxu0 0
      %4750 = vmatpush1.bf16.xpose.msra.mxu0 %v4684
      %4751 = vmatprep.subr.bf16.mxu0 0
      %4752 = vmatpush1.bf16.xpose.msra.mxu0 %v4687
      %4753 = vmatprep.subr.bf16.mxu0 0
      %4754 = vmatpush1.bf16.xpose.msra.mxu0 %v4690
      %4755 = vmatprep.subr.bf16.mxu0 0
      %4756 = vmatpush1.bf16.xpose.msra.mxu0 %v4693
      %4757 = vmatprep.subr.bf16.mxu0 0
      %4758 = vmatpush1.bf16.xpose.msra.mxu0 %v4696
      %4759 = vmatprep.subr.bf16.mxu0 0
      %4760 = vmatpush1.bf16.xpose.msra.mxu0 %v4699
      %4761 = vmatprep.subr.bf16.mxu0 0
      %4762 = vmatpush1.bf16.xpose.msra.mxu0 %v4702
      %4763 = vmatprep.subr.bf16.mxu0 0
      %4764 = vmatpush1.bf16.xpose.msra.mxu0 %v4705
      %4765 = vmatprep.subr.bf16.mxu0 0
      %4766 = vmatpush1.bf16.xpose.msra.mxu0 %v4708
      %4767 = vmatprep.subr.bf16.mxu0 0
      %4768 = vmatpush1.bf16.xpose.msra.mxu0 %v4711
      %4769 = vmatprep.mubr.bf16.mxu0 0
      %4770 = vmatmul.mubr.bf16.gmra.mrb[0].mxu0 %v4663
      %v4771 = vpop.f32.mrb[0].mxu0
      %v4772 = vadd.f32 %v2511, %v4771
      %v4773 = vpop.f32.mrb[0].mxu0
      %v4774 = vadd.f32 %v2515, %v4773
      %v4775 = vpop.f32.mrb[0].mxu0
      %v4776 = vadd.f32 %v2511, %v4775
      %v4777 = vpop.f32.mrb[0].mxu0
      %v4778 = vadd.f32 %v2515, %v4777
      %4779 = vdwg.mxu0
      %4780 = vmatprep.subr.bf16.mxu0 0
      %4781 = vmatpush1.bf16.xpose.msra.mxu0 %v4714
      %4782 = vmatprep.subr.bf16.mxu0 0
      %4783 = vmatpush1.bf16.xpose.msra.mxu0 %v4717
      %4784 = vmatprep.subr.bf16.mxu0 0
      %4785 = vmatpush1.bf16.xpose.msra.mxu0 %v4720
      %4786 = vmatprep.subr.bf16.mxu0 0
      %4787 = vmatpush1.bf16.xpose.msra.mxu0 %v4723
      %4788 = vmatprep.subr.bf16.mxu0 0
      %4789 = vmatpush1.bf16.xpose.msra.mxu0 %v4726
      %4790 = vmatprep.subr.bf16.mxu0 0
      %4791 = vmatpush1.bf16.xpose.msra.mxu0 %v4729
      %4792 = vmatprep.subr.bf16.mxu0 0
      %4793 = vmatpush1.bf16.xpose.msra.mxu0 %v4732
      %4794 = vmatprep.subr.bf16.mxu0 0
      %4795 = vmatpush1.bf16.xpose.msra.mxu0 %v4735
      %4796 = vmatprep.subr.bf16.mxu0 0
      %4797 = vmatpush1.bf16.xpose.msra.mxu0 0
      %4798 = vmatprep.subr.bf16.mxu0 0
      %4799 = vmatpush1.bf16.xpose.msra.mxu0 0
      %4800 = vmatprep.subr.bf16.mxu0 0
      %4801 = vmatpush1.bf16.xpose.msra.mxu0 0
      %4802 = vmatprep.subr.bf16.mxu0 0
      %4803 = vmatpush1.bf16.xpose.msra.mxu0 0
      %4804 = vmatprep.subr.bf16.mxu0 0
      %4805 = vmatpush1.bf16.xpose.msra.mxu0 0
      %4806 = vmatprep.subr.bf16.mxu0 0
      %4807 = vmatpush1.bf16.xpose.msra.mxu0 0
      %4808 = vmatprep.subr.bf16.mxu0 0
      %4809 = vmatpush1.bf16.xpose.msra.mxu0 0
      %4810 = vmatprep.subr.bf16.mxu0 0
      %4811 = vmatpush1.bf16.xpose.msra.mxu0 0
      %4812 = vmatprep.mubr.bf16.mxu0 0
      %4813 = vmatmul.mubr.bf16.gmra.mrb[0].mxu0 %v4663
      %v4814 = vpop.f32.mrb[0].mxu0
      %v4815 = vadd.f32 %v2519, %v4814
      %v4816 = vpop.f32.mrb[0].mxu0
      %v4817 = vpop.f32.mrb[0].mxu0
      %v4818 = vadd.f32 %v2519, %v4817
      %v4819 = vpop.f32.mrb[0].mxu0
      %4820 = vdwg.mxu0
      %v4821 = vmax.f32 %v4772, %v4815
      %v4822 = vmax.f32 %v4821, %v4774
      %4823 = vmax.xlane.f32.xlu0 %v4822
      %v4824 = vpop.xlane.xlu0 %4823
      %v4825 = vmax.f32 %v4776, %v4818
      %v4826 = vmax.f32 %v4825, %v4778
      %4827 = vmax.xlane.f32.xlu0 %v4826
      %v4828 = vpop.xlane.xlu0 %4827
      %v4829 = vsub.f32 %v4772, %v4824
      %v4830 = vsub.f32 %v4774, %v4824
      %v4831 = vsub.f32 %v4815, %v4824
      %v4832 = vsub.f32 %v4776, %v4828
      %v4833 = vsub.f32 %v4778, %v4828
      %v4834 = vsub.f32 %v4818, %v4828
      %v4835 = vmul.f32 %v4829, 1.442695
      %v4836 = vpow.pop %v4835
      %v4837 = vmul.f32 %v4830, 1.442695
      %v4838 = vpow.pop %v4837
      %v4839 = vmul.f32 %v4831, 1.442695
      %v4840 = vpow.pop %v4839
      %v4841 = vmul.f32 %v4832, 1.442695
      %v4842 = vpow.pop %v4841
      %v4843 = vmul.f32 %v4833, 1.442695
      %v4844 = vpow.pop %v4843
      %v4845 = vmul.f32 %v4834, 1.442695
      %v4846 = vpow.pop %v4845
      %v4847 = vadd.f32 %v4836, %v4838
      %v4848 = vadd.f32 %v4847, %v4840
      %4849 = vadd.xlane.f32.xlu0 %v4848
      %v4850 = vpop.xlane.xlu0 %4849
      %v4851 = vadd.f32 %v4842, %v4844
      %v4852 = vadd.f32 %v4851, %v4846
      %4853 = vadd.xlane.f32.xlu0 %v4852
      %v4854 = vpop.xlane.xlu0 %4853
      %v4855 = vrcp.pop %v4850
      %v4856 = vmul.f32 %v4836, %v4855
      %v4857 = vmul.f32 %v4838, %v4855
      %v4858 = vmul.f32 %v4840, %v4855
      %v4859 = vrcp.pop %v4854
      %v4860 = vmul.f32 %v4842, %v4859
      %v4861 = vmul.f32 %v4844, %v4859
      %v4862 = vmul.f32 %v4846, %v4859
      %v4863 = vlaneseq
      %v4864 = vshrl.u32 %v4863, 7
      %v4865 = vsub.s32 5, %v4864
      %v4866 = vrot.slane %v1054, %v4865
      %v4867 = vlaneseq
      %v4868 = vshrl.u32 %v4867, 7
      %v4869 = vsub.s32 5, %v4868
      %v4870 = vrot.slane %v1055, %v4869
      %v4871 = vlaneseq
      %v4872 = vshrl.u32 %v4871, 7
      %v4873 = vsub.s32 5, %v4872
      %v4874 = vrot.slane %v1056, %v4873
      %v4875 = vmul.f32 %v4866, %v4856
      %v4876 = vmul.f32 %v4870, %v4857
      %v4877 = vmul.f32 %v4874, %v4858
      %v4878 = vmul.f32 %v4866, %v4860
      %v4879 = vmul.f32 %v4870, %v4861
      %v4880 = vmul.f32 %v4874, %v4862
      %v4881 = vadd.f32 %v4472, %v4875
      %v4882 = vadd.f32 %v4473, %v4876
      %v4883 = vadd.f32 %v4474, %v4877
      %v4884 = vadd.f32 %v4475, %v4878
      %v4885 = vadd.f32 %v4476, %v4879
      %v4886 = vadd.f32 %v4477, %v4880
      %v4887 = vpack.c.bf16 %v4860, %v4856
      %v4888 = vpack.c.bf16 %v4861, %v4857
      %v4889 = vpack.c.bf16 %v4862, %v4858
      %4914 = vrot.lane.b32.xlu0 %v4481, 96
      %v4915 = vpop.permute.xlu0 %4914
      %4916 = vrot.lane.b32.xlu0 %v4482, 96
      %v4917 = vpop.permute.xlu0 %4916
      %4918 = vrot.lane.b32.xlu0 %v4483, 96
      %v4919 = vpop.permute.xlu0 %4918
      %4920 = vrot.lane.b32.xlu0 %v4484, 96
      %v4921 = vpop.permute.xlu0 %4920
      %4922 = vrot.lane.b32.xlu0 %v4485, 96
      %v4923 = vpop.permute.xlu0 %4922
      %4924 = vrot.lane.b32.xlu0 %v4486, 96
      %v4925 = vpop.permute.xlu0 %4924
      %4926 = vrot.lane.b32.xlu0 %v4487, 96
      %v4927 = vpop.permute.xlu0 %4926
      %4928 = vrot.lane.b32.xlu0 %v4488, 96
      %v4929 = vpop.permute.xlu0 %4928
      %4930 = vrot.lane.b32.xlu0 %v4489, 96
      %v4931 = vpop.permute.xlu0 %4930
      %4932 = vrot.lane.b32.xlu0 %v4490, 96
      %v4933 = vpop.permute.xlu0 %4932
      %4934 = vrot.lane.b32.xlu0 %v4491, 96
      %v4935 = vpop.permute.xlu0 %4934
      %4936 = vrot.lane.b32.xlu0 %v4492, 96
      %v4937 = vpop.permute.xlu0 %4936
      %4938 = vrot.lane.b32.xlu0 %v4493, 96
      %v4939 = vpop.permute.xlu0 %4938
      %4940 = vrot.lane.b32.xlu0 %v4494, 96
      %v4941 = vpop.permute.xlu0 %4940
      %4942 = vrot.lane.b32.xlu0 %v4495, 96
      %v4943 = vpop.permute.xlu0 %4942
      %4944 = vrot.lane.b32.xlu0 %v4496, 96
      %v4945 = vpop.permute.xlu0 %4944
      %4946 = vrot.lane.b32.xlu0 %v4497, 96
      %v4947 = vpop.permute.xlu0 %4946
      %4948 = vrot.lane.b32.xlu0 %v4498, 96
      %v4949 = vpop.permute.xlu0 %4948
      %4950 = vrot.lane.b32.xlu0 %v4499, 96
      %v4951 = vpop.permute.xlu0 %4950
      %4952 = vrot.lane.b32.xlu0 %v4500, 96
      %v4953 = vpop.permute.xlu0 %4952
      %4954 = vrot.lane.b32.xlu0 %v4501, 96
      %v4955 = vpop.permute.xlu0 %4954
      %4956 = vrot.lane.b32.xlu0 %v4502, 96
      %v4957 = vpop.permute.xlu0 %4956
      %4958 = vrot.lane.b32.xlu0 %v4503, 96
      %v4959 = vpop.permute.xlu0 %4958
      %4960 = vrot.lane.b32.xlu0 %v4504, 96
      %v4961 = vpop.permute.xlu0 %4960
      %4986 = vmatprep.subr.bf16.mxu0 0
      %4987 = vmatpush1.bf16.msra.mxu0 %v4915
      %4988 = vmatprep.subr.bf16.mxu0 0
      %4989 = vmatpush1.bf16.msra.mxu0 %v4917
      %4990 = vmatprep.subr.bf16.mxu0 0
      %4991 = vmatpush1.bf16.msra.mxu0 %v4919
      %4992 = vmatprep.subr.bf16.mxu0 0
      %4993 = vmatpush1.bf16.msra.mxu0 %v4921
      %4994 = vmatprep.subr.bf16.mxu0 0
      %4995 = vmatpush1.bf16.msra.mxu0 %v4923
      %4996 = vmatprep.subr.bf16.mxu0 0
      %4997 = vmatpush1.bf16.msra.mxu0 %v4925
      %4998 = vmatprep.subr.bf16.mxu0 0
      %4999 = vmatpush1.bf16.msra.mxu0 %v4927
      %5000 = vmatprep.subr.bf16.mxu0 0
      %5001 = vmatpush1.bf16.msra.mxu0 %v4929
      %5002 = vmatprep.subr.bf16.mxu0 0
      %5003 = vmatpush1.bf16.msra.mxu0 %v4931
      %5004 = vmatprep.subr.bf16.mxu0 0
      %5005 = vmatpush1.bf16.msra.mxu0 %v4933
      %5006 = vmatprep.subr.bf16.mxu0 0
      %5007 = vmatpush1.bf16.msra.mxu0 %v4935
      %5008 = vmatprep.subr.bf16.mxu0 0
      %5009 = vmatpush1.bf16.msra.mxu0 %v4937
      %5010 = vmatprep.subr.bf16.mxu0 0
      %5011 = vmatpush1.bf16.msra.mxu0 %v4939
      %5012 = vmatprep.subr.bf16.mxu0 0
      %5013 = vmatpush1.bf16.msra.mxu0 %v4941
      %5014 = vmatprep.subr.bf16.mxu0 0
      %5015 = vmatpush1.bf16.msra.mxu0 %v4943
      %5016 = vmatprep.subr.bf16.mxu0 0
      %5017 = vmatpush1.bf16.msra.mxu0 %v4945
      %5018 = vmatprep.mubr.bf16.mxu0 %v4888
      %5019 = vmatmul.mubr.bf16.gmra.mrb[0].mxu0 %v4887
      %v5020 = vpop.f32.mrb[0].mxu0
      %v5021 = vadd.f32 0.0, %v5020
      %v5022 = vpop.f32.mrb[0].mxu0
      %v5023 = vpop.f32.mrb[0].mxu0
      %v5024 = vadd.f32 0.0, %v5023
      %v5025 = vpop.f32.mrb[0].mxu0
      %5026 = vdwg.mxu0
      %5027 = vmatprep.subr.bf16.mxu0 0
      %5028 = vmatpush1.bf16.msra.mxu0 %v4947
      %5029 = vmatprep.subr.bf16.mxu0 0
      %5030 = vmatpush1.bf16.msra.mxu0 %v4949
      %5031 = vmatprep.subr.bf16.mxu0 0
      %5032 = vmatpush1.bf16.msra.mxu0 %v4951
      %5033 = vmatprep.subr.bf16.mxu0 0
      %5034 = vmatpush1.bf16.msra.mxu0 %v4953
      %5035 = vmatprep.subr.bf16.mxu0 0
      %5036 = vmatpush1.bf16.msra.mxu0 %v4955
      %5037 = vmatprep.subr.bf16.mxu0 0
      %5038 = vmatpush1.bf16.msra.mxu0 %v4957
      %5039 = vmatprep.subr.bf16.mxu0 0
      %5040 = vmatpush1.bf16.msra.mxu0 %v4959
      %5041 = vmatprep.subr.bf16.mxu0 0
      %5042 = vmatpush1.bf16.msra.mxu0 %v4961
      %5043 = vmatprep.subr.bf16.mxu0 0
      %5044 = vmatpush1.bf16.msra.mxu0 0
      %5045 = vmatprep.subr.bf16.mxu0 0
      %5046 = vmatpush1.bf16.msra.mxu0 0
      %5047 = vmatprep.subr.bf16.mxu0 0
      %5048 = vmatpush1.bf16.msra.mxu0 0
      %5049 = vmatprep.subr.bf16.mxu0 0
      %5050 = vmatpush1.bf16.msra.mxu0 0
      %5051 = vmatprep.subr.bf16.mxu0 0
      %5052 = vmatpush1.bf16.msra.mxu0 0
      %5053 = vmatprep.subr.bf16.mxu0 0
      %5054 = vmatpush1.bf16.msra.mxu0 0
      %5055 = vmatprep.subr.bf16.mxu0 0
      %5056 = vmatpush1.bf16.msra.mxu0 0
      %5057 = vmatprep.subr.bf16.mxu0 0
      %5058 = vmatpush1.bf16.msra.mxu0 0
      %5059 = vmatprep.mubr.bf16.mxu0 0
      %5060 = vmatmul.mubr.bf16.gmra.mrb[0].mxu0 %v4889
      %v5061 = vpop.f32.mrb[0].mxu0
      %v5062 = vadd.f32 %v5021, %v5061
      %v5063 = vpop.f32.mrb[0].mxu0
      %v5064 = vpop.f32.mrb[0].mxu0
      %v5065 = vadd.f32 %v5024, %v5064
      %v5066 = vpop.f32.mrb[0].mxu0
      %5067 = vdwg.mxu0
      %5068 = vrot.lane.b32.xlu0 %v4228, 64
      %v5069 = vpop.permute.xlu0 %5068
      %5070 = vrot.lane.b32.xlu0 %v4229, 64
      %v5071 = vpop.permute.xlu0 %5070
      %5072 = vrot.lane.b32.xlu0 %v4230, 64
      %v5073 = vpop.permute.xlu0 %5072
      %5074 = vrot.lane.b32.xlu0 %v4231, 64
      %v5075 = vpop.permute.xlu0 %5074
      %5076 = vrot.lane.b32.xlu0 %v4232, 64
      %v5077 = vpop.permute.xlu0 %5076
      %5078 = vrot.lane.b32.xlu0 %v4233, 64
      %v5079 = vpop.permute.xlu0 %5078
      %5080 = vrot.lane.b32.xlu0 %v4234, 64
      %v5081 = vpop.permute.xlu0 %5080
      %5082 = vrot.lane.b32.xlu0 %v4235, 64
      %v5083 = vpop.permute.xlu0 %5082
      %5084 = vrot.lane.b32.xlu0 %v4236, 64
      %v5085 = vpop.permute.xlu0 %5084
      %5086 = vrot.lane.b32.xlu0 %v4237, 64
      %v5087 = vpop.permute.xlu0 %5086
      %5088 = vrot.lane.b32.xlu0 %v4238, 64
      %v5089 = vpop.permute.xlu0 %5088
      %5090 = vrot.lane.b32.xlu0 %v4239, 64
      %v5091 = vpop.permute.xlu0 %5090
      %5092 = vrot.lane.b32.xlu0 %v4240, 64
      %v5093 = vpop.permute.xlu0 %5092
      %5094 = vrot.lane.b32.xlu0 %v4241, 64
      %v5095 = vpop.permute.xlu0 %5094
      %5096 = vrot.lane.b32.xlu0 %v4242, 64
      %v5097 = vpop.permute.xlu0 %5096
      %5098 = vrot.lane.b32.xlu0 %v4243, 64
      %v5099 = vpop.permute.xlu0 %5098
      %5100 = vrot.lane.b32.xlu0 %v4244, 64
      %v5101 = vpop.permute.xlu0 %5100
      %5102 = vrot.lane.b32.xlu0 %v4245, 64
      %v5103 = vpop.permute.xlu0 %5102
      %5104 = vrot.lane.b32.xlu0 %v4246, 64
      %v5105 = vpop.permute.xlu0 %5104
      %5106 = vrot.lane.b32.xlu0 %v4247, 64
      %v5107 = vpop.permute.xlu0 %5106
      %5108 = vrot.lane.b32.xlu0 %v4248, 64
      %v5109 = vpop.permute.xlu0 %5108
      %5110 = vrot.lane.b32.xlu0 %v4249, 64
      %v5111 = vpop.permute.xlu0 %5110
      %5112 = vrot.lane.b32.xlu0 %v4250, 64
      %v5113 = vpop.permute.xlu0 %5112
      %5114 = vrot.lane.b32.xlu0 %v4251, 64
      %v5115 = vpop.permute.xlu0 %5114
      %5116 = vrot.lane.b32.xlu0 %v4252, 64
      %v5117 = vpop.permute.xlu0 %5116
      %v5119 = vsel %vm2548, %v5069, 0
      %v5122 = vsel %vm2548, %v5071, 0
      %v5125 = vsel %vm2548, %v5073, 0
      %v5128 = vsel %vm2548, %v5075, 0
      %v5131 = vsel %vm2548, %v5077, 0
      %v5134 = vsel %vm2548, %v5079, 0
      %v5137 = vsel %vm2548, %v5081, 0
      %v5140 = vsel %vm2548, %v5083, 0
      %v5143 = vsel %vm2548, %v5085, 0
      %v5146 = vsel %vm2548, %v5087, 0
      %v5149 = vsel %vm2548, %v5089, 0
      %v5152 = vsel %vm2548, %v5091, 0
      %v5155 = vsel %vm2548, %v5093, 0
      %v5158 = vsel %vm2548, %v5095, 0
      %v5161 = vsel %vm2548, %v5097, 0
      %v5164 = vsel %vm2548, %v5099, 0
      %v5167 = vsel %vm2548, %v5101, 0
      %v5170 = vsel %vm2548, %v5103, 0
      %v5173 = vsel %vm2548, %v5105, 0
      %v5176 = vsel %vm2548, %v5107, 0
      %v5179 = vsel %vm2548, %v5109, 0
      %v5182 = vsel %vm2548, %v5111, 0
      %v5185 = vsel %vm2548, %v5113, 0
      %v5188 = vsel %vm2548, %v5115, 0
      %v5191 = vsel %vm2548, %v5117, 0
      %5193 = vmatprep.subr.bf16.mxu0 0
      %5194 = vmatpush1.bf16.xpose.msra.mxu0 %v5122
      %5195 = vmatprep.subr.bf16.mxu0 0
      %5196 = vmatpush1.bf16.xpose.msra.mxu0 %v5125
      %5197 = vmatprep.subr.bf16.mxu0 0
      %5198 = vmatpush1.bf16.xpose.msra.mxu0 %v5128
      %5199 = vmatprep.subr.bf16.mxu0 0
      %5200 = vmatpush1.bf16.xpose.msra.mxu0 %v5131
      %5201 = vmatprep.subr.bf16.mxu0 0
      %5202 = vmatpush1.bf16.xpose.msra.mxu0 %v5134
      %5203 = vmatprep.subr.bf16.mxu0 0
      %5204 = vmatpush1.bf16.xpose.msra.mxu0 %v5137
      %5205 = vmatprep.subr.bf16.mxu0 0
      %5206 = vmatpush1.bf16.xpose.msra.mxu0 %v5140
      %5207 = vmatprep.subr.bf16.mxu0 0
      %5208 = vmatpush1.bf16.xpose.msra.mxu0 %v5143
      %5209 = vmatprep.subr.bf16.mxu0 0
      %5210 = vmatpush1.bf16.xpose.msra.mxu0 %v5146
      %5211 = vmatprep.subr.bf16.mxu0 0
      %5212 = vmatpush1.bf16.xpose.msra.mxu0 %v5149
      %5213 = vmatprep.subr.bf16.mxu0 0
      %5214 = vmatpush1.bf16.xpose.msra.mxu0 %v5152
      %5215 = vmatprep.subr.bf16.mxu0 0
      %5216 = vmatpush1.bf16.xpose.msra.mxu0 %v5155
      %5217 = vmatprep.subr.bf16.mxu0 0
      %5218 = vmatpush1.bf16.xpose.msra.mxu0 %v5158
      %5219 = vmatprep.subr.bf16.mxu0 0
      %5220 = vmatpush1.bf16.xpose.msra.mxu0 %v5161
      %5221 = vmatprep.subr.bf16.mxu0 0
      %5222 = vmatpush1.bf16.xpose.msra.mxu0 %v5164
      %5223 = vmatprep.subr.bf16.mxu0 0
      %5224 = vmatpush1.bf16.xpose.msra.mxu0 %v5167
      %5225 = vmatprep.mubr.bf16.mxu0 0
      %5226 = vmatmul.mubr.bf16.gmra.mrb[0].mxu0 %v5119
      %v5227 = vpop.f32.mrb[0].mxu0
      %v5228 = vadd.f32 %v2511, %v5227
      %v5229 = vpop.f32.mrb[0].mxu0
      %v5230 = vadd.f32 %v2515, %v5229
      %v5231 = vpop.f32.mrb[0].mxu0
      %v5232 = vadd.f32 %v2511, %v5231
      %v5233 = vpop.f32.mrb[0].mxu0
      %v5234 = vadd.f32 %v2515, %v5233
      %5235 = vdwg.mxu0
      %5236 = vmatprep.subr.bf16.mxu0 0
      %5237 = vmatpush1.bf16.xpose.msra.mxu0 %v5170
      %5238 = vmatprep.subr.bf16.mxu0 0
      %5239 = vmatpush1.bf16.xpose.msra.mxu0 %v5173
      %5240 = vmatprep.subr.bf16.mxu0 0
      %5241 = vmatpush1.bf16.xpose.msra.mxu0 %v5176
      %5242 = vmatprep.subr.bf16.mxu0 0
      %5243 = vmatpush1.bf16.xpose.msra.mxu0 %v5179
      %5244 = vmatprep.subr.bf16.mxu0 0
      %5245 = vmatpush1.bf16.xpose.msra.mxu0 %v5182
      %5246 = vmatprep.subr.bf16.mxu0 0
      %5247 = vmatpush1.bf16.xpose.msra.mxu0 %v5185
      %5248 = vmatprep.subr.bf16.mxu0 0
      %5249 = vmatpush1.bf16.xpose.msra.mxu0 %v5188
      %5250 = vmatprep.subr.bf16.mxu0 0
      %5251 = vmatpush1.bf16.xpose.msra.mxu0 %v5191
      %5252 = vmatprep.subr.bf16.mxu0 0
      %5253 = vmatpush1.bf16.xpose.msra.mxu0 0
      %5254 = vmatprep.subr.bf16.mxu0 0
      %5255 = vmatpush1.bf16.xpose.msra.mxu0 0
      %5256 = vmatprep.subr.bf16.mxu0 0
      %5257 = vmatpush1.bf16.xpose.msra.mxu0 0
      %5258 = vmatprep.subr.bf16.mxu0 0
      %5259 = vmatpush1.bf16.xpose.msra.mxu0 0
      %5260 = vmatprep.subr.bf16.mxu0 0
      %5261 = vmatpush1.bf16.xpose.msra.mxu0 0
      %5262 = vmatprep.subr.bf16.mxu0 0
      %5263 = vmatpush1.bf16.xpose.msra.mxu0 0
      %5264 = vmatprep.subr.bf16.mxu0 0
      %5265 = vmatpush1.bf16.xpose.msra.mxu0 0
      %5266 = vmatprep.subr.bf16.mxu0 0
      %5267 = vmatpush1.bf16.xpose.msra.mxu0 0
      %5268 = vmatprep.mubr.bf16.mxu0 0
      %5269 = vmatmul.mubr.bf16.gmra.mrb[0].mxu0 %v5119
      %v5270 = vpop.f32.mrb[0].mxu0
      %v5271 = vadd.f32 %v2519, %v5270
      %v5272 = vpop.f32.mrb[0].mxu0
      %v5273 = vpop.f32.mrb[0].mxu0
      %v5274 = vadd.f32 %v2519, %v5273
      %v5275 = vpop.f32.mrb[0].mxu0
      %5276 = vdwg.mxu0
      %v5277 = vmax.f32 %v5228, %v5271
      %v5278 = vmax.f32 %v5277, %v5230
      %5279 = vmax.xlane.f32.xlu0 %v5278
      %v5280 = vpop.xlane.xlu0 %5279
      %v5281 = vmax.f32 %v5232, %v5274
      %v5282 = vmax.f32 %v5281, %v5234
      %5283 = vmax.xlane.f32.xlu0 %v5282
      %v5284 = vpop.xlane.xlu0 %5283
      %v5285 = vsub.f32 %v5228, %v5280
      %v5286 = vsub.f32 %v5230, %v5280
      %v5287 = vsub.f32 %v5271, %v5280
      %v5288 = vsub.f32 %v5232, %v5284
      %v5289 = vsub.f32 %v5234, %v5284
      %v5290 = vsub.f32 %v5274, %v5284
      %v5291 = vmul.f32 %v5285, 1.442695
      %v5292 = vpow.pop %v5291
      %v5293 = vmul.f32 %v5286, 1.442695
      %v5294 = vpow.pop %v5293
      %v5295 = vmul.f32 %v5287, 1.442695
      %v5296 = vpow.pop %v5295
      %v5297 = vmul.f32 %v5288, 1.442695
      %v5298 = vpow.pop %v5297
      %v5299 = vmul.f32 %v5289, 1.442695
      %v5300 = vpow.pop %v5299
      %v5301 = vmul.f32 %v5290, 1.442695
      %v5302 = vpow.pop %v5301
      %v5303 = vadd.f32 %v5292, %v5294
      %v5304 = vadd.f32 %v5303, %v5296
      %5305 = vadd.xlane.f32.xlu0 %v5304
      %v5306 = vpop.xlane.xlu0 %5305
      %v5307 = vadd.f32 %v5298, %v5300
      %v5308 = vadd.f32 %v5307, %v5302
      %5309 = vadd.xlane.f32.xlu0 %v5308
      %v5310 = vpop.xlane.xlu0 %5309
      %v5311 = vrcp.pop %v5306
      %v5312 = vmul.f32 %v5292, %v5311
      %v5313 = vmul.f32 %v5294, %v5311
      %v5314 = vmul.f32 %v5296, %v5311
      %v5315 = vrcp.pop %v5310
      %v5316 = vmul.f32 %v5298, %v5315
      %v5317 = vmul.f32 %v5300, %v5315
      %v5318 = vmul.f32 %v5302, %v5315
      %v5319 = vlaneseq
      %v5320 = vshrl.u32 %v5319, 7
      %v5321 = vsub.s32 6, %v5320
      %v5322 = vrot.slane %v1054, %v5321
      %v5323 = vlaneseq
      %v5324 = vshrl.u32 %v5323, 7
      %v5325 = vsub.s32 6, %v5324
      %v5326 = vrot.slane %v1055, %v5325
      %v5327 = vlaneseq
      %v5328 = vshrl.u32 %v5327, 7
      %v5329 = vsub.s32 6, %v5328
      %v5330 = vrot.slane %v1056, %v5329
      %v5331 = vmul.f32 %v5322, %v5312
      %v5332 = vmul.f32 %v5326, %v5313
      %v5333 = vmul.f32 %v5330, %v5314
      %v5334 = vmul.f32 %v5322, %v5316
      %v5335 = vmul.f32 %v5326, %v5317
      %v5336 = vmul.f32 %v5330, %v5318
      %v5337 = vadd.f32 %v4881, %v5331
      %v5338 = vadd.f32 %v4882, %v5332
      %v5339 = vadd.f32 %v4883, %v5333
      %v5340 = vadd.f32 %v4884, %v5334
      %v5341 = vadd.f32 %v4885, %v5335
      %v5342 = vadd.f32 %v4886, %v5336
      %v5343 = vpack.c.bf16 %v5316, %v5312
      %v5344 = vpack.c.bf16 %v5317, %v5313
      %v5345 = vpack.c.bf16 %v5318, %v5314
      %5346 = vrot.lane.b32.xlu0 %v4481, 64
      %v5347 = vpop.permute.xlu0 %5346
      %5348 = vrot.lane.b32.xlu0 %v4482, 64
      %v5349 = vpop.permute.xlu0 %5348
      %5350 = vrot.lane.b32.xlu0 %v4483, 64
      %v5351 = vpop.permute.xlu0 %5350
      %5352 = vrot.lane.b32.xlu0 %v4484, 64
      %v5353 = vpop.permute.xlu0 %5352
      %5354 = vrot.lane.b32.xlu0 %v4485, 64
      %v5355 = vpop.permute.xlu0 %5354
      %5356 = vrot.lane.b32.xlu0 %v4486, 64
      %v5357 = vpop.permute.xlu0 %5356
      %5358 = vrot.lane.b32.xlu0 %v4487, 64
      %v5359 = vpop.permute.xlu0 %5358
      %5360 = vrot.lane.b32.xlu0 %v4488, 64
      %v5361 = vpop.permute.xlu0 %5360
      %5362 = vrot.lane.b32.xlu0 %v4489, 64
      %v5363 = vpop.permute.xlu0 %5362
      %5364 = vrot.lane.b32.xlu0 %v4490, 64
      %v5365 = vpop.permute.xlu0 %5364
      %5366 = vrot.lane.b32.xlu0 %v4491, 64
      %v5367 = vpop.permute.xlu0 %5366
      %5368 = vrot.lane.b32.xlu0 %v4492, 64
      %v5369 = vpop.permute.xlu0 %5368
      %5370 = vrot.lane.b32.xlu0 %v4493, 64
      %v5371 = vpop.permute.xlu0 %5370
      %5372 = vrot.lane.b32.xlu0 %v4494, 64
      %v5373 = vpop.permute.xlu0 %5372
      %5374 = vrot.lane.b32.xlu0 %v4495, 64
      %v5375 = vpop.permute.xlu0 %5374
      %5376 = vrot.lane.b32.xlu0 %v4496, 64
      %v5377 = vpop.permute.xlu0 %5376
      %5378 = vrot.lane.b32.xlu0 %v4497, 64
      %v5379 = vpop.permute.xlu0 %5378
      %5380 = vrot.lane.b32.xlu0 %v4498, 64
      %v5381 = vpop.permute.xlu0 %5380
      %5382 = vrot.lane.b32.xlu0 %v4499, 64
      %v5383 = vpop.permute.xlu0 %5382
      %5384 = vrot.lane.b32.xlu0 %v4500, 64
      %v5385 = vpop.permute.xlu0 %5384
      %5386 = vrot.lane.b32.xlu0 %v4501, 64
      %v5387 = vpop.permute.xlu0 %5386
      %5388 = vrot.lane.b32.xlu0 %v4502, 64
      %v5389 = vpop.permute.xlu0 %5388
      %5390 = vrot.lane.b32.xlu0 %v4503, 64
      %v5391 = vpop.permute.xlu0 %5390
      %5392 = vrot.lane.b32.xlu0 %v4504, 64
      %v5393 = vpop.permute.xlu0 %5392
      %5418 = vmatprep.subr.bf16.mxu0 0
      %5419 = vmatpush1.bf16.msra.mxu0 %v5347
      %5420 = vmatprep.subr.bf16.mxu0 0
      %5421 = vmatpush1.bf16.msra.mxu0 %v5349
      %5422 = vmatprep.subr.bf16.mxu0 0
      %5423 = vmatpush1.bf16.msra.mxu0 %v5351
      %5424 = vmatprep.subr.bf16.mxu0 0
      %5425 = vmatpush1.bf16.msra.mxu0 %v5353
      %5426 = vmatprep.subr.bf16.mxu0 0
      %5427 = vmatpush1.bf16.msra.mxu0 %v5355
      %5428 = vmatprep.subr.bf16.mxu0 0
      %5429 = vmatpush1.bf16.msra.mxu0 %v5357
      %5430 = vmatprep.subr.bf16.mxu0 0
      %5431 = vmatpush1.bf16.msra.mxu0 %v5359
      %5432 = vmatprep.subr.bf16.mxu0 0
      %5433 = vmatpush1.bf16.msra.mxu0 %v5361
      %5434 = vmatprep.subr.bf16.mxu0 0
      %5435 = vmatpush1.bf16.msra.mxu0 %v5363
      %5436 = vmatprep.subr.bf16.mxu0 0
      %5437 = vmatpush1.bf16.msra.mxu0 %v5365
      %5438 = vmatprep.subr.bf16.mxu0 0
      %5439 = vmatpush1.bf16.msra.mxu0 %v5367
      %5440 = vmatprep.subr.bf16.mxu0 0
      %5441 = vmatpush1.bf16.msra.mxu0 %v5369
      %5442 = vmatprep.subr.bf16.mxu0 0
      %5443 = vmatpush1.bf16.msra.mxu0 %v5371
      %5444 = vmatprep.subr.bf16.mxu0 0
      %5445 = vmatpush1.bf16.msra.mxu0 %v5373
      %5446 = vmatprep.subr.bf16.mxu0 0
      %5447 = vmatpush1.bf16.msra.mxu0 %v5375
      %5448 = vmatprep.subr.bf16.mxu0 0
      %5449 = vmatpush1.bf16.msra.mxu0 %v5377
      %5450 = vmatprep.mubr.bf16.mxu0 %v5344
      %5451 = vmatmul.mubr.bf16.gmra.mrb[0].mxu0 %v5343
      %v5452 = vpop.f32.mrb[0].mxu0
      %v5453 = vadd.f32 0.0, %v5452
      %v5454 = vpop.f32.mrb[0].mxu0
      %v5455 = vpop.f32.mrb[0].mxu0
      %v5456 = vadd.f32 0.0, %v5455
      %v5457 = vpop.f32.mrb[0].mxu0
      %5458 = vdwg.mxu0
      %5459 = vmatprep.subr.bf16.mxu0 0
      %5460 = vmatpush1.bf16.msra.mxu0 %v5379
      %5461 = vmatprep.subr.bf16.mxu0 0
      %5462 = vmatpush1.bf16.msra.mxu0 %v5381
      %5463 = vmatprep.subr.bf16.mxu0 0
      %5464 = vmatpush1.bf16.msra.mxu0 %v5383
      %5465 = vmatprep.subr.bf16.mxu0 0
      %5466 = vmatpush1.bf16.msra.mxu0 %v5385
      %5467 = vmatprep.subr.bf16.mxu0 0
      %5468 = vmatpush1.bf16.msra.mxu0 %v5387
      %5469 = vmatprep.subr.bf16.mxu0 0
      %5470 = vmatpush1.bf16.msra.mxu0 %v5389
      %5471 = vmatprep.subr.bf16.mxu0 0
      %5472 = vmatpush1.bf16.msra.mxu0 %v5391
      %5473 = vmatprep.subr.bf16.mxu0 0
      %5474 = vmatpush1.bf16.msra.mxu0 %v5393
      %5475 = vmatprep.subr.bf16.mxu0 0
      %5476 = vmatpush1.bf16.msra.mxu0 0
      %5477 = vmatprep.subr.bf16.mxu0 0
      %5478 = vmatpush1.bf16.msra.mxu0 0
      %5479 = vmatprep.subr.bf16.mxu0 0
      %5480 = vmatpush1.bf16.msra.mxu0 0
      %5481 = vmatprep.subr.bf16.mxu0 0
      %5482 = vmatpush1.bf16.msra.mxu0 0
      %5483 = vmatprep.subr.bf16.mxu0 0
      %5484 = vmatpush1.bf16.msra.mxu0 0
      %5485 = vmatprep.subr.bf16.mxu0 0
      %5486 = vmatpush1.bf16.msra.mxu0 0
      %5487 = vmatprep.subr.bf16.mxu0 0
      %5488 = vmatpush1.bf16.msra.mxu0 0
      %5489 = vmatprep.subr.bf16.mxu0 0
      %5490 = vmatpush1.bf16.msra.mxu0 0
      %5491 = vmatprep.mubr.bf16.mxu0 0
      %5492 = vmatmul.mubr.bf16.gmra.mrb[0].mxu0 %v5345
      %v5493 = vpop.f32.mrb[0].mxu0
      %v5494 = vadd.f32 %v5453, %v5493
      %v5495 = vpop.f32.mrb[0].mxu0
      %v5496 = vpop.f32.mrb[0].mxu0
      %v5497 = vadd.f32 %v5456, %v5496
      %v5498 = vpop.f32.mrb[0].mxu0
      %5499 = vdwg.mxu0
      %5500 = vrot.lane.b32.xlu0 %v4228, 32
      %v5501 = vpop.permute.xlu0 %5500
      %5502 = vrot.lane.b32.xlu0 %v4229, 32
      %v5503 = vpop.permute.xlu0 %5502
      %5504 = vrot.lane.b32.xlu0 %v4230, 32
      %v5505 = vpop.permute.xlu0 %5504
      %5506 = vrot.lane.b32.xlu0 %v4231, 32
      %v5507 = vpop.permute.xlu0 %5506
      %5508 = vrot.lane.b32.xlu0 %v4232, 32
      %v5509 = vpop.permute.xlu0 %5508
      %5510 = vrot.lane.b32.xlu0 %v4233, 32
      %v5511 = vpop.permute.xlu0 %5510
      %5512 = vrot.lane.b32.xlu0 %v4234, 32
      %v5513 = vpop.permute.xlu0 %5512
      %5514 = vrot.lane.b32.xlu0 %v4235, 32
      %v5515 = vpop.permute.xlu0 %5514
      %5516 = vrot.lane.b32.xlu0 %v4236, 32
      %v5517 = vpop.permute.xlu0 %5516
      %5518 = vrot.lane.b32.xlu0 %v4237, 32
      %v5519 = vpop.permute.xlu0 %5518
      %5520 = vrot.lane.b32.xlu0 %v4238, 32
      %v5521 = vpop.permute.xlu0 %5520
      %5522 = vrot.lane.b32.xlu0 %v4239, 32
      %v5523 = vpop.permute.xlu0 %5522
      %5524 = vrot.lane.b32.xlu0 %v4240, 32
      %v5525 = vpop.permute.xlu0 %5524
      %5526 = vrot.lane.b32.xlu0 %v4241, 32
      %v5527 = vpop.permute.xlu0 %5526
      %5528 = vrot.lane.b32.xlu0 %v4242, 32
      %v5529 = vpop.permute.xlu0 %5528
      %5530 = vrot.lane.b32.xlu0 %v4243, 32
      %v5531 = vpop.permute.xlu0 %5530
      %5532 = vrot.lane.b32.xlu0 %v4244, 32
      %v5533 = vpop.permute.xlu0 %5532
      %5534 = vrot.lane.b32.xlu0 %v4245, 32
      %v5535 = vpop.permute.xlu0 %5534
      %5536 = vrot.lane.b32.xlu0 %v4246, 32
      %v5537 = vpop.permute.xlu0 %5536
      %5538 = vrot.lane.b32.xlu0 %v4247, 32
      %v5539 = vpop.permute.xlu0 %5538
      %5540 = vrot.lane.b32.xlu0 %v4248, 32
      %v5541 = vpop.permute.xlu0 %5540
      %5542 = vrot.lane.b32.xlu0 %v4249, 32
      %v5543 = vpop.permute.xlu0 %5542
      %5544 = vrot.lane.b32.xlu0 %v4250, 32
      %v5545 = vpop.permute.xlu0 %5544
      %5546 = vrot.lane.b32.xlu0 %v4251, 32
      %v5547 = vpop.permute.xlu0 %5546
      %5548 = vrot.lane.b32.xlu0 %v4252, 32
      %v5549 = vpop.permute.xlu0 %5548
      %v5551 = vsel %vm2548, %v5501, 0
      %v5554 = vsel %vm2548, %v5503, 0
      %v5557 = vsel %vm2548, %v5505, 0
      %v5560 = vsel %vm2548, %v5507, 0
      %v5563 = vsel %vm2548, %v5509, 0
      %v5566 = vsel %vm2548, %v5511, 0
      %v5569 = vsel %vm2548, %v5513, 0
      %v5572 = vsel %vm2548, %v5515, 0
      %v5575 = vsel %vm2548, %v5517, 0
      %v5578 = vsel %vm2548, %v5519, 0
      %v5581 = vsel %vm2548, %v5521, 0
      %v5584 = vsel %vm2548, %v5523, 0
      %v5587 = vsel %vm2548, %v5525, 0
      %v5590 = vsel %vm2548, %v5527, 0
      %v5593 = vsel %vm2548, %v5529, 0
      %v5596 = vsel %vm2548, %v5531, 0
      %v5599 = vsel %vm2548, %v5533, 0
      %v5602 = vsel %vm2548, %v5535, 0
      %v5605 = vsel %vm2548, %v5537, 0
      %v5608 = vsel %vm2548, %v5539, 0
      %v5611 = vsel %vm2548, %v5541, 0
      %v5614 = vsel %vm2548, %v5543, 0
      %v5617 = vsel %vm2548, %v5545, 0
      %v5620 = vsel %vm2548, %v5547, 0
      %v5623 = vsel %vm2548, %v5549, 0
      %5625 = vmatprep.subr.bf16.mxu0 0
      %5626 = vmatpush1.bf16.xpose.msra.mxu0 %v5554
      %5627 = vmatprep.subr.bf16.mxu0 0
      %5628 = vmatpush1.bf16.xpose.msra.mxu0 %v5557
      %5629 = vmatprep.subr.bf16.mxu0 0
      %5630 = vmatpush1.bf16.xpose.msra.mxu0 %v5560
      %5631 = vmatprep.subr.bf16.mxu0 0
      %5632 = vmatpush1.bf16.xpose.msra.mxu0 %v5563
      %5633 = vmatprep.subr.bf16.mxu0 0
      %5634 = vmatpush1.bf16.xpose.msra.mxu0 %v5566
      %5635 = vmatprep.subr.bf16.mxu0 0
      %5636 = vmatpush1.bf16.xpose.msra.mxu0 %v5569
      %5637 = vmatprep.subr.bf16.mxu0 0
      %5638 = vmatpush1.bf16.xpose.msra.mxu0 %v5572
      %5639 = vmatprep.subr.bf16.mxu0 0
      %5640 = vmatpush1.bf16.xpose.msra.mxu0 %v5575
      %5641 = vmatprep.subr.bf16.mxu0 0
      %5642 = vmatpush1.bf16.xpose.msra.mxu0 %v5578
      %5643 = vmatprep.subr.bf16.mxu0 0
      %5644 = vmatpush1.bf16.xpose.msra.mxu0 %v5581
      %5645 = vmatprep.subr.bf16.mxu0 0
      %5646 = vmatpush1.bf16.xpose.msra.mxu0 %v5584
      %5647 = vmatprep.subr.bf16.mxu0 0
      %5648 = vmatpush1.bf16.xpose.msra.mxu0 %v5587
      %5649 = vmatprep.subr.bf16.mxu0 0
      %5650 = vmatpush1.bf16.xpose.msra.mxu0 %v5590
      %5651 = vmatprep.subr.bf16.mxu0 0
      %5652 = vmatpush1.bf16.xpose.msra.mxu0 %v5593
      %5653 = vmatprep.subr.bf16.mxu0 0
      %5654 = vmatpush1.bf16.xpose.msra.mxu0 %v5596
      %5655 = vmatprep.subr.bf16.mxu0 0
      %5656 = vmatpush1.bf16.xpose.msra.mxu0 %v5599
      %5657 = vmatprep.mubr.bf16.mxu0 0
      %5658 = vmatmul.mubr.bf16.gmra.mrb[0].mxu0 %v5551
      %v5659 = vpop.f32.mrb[0].mxu0
      %v5660 = vadd.f32 %v2511, %v5659
      %v5661 = vpop.f32.mrb[0].mxu0
      %v5662 = vadd.f32 %v2515, %v5661
      %v5663 = vpop.f32.mrb[0].mxu0
      %v5664 = vadd.f32 %v2511, %v5663
      %v5665 = vpop.f32.mrb[0].mxu0
      %v5666 = vadd.f32 %v2515, %v5665
      %5667 = vdwg.mxu0
      %5668 = vmatprep.subr.bf16.mxu0 0
      %5669 = vmatpush1.bf16.xpose.msra.mxu0 %v5602
      %5670 = vmatprep.subr.bf16.mxu0 0
      %5671 = vmatpush1.bf16.xpose.msra.mxu0 %v5605
      %5672 = vmatprep.subr.bf16.mxu0 0
      %5673 = vmatpush1.bf16.xpose.msra.mxu0 %v5608
      %5674 = vmatprep.subr.bf16.mxu0 0
      %5675 = vmatpush1.bf16.xpose.msra.mxu0 %v5611
      %5676 = vmatprep.subr.bf16.mxu0 0
      %5677 = vmatpush1.bf16.xpose.msra.mxu0 %v5614
      %5678 = vmatprep.subr.bf16.mxu0 0
      %5679 = vmatpush1.bf16.xpose.msra.mxu0 %v5617
      %5680 = vmatprep.subr.bf16.mxu0 0
      %5681 = vmatpush1.bf16.xpose.msra.mxu0 %v5620
      %5682 = vmatprep.subr.bf16.mxu0 0
      %5683 = vmatpush1.bf16.xpose.msra.mxu0 %v5623
      %5684 = vmatprep.subr.bf16.mxu0 0
      %5685 = vmatpush1.bf16.xpose.msra.mxu0 0
      %5686 = vmatprep.subr.bf16.mxu0 0
      %5687 = vmatpush1.bf16.xpose.msra.mxu0 0
      %5688 = vmatprep.subr.bf16.mxu0 0
      %5689 = vmatpush1.bf16.xpose.msra.mxu0 0
      %5690 = vmatprep.subr.bf16.mxu0 0
      %5691 = vmatpush1.bf16.xpose.msra.mxu0 0
      %5692 = vmatprep.subr.bf16.mxu0 0
      %5693 = vmatpush1.bf16.xpose.msra.mxu0 0
      %5694 = vmatprep.subr.bf16.mxu0 0
      %5695 = vmatpush1.bf16.xpose.msra.mxu0 0
      %5696 = vmatprep.subr.bf16.mxu0 0
      %5697 = vmatpush1.bf16.xpose.msra.mxu0 0
      %5698 = vmatprep.subr.bf16.mxu0 0
      %5699 = vmatpush1.bf16.xpose.msra.mxu0 0
      %5700 = vmatprep.mubr.bf16.mxu0 0
      %5701 = vmatmul.mubr.bf16.gmra.mrb[0].mxu0 %v5551
      %v5702 = vpop.f32.mrb[0].mxu0
      %v5703 = vadd.f32 %v2519, %v5702
      %v5704 = vpop.f32.mrb[0].mxu0
      %v5705 = vpop.f32.mrb[0].mxu0
      %v5706 = vadd.f32 %v2519, %v5705
      %v5707 = vpop.f32.mrb[0].mxu0
      %5708 = vdwg.mxu0
      %v5709 = vmax.f32 %v5660, %v5703
      %v5710 = vmax.f32 %v5709, %v5662
      %5711 = vmax.xlane.f32.xlu0 %v5710
      %v5712 = vpop.xlane.xlu0 %5711
      %v5713 = vmax.f32 %v5664, %v5706
      %v5714 = vmax.f32 %v5713, %v5666
      %5715 = vmax.xlane.f32.xlu0 %v5714
      %v5716 = vpop.xlane.xlu0 %5715
      %v5717 = vsub.f32 %v5660, %v5712
      %v5718 = vsub.f32 %v5662, %v5712
      %v5719 = vsub.f32 %v5703, %v5712
      %v5720 = vsub.f32 %v5664, %v5716
      %v5721 = vsub.f32 %v5666, %v5716
      %v5722 = vsub.f32 %v5706, %v5716
      %v5723 = vmul.f32 %v5717, 1.442695
      %v5724 = vpow.pop %v5723
      %v5725 = vmul.f32 %v5718, 1.442695
      %v5726 = vpow.pop %v5725
      %v5727 = vmul.f32 %v5719, 1.442695
      %v5728 = vpow.pop %v5727
      %v5729 = vmul.f32 %v5720, 1.442695
      %v5730 = vpow.pop %v5729
      %v5731 = vmul.f32 %v5721, 1.442695
      %v5732 = vpow.pop %v5731
      %v5733 = vmul.f32 %v5722, 1.442695
      %v5734 = vpow.pop %v5733
      %v5735 = vadd.f32 %v5724, %v5726
      %v5736 = vadd.f32 %v5735, %v5728
      %5737 = vadd.xlane.f32.xlu0 %v5736
      %v5738 = vpop.xlane.xlu0 %5737
      %v5739 = vadd.f32 %v5730, %v5732
      %v5740 = vadd.f32 %v5739, %v5734
      %5741 = vadd.xlane.f32.xlu0 %v5740
      %v5742 = vpop.xlane.xlu0 %5741
      %v5743 = vrcp.pop %v5738
      %v5744 = vmul.f32 %v5724, %v5743
      %v5745 = vmul.f32 %v5726, %v5743
      %v5746 = vmul.f32 %v5728, %v5743
      %v5747 = vrcp.pop %v5742
      %v5748 = vmul.f32 %v5730, %v5747
      %v5749 = vmul.f32 %v5732, %v5747
      %v5750 = vmul.f32 %v5734, %v5747
      %v5751 = vlaneseq
      %v5752 = vshrl.u32 %v5751, 7
      %v5753 = vsub.s32 7, %v5752
      %v5754 = vrot.slane %v1054, %v5753
      %v5755 = vlaneseq
      %v5756 = vshrl.u32 %v5755, 7
      %v5757 = vsub.s32 7, %v5756
      %v5758 = vrot.slane %v1055, %v5757
      %v5759 = vlaneseq
      %v5760 = vshrl.u32 %v5759, 7
      %v5761 = vsub.s32 7, %v5760
      %v5762 = vrot.slane %v1056, %v5761
      %v5763 = vmul.f32 %v5754, %v5744
      %v5764 = vmul.f32 %v5758, %v5745
      %v5765 = vmul.f32 %v5762, %v5746
      %v5766 = vmul.f32 %v5754, %v5748
      %v5767 = vmul.f32 %v5758, %v5749
      %v5768 = vmul.f32 %v5762, %v5750
      %v5769 = vadd.f32 %v5337, %v5763
      %v5770 = vadd.f32 %v5338, %v5764
      %v5771 = vadd.f32 %v5339, %v5765
      %v5772 = vadd.f32 %v5340, %v5766
      %v5773 = vadd.f32 %v5341, %v5767
      %v5774 = vadd.f32 %v5342, %v5768
      %v5775 = vpack.c.bf16 %v5748, %v5744
      %v5776 = vpack.c.bf16 %v5749, %v5745
      %v5777 = vpack.c.bf16 %v5750, %v5746
      %5778 = vrot.lane.b32.xlu0 %v4481, 32
      %v5779 = vpop.permute.xlu0 %5778
      %5780 = vrot.lane.b32.xlu0 %v4482, 32
      %v5781 = vpop.permute.xlu0 %5780
      %5782 = vrot.lane.b32.xlu0 %v4483, 32
      %v5783 = vpop.permute.xlu0 %5782
      %5784 = vrot.lane.b32.xlu0 %v4484, 32
      %v5785 = vpop.permute.xlu0 %5784
      %5786 = vrot.lane.b32.xlu0 %v4485, 32
      %v5787 = vpop.permute.xlu0 %5786
      %5788 = vrot.lane.b32.xlu0 %v4486, 32
      %v5789 = vpop.permute.xlu0 %5788
      %5790 = vrot.lane.b32.xlu0 %v4487, 32
      %v5791 = vpop.permute.xlu0 %5790
      %5792 = vrot.lane.b32.xlu0 %v4488, 32
      %v5793 = vpop.permute.xlu0 %5792
      %5794 = vrot.lane.b32.xlu0 %v4489, 32
      %v5795 = vpop.permute.xlu0 %5794
      %5796 = vrot.lane.b32.xlu0 %v4490, 32
      %v5797 = vpop.permute.xlu0 %5796
      %5798 = vrot.lane.b32.xlu0 %v4491, 32
      %v5799 = vpop.permute.xlu0 %5798
      %5800 = vrot.lane.b32.xlu0 %v4492, 32
      %v5801 = vpop.permute.xlu0 %5800
      %5802 = vrot.lane.b32.xlu0 %v4493, 32
      %v5803 = vpop.permute.xlu0 %5802
      %5804 = vrot.lane.b32.xlu0 %v4494, 32
      %v5805 = vpop.permute.xlu0 %5804
      %5806 = vrot.lane.b32.xlu0 %v4495, 32
      %v5807 = vpop.permute.xlu0 %5806
      %5808 = vrot.lane.b32.xlu0 %v4496, 32
      %v5809 = vpop.permute.xlu0 %5808
      %5810 = vrot.lane.b32.xlu0 %v4497, 32
      %v5811 = vpop.permute.xlu0 %5810
      %5812 = vrot.lane.b32.xlu0 %v4498, 32
      %v5813 = vpop.permute.xlu0 %5812
      %5814 = vrot.lane.b32.xlu0 %v4499, 32
      %v5815 = vpop.permute.xlu0 %5814
      %5816 = vrot.lane.b32.xlu0 %v4500, 32
      %v5817 = vpop.permute.xlu0 %5816
      %5818 = vrot.lane.b32.xlu0 %v4501, 32
      %v5819 = vpop.permute.xlu0 %5818
      %5820 = vrot.lane.b32.xlu0 %v4502, 32
      %v5821 = vpop.permute.xlu0 %5820
      %5822 = vrot.lane.b32.xlu0 %v4503, 32
      %v5823 = vpop.permute.xlu0 %5822
      %5824 = vrot.lane.b32.xlu0 %v4504, 32
      %v5825 = vpop.permute.xlu0 %5824
      %5850 = vmatprep.subr.bf16.mxu0 0
      %5851 = vmatpush1.bf16.msra.mxu0 %v5779
      %5852 = vmatprep.subr.bf16.mxu0 0
      %5853 = vmatpush1.bf16.msra.mxu0 %v5781
      %5854 = vmatprep.subr.bf16.mxu0 0
      %5855 = vmatpush1.bf16.msra.mxu0 %v5783
      %5856 = vmatprep.subr.bf16.mxu0 0
      %5857 = vmatpush1.bf16.msra.mxu0 %v5785
      %5858 = vmatprep.subr.bf16.mxu0 0
      %5859 = vmatpush1.bf16.msra.mxu0 %v5787
      %5860 = vmatprep.subr.bf16.mxu0 0
      %5861 = vmatpush1.bf16.msra.mxu0 %v5789
      %5862 = vmatprep.subr.bf16.mxu0 0
      %5863 = vmatpush1.bf16.msra.mxu0 %v5791
      %5864 = vmatprep.subr.bf16.mxu0 0
      %5865 = vmatpush1.bf16.msra.mxu0 %v5793
      %5866 = vmatprep.subr.bf16.mxu0 0
      %5867 = vmatpush1.bf16.msra.mxu0 %v5795
      %5868 = vmatprep.subr.bf16.mxu0 0
      %5869 = vmatpush1.bf16.msra.mxu0 %v5797
      %5870 = vmatprep.subr.bf16.mxu0 0
      %5871 = vmatpush1.bf16.msra.mxu0 %v5799
      %5872 = vmatprep.subr.bf16.mxu0 0
      %5873 = vmatpush1.bf16.msra.mxu0 %v5801
      %5874 = vmatprep.subr.bf16.mxu0 0
      %5875 = vmatpush1.bf16.msra.mxu0 %v5803
      %5876 = vmatprep.subr.bf16.mxu0 0
      %5877 = vmatpush1.bf16.msra.mxu0 %v5805
      %5878 = vmatprep.subr.bf16.mxu0 0
      %5879 = vmatpush1.bf16.msra.mxu0 %v5807
      %5880 = vmatprep.subr.bf16.mxu0 0
      %5881 = vmatpush1.bf16.msra.mxu0 %v5809
      %5882 = vmatprep.mubr.bf16.mxu0 %v5776
      %5883 = vmatmul.mubr.bf16.gmra.mrb[0].mxu0 %v5775
      %v5884 = vpop.f32.mrb[0].mxu0
      %v5885 = vadd.f32 0.0, %v5884
      %v5886 = vpop.f32.mrb[0].mxu0
      %v5887 = vpop.f32.mrb[0].mxu0
      %v5888 = vadd.f32 0.0, %v5887
      %v5889 = vpop.f32.mrb[0].mxu0
      %5890 = vdwg.mxu0
      %5891 = vmatprep.subr.bf16.mxu0 0
      %5892 = vmatpush1.bf16.msra.mxu0 %v5811
      %5893 = vmatprep.subr.bf16.mxu0 0
      %5894 = vmatpush1.bf16.msra.mxu0 %v5813
      %5895 = vmatprep.subr.bf16.mxu0 0
      %5896 = vmatpush1.bf16.msra.mxu0 %v5815
      %5897 = vmatprep.subr.bf16.mxu0 0
      %5898 = vmatpush1.bf16.msra.mxu0 %v5817
      %5899 = vmatprep.subr.bf16.mxu0 0
      %5900 = vmatpush1.bf16.msra.mxu0 %v5819
      %5901 = vmatprep.subr.bf16.mxu0 0
      %5902 = vmatpush1.bf16.msra.mxu0 %v5821
      %5903 = vmatprep.subr.bf16.mxu0 0
      %5904 = vmatpush1.bf16.msra.mxu0 %v5823
      %5905 = vmatprep.subr.bf16.mxu0 0
      %5906 = vmatpush1.bf16.msra.mxu0 %v5825
      %5907 = vmatprep.subr.bf16.mxu0 0
      %5908 = vmatpush1.bf16.msra.mxu0 0
      %5909 = vmatprep.subr.bf16.mxu0 0
      %5910 = vmatpush1.bf16.msra.mxu0 0
      %5911 = vmatprep.subr.bf16.mxu0 0
      %5912 = vmatpush1.bf16.msra.mxu0 0
      %5913 = vmatprep.subr.bf16.mxu0 0
      %5914 = vmatpush1.bf16.msra.mxu0 0
      %5915 = vmatprep.subr.bf16.mxu0 0
      %5916 = vmatpush1.bf16.msra.mxu0 0
      %5917 = vmatprep.subr.bf16.mxu0 0
      %5918 = vmatpush1.bf16.msra.mxu0 0
      %5919 = vmatprep.subr.bf16.mxu0 0
      %5920 = vmatpush1.bf16.msra.mxu0 0
      %5921 = vmatprep.subr.bf16.mxu0 0
      %5922 = vmatpush1.bf16.msra.mxu0 0
      %5923 = vmatprep.mubr.bf16.mxu0 0
      %5924 = vmatmul.mubr.bf16.gmra.mrb[0].mxu0 %v5777
      %v5925 = vpop.f32.mrb[0].mxu0
      %v5926 = vadd.f32 %v5885, %v5925
      %v5927 = vpop.f32.mrb[0].mxu0
      %v5928 = vpop.f32.mrb[0].mxu0
      %v5929 = vadd.f32 %v5888, %v5928
      %v5930 = vpop.f32.mrb[0].mxu0
      %5931 = vdwg.mxu0
      %5934 = vrot.lane.b32.xlu0 %v3358, 32
      %v5935 = vpop.permute.xlu0 %5934
      %5936 = vrot.lane.b32.xlu0 %v3361, 32
      %v5937 = vpop.permute.xlu0 %5936
      %5942 = vrot.lane.b32.xlu0 %v3790, 64
      %v5943 = vpop.permute.xlu0 %5942
      %5944 = vrot.lane.b32.xlu0 %v3793, 64
      %v5945 = vpop.permute.xlu0 %5944
      %5950 = vrot.lane.b32.xlu0 %v4222, 96
      %v5951 = vpop.permute.xlu0 %5950
      %5952 = vrot.lane.b32.xlu0 %v4225, 96
      %v5953 = vpop.permute.xlu0 %5952
      %5958 = vrot.lane.b32.xlu0 %v5062, 32
      %v5959 = vpop.permute.xlu0 %5958
      %5960 = vrot.lane.b32.xlu0 %v5065, 32
      %v5961 = vpop.permute.xlu0 %5960
      %5966 = vrot.lane.b32.xlu0 %v5494, 64
      %v5967 = vpop.permute.xlu0 %5966
      %5968 = vrot.lane.b32.xlu0 %v5497, 64
      %v5969 = vpop.permute.xlu0 %5968
      %5974 = vrot.lane.b32.xlu0 %v5926, 96
      %v5975 = vpop.permute.xlu0 %5974
      %5976 = vrot.lane.b32.xlu0 %v5929, 96
      %v5977 = vpop.permute.xlu0 %5976
      %v5980 = vsel %vm2548, %v2877, %v5935
      %v5981 = vsel %vm2548, %v2880, %v5937
      %vm5982 = vcmask 523264
      %v5983 = vsel %vm5982, %v5980, %v5943
      %v5984 = vsel %vm5982, %v5981, %v5945
      %vm5985 = vcmask 785408
      %v5986 = vsel %vm5985, %v5983, %v5951
      %v5987 = vsel %vm5985, %v5984, %v5953
      %v5988 = vsel %vm2548, %v4581, %v5959
      %v5989 = vsel %vm2548, %v4584, %v5961
      %v5990 = vsel %vm5982, %v5988, %v5967
      %v5991 = vsel %vm5982, %v5989, %v5969
      %v5992 = vsel %vm5985, %v5990, %v5975
      %v5993 = vsel %vm5985, %v5991, %v5977
      %v5994 = vpack.c.bf16 %v5987, %v5986
      %v5995 = vpack.c.bf16 %v5993, %v5992
      %v5996 = vld [vmem:[%s928] sm:$0xff]
      %v5997 = vld [vmem:[%s928 + $0x8] sm:$0xff]
      %v5998 = vld [vmem:[%s928 + $0x10] sm:$0xff]
      %v5999 = vld [vmem:[%s928 + $0x18] sm:$0xff]
      %v6000 = vld [vmem:[%s928 + $0x20] sm:$0xff]
      %v6001 = vld [vmem:[%s928 + $0x28] sm:$0xff]
      %v6002 = vld [vmem:[%s928 + $0x30] sm:$0xff]
      %v6003 = vld [vmem:[%s928 + $0x38] sm:$0xff]
      %v6004 = vld [vmem:[%s928 + $0x40] sm:$0xff]
      %v6005 = vld [vmem:[%s928 + $0x48] sm:$0xff]
      %v6006 = vld [vmem:[%s928 + $0x50] sm:$0xff]
      %v6007 = vld [vmem:[%s928 + $0x58] sm:$0xff]
      %v6008 = vld [vmem:[%s928 + $0x60] sm:$0xff]
      %v6009 = vld [vmem:[%s928 + $0x68] sm:$0xff]
      %v6010 = vld [vmem:[%s928 + $0x70] sm:$0xff]
      %v6011 = vld [vmem:[%s928 + $0x78] sm:$0xff]
      %v6012 = vld [vmem:[%s928 + $0x80] sm:$0xff]
      %v6013 = vld [vmem:[%s928 + $0x88] sm:$0xff]
      %v6014 = vld [vmem:[%s928 + $0x90] sm:$0xff]
      %v6015 = vld [vmem:[%s928 + $0x98] sm:$0xff]
      %v6016 = vld [vmem:[%s928 + $0xa0] sm:$0xff]
      %v6017 = vld [vmem:[%s928 + $0xa8] sm:$0xff]
      %v6018 = vld [vmem:[%s928 + $0xb0] sm:$0xff]
      %v6019 = vld [vmem:[%s928 + $0xb8] sm:$0xff]
      %v6020 = vld [vmem:[%s928 + $0xc0] sm:$0xff]
      %v6021 = vld [vmem:[%s928 + $0xc8] sm:$0xff]
      %v6022 = vld [vmem:[%s928 + $0xd0] sm:$0xff]
      %v6023 = vld [vmem:[%s928 + $0xd8] sm:$0xff]
      %v6024 = vld [vmem:[%s928 + $0xe0] sm:$0xff]
      %v6025 = vld [vmem:[%s928 + $0xe8] sm:$0xff]
      %v6026 = vld [vmem:[%s928 + $0xf0] sm:$0xff]
      %v6027 = vld [vmem:[%s928 + $0xf8] sm:$0xff]
      %v6028 = vld [vmem:[%s932] sm:$0x3]
      %v6030 = vlaneseq
      %v6031 = vshrl.u32 %v6030, 7
      %v6032 = vsub.s32 0, %v6031
      %v6033 = vrot.slane %v6028, %v6032
      %v6034 = vlaneseq
      %v6035 = vshrl.u32 %v6034, 7
      %v6036 = vsub.s32 1, %v6035
      %v6037 = vrot.slane %v6028, %v6036
      %v6072 = vunpack.c.l.b16 %v5996
      %v6073 = vunpack.c.h.b16 %v5996
      %v6074 = vunpack.c.l.b16 %v5997
      %v6075 = vunpack.c.h.b16 %v5997
      %v6076 = vunpack.c.l.b16 %v5998
      %v6077 = vunpack.c.h.b16 %v5998
      %v6078 = vunpack.c.l.b16 %v5999
      %v6079 = vunpack.c.h.b16 %v5999
      %v6080 = vunpack.c.l.b16 %v6000
      %v6081 = vunpack.c.h.b16 %v6000
      %v6082 = vunpack.c.l.b16 %v6001
      %v6083 = vunpack.c.h.b16 %v6001
      %v6084 = vunpack.c.l.b16 %v6002
      %v6085 = vunpack.c.h.b16 %v6002
      %v6086 = vunpack.c.l.b16 %v6003
      %v6087 = vunpack.c.h.b16 %v6003
      %v6088 = vunpack.c.l.b16 %v6004
      %v6089 = vunpack.c.h.b16 %v6004
      %v6090 = vunpack.c.l.b16 %v6005
      %v6091 = vunpack.c.h.b16 %v6005
      %v6092 = vunpack.c.l.b16 %v6006
      %v6093 = vunpack.c.h.b16 %v6006
      %v6094 = vunpack.c.l.b16 %v6007
      %v6095 = vunpack.c.h.b16 %v6007
      %v6096 = vunpack.c.l.b16 %v6008
      %v6097 = vunpack.c.h.b16 %v6008
      %v6098 = vunpack.c.l.b16 %v6009
      %v6099 = vunpack.c.h.b16 %v6009
      %v6100 = vunpack.c.l.b16 %v6010
      %v6101 = vunpack.c.h.b16 %v6010
      %v6102 = vunpack.c.l.b16 %v6011
      %v6103 = vunpack.c.h.b16 %v6011
      %v6104 = vunpack.c.l.b16 %v6012
      %v6105 = vunpack.c.h.b16 %v6012
      %v6106 = vunpack.c.l.b16 %v6013
      %v6107 = vunpack.c.h.b16 %v6013
      %v6108 = vunpack.c.l.b16 %v6014
      %v6109 = vunpack.c.h.b16 %v6014
      %v6110 = vunpack.c.l.b16 %v6015
      %v6111 = vunpack.c.h.b16 %v6015
      %v6112 = vunpack.c.l.b16 %v6016
      %v6113 = vunpack.c.h.b16 %v6016
      %v6114 = vunpack.c.l.b16 %v6017
      %v6115 = vunpack.c.h.b16 %v6017
      %v6116 = vunpack.c.l.b16 %v6018
      %v6117 = vunpack.c.h.b16 %v6018
      %v6118 = vunpack.c.l.b16 %v6019
      %v6119 = vunpack.c.h.b16 %v6019
      %v6120 = vunpack.c.l.b16 %v6020
      %v6121 = vunpack.c.h.b16 %v6020
      %v6122 = vunpack.c.l.b16 %v6021
      %v6123 = vunpack.c.h.b16 %v6021
      %v6124 = vunpack.c.l.b16 %v6022
      %v6125 = vunpack.c.h.b16 %v6022
      %v6126 = vunpack.c.l.b16 %v6023
      %v6127 = vunpack.c.h.b16 %v6023
      %v6128 = vunpack.c.l.b16 %v6024
      %v6129 = vunpack.c.h.b16 %v6024
      %v6130 = vunpack.c.l.b16 %v6025
      %v6131 = vunpack.c.h.b16 %v6025
      %v6132 = vunpack.c.l.b16 %v6026
      %v6133 = vunpack.c.h.b16 %v6026
      %v6134 = vunpack.c.l.b16 %v6027
      %v6135 = vunpack.c.h.b16 %v6027
      %v6136 = vpack.c.b16 %v6074, %v6072
      %v6137 = vpack.c.b16 %v6075, %v6073
      %v6138 = vpack.c.b16 %v6078, %v6076
      %v6139 = vpack.c.b16 %v6079, %v6077
      %v6140 = vpack.c.b16 %v6082, %v6080
      %v6141 = vpack.c.b16 %v6083, %v6081
      %v6142 = vpack.c.b16 %v6086, %v6084
      %v6143 = vpack.c.b16 %v6087, %v6085
      %v6144 = vpack.c.b16 %v6090, %v6088
      %v6145 = vpack.c.b16 %v6091, %v6089
      %v6146 = vpack.c.b16 %v6094, %v6092
      %v6147 = vpack.c.b16 %v6095, %v6093
      %v6148 = vpack.c.b16 %v6098, %v6096
      %v6149 = vpack.c.b16 %v6099, %v6097
      %v6150 = vpack.c.b16 %v6102, %v6100
      %v6151 = vpack.c.b16 %v6103, %v6101
      %v6152 = vpack.c.b16 %v6106, %v6104
      %v6153 = vpack.c.b16 %v6107, %v6105
      %v6154 = vpack.c.b16 %v6110, %v6108
      %v6155 = vpack.c.b16 %v6111, %v6109
      %v6156 = vpack.c.b16 %v6114, %v6112
      %v6157 = vpack.c.b16 %v6115, %v6113
      %v6158 = vpack.c.b16 %v6118, %v6116
      %v6159 = vpack.c.b16 %v6119, %v6117
      %v6160 = vpack.c.b16 %v6122, %v6120
      %v6161 = vpack.c.b16 %v6123, %v6121
      %v6162 = vpack.c.b16 %v6126, %v6124
      %v6163 = vpack.c.b16 %v6127, %v6125
      %v6164 = vpack.c.b16 %v6130, %v6128
      %v6165 = vpack.c.b16 %v6131, %v6129
      %v6166 = vpack.c.b16 %v6134, %v6132
      %v6167 = vpack.c.b16 %v6135, %v6133
      %6200 = vmatprep.subr.bf16.mxu0 %v6137
      %6201 = vmatpush1.bf16.msra.mxu0 %v6136
      %6202 = vmatprep.subr.bf16.mxu0 %v6139
      %6203 = vmatpush1.bf16.msra.mxu0 %v6138
      %6204 = vmatprep.subr.bf16.mxu0 %v6141
      %6205 = vmatpush1.bf16.msra.mxu0 %v6140
      %6206 = vmatprep.subr.bf16.mxu0 %v6143
      %6207 = vmatpush1.bf16.msra.mxu0 %v6142
      %6208 = vmatprep.subr.bf16.mxu0 %v6145
      %6209 = vmatpush1.bf16.msra.mxu0 %v6144
      %6210 = vmatprep.subr.bf16.mxu0 %v6147
      %6211 = vmatpush1.bf16.msra.mxu0 %v6146
      %6212 = vmatprep.subr.bf16.mxu0 %v6149
      %6213 = vmatpush1.bf16.msra.mxu0 %v6148
      %6214 = vmatprep.subr.bf16.mxu0 %v6151
      %6215 = vmatpush1.bf16.msra.mxu0 %v6150
      %6216 = vmatprep.subr.bf16.mxu0 %v6153
      %6217 = vmatpush1.bf16.msra.mxu0 %v6152
      %6218 = vmatprep.subr.bf16.mxu0 %v6155
      %6219 = vmatpush1.bf16.msra.mxu0 %v6154
      %6220 = vmatprep.subr.bf16.mxu0 %v6157
      %6221 = vmatpush1.bf16.msra.mxu0 %v6156
      %6222 = vmatprep.subr.bf16.mxu0 %v6159
      %6223 = vmatpush1.bf16.msra.mxu0 %v6158
      %6224 = vmatprep.subr.bf16.mxu0 %v6161
      %6225 = vmatpush1.bf16.msra.mxu0 %v6160
      %6226 = vmatprep.subr.bf16.mxu0 %v6163
      %6227 = vmatpush1.bf16.msra.mxu0 %v6162
      %6228 = vmatprep.subr.bf16.mxu0 %v6165
      %6229 = vmatpush1.bf16.msra.mxu0 %v6164
      %6230 = vmatprep.subr.bf16.mxu0 %v6167
      %6231 = vmatpush1.bf16.msra.mxu0 %v6166
      %6232 = vmatprep.mubr.bf16.mxu0 %v5995
      %6233 = vmatmul.mubr.bf16.gmra.mrb[0].mxu0 %v5994
      %v6234 = vpop.f32.mrb[0].mxu0
      %v6235 = vadd.f32 %v6033, %v6234
      %v6236 = vpop.f32.mrb[0].mxu0
      %v6237 = vadd.f32 %v6037, %v6236
      %v6238 = vpop.f32.mrb[0].mxu0
      %v6239 = vadd.f32 %v6033, %v6238
      %v6240 = vpop.f32.mrb[0].mxu0
      %v6241 = vadd.f32 %v6037, %v6240
      %6242 = vdwg.mxu0
      %v6243 = vadd.f32 %v998, %v6235
      %v6244 = vadd.f32 %v999, %v6237
      %v6245 = vadd.f32 %v1000, %v6239
      %v6246 = vadd.f32 %v1001, %v6241
      %v6247 = vld [vmem:[%s936] sm:$0x3]
      %v6248 = vld [vmem:[%s940] sm:$0x3]
      %v6249 = vadd.f32 %v6243, %v6244
      %6250 = vadd.xlane.f32.xlu0 %v6249
      %v6251 = vpop.xlane.xlu0 %6250
      %v6252 = vadd.f32 %v6245, %v6246
      %6253 = vadd.xlane.f32.xlu0 %v6252
      %v6254 = vpop.xlane.xlu0 %6253
      %v6255 = vrcp.pop 256.0
      %v6256 = vmul.f32 %v6251, %v6255
      %v6257 = vmul.f32 %v6254, %v6255
      %v6258 = vsub.f32 %v6243, %v6256
      %v6259 = vsub.f32 %v6244, %v6256
      %v6260 = vsub.f32 %v6245, %v6257
      %v6261 = vsub.f32 %v6246, %v6257
      %v6262 = vmul.f32 %v6258, %v6258
      %v6263 = vmul.f32 %v6259, %v6259
      %v6264 = vmul.f32 %v6260, %v6260
      %v6265 = vmul.f32 %v6261, %v6261
      %v6266 = vadd.f32 %v6262, %v6263
      %6267 = vadd.xlane.f32.xlu0 %v6266
      %v6268 = vpop.xlane.xlu0 %6267
      %v6269 = vadd.f32 %v6264, %v6265
      %6270 = vadd.xlane.f32.xlu0 %v6269
      %v6271 = vpop.xlane.xlu0 %6270
      %v6272 = vmul.f32 %v6268, %v6255
      %v6273 = vmul.f32 %v6271, %v6255
      %v6274 = vadd.f32 %v6272, 1e-05
      %v6275 = vadd.f32 %v6273, 1e-05
      %v6276 = vrsqrt.pop %v6274
      %v6277 = vrsqrt.pop %v6275
      %v6278 = vmul.f32 %v6258, %v6276
      %v6279 = vmul.f32 %v6259, %v6276
      %v6280 = vmul.f32 %v6260, %v6277
      %v6281 = vmul.f32 %v6261, %v6277
      %v6283 = vlaneseq
      %v6284 = vshrl.u32 %v6283, 7
      %v6285 = vsub.s32 0, %v6284
      %v6286 = vrot.slane %v6247, %v6285
      %v6287 = vlaneseq
      %v6288 = vshrl.u32 %v6287, 7
      %v6289 = vsub.s32 1, %v6288
      %v6290 = vrot.slane %v6247, %v6289
      %v6293 = vmul.f32 %v6278, %v6286
      %v6294 = vmul.f32 %v6279, %v6290
      %v6295 = vmul.f32 %v6280, %v6286
      %v6296 = vmul.f32 %v6281, %v6290
      %v6298 = vlaneseq
      %v6299 = vshrl.u32 %v6298, 7
      %v6300 = vsub.s32 0, %v6299
      %v6301 = vrot.slane %v6248, %v6300
      %v6302 = vlaneseq
      %v6303 = vshrl.u32 %v6302, 7
      %v6304 = vsub.s32 1, %v6303
      %v6305 = vrot.slane %v6248, %v6304
      %v6308 = vadd.f32 %v6293, %v6301
      %v6309 = vadd.f32 %v6294, %v6305
      %v6310 = vadd.f32 %v6295, %v6301
      %v6311 = vadd.f32 %v6296, %v6305
      %v6312 = vpack.c.bf16 %v6310, %v6308
      %v6313 = vpack.c.bf16 %v6311, %v6309
      %v6314 = vld [vmem:[%s945] sm:$0xff]
      %v6315 = vld [vmem:[%s945 + $0x8] sm:$0xff]
      %v6316 = vld [vmem:[%s945 + $0x10] sm:$0xff]
      %v6317 = vld [vmem:[%s945 + $0x18] sm:$0xff]
      %v6318 = vld [vmem:[%s945 + $0x20] sm:$0xff]
      %v6319 = vld [vmem:[%s945 + $0x28] sm:$0xff]
      %v6320 = vld [vmem:[%s945 + $0x30] sm:$0xff]
      %v6321 = vld [vmem:[%s945 + $0x38] sm:$0xff]
      %v6322 = vld [vmem:[%s945 + $0x40] sm:$0xff]
      %v6323 = vld [vmem:[%s945 + $0x48] sm:$0xff]
      %v6324 = vld [vmem:[%s945 + $0x50] sm:$0xff]
      %v6325 = vld [vmem:[%s945 + $0x58] sm:$0xff]
      %v6326 = vld [vmem:[%s945 + $0x60] sm:$0xff]
      %v6327 = vld [vmem:[%s945 + $0x68] sm:$0xff]
      %v6328 = vld [vmem:[%s945 + $0x70] sm:$0xff]
      %v6329 = vld [vmem:[%s945 + $0x78] sm:$0xff]
      %v6330 = vld [vmem:[%s945 + $0x80] sm:$0xff]
      %v6331 = vld [vmem:[%s945 + $0x88] sm:$0xff]
      %v6332 = vld [vmem:[%s945 + $0x90] sm:$0xff]
      %v6333 = vld [vmem:[%s945 + $0x98] sm:$0xff]
      %v6334 = vld [vmem:[%s945 + $0xa0] sm:$0xff]
      %v6335 = vld [vmem:[%s945 + $0xa8] sm:$0xff]
      %v6336 = vld [vmem:[%s945 + $0xb0] sm:$0xff]
      %v6337 = vld [vmem:[%s945 + $0xb8] sm:$0xff]
      %v6338 = vld [vmem:[%s945 + $0xc0] sm:$0xff]
      %v6339 = vld [vmem:[%s945 + $0xc8] sm:$0xff]
      %v6340 = vld [vmem:[%s945 + $0xd0] sm:$0xff]
      %v6341 = vld [vmem:[%s945 + $0xd8] sm:$0xff]
      %v6342 = vld [vmem:[%s945 + $0xe0] sm:$0xff]
      %v6343 = vld [vmem:[%s945 + $0xe8] sm:$0xff]
      %v6344 = vld [vmem:[%s945 + $0xf0] sm:$0xff]
      %v6345 = vld [vmem:[%s945 + $0xf8] sm:$0xff]
      %v6346 = vld [vmem:[%s945 + $0x100] sm:$0xff]
      %v6347 = vld [vmem:[%s945 + $0x108] sm:$0xff]
      %v6348 = vld [vmem:[%s945 + $0x110] sm:$0xff]
      %v6349 = vld [vmem:[%s945 + $0x118] sm:$0xff]
      %v6350 = vld [vmem:[%s945 + $0x120] sm:$0xff]
      %v6351 = vld [vmem:[%s945 + $0x128] sm:$0xff]
      %v6352 = vld [vmem:[%s945 + $0x130] sm:$0xff]
      %v6353 = vld [vmem:[%s945 + $0x138] sm:$0xff]
      %v6354 = vld [vmem:[%s945 + $0x140] sm:$0xff]
      %v6355 = vld [vmem:[%s945 + $0x148] sm:$0xff]
      %v6356 = vld [vmem:[%s945 + $0x150] sm:$0xff]
      %v6357 = vld [vmem:[%s945 + $0x158] sm:$0xff]
      %v6358 = vld [vmem:[%s945 + $0x160] sm:$0xff]
      %v6359 = vld [vmem:[%s945 + $0x168] sm:$0xff]
      %v6360 = vld [vmem:[%s945 + $0x170] sm:$0xff]
      %v6361 = vld [vmem:[%s945 + $0x178] sm:$0xff]
      %v6362 = vld [vmem:[%s945 + $0x180] sm:$0xff]
      %v6363 = vld [vmem:[%s945 + $0x188] sm:$0xff]
      %v6364 = vld [vmem:[%s945 + $0x190] sm:$0xff]
      %v6365 = vld [vmem:[%s945 + $0x198] sm:$0xff]
      %v6366 = vld [vmem:[%s945 + $0x1a0] sm:$0xff]
      %v6367 = vld [vmem:[%s945 + $0x1a8] sm:$0xff]
      %v6368 = vld [vmem:[%s945 + $0x1b0] sm:$0xff]
      %v6369 = vld [vmem:[%s945 + $0x1b8] sm:$0xff]
      %v6370 = vld [vmem:[%s945 + $0x1c0] sm:$0xff]
      %v6371 = vld [vmem:[%s945 + $0x1c8] sm:$0xff]
      %v6372 = vld [vmem:[%s945 + $0x1d0] sm:$0xff]
      %v6373 = vld [vmem:[%s945 + $0x1d8] sm:$0xff]
      %v6374 = vld [vmem:[%s945 + $0x1e0] sm:$0xff]
      %v6375 = vld [vmem:[%s945 + $0x1e8] sm:$0xff]
      %v6376 = vld [vmem:[%s945 + $0x1f0] sm:$0xff]
      %v6377 = vld [vmem:[%s945 + $0x1f8] sm:$0xff]
      %v6378 = vld [vmem:[%s945 + $0x200] sm:$0xff]
      %v6379 = vld [vmem:[%s945 + $0x208] sm:$0xff]
      %v6380 = vld [vmem:[%s945 + $0x210] sm:$0xff]
      %v6381 = vld [vmem:[%s945 + $0x218] sm:$0xff]
      %v6382 = vld [vmem:[%s945 + $0x220] sm:$0xff]
      %v6383 = vld [vmem:[%s945 + $0x228] sm:$0xff]
      %v6384 = vld [vmem:[%s945 + $0x230] sm:$0xff]
      %v6385 = vld [vmem:[%s945 + $0x238] sm:$0xff]
      %v6386 = vld [vmem:[%s945 + $0x240] sm:$0xff]
      %v6387 = vld [vmem:[%s945 + $0x248] sm:$0xff]
      %v6388 = vld [vmem:[%s945 + $0x250] sm:$0xff]
      %v6389 = vld [vmem:[%s945 + $0x258] sm:$0xff]
      %v6390 = vld [vmem:[%s945 + $0x260] sm:$0xff]
      %v6391 = vld [vmem:[%s945 + $0x268] sm:$0xff]
      %v6392 = vld [vmem:[%s945 + $0x270] sm:$0xff]
      %v6393 = vld [vmem:[%s945 + $0x278] sm:$0xff]
      %v6394 = vld [vmem:[%s945 + $0x280] sm:$0xff]
      %v6395 = vld [vmem:[%s945 + $0x288] sm:$0xff]
      %v6396 = vld [vmem:[%s945 + $0x290] sm:$0xff]
      %v6397 = vld [vmem:[%s945 + $0x298] sm:$0xff]
      %v6398 = vld [vmem:[%s945 + $0x2a0] sm:$0xff]
      %v6399 = vld [vmem:[%s945 + $0x2a8] sm:$0xff]
      %v6400 = vld [vmem:[%s945 + $0x2b0] sm:$0xff]
      %v6401 = vld [vmem:[%s945 + $0x2b8] sm:$0xff]
      %v6402 = vld [vmem:[%s945 + $0x2c0] sm:$0xff]
      %v6403 = vld [vmem:[%s945 + $0x2c8] sm:$0xff]
      %v6404 = vld [vmem:[%s945 + $0x2d0] sm:$0xff]
      %v6405 = vld [vmem:[%s945 + $0x2d8] sm:$0xff]
      %v6406 = vld [vmem:[%s945 + $0x2e0] sm:$0xff]
      %v6407 = vld [vmem:[%s945 + $0x2e8] sm:$0xff]
      %v6408 = vld [vmem:[%s945 + $0x2f0] sm:$0xff]
      %v6409 = vld [vmem:[%s945 + $0x2f8] sm:$0xff]
      %v6410 = vld [vmem:[%s945 + $0x300] sm:$0xff]
      %v6411 = vld [vmem:[%s945 + $0x308] sm:$0xff]
      %v6412 = vld [vmem:[%s945 + $0x310] sm:$0xff]
      %v6413 = vld [vmem:[%s945 + $0x318] sm:$0xff]
      %v6414 = vld [vmem:[%s945 + $0x320] sm:$0xff]
      %v6415 = vld [vmem:[%s945 + $0x328] sm:$0xff]
      %v6416 = vld [vmem:[%s945 + $0x330] sm:$0xff]
      %v6417 = vld [vmem:[%s945 + $0x338] sm:$0xff]
      %v6418 = vld [vmem:[%s945 + $0x340] sm:$0xff]
      %v6419 = vld [vmem:[%s945 + $0x348] sm:$0xff]
      %v6420 = vld [vmem:[%s945 + $0x350] sm:$0xff]
      %v6421 = vld [vmem:[%s945 + $0x358] sm:$0xff]
      %v6422 = vld [vmem:[%s945 + $0x360] sm:$0xff]
      %v6423 = vld [vmem:[%s945 + $0x368] sm:$0xff]
      %v6424 = vld [vmem:[%s945 + $0x370] sm:$0xff]
      %v6425 = vld [vmem:[%s945 + $0x378] sm:$0xff]
      %v6426 = vld [vmem:[%s945 + $0x380] sm:$0xff]
      %v6427 = vld [vmem:[%s945 + $0x388] sm:$0xff]
      %v6428 = vld [vmem:[%s945 + $0x390] sm:$0xff]
      %v6429 = vld [vmem:[%s945 + $0x398] sm:$0xff]
      %v6430 = vld [vmem:[%s945 + $0x3a0] sm:$0xff]
      %v6431 = vld [vmem:[%s945 + $0x3a8] sm:$0xff]
      %v6432 = vld [vmem:[%s945 + $0x3b0] sm:$0xff]
      %v6433 = vld [vmem:[%s945 + $0x3b8] sm:$0xff]
      %v6434 = vld [vmem:[%s945 + $0x3c0] sm:$0xff]
      %v6435 = vld [vmem:[%s945 + $0x3c8] sm:$0xff]
      %v6436 = vld [vmem:[%s945 + $0x3d0] sm:$0xff]
      %v6437 = vld [vmem:[%s945 + $0x3d8] sm:$0xff]
      %v6438 = vld [vmem:[%s945 + $0x3e0] sm:$0xff]
      %v6439 = vld [vmem:[%s945 + $0x3e8] sm:$0xff]
      %v6440 = vld [vmem:[%s945 + $0x3f0] sm:$0xff]
      %v6441 = vld [vmem:[%s945 + $0x3f8] sm:$0xff]
      %v6442 = vld [vmem:[%s949] sm:$0xff]
      %v6444 = vlaneseq
      %v6445 = vshrl.u32 %v6444, 7
      %v6446 = vsub.s32 0, %v6445
      %v6447 = vrot.slane %v6442, %v6446
      %v6448 = vlaneseq
      %v6449 = vshrl.u32 %v6448, 7
      %v6450 = vsub.s32 1, %v6449
      %v6451 = vrot.slane %v6442, %v6450
      %v6452 = vlaneseq
      %v6453 = vshrl.u32 %v6452, 7
      %v6454 = vsub.s32 2, %v6453
      %v6455 = vrot.slane %v6442, %v6454
      %v6456 = vlaneseq
      %v6457 = vshrl.u32 %v6456, 7
      %v6458 = vsub.s32 3, %v6457
      %v6459 = vrot.slane %v6442, %v6458
      %v6460 = vlaneseq
      %v6461 = vshrl.u32 %v6460, 7
      %v6462 = vsub.s32 4, %v6461
      %v6463 = vrot.slane %v6442, %v6462
      %v6464 = vlaneseq
      %v6465 = vshrl.u32 %v6464, 7
      %v6466 = vsub.s32 5, %v6465
      %v6467 = vrot.slane %v6442, %v6466
      %v6468 = vlaneseq
      %v6469 = vshrl.u32 %v6468, 7
      %v6470 = vsub.s32 6, %v6469
      %v6471 = vrot.slane %v6442, %v6470
      %v6472 = vlaneseq
      %v6473 = vshrl.u32 %v6472, 7
      %v6474 = vsub.s32 7, %v6473
      %v6475 = vrot.slane %v6442, %v6474
      %v6612 = vunpack.c.l.b16 %v6314
      %v6613 = vunpack.c.h.b16 %v6314
      %v6614 = vunpack.c.l.b16 %v6315
      %v6615 = vunpack.c.h.b16 %v6315
      %v6616 = vunpack.c.l.b16 %v6316
      %v6617 = vunpack.c.h.b16 %v6316
      %v6618 = vunpack.c.l.b16 %v6317
      %v6619 = vunpack.c.h.b16 %v6317
      %v6620 = vunpack.c.l.b16 %v6318
      %v6621 = vunpack.c.h.b16 %v6318
      %v6622 = vunpack.c.l.b16 %v6319
      %v6623 = vunpack.c.h.b16 %v6319
      %v6624 = vunpack.c.l.b16 %v6320
      %v6625 = vunpack.c.h.b16 %v6320
      %v6626 = vunpack.c.l.b16 %v6321
      %v6627 = vunpack.c.h.b16 %v6321
      %v6628 = vunpack.c.l.b16 %v6322
      %v6629 = vunpack.c.h.b16 %v6322
      %v6630 = vunpack.c.l.b16 %v6323
      %v6631 = vunpack.c.h.b16 %v6323
      %v6632 = vunpack.c.l.b16 %v6324
      %v6633 = vunpack.c.h.b16 %v6324
      %v6634 = vunpack.c.l.b16 %v6325
      %v6635 = vunpack.c.h.b16 %v6325
      %v6636 = vunpack.c.l.b16 %v6326
      %v6637 = vunpack.c.h.b16 %v6326
      %v6638 = vunpack.c.l.b16 %v6327
      %v6639 = vunpack.c.h.b16 %v6327
      %v6640 = vunpack.c.l.b16 %v6328
      %v6641 = vunpack.c.h.b16 %v6328
      %v6642 = vunpack.c.l.b16 %v6329
      %v6643 = vunpack.c.h.b16 %v6329
      %v6644 = vunpack.c.l.b16 %v6330
      %v6645 = vunpack.c.h.b16 %v6330
      %v6646 = vunpack.c.l.b16 %v6331
      %v6647 = vunpack.c.h.b16 %v6331
      %v6648 = vunpack.c.l.b16 %v6332
      %v6649 = vunpack.c.h.b16 %v6332
      %v6650 = vunpack.c.l.b16 %v6333
      %v6651 = vunpack.c.h.b16 %v6333
      %v6652 = vunpack.c.l.b16 %v6334
      %v6653 = vunpack.c.h.b16 %v6334
      %v6654 = vunpack.c.l.b16 %v6335
      %v6655 = vunpack.c.h.b16 %v6335
      %v6656 = vunpack.c.l.b16 %v6336
      %v6657 = vunpack.c.h.b16 %v6336
      %v6658 = vunpack.c.l.b16 %v6337
      %v6659 = vunpack.c.h.b16 %v6337
      %v6660 = vunpack.c.l.b16 %v6338
      %v6661 = vunpack.c.h.b16 %v6338
      %v6662 = vunpack.c.l.b16 %v6339
      %v6663 = vunpack.c.h.b16 %v6339
      %v6664 = vunpack.c.l.b16 %v6340
      %v6665 = vunpack.c.h.b16 %v6340
      %v6666 = vunpack.c.l.b16 %v6341
      %v6667 = vunpack.c.h.b16 %v6341
      %v6668 = vunpack.c.l.b16 %v6342
      %v6669 = vunpack.c.h.b16 %v6342
      %v6670 = vunpack.c.l.b16 %v6343
      %v6671 = vunpack.c.h.b16 %v6343
      %v6672 = vunpack.c.l.b16 %v6344
      %v6673 = vunpack.c.h.b16 %v6344
      %v6674 = vunpack.c.l.b16 %v6345
      %v6675 = vunpack.c.h.b16 %v6345
      %v6676 = vunpack.c.l.b16 %v6346
      %v6677 = vunpack.c.h.b16 %v6346
      %v6678 = vunpack.c.l.b16 %v6347
      %v6679 = vunpack.c.h.b16 %v6347
      %v6680 = vunpack.c.l.b16 %v6348
      %v6681 = vunpack.c.h.b16 %v6348
      %v6682 = vunpack.c.l.b16 %v6349
      %v6683 = vunpack.c.h.b16 %v6349
      %v6684 = vunpack.c.l.b16 %v6350
      %v6685 = vunpack.c.h.b16 %v6350
      %v6686 = vunpack.c.l.b16 %v6351
      %v6687 = vunpack.c.h.b16 %v6351
      %v6688 = vunpack.c.l.b16 %v6352
      %v6689 = vunpack.c.h.b16 %v6352
      %v6690 = vunpack.c.l.b16 %v6353
      %v6691 = vunpack.c.h.b16 %v6353
      %v6692 = vunpack.c.l.b16 %v6354
      %v6693 = vunpack.c.h.b16 %v6354
      %v6694 = vunpack.c.l.b16 %v6355
      %v6695 = vunpack.c.h.b16 %v6355
      %v6696 = vunpack.c.l.b16 %v6356
      %v6697 = vunpack.c.h.b16 %v6356
      %v6698 = vunpack.c.l.b16 %v6357
      %v6699 = vunpack.c.h.b16 %v6357
      %v6700 = vunpack.c.l.b16 %v6358
      %v6701 = vunpack.c.h.b16 %v6358
      %v6702 = vunpack.c.l.b16 %v6359
      %v6703 = vunpack.c.h.b16 %v6359
      %v6704 = vunpack.c.l.b16 %v6360
      %v6705 = vunpack.c.h.b16 %v6360
      %v6706 = vunpack.c.l.b16 %v6361
      %v6707 = vunpack.c.h.b16 %v6361
      %v6708 = vunpack.c.l.b16 %v6362
      %v6709 = vunpack.c.h.b16 %v6362
      %v6710 = vunpack.c.l.b16 %v6363
      %v6711 = vunpack.c.h.b16 %v6363
      %v6712 = vunpack.c.l.b16 %v6364
      %v6713 = vunpack.c.h.b16 %v6364
      %v6714 = vunpack.c.l.b16 %v6365
      %v6715 = vunpack.c.h.b16 %v6365
      %v6716 = vunpack.c.l.b16 %v6366
      %v6717 = vunpack.c.h.b16 %v6366
      %v6718 = vunpack.c.l.b16 %v6367
      %v6719 = vunpack.c.h.b16 %v6367
      %v6720 = vunpack.c.l.b16 %v6368
      %v6721 = vunpack.c.h.b16 %v6368
      %v6722 = vunpack.c.l.b16 %v6369
      %v6723 = vunpack.c.h.b16 %v6369
      %v6724 = vunpack.c.l.b16 %v6370
      %v6725 = vunpack.c.h.b16 %v6370
      %v6726 = vunpack.c.l.b16 %v6371
      %v6727 = vunpack.c.h.b16 %v6371
      %v6728 = vunpack.c.l.b16 %v6372
      %v6729 = vunpack.c.h.b16 %v6372
      %v6730 = vunpack.c.l.b16 %v6373
      %v6731 = vunpack.c.h.b16 %v6373
      %v6732 = vunpack.c.l.b16 %v6374
      %v6733 = vunpack.c.h.b16 %v6374
      %v6734 = vunpack.c.l.b16 %v6375
      %v6735 = vunpack.c.h.b16 %v6375
      %v6736 = vunpack.c.l.b16 %v6376
      %v6737 = vunpack.c.h.b16 %v6376
      %v6738 = vunpack.c.l.b16 %v6377
      %v6739 = vunpack.c.h.b16 %v6377
      %v6740 = vunpack.c.l.b16 %v6378
      %v6741 = vunpack.c.h.b16 %v6378
      %v6742 = vunpack.c.l.b16 %v6379
      %v6743 = vunpack.c.h.b16 %v6379
      %v6744 = vunpack.c.l.b16 %v6380
      %v6745 = vunpack.c.h.b16 %v6380
      %v6746 = vunpack.c.l.b16 %v6381
      %v6747 = vunpack.c.h.b16 %v6381
      %v6748 = vunpack.c.l.b16 %v6382
      %v6749 = vunpack.c.h.b16 %v6382
      %v6750 = vunpack.c.l.b16 %v6383
      %v6751 = vunpack.c.h.b16 %v6383
      %v6752 = vunpack.c.l.b16 %v6384
      %v6753 = vunpack.c.h.b16 %v6384
      %v6754 = vunpack.c.l.b16 %v6385
      %v6755 = vunpack.c.h.b16 %v6385
      %v6756 = vunpack.c.l.b16 %v6386
      %v6757 = vunpack.c.h.b16 %v6386
      %v6758 = vunpack.c.l.b16 %v6387
      %v6759 = vunpack.c.h.b16 %v6387
      %v6760 = vunpack.c.l.b16 %v6388
      %v6761 = vunpack.c.h.b16 %v6388
      %v6762 = vunpack.c.l.b16 %v6389
      %v6763 = vunpack.c.h.b16 %v6389
      %v6764 = vunpack.c.l.b16 %v6390
      %v6765 = vunpack.c.h.b16 %v6390
      %v6766 = vunpack.c.l.b16 %v6391
      %v6767 = vunpack.c.h.b16 %v6391
      %v6768 = vunpack.c.l.b16 %v6392
      %v6769 = vunpack.c.h.b16 %v6392
      %v6770 = vunpack.c.l.b16 %v6393
      %v6771 = vunpack.c.h.b16 %v6393
      %v6772 = vunpack.c.l.b16 %v6394
      %v6773 = vunpack.c.h.b16 %v6394
      %v6774 = vunpack.c.l.b16 %v6395
      %v6775 = vunpack.c.h.b16 %v6395
      %v6776 = vunpack.c.l.b16 %v6396
      %v6777 = vunpack.c.h.b16 %v6396
      %v6778 = vunpack.c.l.b16 %v6397
      %v6779 = vunpack.c.h.b16 %v6397
      %v6780 = vunpack.c.l.b16 %v6398
      %v6781 = vunpack.c.h.b16 %v6398
      %v6782 = vunpack.c.l.b16 %v6399
      %v6783 = vunpack.c.h.b16 %v6399
      %v6784 = vunpack.c.l.b16 %v6400
      %v6785 = vunpack.c.h.b16 %v6400
      %v6786 = vunpack.c.l.b16 %v6401
      %v6787 = vunpack.c.h.b16 %v6401
      %v6788 = vunpack.c.l.b16 %v6402
      %v6789 = vunpack.c.h.b16 %v6402
      %v6790 = vunpack.c.l.b16 %v6403
      %v6791 = vunpack.c.h.b16 %v6403
      %v6792 = vunpack.c.l.b16 %v6404
      %v6793 = vunpack.c.h.b16 %v6404
      %v6794 = vunpack.c.l.b16 %v6405
      %v6795 = vunpack.c.h.b16 %v6405
      %v6796 = vunpack.c.l.b16 %v6406
      %v6797 = vunpack.c.h.b16 %v6406
      %v6798 = vunpack.c.l.b16 %v6407
      %v6799 = vunpack.c.h.b16 %v6407
      %v6800 = vunpack.c.l.b16 %v6408
      %v6801 = vunpack.c.h.b16 %v6408
      %v6802 = vunpack.c.l.b16 %v6409
      %v6803 = vunpack.c.h.b16 %v6409
      %v6804 = vunpack.c.l.b16 %v6410
      %v6805 = vunpack.c.h.b16 %v6410
      %v6806 = vunpack.c.l.b16 %v6411
      %v6807 = vunpack.c.h.b16 %v6411
      %v6808 = vunpack.c.l.b16 %v6412
      %v6809 = vunpack.c.h.b16 %v6412
      %v6810 = vunpack.c.l.b16 %v6413
      %v6811 = vunpack.c.h.b16 %v6413
      %v6812 = vunpack.c.l.b16 %v6414
      %v6813 = vunpack.c.h.b16 %v6414
      %v6814 = vunpack.c.l.b16 %v6415
      %v6815 = vunpack.c.h.b16 %v6415
      %v6816 = vunpack.c.l.b16 %v6416
      %v6817 = vunpack.c.h.b16 %v6416
      %v6818 = vunpack.c.l.b16 %v6417
      %v6819 = vunpack.c.h.b16 %v6417
      %v6820 = vunpack.c.l.b16 %v6418
      %v6821 = vunpack.c.h.b16 %v6418
      %v6822 = vunpack.c.l.b16 %v6419
      %v6823 = vunpack.c.h.b16 %v6419
      %v6824 = vunpack.c.l.b16 %v6420
      %v6825 = vunpack.c.h.b16 %v6420
      %v6826 = vunpack.c.l.b16 %v6421
      %v6827 = vunpack.c.h.b16 %v6421
      %v6828 = vunpack.c.l.b16 %v6422
      %v6829 = vunpack.c.h.b16 %v6422
      %v6830 = vunpack.c.l.b16 %v6423
      %v6831 = vunpack.c.h.b16 %v6423
      %v6832 = vunpack.c.l.b16 %v6424
      %v6833 = vunpack.c.h.b16 %v6424
      %v6834 = vunpack.c.l.b16 %v6425
      %v6835 = vunpack.c.h.b16 %v6425
      %v6836 = vunpack.c.l.b16 %v6426
      %v6837 = vunpack.c.h.b16 %v6426
      %v6838 = vunpack.c.l.b16 %v6427
      %v6839 = vunpack.c.h.b16 %v6427
      %v6840 = vunpack.c.l.b16 %v6428
      %v6841 = vunpack.c.h.b16 %v6428
      %v6842 = vunpack.c.l.b16 %v6429
      %v6843 = vunpack.c.h.b16 %v6429
      %v6844 = vunpack.c.l.b16 %v6430
      %v6845 = vunpack.c.h.b16 %v6430
      %v6846 = vunpack.c.l.b16 %v6431
      %v6847 = vunpack.c.h.b16 %v6431
      %v6848 = vunpack.c.l.b16 %v6432
      %v6849 = vunpack.c.h.b16 %v6432
      %v6850 = vunpack.c.l.b16 %v6433
      %v6851 = vunpack.c.h.b16 %v6433
      %v6852 = vunpack.c.l.b16 %v6434
      %v6853 = vunpack.c.h.b16 %v6434
      %v6854 = vunpack.c.l.b16 %v6435
      %v6855 = vunpack.c.h.b16 %v6435
      %v6856 = vunpack.c.l.b16 %v6436
      %v6857 = vunpack.c.h.b16 %v6436
      %v6858 = vunpack.c.l.b16 %v6437
      %v6859 = vunpack.c.h.b16 %v6437
      %v6860 = vunpack.c.l.b16 %v6438
      %v6861 = vunpack.c.h.b16 %v6438
      %v6862 = vunpack.c.l.b16 %v6439
      %v6863 = vunpack.c.h.b16 %v6439
      %v6864 = vunpack.c.l.b16 %v6440
      %v6865 = vunpack.c.h.b16 %v6440
      %v6866 = vunpack.c.l.b16 %v6441
      %v6867 = vunpack.c.h.b16 %v6441
      %v6868 = vpack.c.b16 %v6620, %v6612
      %v6869 = vpack.c.b16 %v6621, %v6613
      %v6870 = vpack.c.b16 %v6622, %v6614
      %v6871 = vpack.c.b16 %v6623, %v6615
      %v6872 = vpack.c.b16 %v6624, %v6616
      %v6873 = vpack.c.b16 %v6625, %v6617
      %v6874 = vpack.c.b16 %v6626, %v6618
      %v6875 = vpack.c.b16 %v6627, %v6619
      %v6876 = vpack.c.b16 %v6636, %v6628
      %v6877 = vpack.c.b16 %v6637, %v6629
      %v6878 = vpack.c.b16 %v6638, %v6630
      %v6879 = vpack.c.b16 %v6639, %v6631
      %v6880 = vpack.c.b16 %v6640, %v6632
      %v6881 = vpack.c.b16 %v6641, %v6633
      %v6882 = vpack.c.b16 %v6642, %v6634
      %v6883 = vpack.c.b16 %v6643, %v6635
      %v6884 = vpack.c.b16 %v6652, %v6644
      %v6885 = vpack.c.b16 %v6653, %v6645
      %v6886 = vpack.c.b16 %v6654, %v6646
      %v6887 = vpack.c.b16 %v6655, %v6647
      %v6888 = vpack.c.b16 %v6656, %v6648
      %v6889 = vpack.c.b16 %v6657, %v6649
      %v6890 = vpack.c.b16 %v6658, %v6650
      %v6891 = vpack.c.b16 %v6659, %v6651
      %v6892 = vpack.c.b16 %v6668, %v6660
      %v6893 = vpack.c.b16 %v6669, %v6661
      %v6894 = vpack.c.b16 %v6670, %v6662
      %v6895 = vpack.c.b16 %v6671, %v6663
      %v6896 = vpack.c.b16 %v6672, %v6664
      %v6897 = vpack.c.b16 %v6673, %v6665
      %v6898 = vpack.c.b16 %v6674, %v6666
      %v6899 = vpack.c.b16 %v6675, %v6667
      %v6900 = vpack.c.b16 %v6684, %v6676
      %v6901 = vpack.c.b16 %v6685, %v6677
      %v6902 = vpack.c.b16 %v6686, %v6678
      %v6903 = vpack.c.b16 %v6687, %v6679
      %v6904 = vpack.c.b16 %v6688, %v6680
      %v6905 = vpack.c.b16 %v6689, %v6681
      %v6906 = vpack.c.b16 %v6690, %v6682
      %v6907 = vpack.c.b16 %v6691, %v6683
      %v6908 = vpack.c.b16 %v6700, %v6692
      %v6909 = vpack.c.b16 %v6701, %v6693
      %v6910 = vpack.c.b16 %v6702, %v6694
      %v6911 = vpack.c.b16 %v6703, %v6695
      %v6912 = vpack.c.b16 %v6704, %v6696
      %v6913 = vpack.c.b16 %v6705, %v6697
      %v6914 = vpack.c.b16 %v6706, %v6698
      %v6915 = vpack.c.b16 %v6707, %v6699
      %v6916 = vpack.c.b16 %v6716, %v6708
      %v6917 = vpack.c.b16 %v6717, %v6709
      %v6918 = vpack.c.b16 %v6718, %v6710
      %v6919 = vpack.c.b16 %v6719, %v6711
      %v6920 = vpack.c.b16 %v6720, %v6712
      %v6921 = vpack.c.b16 %v6721, %v6713
      %v6922 = vpack.c.b16 %v6722, %v6714
      %v6923 = vpack.c.b16 %v6723, %v6715
      %v6924 = vpack.c.b16 %v6732, %v6724
      %v6925 = vpack.c.b16 %v6733, %v6725
      %v6926 = vpack.c.b16 %v6734, %v6726
      %v6927 = vpack.c.b16 %v6735, %v6727
      %v6928 = vpack.c.b16 %v6736, %v6728
      %v6929 = vpack.c.b16 %v6737, %v6729
      %v6930 = vpack.c.b16 %v6738, %v6730
      %v6931 = vpack.c.b16 %v6739, %v6731
      %v6932 = vpack.c.b16 %v6748, %v6740
      %v6933 = vpack.c.b16 %v6749, %v6741
      %v6934 = vpack.c.b16 %v6750, %v6742
      %v6935 = vpack.c.b16 %v6751, %v6743
      %v6936 = vpack.c.b16 %v6752, %v6744
      %v6937 = vpack.c.b16 %v6753, %v6745
      %v6938 = vpack.c.b16 %v6754, %v6746
      %v6939 = vpack.c.b16 %v6755, %v6747
      %v6940 = vpack.c.b16 %v6764, %v6756
      %v6941 = vpack.c.b16 %v6765, %v6757
      %v6942 = vpack.c.b16 %v6766, %v6758
      %v6943 = vpack.c.b16 %v6767, %v6759
      %v6944 = vpack.c.b16 %v6768, %v6760
      %v6945 = vpack.c.b16 %v6769, %v6761
      %v6946 = vpack.c.b16 %v6770, %v6762
      %v6947 = vpack.c.b16 %v6771, %v6763
      %v6948 = vpack.c.b16 %v6780, %v6772
      %v6949 = vpack.c.b16 %v6781, %v6773
      %v6950 = vpack.c.b16 %v6782, %v6774
      %v6951 = vpack.c.b16 %v6783, %v6775
      %v6952 = vpack.c.b16 %v6784, %v6776
      %v6953 = vpack.c.b16 %v6785, %v6777
      %v6954 = vpack.c.b16 %v6786, %v6778
      %v6955 = vpack.c.b16 %v6787, %v6779
      %v6956 = vpack.c.b16 %v6796, %v6788
      %v6957 = vpack.c.b16 %v6797, %v6789
      %v6958 = vpack.c.b16 %v6798, %v6790
      %v6959 = vpack.c.b16 %v6799, %v6791
      %v6960 = vpack.c.b16 %v6800, %v6792
      %v6961 = vpack.c.b16 %v6801, %v6793
      %v6962 = vpack.c.b16 %v6802, %v6794
      %v6963 = vpack.c.b16 %v6803, %v6795
      %v6964 = vpack.c.b16 %v6812, %v6804
      %v6965 = vpack.c.b16 %v6813, %v6805
      %v6966 = vpack.c.b16 %v6814, %v6806
      %v6967 = vpack.c.b16 %v6815, %v6807
      %v6968 = vpack.c.b16 %v6816, %v6808
      %v6969 = vpack.c.b16 %v6817, %v6809
      %v6970 = vpack.c.b16 %v6818, %v6810
      %v6971 = vpack.c.b16 %v6819, %v6811
      %v6972 = vpack.c.b16 %v6828, %v6820
      %v6973 = vpack.c.b16 %v6829, %v6821
      %v6974 = vpack.c.b16 %v6830, %v6822
      %v6975 = vpack.c.b16 %v6831, %v6823
      %v6976 = vpack.c.b16 %v6832, %v6824
      %v6977 = vpack.c.b16 %v6833, %v6825
      %v6978 = vpack.c.b16 %v6834, %v6826
      %v6979 = vpack.c.b16 %v6835, %v6827
      %v6980 = vpack.c.b16 %v6844, %v6836
      %v6981 = vpack.c.b16 %v6845, %v6837
      %v6982 = vpack.c.b16 %v6846, %v6838
      %v6983 = vpack.c.b16 %v6847, %v6839
      %v6984 = vpack.c.b16 %v6848, %v6840
      %v6985 = vpack.c.b16 %v6849, %v6841
      %v6986 = vpack.c.b16 %v6850, %v6842
      %v6987 = vpack.c.b16 %v6851, %v6843
      %v6988 = vpack.c.b16 %v6860, %v6852
      %v6989 = vpack.c.b16 %v6861, %v6853
      %v6990 = vpack.c.b16 %v6862, %v6854
      %v6991 = vpack.c.b16 %v6863, %v6855
      %v6992 = vpack.c.b16 %v6864, %v6856
      %v6993 = vpack.c.b16 %v6865, %v6857
      %v6994 = vpack.c.b16 %v6866, %v6858
      %v6995 = vpack.c.b16 %v6867, %v6859
      %7124 = vmatprep.subr.bf16.mxu0 %v6869
      %7125 = vmatpush1.bf16.msra.mxu0 %v6868
      %7126 = vmatprep.subr.bf16.mxu0 %v6877
      %7127 = vmatpush1.bf16.msra.mxu0 %v6876
      %7128 = vmatprep.subr.bf16.mxu0 %v6885
      %7129 = vmatpush1.bf16.msra.mxu0 %v6884
      %7130 = vmatprep.subr.bf16.mxu0 %v6893
      %7131 = vmatpush1.bf16.msra.mxu0 %v6892
      %7132 = vmatprep.subr.bf16.mxu0 %v6901
      %7133 = vmatpush1.bf16.msra.mxu0 %v6900
      %7134 = vmatprep.subr.bf16.mxu0 %v6909
      %7135 = vmatpush1.bf16.msra.mxu0 %v6908
      %7136 = vmatprep.subr.bf16.mxu0 %v6917
      %7137 = vmatpush1.bf16.msra.mxu0 %v6916
      %7138 = vmatprep.subr.bf16.mxu0 %v6925
      %7139 = vmatpush1.bf16.msra.mxu0 %v6924
      %7140 = vmatprep.subr.bf16.mxu0 %v6933
      %7141 = vmatpush1.bf16.msra.mxu0 %v6932
      %7142 = vmatprep.subr.bf16.mxu0 %v6941
      %7143 = vmatpush1.bf16.msra.mxu0 %v6940
      %7144 = vmatprep.subr.bf16.mxu0 %v6949
      %7145 = vmatpush1.bf16.msra.mxu0 %v6948
      %7146 = vmatprep.subr.bf16.mxu0 %v6957
      %7147 = vmatpush1.bf16.msra.mxu0 %v6956
      %7148 = vmatprep.subr.bf16.mxu0 %v6965
      %7149 = vmatpush1.bf16.msra.mxu0 %v6964
      %7150 = vmatprep.subr.bf16.mxu0 %v6973
      %7151 = vmatpush1.bf16.msra.mxu0 %v6972
      %7152 = vmatprep.subr.bf16.mxu0 %v6981
      %7153 = vmatpush1.bf16.msra.mxu0 %v6980
      %7154 = vmatprep.subr.bf16.mxu0 %v6989
      %7155 = vmatpush1.bf16.msra.mxu0 %v6988
      %7156 = vmatprep.mubr.bf16.mxu0 %v6313
      %7157 = vmatmul.mubr.bf16.gmra.mrb[0].mxu0 %v6312
      %v7158 = vpop.f32.mrb[0].mxu0
      %v7159 = vadd.f32 %v6447, %v7158
      %v7160 = vpop.f32.mrb[0].mxu0
      %v7161 = vadd.f32 %v6451, %v7160
      %v7162 = vpop.f32.mrb[0].mxu0
      %v7163 = vadd.f32 %v6447, %v7162
      %v7164 = vpop.f32.mrb[0].mxu0
      %v7165 = vadd.f32 %v6451, %v7164
      %7166 = vdwg.mxu0
      %7167 = vmatprep.subr.bf16.mxu0 %v6871
      %7168 = vmatpush1.bf16.msra.mxu0 %v6870
      %7169 = vmatprep.subr.bf16.mxu0 %v6879
      %7170 = vmatpush1.bf16.msra.mxu0 %v6878
      %7171 = vmatprep.subr.bf16.mxu0 %v6887
      %7172 = vmatpush1.bf16.msra.mxu0 %v6886
      %7173 = vmatprep.subr.bf16.mxu0 %v6895
      %7174 = vmatpush1.bf16.msra.mxu0 %v6894
      %7175 = vmatprep.subr.bf16.mxu0 %v6903
      %7176 = vmatpush1.bf16.msra.mxu0 %v6902
      %7177 = vmatprep.subr.bf16.mxu0 %v6911
      %7178 = vmatpush1.bf16.msra.mxu0 %v6910
      %7179 = vmatprep.subr.bf16.mxu0 %v6919
      %7180 = vmatpush1.bf16.msra.mxu0 %v6918
      %7181 = vmatprep.subr.bf16.mxu0 %v6927
      %7182 = vmatpush1.bf16.msra.mxu0 %v6926
      %7183 = vmatprep.subr.bf16.mxu0 %v6935
      %7184 = vmatpush1.bf16.msra.mxu0 %v6934
      %7185 = vmatprep.subr.bf16.mxu0 %v6943
      %7186 = vmatpush1.bf16.msra.mxu0 %v6942
      %7187 = vmatprep.subr.bf16.mxu0 %v6951
      %7188 = vmatpush1.bf16.msra.mxu0 %v6950
      %7189 = vmatprep.subr.bf16.mxu0 %v6959
      %7190 = vmatpush1.bf16.msra.mxu0 %v6958
      %7191 = vmatprep.subr.bf16.mxu0 %v6967
      %7192 = vmatpush1.bf16.msra.mxu0 %v6966
      %7193 = vmatprep.subr.bf16.mxu0 %v6975
      %7194 = vmatpush1.bf16.msra.mxu0 %v6974
      %7195 = vmatprep.subr.bf16.mxu0 %v6983
      %7196 = vmatpush1.bf16.msra.mxu0 %v6982
      %7197 = vmatprep.subr.bf16.mxu0 %v6991
      %7198 = vmatpush1.bf16.msra.mxu0 %v6990
      %7199 = vmatprep.mubr.bf16.mxu0 %v6313
      %7200 = vmatmul.mubr.bf16.gmra.mrb[0].mxu0 %v6312
      %v7201 = vpop.f32.mrb[0].mxu0
      %v7202 = vadd.f32 %v6455, %v7201
      %v7203 = vpop.f32.mrb[0].mxu0
      %v7204 = vadd.f32 %v6459, %v7203
      %v7205 = vpop.f32.mrb[0].mxu0
      %v7206 = vadd.f32 %v6455, %v7205
      %v7207 = vpop.f32.mrb[0].mxu0
      %v7208 = vadd.f32 %v6459, %v7207
      %7209 = vdwg.mxu0
      %7210 = vmatprep.subr.bf16.mxu0 %v6873
      %7211 = vmatpush1.bf16.msra.mxu0 %v6872
      %7212 = vmatprep.subr.bf16.mxu0 %v6881
      %7213 = vmatpush1.bf16.msra.mxu0 %v6880
      %7214 = vmatprep.subr.bf16.mxu0 %v6889
      %7215 = vmatpush1.bf16.msra.mxu0 %v6888
      %7216 = vmatprep.subr.bf16.mxu0 %v6897
      %7217 = vmatpush1.bf16.msra.mxu0 %v6896
      %7218 = vmatprep.subr.bf16.mxu0 %v6905
      %7219 = vmatpush1.bf16.msra.mxu0 %v6904
      %7220 = vmatprep.subr.bf16.mxu0 %v6913
      %7221 = vmatpush1.bf16.msra.mxu0 %v6912
      %7222 = vmatprep.subr.bf16.mxu0 %v6921
      %7223 = vmatpush1.bf16.msra.mxu0 %v6920
      %7224 = vmatprep.subr.bf16.mxu0 %v6929
      %7225 = vmatpush1.bf16.msra.mxu0 %v6928
      %7226 = vmatprep.subr.bf16.mxu0 %v6937
      %7227 = vmatpush1.bf16.msra.mxu0 %v6936
      %7228 = vmatprep.subr.bf16.mxu0 %v6945
      %7229 = vmatpush1.bf16.msra.mxu0 %v6944
      %7230 = vmatprep.subr.bf16.mxu0 %v6953
      %7231 = vmatpush1.bf16.msra.mxu0 %v6952
      %7232 = vmatprep.subr.bf16.mxu0 %v6961
      %7233 = vmatpush1.bf16.msra.mxu0 %v6960
      %7234 = vmatprep.subr.bf16.mxu0 %v6969
      %7235 = vmatpush1.bf16.msra.mxu0 %v6968
      %7236 = vmatprep.subr.bf16.mxu0 %v6977
      %7237 = vmatpush1.bf16.msra.mxu0 %v6976
      %7238 = vmatprep.subr.bf16.mxu0 %v6985
      %7239 = vmatpush1.bf16.msra.mxu0 %v6984
      %7240 = vmatprep.subr.bf16.mxu0 %v6993
      %7241 = vmatpush1.bf16.msra.mxu0 %v6992
      %7242 = vmatprep.mubr.bf16.mxu0 %v6313
      %7243 = vmatmul.mubr.bf16.gmra.mrb[0].mxu0 %v6312
      %v7244 = vpop.f32.mrb[0].mxu0
      %v7245 = vadd.f32 %v6463, %v7244
      %v7246 = vpop.f32.mrb[0].mxu0
      %v7247 = vadd.f32 %v6467, %v7246
      %v7248 = vpop.f32.mrb[0].mxu0
      %v7249 = vadd.f32 %v6463, %v7248
      %v7250 = vpop.f32.mrb[0].mxu0
      %v7251 = vadd.f32 %v6467, %v7250
      %7252 = vdwg.mxu0
      %7253 = vmatprep.subr.bf16.mxu0 %v6875
      %7254 = vmatpush1.bf16.msra.mxu0 %v6874
      %7255 = vmatprep.subr.bf16.mxu0 %v6883
      %7256 = vmatpush1.bf16.msra.mxu0 %v6882
      %7257 = vmatprep.subr.bf16.mxu0 %v6891
      %7258 = vmatpush1.bf16.msra.mxu0 %v6890
      %7259 = vmatprep.subr.bf16.mxu0 %v6899
      %7260 = vmatpush1.bf16.msra.mxu0 %v6898
      %7261 = vmatprep.subr.bf16.mxu0 %v6907
      %7262 = vmatpush1.bf16.msra.mxu0 %v6906
      %7263 = vmatprep.subr.bf16.mxu0 %v6915
      %7264 = vmatpush1.bf16.msra.mxu0 %v6914
      %7265 = vmatprep.subr.bf16.mxu0 %v6923
      %7266 = vmatpush1.bf16.msra.mxu0 %v6922
      %7267 = vmatprep.subr.bf16.mxu0 %v6931
      %7268 = vmatpush1.bf16.msra.mxu0 %v6930
      %7269 = vmatprep.subr.bf16.mxu0 %v6939
      %7270 = vmatpush1.bf16.msra.mxu0 %v6938
      %7271 = vmatprep.subr.bf16.mxu0 %v6947
      %7272 = vmatpush1.bf16.msra.mxu0 %v6946
      %7273 = vmatprep.subr.bf16.mxu0 %v6955
      %7274 = vmatpush1.bf16.msra.mxu0 %v6954
      %7275 = vmatprep.subr.bf16.mxu0 %v6963
      %7276 = vmatpush1.bf16.msra.mxu0 %v6962
      %7277 = vmatprep.subr.bf16.mxu0 %v6971
      %7278 = vmatpush1.bf16.msra.mxu0 %v6970
      %7279 = vmatprep.subr.bf16.mxu0 %v6979
      %7280 = vmatpush1.bf16.msra.mxu0 %v6978
      %7281 = vmatprep.subr.bf16.mxu0 %v6987
      %7282 = vmatpush1.bf16.msra.mxu0 %v6986
      %7283 = vmatprep.subr.bf16.mxu0 %v6995
      %7284 = vmatpush1.bf16.msra.mxu0 %v6994
      %7285 = vmatprep.mubr.bf16.mxu0 %v6313
      %7286 = vmatmul.mubr.bf16.gmra.mrb[0].mxu0 %v6312
      %v7287 = vpop.f32.mrb[0].mxu0
      %v7288 = vadd.f32 %v6471, %v7287
      %v7289 = vpop.f32.mrb[0].mxu0
      %v7290 = vadd.f32 %v6475, %v7289
      %v7291 = vpop.f32.mrb[0].mxu0
      %v7292 = vadd.f32 %v6471, %v7291
      %v7293 = vpop.f32.mrb[0].mxu0
      %v7294 = vadd.f32 %v6475, %v7293
      %7295 = vdwg.mxu0
      %v7296 = vmax.f32 %v7159, 0.0
      %v7297 = vmax.f32 %v7161, 0.0
      %v7298 = vmax.f32 %v7202, 0.0
      %v7299 = vmax.f32 %v7204, 0.0
      %v7300 = vmax.f32 %v7245, 0.0
      %v7301 = vmax.f32 %v7247, 0.0
      %v7302 = vmax.f32 %v7288, 0.0
      %v7303 = vmax.f32 %v7290, 0.0
      %v7304 = vmax.f32 %v7163, 0.0
      %v7305 = vmax.f32 %v7165, 0.0
      %v7306 = vmax.f32 %v7206, 0.0
      %v7307 = vmax.f32 %v7208, 0.0
      %v7308 = vmax.f32 %v7249, 0.0
      %v7309 = vmax.f32 %v7251, 0.0
      %v7310 = vmax.f32 %v7292, 0.0
      %v7311 = vmax.f32 %v7294, 0.0
      %v7312 = vpack.c.bf16 %v7304, %v7296
      %v7313 = vpack.c.bf16 %v7305, %v7297
      %v7314 = vpack.c.bf16 %v7306, %v7298
      %v7315 = vpack.c.bf16 %v7307, %v7299
      %v7316 = vpack.c.bf16 %v7308, %v7300
      %v7317 = vpack.c.bf16 %v7309, %v7301
      %v7318 = vpack.c.bf16 %v7310, %v7302
      %v7319 = vpack.c.bf16 %v7311, %v7303
      %v7320 = vld [vmem:[%s954] sm:$0xff]
      %v7321 = vld [vmem:[%s954 + $0x8] sm:$0xff]
      %v7322 = vld [vmem:[%s954 + $0x10] sm:$0xff]
      %v7323 = vld [vmem:[%s954 + $0x18] sm:$0xff]
      %v7324 = vld [vmem:[%s954 + $0x20] sm:$0xff]
      %v7325 = vld [vmem:[%s954 + $0x28] sm:$0xff]
      %v7326 = vld [vmem:[%s954 + $0x30] sm:$0xff]
      %v7327 = vld [vmem:[%s954 + $0x38] sm:$0xff]
      %v7328 = vld [vmem:[%s954 + $0x40] sm:$0xff]
      %v7329 = vld [vmem:[%s954 + $0x48] sm:$0xff]
      %v7330 = vld [vmem:[%s954 + $0x50] sm:$0xff]
      %v7331 = vld [vmem:[%s954 + $0x58] sm:$0xff]
      %v7332 = vld [vmem:[%s954 + $0x60] sm:$0xff]
      %v7333 = vld [vmem:[%s954 + $0x68] sm:$0xff]
      %v7334 = vld [vmem:[%s954 + $0x70] sm:$0xff]
      %v7335 = vld [vmem:[%s954 + $0x78] sm:$0xff]
      %v7336 = vld [vmem:[%s954 + $0x80] sm:$0xff]
      %v7337 = vld [vmem:[%s954 + $0x88] sm:$0xff]
      %v7338 = vld [vmem:[%s954 + $0x90] sm:$0xff]
      %v7339 = vld [vmem:[%s954 + $0x98] sm:$0xff]
      %v7340 = vld [vmem:[%s954 + $0xa0] sm:$0xff]
      %v7341 = vld [vmem:[%s954 + $0xa8] sm:$0xff]
      %v7342 = vld [vmem:[%s954 + $0xb0] sm:$0xff]
      %v7343 = vld [vmem:[%s954 + $0xb8] sm:$0xff]
      %v7344 = vld [vmem:[%s954 + $0xc0] sm:$0xff]
      %v7345 = vld [vmem:[%s954 + $0xc8] sm:$0xff]
      %v7346 = vld [vmem:[%s954 + $0xd0] sm:$0xff]
      %v7347 = vld [vmem:[%s954 + $0xd8] sm:$0xff]
      %v7348 = vld [vmem:[%s954 + $0xe0] sm:$0xff]
      %v7349 = vld [vmem:[%s954 + $0xe8] sm:$0xff]
      %v7350 = vld [vmem:[%s954 + $0xf0] sm:$0xff]
      %v7351 = vld [vmem:[%s954 + $0xf8] sm:$0xff]
      %v7352 = vld [vmem:[%s954 + $0x100] sm:$0xff]
      %v7353 = vld [vmem:[%s954 + $0x108] sm:$0xff]
      %v7354 = vld [vmem:[%s954 + $0x110] sm:$0xff]
      %v7355 = vld [vmem:[%s954 + $0x118] sm:$0xff]
      %v7356 = vld [vmem:[%s954 + $0x120] sm:$0xff]
      %v7357 = vld [vmem:[%s954 + $0x128] sm:$0xff]
      %v7358 = vld [vmem:[%s954 + $0x130] sm:$0xff]
      %v7359 = vld [vmem:[%s954 + $0x138] sm:$0xff]
      %v7360 = vld [vmem:[%s954 + $0x140] sm:$0xff]
      %v7361 = vld [vmem:[%s954 + $0x148] sm:$0xff]
      %v7362 = vld [vmem:[%s954 + $0x150] sm:$0xff]
      %v7363 = vld [vmem:[%s954 + $0x158] sm:$0xff]
      %v7364 = vld [vmem:[%s954 + $0x160] sm:$0xff]
      %v7365 = vld [vmem:[%s954 + $0x168] sm:$0xff]
      %v7366 = vld [vmem:[%s954 + $0x170] sm:$0xff]
      %v7367 = vld [vmem:[%s954 + $0x178] sm:$0xff]
      %v7368 = vld [vmem:[%s954 + $0x180] sm:$0xff]
      %v7369 = vld [vmem:[%s954 + $0x188] sm:$0xff]
      %v7370 = vld [vmem:[%s954 + $0x190] sm:$0xff]
      %v7371 = vld [vmem:[%s954 + $0x198] sm:$0xff]
      %v7372 = vld [vmem:[%s954 + $0x1a0] sm:$0xff]
      %v7373 = vld [vmem:[%s954 + $0x1a8] sm:$0xff]
      %v7374 = vld [vmem:[%s954 + $0x1b0] sm:$0xff]
      %v7375 = vld [vmem:[%s954 + $0x1b8] sm:$0xff]
      %v7376 = vld [vmem:[%s954 + $0x1c0] sm:$0xff]
      %v7377 = vld [vmem:[%s954 + $0x1c8] sm:$0xff]
      %v7378 = vld [vmem:[%s954 + $0x1d0] sm:$0xff]
      %v7379 = vld [vmem:[%s954 + $0x1d8] sm:$0xff]
      %v7380 = vld [vmem:[%s954 + $0x1e0] sm:$0xff]
      %v7381 = vld [vmem:[%s954 + $0x1e8] sm:$0xff]
      %v7382 = vld [vmem:[%s954 + $0x1f0] sm:$0xff]
      %v7383 = vld [vmem:[%s954 + $0x1f8] sm:$0xff]
      %v7384 = vld [vmem:[%s954 + $0x200] sm:$0xff]
      %v7385 = vld [vmem:[%s954 + $0x208] sm:$0xff]
      %v7386 = vld [vmem:[%s954 + $0x210] sm:$0xff]
      %v7387 = vld [vmem:[%s954 + $0x218] sm:$0xff]
      %v7388 = vld [vmem:[%s954 + $0x220] sm:$0xff]
      %v7389 = vld [vmem:[%s954 + $0x228] sm:$0xff]
      %v7390 = vld [vmem:[%s954 + $0x230] sm:$0xff]
      %v7391 = vld [vmem:[%s954 + $0x238] sm:$0xff]
      %v7392 = vld [vmem:[%s954 + $0x240] sm:$0xff]
      %v7393 = vld [vmem:[%s954 + $0x248] sm:$0xff]
      %v7394 = vld [vmem:[%s954 + $0x250] sm:$0xff]
      %v7395 = vld [vmem:[%s954 + $0x258] sm:$0xff]
      %v7396 = vld [vmem:[%s954 + $0x260] sm:$0xff]
      %v7397 = vld [vmem:[%s954 + $0x268] sm:$0xff]
      %v7398 = vld [vmem:[%s954 + $0x270] sm:$0xff]
      %v7399 = vld [vmem:[%s954 + $0x278] sm:$0xff]
      %v7400 = vld [vmem:[%s954 + $0x280] sm:$0xff]
      %v7401 = vld [vmem:[%s954 + $0x288] sm:$0xff]
      %v7402 = vld [vmem:[%s954 + $0x290] sm:$0xff]
      %v7403 = vld [vmem:[%s954 + $0x298] sm:$0xff]
      %v7404 = vld [vmem:[%s954 + $0x2a0] sm:$0xff]
      %v7405 = vld [vmem:[%s954 + $0x2a8] sm:$0xff]
      %v7406 = vld [vmem:[%s954 + $0x2b0] sm:$0xff]
      %v7407 = vld [vmem:[%s954 + $0x2b8] sm:$0xff]
      %v7408 = vld [vmem:[%s954 + $0x2c0] sm:$0xff]
      %v7409 = vld [vmem:[%s954 + $0x2c8] sm:$0xff]
      %v7410 = vld [vmem:[%s954 + $0x2d0] sm:$0xff]
      %v7411 = vld [vmem:[%s954 + $0x2d8] sm:$0xff]
      %v7412 = vld [vmem:[%s954 + $0x2e0] sm:$0xff]
      %v7413 = vld [vmem:[%s954 + $0x2e8] sm:$0xff]
      %v7414 = vld [vmem:[%s954 + $0x2f0] sm:$0xff]
      %v7415 = vld [vmem:[%s954 + $0x2f8] sm:$0xff]
      %v7416 = vld [vmem:[%s954 + $0x300] sm:$0xff]
      %v7417 = vld [vmem:[%s954 + $0x308] sm:$0xff]
      %v7418 = vld [vmem:[%s954 + $0x310] sm:$0xff]
      %v7419 = vld [vmem:[%s954 + $0x318] sm:$0xff]
      %v7420 = vld [vmem:[%s954 + $0x320] sm:$0xff]
      %v7421 = vld [vmem:[%s954 + $0x328] sm:$0xff]
      %v7422 = vld [vmem:[%s954 + $0x330] sm:$0xff]
      %v7423 = vld [vmem:[%s954 + $0x338] sm:$0xff]
      %v7424 = vld [vmem:[%s954 + $0x340] sm:$0xff]
      %v7425 = vld [vmem:[%s954 + $0x348] sm:$0xff]
      %v7426 = vld [vmem:[%s954 + $0x350] sm:$0xff]
      %v7427 = vld [vmem:[%s954 + $0x358] sm:$0xff]
      %v7428 = vld [vmem:[%s954 + $0x360] sm:$0xff]
      %v7429 = vld [vmem:[%s954 + $0x368] sm:$0xff]
      %v7430 = vld [vmem:[%s954 + $0x370] sm:$0xff]
      %v7431 = vld [vmem:[%s954 + $0x378] sm:$0xff]
      %v7432 = vld [vmem:[%s954 + $0x380] sm:$0xff]
      %v7433 = vld [vmem:[%s954 + $0x388] sm:$0xff]
      %v7434 = vld [vmem:[%s954 + $0x390] sm:$0xff]
      %v7435 = vld [vmem:[%s954 + $0x398] sm:$0xff]
      %v7436 = vld [vmem:[%s954 + $0x3a0] sm:$0xff]
      %v7437 = vld [vmem:[%s954 + $0x3a8] sm:$0xff]
      %v7438 = vld [vmem:[%s954 + $0x3b0] sm:$0xff]
      %v7439 = vld [vmem:[%s954 + $0x3b8] sm:$0xff]
      %v7440 = vld [vmem:[%s954 + $0x3c0] sm:$0xff]
      %v7441 = vld [vmem:[%s954 + $0x3c8] sm:$0xff]
      %v7442 = vld [vmem:[%s954 + $0x3d0] sm:$0xff]
      %v7443 = vld [vmem:[%s954 + $0x3d8] sm:$0xff]
      %v7444 = vld [vmem:[%s954 + $0x3e0] sm:$0xff]
      %v7445 = vld [vmem:[%s954 + $0x3e8] sm:$0xff]
      %v7446 = vld [vmem:[%s954 + $0x3f0] sm:$0xff]
      %v7447 = vld [vmem:[%s954 + $0x3f8] sm:$0xff]
      %v7448 = vld [vmem:[%s958] sm:$0x3]
      %v7450 = vlaneseq
      %v7451 = vshrl.u32 %v7450, 7
      %v7452 = vsub.s32 0, %v7451
      %v7453 = vrot.slane %v7448, %v7452
      %v7454 = vlaneseq
      %v7455 = vshrl.u32 %v7454, 7
      %v7456 = vsub.s32 1, %v7455
      %v7457 = vrot.slane %v7448, %v7456
      %v7588 = vunpack.c.l.b16 %v7320
      %v7589 = vunpack.c.h.b16 %v7320
      %v7590 = vunpack.c.l.b16 %v7321
      %v7591 = vunpack.c.h.b16 %v7321
      %v7592 = vunpack.c.l.b16 %v7322
      %v7593 = vunpack.c.h.b16 %v7322
      %v7594 = vunpack.c.l.b16 %v7323
      %v7595 = vunpack.c.h.b16 %v7323
      %v7596 = vunpack.c.l.b16 %v7324
      %v7597 = vunpack.c.h.b16 %v7324
      %v7598 = vunpack.c.l.b16 %v7325
      %v7599 = vunpack.c.h.b16 %v7325
      %v7600 = vunpack.c.l.b16 %v7326
      %v7601 = vunpack.c.h.b16 %v7326
      %v7602 = vunpack.c.l.b16 %v7327
      %v7603 = vunpack.c.h.b16 %v7327
      %v7604 = vunpack.c.l.b16 %v7328
      %v7605 = vunpack.c.h.b16 %v7328
      %v7606 = vunpack.c.l.b16 %v7329
      %v7607 = vunpack.c.h.b16 %v7329
      %v7608 = vunpack.c.l.b16 %v7330
      %v7609 = vunpack.c.h.b16 %v7330
      %v7610 = vunpack.c.l.b16 %v7331
      %v7611 = vunpack.c.h.b16 %v7331
      %v7612 = vunpack.c.l.b16 %v7332
      %v7613 = vunpack.c.h.b16 %v7332
      %v7614 = vunpack.c.l.b16 %v7333
      %v7615 = vunpack.c.h.b16 %v7333
      %v7616 = vunpack.c.l.b16 %v7334
      %v7617 = vunpack.c.h.b16 %v7334
      %v7618 = vunpack.c.l.b16 %v7335
      %v7619 = vunpack.c.h.b16 %v7335
      %v7620 = vunpack.c.l.b16 %v7336
      %v7621 = vunpack.c.h.b16 %v7336
      %v7622 = vunpack.c.l.b16 %v7337
      %v7623 = vunpack.c.h.b16 %v7337
      %v7624 = vunpack.c.l.b16 %v7338
      %v7625 = vunpack.c.h.b16 %v7338
      %v7626 = vunpack.c.l.b16 %v7339
      %v7627 = vunpack.c.h.b16 %v7339
      %v7628 = vunpack.c.l.b16 %v7340
      %v7629 = vunpack.c.h.b16 %v7340
      %v7630 = vunpack.c.l.b16 %v7341
      %v7631 = vunpack.c.h.b16 %v7341
      %v7632 = vunpack.c.l.b16 %v7342
      %v7633 = vunpack.c.h.b16 %v7342
      %v7634 = vunpack.c.l.b16 %v7343
      %v7635 = vunpack.c.h.b16 %v7343
      %v7636 = vunpack.c.l.b16 %v7344
      %v7637 = vunpack.c.h.b16 %v7344
      %v7638 = vunpack.c.l.b16 %v7345
      %v7639 = vunpack.c.h.b16 %v7345
      %v7640 = vunpack.c.l.b16 %v7346
      %v7641 = vunpack.c.h.b16 %v7346
      %v7642 = vunpack.c.l.b16 %v7347
      %v7643 = vunpack.c.h.b16 %v7347
      %v7644 = vunpack.c.l.b16 %v7348
      %v7645 = vunpack.c.h.b16 %v7348
      %v7646 = vunpack.c.l.b16 %v7349
      %v7647 = vunpack.c.h.b16 %v7349
      %v7648 = vunpack.c.l.b16 %v7350
      %v7649 = vunpack.c.h.b16 %v7350
      %v7650 = vunpack.c.l.b16 %v7351
      %v7651 = vunpack.c.h.b16 %v7351
      %v7652 = vunpack.c.l.b16 %v7352
      %v7653 = vunpack.c.h.b16 %v7352
      %v7654 = vunpack.c.l.b16 %v7353
      %v7655 = vunpack.c.h.b16 %v7353
      %v7656 = vunpack.c.l.b16 %v7354
      %v7657 = vunpack.c.h.b16 %v7354
      %v7658 = vunpack.c.l.b16 %v7355
      %v7659 = vunpack.c.h.b16 %v7355
      %v7660 = vunpack.c.l.b16 %v7356
      %v7661 = vunpack.c.h.b16 %v7356
      %v7662 = vunpack.c.l.b16 %v7357
      %v7663 = vunpack.c.h.b16 %v7357
      %v7664 = vunpack.c.l.b16 %v7358
      %v7665 = vunpack.c.h.b16 %v7358
      %v7666 = vunpack.c.l.b16 %v7359
      %v7667 = vunpack.c.h.b16 %v7359
      %v7668 = vunpack.c.l.b16 %v7360
      %v7669 = vunpack.c.h.b16 %v7360
      %v7670 = vunpack.c.l.b16 %v7361
      %v7671 = vunpack.c.h.b16 %v7361
      %v7672 = vunpack.c.l.b16 %v7362
      %v7673 = vunpack.c.h.b16 %v7362
      %v7674 = vunpack.c.l.b16 %v7363
      %v7675 = vunpack.c.h.b16 %v7363
      %v7676 = vunpack.c.l.b16 %v7364
      %v7677 = vunpack.c.h.b16 %v7364
      %v7678 = vunpack.c.l.b16 %v7365
      %v7679 = vunpack.c.h.b16 %v7365
      %v7680 = vunpack.c.l.b16 %v7366
      %v7681 = vunpack.c.h.b16 %v7366
      %v7682 = vunpack.c.l.b16 %v7367
      %v7683 = vunpack.c.h.b16 %v7367
      %v7684 = vunpack.c.l.b16 %v7368
      %v7685 = vunpack.c.h.b16 %v7368
      %v7686 = vunpack.c.l.b16 %v7369
      %v7687 = vunpack.c.h.b16 %v7369
      %v7688 = vunpack.c.l.b16 %v7370
      %v7689 = vunpack.c.h.b16 %v7370
      %v7690 = vunpack.c.l.b16 %v7371
      %v7691 = vunpack.c.h.b16 %v7371
      %v7692 = vunpack.c.l.b16 %v7372
      %v7693 = vunpack.c.h.b16 %v7372
      %v7694 = vunpack.c.l.b16 %v7373
      %v7695 = vunpack.c.h.b16 %v7373
      %v7696 = vunpack.c.l.b16 %v7374
      %v7697 = vunpack.c.h.b16 %v7374
      %v7698 = vunpack.c.l.b16 %v7375
      %v7699 = vunpack.c.h.b16 %v7375
      %v7700 = vunpack.c.l.b16 %v7376
      %v7701 = vunpack.c.h.b16 %v7376
      %v7702 = vunpack.c.l.b16 %v7377
      %v7703 = vunpack.c.h.b16 %v7377
      %v7704 = vunpack.c.l.b16 %v7378
      %v7705 = vunpack.c.h.b16 %v7378
      %v7706 = vunpack.c.l.b16 %v7379
      %v7707 = vunpack.c.h.b16 %v7379
      %v7708 = vunpack.c.l.b16 %v7380
      %v7709 = vunpack.c.h.b16 %v7380
      %v7710 = vunpack.c.l.b16 %v7381
      %v7711 = vunpack.c.h.b16 %v7381
      %v7712 = vunpack.c.l.b16 %v7382
      %v7713 = vunpack.c.h.b16 %v7382
      %v7714 = vunpack.c.l.b16 %v7383
      %v7715 = vunpack.c.h.b16 %v7383
      %v7716 = vunpack.c.l.b16 %v7384
      %v7717 = vunpack.c.h.b16 %v7384
      %v7718 = vunpack.c.l.b16 %v7385
      %v7719 = vunpack.c.h.b16 %v7385
      %v7720 = vunpack.c.l.b16 %v7386
      %v7721 = vunpack.c.h.b16 %v7386
      %v7722 = vunpack.c.l.b16 %v7387
      %v7723 = vunpack.c.h.b16 %v7387
      %v7724 = vunpack.c.l.b16 %v7388
      %v7725 = vunpack.c.h.b16 %v7388
      %v7726 = vunpack.c.l.b16 %v7389
      %v7727 = vunpack.c.h.b16 %v7389
      %v7728 = vunpack.c.l.b16 %v7390
      %v7729 = vunpack.c.h.b16 %v7390
      %v7730 = vunpack.c.l.b16 %v7391
      %v7731 = vunpack.c.h.b16 %v7391
      %v7732 = vunpack.c.l.b16 %v7392
      %v7733 = vunpack.c.h.b16 %v7392
      %v7734 = vunpack.c.l.b16 %v7393
      %v7735 = vunpack.c.h.b16 %v7393
      %v7736 = vunpack.c.l.b16 %v7394
      %v7737 = vunpack.c.h.b16 %v7394
      %v7738 = vunpack.c.l.b16 %v7395
      %v7739 = vunpack.c.h.b16 %v7395
      %v7740 = vunpack.c.l.b16 %v7396
      %v7741 = vunpack.c.h.b16 %v7396
      %v7742 = vunpack.c.l.b16 %v7397
      %v7743 = vunpack.c.h.b16 %v7397
      %v7744 = vunpack.c.l.b16 %v7398
      %v7745 = vunpack.c.h.b16 %v7398
      %v7746 = vunpack.c.l.b16 %v7399
      %v7747 = vunpack.c.h.b16 %v7399
      %v7748 = vunpack.c.l.b16 %v7400
      %v7749 = vunpack.c.h.b16 %v7400
      %v7750 = vunpack.c.l.b16 %v7401
      %v7751 = vunpack.c.h.b16 %v7401
      %v7752 = vunpack.c.l.b16 %v7402
      %v7753 = vunpack.c.h.b16 %v7402
      %v7754 = vunpack.c.l.b16 %v7403
      %v7755 = vunpack.c.h.b16 %v7403
      %v7756 = vunpack.c.l.b16 %v7404
      %v7757 = vunpack.c.h.b16 %v7404
      %v7758 = vunpack.c.l.b16 %v7405
      %v7759 = vunpack.c.h.b16 %v7405
      %v7760 = vunpack.c.l.b16 %v7406
      %v7761 = vunpack.c.h.b16 %v7406
      %v7762 = vunpack.c.l.b16 %v7407
      %v7763 = vunpack.c.h.b16 %v7407
      %v7764 = vunpack.c.l.b16 %v7408
      %v7765 = vunpack.c.h.b16 %v7408
      %v7766 = vunpack.c.l.b16 %v7409
      %v7767 = vunpack.c.h.b16 %v7409
      %v7768 = vunpack.c.l.b16 %v7410
      %v7769 = vunpack.c.h.b16 %v7410
      %v7770 = vunpack.c.l.b16 %v7411
      %v7771 = vunpack.c.h.b16 %v7411
      %v7772 = vunpack.c.l.b16 %v7412
      %v7773 = vunpack.c.h.b16 %v7412
      %v7774 = vunpack.c.l.b16 %v7413
      %v7775 = vunpack.c.h.b16 %v7413
      %v7776 = vunpack.c.l.b16 %v7414
      %v7777 = vunpack.c.h.b16 %v7414
      %v7778 = vunpack.c.l.b16 %v7415
      %v7779 = vunpack.c.h.b16 %v7415
      %v7780 = vunpack.c.l.b16 %v7416
      %v7781 = vunpack.c.h.b16 %v7416
      %v7782 = vunpack.c.l.b16 %v7417
      %v7783 = vunpack.c.h.b16 %v7417
      %v7784 = vunpack.c.l.b16 %v7418
      %v7785 = vunpack.c.h.b16 %v7418
      %v7786 = vunpack.c.l.b16 %v7419
      %v7787 = vunpack.c.h.b16 %v7419
      %v7788 = vunpack.c.l.b16 %v7420
      %v7789 = vunpack.c.h.b16 %v7420
      %v7790 = vunpack.c.l.b16 %v7421
      %v7791 = vunpack.c.h.b16 %v7421
      %v7792 = vunpack.c.l.b16 %v7422
      %v7793 = vunpack.c.h.b16 %v7422
      %v7794 = vunpack.c.l.b16 %v7423
      %v7795 = vunpack.c.h.b16 %v7423
      %v7796 = vunpack.c.l.b16 %v7424
      %v7797 = vunpack.c.h.b16 %v7424
      %v7798 = vunpack.c.l.b16 %v7425
      %v7799 = vunpack.c.h.b16 %v7425
      %v7800 = vunpack.c.l.b16 %v7426
      %v7801 = vunpack.c.h.b16 %v7426
      %v7802 = vunpack.c.l.b16 %v7427
      %v7803 = vunpack.c.h.b16 %v7427
      %v7804 = vunpack.c.l.b16 %v7428
      %v7805 = vunpack.c.h.b16 %v7428
      %v7806 = vunpack.c.l.b16 %v7429
      %v7807 = vunpack.c.h.b16 %v7429
      %v7808 = vunpack.c.l.b16 %v7430
      %v7809 = vunpack.c.h.b16 %v7430
      %v7810 = vunpack.c.l.b16 %v7431
      %v7811 = vunpack.c.h.b16 %v7431
      %v7812 = vunpack.c.l.b16 %v7432
      %v7813 = vunpack.c.h.b16 %v7432
      %v7814 = vunpack.c.l.b16 %v7433
      %v7815 = vunpack.c.h.b16 %v7433
      %v7816 = vunpack.c.l.b16 %v7434
      %v7817 = vunpack.c.h.b16 %v7434
      %v7818 = vunpack.c.l.b16 %v7435
      %v7819 = vunpack.c.h.b16 %v7435
      %v7820 = vunpack.c.l.b16 %v7436
      %v7821 = vunpack.c.h.b16 %v7436
      %v7822 = vunpack.c.l.b16 %v7437
      %v7823 = vunpack.c.h.b16 %v7437
      %v7824 = vunpack.c.l.b16 %v7438
      %v7825 = vunpack.c.h.b16 %v7438
      %v7826 = vunpack.c.l.b16 %v7439
      %v7827 = vunpack.c.h.b16 %v7439
      %v7828 = vunpack.c.l.b16 %v7440
      %v7829 = vunpack.c.h.b16 %v7440
      %v7830 = vunpack.c.l.b16 %v7441
      %v7831 = vunpack.c.h.b16 %v7441
      %v7832 = vunpack.c.l.b16 %v7442
      %v7833 = vunpack.c.h.b16 %v7442
      %v7834 = vunpack.c.l.b16 %v7443
      %v7835 = vunpack.c.h.b16 %v7443
      %v7836 = vunpack.c.l.b16 %v7444
      %v7837 = vunpack.c.h.b16 %v7444
      %v7838 = vunpack.c.l.b16 %v7445
      %v7839 = vunpack.c.h.b16 %v7445
      %v7840 = vunpack.c.l.b16 %v7446
      %v7841 = vunpack.c.h.b16 %v7446
      %v7842 = vunpack.c.l.b16 %v7447
      %v7843 = vunpack.c.h.b16 %v7447
      %v7844 = vpack.c.b16 %v7590, %v7588
      %v7845 = vpack.c.b16 %v7591, %v7589
      %v7846 = vpack.c.b16 %v7594, %v7592
      %v7847 = vpack.c.b16 %v7595, %v7593
      %v7848 = vpack.c.b16 %v7598, %v7596
      %v7849 = vpack.c.b16 %v7599, %v7597
      %v7850 = vpack.c.b16 %v7602, %v7600
      %v7851 = vpack.c.b16 %v7603, %v7601
      %v7852 = vpack.c.b16 %v7606, %v7604
      %v7853 = vpack.c.b16 %v7607, %v7605
      %v7854 = vpack.c.b16 %v7610, %v7608
      %v7855 = vpack.c.b16 %v7611, %v7609
      %v7856 = vpack.c.b16 %v7614, %v7612
      %v7857 = vpack.c.b16 %v7615, %v7613
      %v7858 = vpack.c.b16 %v7618, %v7616
      %v7859 = vpack.c.b16 %v7619, %v7617
      %v7860 = vpack.c.b16 %v7622, %v7620
      %v7861 = vpack.c.b16 %v7623, %v7621
      %v7862 = vpack.c.b16 %v7626, %v7624
      %v7863 = vpack.c.b16 %v7627, %v7625
      %v7864 = vpack.c.b16 %v7630, %v7628
      %v7865 = vpack.c.b16 %v7631, %v7629
      %v7866 = vpack.c.b16 %v7634, %v7632
      %v7867 = vpack.c.b16 %v7635, %v7633
      %v7868 = vpack.c.b16 %v7638, %v7636
      %v7869 = vpack.c.b16 %v7639, %v7637
      %v7870 = vpack.c.b16 %v7642, %v7640
      %v7871 = vpack.c.b16 %v7643, %v7641
      %v7872 = vpack.c.b16 %v7646, %v7644
      %v7873 = vpack.c.b16 %v7647, %v7645
      %v7874 = vpack.c.b16 %v7650, %v7648
      %v7875 = vpack.c.b16 %v7651, %v7649
      %v7876 = vpack.c.b16 %v7654, %v7652
      %v7877 = vpack.c.b16 %v7655, %v7653
      %v7878 = vpack.c.b16 %v7658, %v7656
      %v7879 = vpack.c.b16 %v7659, %v7657
      %v7880 = vpack.c.b16 %v7662, %v7660
      %v7881 = vpack.c.b16 %v7663, %v7661
      %v7882 = vpack.c.b16 %v7666, %v7664
      %v7883 = vpack.c.b16 %v7667, %v7665
      %v7884 = vpack.c.b16 %v7670, %v7668
      %v7885 = vpack.c.b16 %v7671, %v7669
      %v7886 = vpack.c.b16 %v7674, %v7672
      %v7887 = vpack.c.b16 %v7675, %v7673
      %v7888 = vpack.c.b16 %v7678, %v7676
      %v7889 = vpack.c.b16 %v7679, %v7677
      %v7890 = vpack.c.b16 %v7682, %v7680
      %v7891 = vpack.c.b16 %v7683, %v7681
      %v7892 = vpack.c.b16 %v7686, %v7684
      %v7893 = vpack.c.b16 %v7687, %v7685
      %v7894 = vpack.c.b16 %v7690, %v7688
      %v7895 = vpack.c.b16 %v7691, %v7689
      %v7896 = vpack.c.b16 %v7694, %v7692
      %v7897 = vpack.c.b16 %v7695, %v7693
      %v7898 = vpack.c.b16 %v7698, %v7696
      %v7899 = vpack.c.b16 %v7699, %v7697
      %v7900 = vpack.c.b16 %v7702, %v7700
      %v7901 = vpack.c.b16 %v7703, %v7701
      %v7902 = vpack.c.b16 %v7706, %v7704
      %v7903 = vpack.c.b16 %v7707, %v7705
      %v7904 = vpack.c.b16 %v7710, %v7708
      %v7905 = vpack.c.b16 %v7711, %v7709
      %v7906 = vpack.c.b16 %v7714, %v7712
      %v7907 = vpack.c.b16 %v7715, %v7713
      %v7908 = vpack.c.b16 %v7718, %v7716
      %v7909 = vpack.c.b16 %v7719, %v7717
      %v7910 = vpack.c.b16 %v7722, %v7720
      %v7911 = vpack.c.b16 %v7723, %v7721
      %v7912 = vpack.c.b16 %v7726, %v7724
      %v7913 = vpack.c.b16 %v7727, %v7725
      %v7914 = vpack.c.b16 %v7730, %v7728
      %v7915 = vpack.c.b16 %v7731, %v7729
      %v7916 = vpack.c.b16 %v7734, %v7732
      %v7917 = vpack.c.b16 %v7735, %v7733
      %v7918 = vpack.c.b16 %v7738, %v7736
      %v7919 = vpack.c.b16 %v7739, %v7737
      %v7920 = vpack.c.b16 %v7742, %v7740
      %v7921 = vpack.c.b16 %v7743, %v7741
      %v7922 = vpack.c.b16 %v7746, %v7744
      %v7923 = vpack.c.b16 %v7747, %v7745
      %v7924 = vpack.c.b16 %v7750, %v7748
      %v7925 = vpack.c.b16 %v7751, %v7749
      %v7926 = vpack.c.b16 %v7754, %v7752
      %v7927 = vpack.c.b16 %v7755, %v7753
      %v7928 = vpack.c.b16 %v7758, %v7756
      %v7929 = vpack.c.b16 %v7759, %v7757
      %v7930 = vpack.c.b16 %v7762, %v7760
      %v7931 = vpack.c.b16 %v7763, %v7761
      %v7932 = vpack.c.b16 %v7766, %v7764
      %v7933 = vpack.c.b16 %v7767, %v7765
      %v7934 = vpack.c.b16 %v7770, %v7768
      %v7935 = vpack.c.b16 %v7771, %v7769
      %v7936 = vpack.c.b16 %v7774, %v7772
      %v7937 = vpack.c.b16 %v7775, %v7773
      %v7938 = vpack.c.b16 %v7778, %v7776
      %v7939 = vpack.c.b16 %v7779, %v7777
      %v7940 = vpack.c.b16 %v7782, %v7780
      %v7941 = vpack.c.b16 %v7783, %v7781
      %v7942 = vpack.c.b16 %v7786, %v7784
      %v7943 = vpack.c.b16 %v7787, %v7785
      %v7944 = vpack.c.b16 %v7790, %v7788
      %v7945 = vpack.c.b16 %v7791, %v7789
      %v7946 = vpack.c.b16 %v7794, %v7792
      %v7947 = vpack.c.b16 %v7795, %v7793
      %v7948 = vpack.c.b16 %v7798, %v7796
      %v7949 = vpack.c.b16 %v7799, %v7797
      %v7950 = vpack.c.b16 %v7802, %v7800
      %v7951 = vpack.c.b16 %v7803, %v7801
      %v7952 = vpack.c.b16 %v7806, %v7804
      %v7953 = vpack.c.b16 %v7807, %v7805
      %v7954 = vpack.c.b16 %v7810, %v7808
      %v7955 = vpack.c.b16 %v7811, %v7809
      %v7956 = vpack.c.b16 %v7814, %v7812
      %v7957 = vpack.c.b16 %v7815, %v7813
      %v7958 = vpack.c.b16 %v7818, %v7816
      %v7959 = vpack.c.b16 %v7819, %v7817
      %v7960 = vpack.c.b16 %v7822, %v7820
      %v7961 = vpack.c.b16 %v7823, %v7821
      %v7962 = vpack.c.b16 %v7826, %v7824
      %v7963 = vpack.c.b16 %v7827, %v7825
      %v7964 = vpack.c.b16 %v7830, %v7828
      %v7965 = vpack.c.b16 %v7831, %v7829
      %v7966 = vpack.c.b16 %v7834, %v7832
      %v7967 = vpack.c.b16 %v7835, %v7833
      %v7968 = vpack.c.b16 %v7838, %v7836
      %v7969 = vpack.c.b16 %v7839, %v7837
      %v7970 = vpack.c.b16 %v7842, %v7840
      %v7971 = vpack.c.b16 %v7843, %v7841
      %8100 = vmatprep.subr.bf16.mxu0 %v7845
      %8101 = vmatpush1.bf16.msra.mxu0 %v7844
      %8102 = vmatprep.subr.bf16.mxu0 %v7847
      %8103 = vmatpush1.bf16.msra.mxu0 %v7846
      %8104 = vmatprep.subr.bf16.mxu0 %v7849
      %8105 = vmatpush1.bf16.msra.mxu0 %v7848
      %8106 = vmatprep.subr.bf16.mxu0 %v7851
      %8107 = vmatpush1.bf16.msra.mxu0 %v7850
      %8108 = vmatprep.subr.bf16.mxu0 %v7853
      %8109 = vmatpush1.bf16.msra.mxu0 %v7852
      %8110 = vmatprep.subr.bf16.mxu0 %v7855
      %8111 = vmatpush1.bf16.msra.mxu0 %v7854
      %8112 = vmatprep.subr.bf16.mxu0 %v7857
      %8113 = vmatpush1.bf16.msra.mxu0 %v7856
      %8114 = vmatprep.subr.bf16.mxu0 %v7859
      %8115 = vmatpush1.bf16.msra.mxu0 %v7858
      %8116 = vmatprep.subr.bf16.mxu0 %v7861
      %8117 = vmatpush1.bf16.msra.mxu0 %v7860
      %8118 = vmatprep.subr.bf16.mxu0 %v7863
      %8119 = vmatpush1.bf16.msra.mxu0 %v7862
      %8120 = vmatprep.subr.bf16.mxu0 %v7865
      %8121 = vmatpush1.bf16.msra.mxu0 %v7864
      %8122 = vmatprep.subr.bf16.mxu0 %v7867
      %8123 = vmatpush1.bf16.msra.mxu0 %v7866
      %8124 = vmatprep.subr.bf16.mxu0 %v7869
      %8125 = vmatpush1.bf16.msra.mxu0 %v7868
      %8126 = vmatprep.subr.bf16.mxu0 %v7871
      %8127 = vmatpush1.bf16.msra.mxu0 %v7870
      %8128 = vmatprep.subr.bf16.mxu0 %v7873
      %8129 = vmatpush1.bf16.msra.mxu0 %v7872
      %8130 = vmatprep.subr.bf16.mxu0 %v7875
      %8131 = vmatpush1.bf16.msra.mxu0 %v7874
      %8132 = vmatprep.mubr.bf16.mxu0 %v7313
      %8133 = vmatmul.mubr.bf16.gmra.mrb[0].mxu0 %v7312
      %v8134 = vpop.f32.mrb[0].mxu0
      %v8135 = vadd.f32 %v7453, %v8134
      %v8136 = vpop.f32.mrb[0].mxu0
      %v8137 = vadd.f32 %v7457, %v8136
      %v8138 = vpop.f32.mrb[0].mxu0
      %v8139 = vadd.f32 %v7453, %v8138
      %v8140 = vpop.f32.mrb[0].mxu0
      %v8141 = vadd.f32 %v7457, %v8140
      %8142 = vdwg.mxu0
      %8143 = vmatprep.subr.bf16.mxu0 %v7877
      %8144 = vmatpush1.bf16.msra.mxu0 %v7876
      %8145 = vmatprep.subr.bf16.mxu0 %v7879
      %8146 = vmatpush1.bf16.msra.mxu0 %v7878
      %8147 = vmatprep.subr.bf16.mxu0 %v7881
      %8148 = vmatpush1.bf16.msra.mxu0 %v7880
      %8149 = vmatprep.subr.bf16.mxu0 %v7883
      %8150 = vmatpush1.bf16.msra.mxu0 %v7882
      %8151 = vmatprep.subr.bf16.mxu0 %v7885
      %8152 = vmatpush1.bf16.msra.mxu0 %v7884
      %8153 = vmatprep.subr.bf16.mxu0 %v7887
      %8154 = vmatpush1.bf16.msra.mxu0 %v7886
      %8155 = vmatprep.subr.bf16.mxu0 %v7889
      %8156 = vmatpush1.bf16.msra.mxu0 %v7888
      %8157 = vmatprep.subr.bf16.mxu0 %v7891
      %8158 = vmatpush1.bf16.msra.mxu0 %v7890
      %8159 = vmatprep.subr.bf16.mxu0 %v7893
      %8160 = vmatpush1.bf16.msra.mxu0 %v7892
      %8161 = vmatprep.subr.bf16.mxu0 %v7895
      %8162 = vmatpush1.bf16.msra.mxu0 %v7894
      %8163 = vmatprep.subr.bf16.mxu0 %v7897
      %8164 = vmatpush1.bf16.msra.mxu0 %v7896
      %8165 = vmatprep.subr.bf16.mxu0 %v7899
      %8166 = vmatpush1.bf16.msra.mxu0 %v7898
      %8167 = vmatprep.subr.bf16.mxu0 %v7901
      %8168 = vmatpush1.bf16.msra.mxu0 %v7900
      %8169 = vmatprep.subr.bf16.mxu0 %v7903
      %8170 = vmatpush1.bf16.msra.mxu0 %v7902
      %8171 = vmatprep.subr.bf16.mxu0 %v7905
      %8172 = vmatpush1.bf16.msra.mxu0 %v7904
      %8173 = vmatprep.subr.bf16.mxu0 %v7907
      %8174 = vmatpush1.bf16.msra.mxu0 %v7906
      %8175 = vmatprep.mubr.bf16.mxu0 %v7315
      %8176 = vmatmul.mubr.bf16.gmra.mrb[0].mxu0 %v7314
      %v8177 = vpop.f32.mrb[0].mxu0
      %v8178 = vadd.f32 %v8135, %v8177
      %v8179 = vpop.f32.mrb[0].mxu0
      %v8180 = vadd.f32 %v8137, %v8179
      %v8181 = vpop.f32.mrb[0].mxu0
      %v8182 = vadd.f32 %v8139, %v8181
      %v8183 = vpop.f32.mrb[0].mxu0
      %v8184 = vadd.f32 %v8141, %v8183
      %8185 = vdwg.mxu0
      %8186 = vmatprep.subr.bf16.mxu0 %v7909
      %8187 = vmatpush1.bf16.msra.mxu0 %v7908
      %8188 = vmatprep.subr.bf16.mxu0 %v7911
      %8189 = vmatpush1.bf16.msra.mxu0 %v7910
      %8190 = vmatprep.subr.bf16.mxu0 %v7913
      %8191 = vmatpush1.bf16.msra.mxu0 %v7912
      %8192 = vmatprep.subr.bf16.mxu0 %v7915
      %8193 = vmatpush1.bf16.msra.mxu0 %v7914
      %8194 = vmatprep.subr.bf16.mxu0 %v7917
      %8195 = vmatpush1.bf16.msra.mxu0 %v7916
      %8196 = vmatprep.subr.bf16.mxu0 %v7919
      %8197 = vmatpush1.bf16.msra.mxu0 %v7918
      %8198 = vmatprep.subr.bf16.mxu0 %v7921
      %8199 = vmatpush1.bf16.msra.mxu0 %v7920
      %8200 = vmatprep.subr.bf16.mxu0 %v7923
      %8201 = vmatpush1.bf16.msra.mxu0 %v7922
      %8202 = vmatprep.subr.bf16.mxu0 %v7925
      %8203 = vmatpush1.bf16.msra.mxu0 %v7924
      %8204 = vmatprep.subr.bf16.mxu0 %v7927
      %8205 = vmatpush1.bf16.msra.mxu0 %v7926
      %8206 = vmatprep.subr.bf16.mxu0 %v7929
      %8207 = vmatpush1.bf16.msra.mxu0 %v7928
      %8208 = vmatprep.subr.bf16.mxu0 %v7931
      %8209 = vmatpush1.bf16.msra.mxu0 %v7930
      %8210 = vmatprep.subr.bf16.mxu0 %v7933
      %8211 = vmatpush1.bf16.msra.mxu0 %v7932
      %8212 = vmatprep.subr.bf16.mxu0 %v7935
      %8213 = vmatpush1.bf16.msra.mxu0 %v7934
      %8214 = vmatprep.subr.bf16.mxu0 %v7937
      %8215 = vmatpush1.bf16.msra.mxu0 %v7936
      %8216 = vmatprep.subr.bf16.mxu0 %v7939
      %8217 = vmatpush1.bf16.msra.mxu0 %v7938
      %8218 = vmatprep.mubr.bf16.mxu0 %v7317
      %8219 = vmatmul.mubr.bf16.gmra.mrb[0].mxu0 %v7316
      %v8220 = vpop.f32.mrb[0].mxu0
      %v8221 = vadd.f32 %v8178, %v8220
      %v8222 = vpop.f32.mrb[0].mxu0
      %v8223 = vadd.f32 %v8180, %v8222
      %v8224 = vpop.f32.mrb[0].mxu0
      %v8225 = vadd.f32 %v8182, %v8224
      %v8226 = vpop.f32.mrb[0].mxu0
      %v8227 = vadd.f32 %v8184, %v8226
      %8228 = vdwg.mxu0
      %8229 = vmatprep.subr.bf16.mxu0 %v7941
      %8230 = vmatpush1.bf16.msra.mxu0 %v7940
      %8231 = vmatprep.subr.bf16.mxu0 %v7943
      %8232 = vmatpush1.bf16.msra.mxu0 %v7942
      %8233 = vmatprep.subr.bf16.mxu0 %v7945
      %8234 = vmatpush1.bf16.msra.mxu0 %v7944
      %8235 = vmatprep.subr.bf16.mxu0 %v7947
      %8236 = vmatpush1.bf16.msra.mxu0 %v7946
      %8237 = vmatprep.subr.bf16.mxu0 %v7949
      %8238 = vmatpush1.bf16.msra.mxu0 %v7948
      %8239 = vmatprep.subr.bf16.mxu0 %v7951
      %8240 = vmatpush1.bf16.msra.mxu0 %v7950
      %8241 = vmatprep.subr.bf16.mxu0 %v7953
      %8242 = vmatpush1.bf16.msra.mxu0 %v7952
      %8243 = vmatprep.subr.bf16.mxu0 %v7955
      %8244 = vmatpush1.bf16.msra.mxu0 %v7954
      %8245 = vmatprep.subr.bf16.mxu0 %v7957
      %8246 = vmatpush1.bf16.msra.mxu0 %v7956
      %8247 = vmatprep.subr.bf16.mxu0 %v7959
      %8248 = vmatpush1.bf16.msra.mxu0 %v7958
      %8249 = vmatprep.subr.bf16.mxu0 %v7961
      %8250 = vmatpush1.bf16.msra.mxu0 %v7960
      %8251 = vmatprep.subr.bf16.mxu0 %v7963
      %8252 = vmatpush1.bf16.msra.mxu0 %v7962
      %8253 = vmatprep.subr.bf16.mxu0 %v7965
      %8254 = vmatpush1.bf16.msra.mxu0 %v7964
      %8255 = vmatprep.subr.bf16.mxu0 %v7967
      %8256 = vmatpush1.bf16.msra.mxu0 %v7966
      %8257 = vmatprep.subr.bf16.mxu0 %v7969
      %8258 = vmatpush1.bf16.msra.mxu0 %v7968
      %8259 = vmatprep.subr.bf16.mxu0 %v7971
      %8260 = vmatpush1.bf16.msra.mxu0 %v7970
      %8261 = vmatprep.mubr.bf16.mxu0 %v7319
      %8262 = vmatmul.mubr.bf16.gmra.mrb[0].mxu0 %v7318
      %v8263 = vpop.f32.mrb[0].mxu0
      %v8264 = vadd.f32 %v8221, %v8263
      %v8265 = vpop.f32.mrb[0].mxu0
      %v8266 = vadd.f32 %v8223, %v8265
      %v8267 = vpop.f32.mrb[0].mxu0
      %v8268 = vadd.f32 %v8225, %v8267
      %v8269 = vpop.f32.mrb[0].mxu0
      %v8270 = vadd.f32 %v8227, %v8269
      %8271 = vdwg.mxu0
      %v8272 = vadd.f32 %v6308, %v8264
      %v8273 = vadd.f32 %v6309, %v8266
      %v8274 = vadd.f32 %v6310, %v8268
      %v8275 = vadd.f32 %v6311, %v8270
      %v8276 = vld [vmem:[%s962] sm:$0x3]
      %v8277 = vld [vmem:[%s966] sm:$0x3]
      %v8278 = vadd.f32 %v8272, %v8273
      %8279 = vadd.xlane.f32.xlu0 %v8278
      %v8280 = vpop.xlane.xlu0 %8279
      %v8281 = vadd.f32 %v8274, %v8275
      %8282 = vadd.xlane.f32.xlu0 %v8281
      %v8283 = vpop.xlane.xlu0 %8282
      %v8284 = vmul.f32 %v8280, %v6255
      %v8285 = vmul.f32 %v8283, %v6255
      %v8286 = vsub.f32 %v8272, %v8284
      %v8287 = vsub.f32 %v8273, %v8284
      %v8288 = vsub.f32 %v8274, %v8285
      %v8289 = vsub.f32 %v8275, %v8285
      %v8290 = vmul.f32 %v8286, %v8286
      %v8291 = vmul.f32 %v8287, %v8287
      %v8292 = vmul.f32 %v8288, %v8288
      %v8293 = vmul.f32 %v8289, %v8289
      %v8294 = vadd.f32 %v8290, %v8291
      %8295 = vadd.xlane.f32.xlu0 %v8294
      %v8296 = vpop.xlane.xlu0 %8295
      %v8297 = vadd.f32 %v8292, %v8293
      %8298 = vadd.xlane.f32.xlu0 %v8297
      %v8299 = vpop.xlane.xlu0 %8298
      %v8300 = vmul.f32 %v8296, %v6255
      %v8301 = vmul.f32 %v8299, %v6255
      %v8302 = vadd.f32 %v8300, 1e-05
      %v8303 = vadd.f32 %v8301, 1e-05
      %v8304 = vrsqrt.pop %v8302
      %v8305 = vrsqrt.pop %v8303
      %v8306 = vmul.f32 %v8286, %v8304
      %v8307 = vmul.f32 %v8287, %v8304
      %v8308 = vmul.f32 %v8288, %v8305
      %v8309 = vmul.f32 %v8289, %v8305
      %v8311 = vlaneseq
      %v8312 = vshrl.u32 %v8311, 7
      %v8313 = vsub.s32 0, %v8312
      %v8314 = vrot.slane %v8276, %v8313
      %v8315 = vlaneseq
      %v8316 = vshrl.u32 %v8315, 7
      %v8317 = vsub.s32 1, %v8316
      %v8318 = vrot.slane %v8276, %v8317
      %v8321 = vmul.f32 %v8306, %v8314
      %v8322 = vmul.f32 %v8307, %v8318
      %v8323 = vmul.f32 %v8308, %v8314
      %v8324 = vmul.f32 %v8309, %v8318
      %v8326 = vlaneseq
      %v8327 = vshrl.u32 %v8326, 7
      %v8328 = vsub.s32 0, %v8327
      %v8329 = vrot.slane %v8277, %v8328
      %v8330 = vlaneseq
      %v8331 = vshrl.u32 %v8330, 7
      %v8332 = vsub.s32 1, %v8331
      %v8333 = vrot.slane %v8277, %v8332
      %v8336 = vadd.f32 %v8321, %v8329
      %v8337 = vadd.f32 %v8322, %v8333
      %v8338 = vadd.f32 %v8323, %v8329
      %v8339 = vadd.f32 %v8324, %v8333
      %8340 = vst [vmem:[#allocation2] sm:$0xff] %v8336
      %8341 = vst [vmem:[#allocation2 + $0x8] sm:$0xff] %v8337
      %8342 = vst [vmem:[#allocation2 + $0x10] sm:$0xff] %v8338
      %8343 = vst [vmem:[#allocation2 + $0x18] sm:$0xff] %v8339
      %8344 = vst [vmem:[%s975] sm:$0xff] %v8336
      %8345 = vst [vmem:[%s975 + $0x8] sm:$0xff] %v8337
      %8346 = vst [vmem:[%s975 + $0x10] sm:$0xff] %v8338
      %8347 = vst [vmem:[%s975 + $0x18] sm:$0xff] %v8339
      %8348 = vst [vmem:[%s984] sm:$0xff] %v5769
      %8349 = vst [vmem:[%s984 + $0x8] sm:$0xff] %v5770
      %8350 = vst [vmem:[%s984 + $0x10] sm:$0xff] %v5771
      %8351 = vst [vmem:[%s984 + $0x18] sm:$0xff] %v5772
      %8352 = vst [vmem:[%s984 + $0x20] sm:$0xff] %v5773
      %8353 = vst [vmem:[%s984 + $0x28] sm:$0xff] %v5774
      %p8354 = scmp.lt.s32.totalorder %s36, 1
      %s8355 = scalar_select %p8354, %s36, 1
      %p8356 = scmp.lt.s32.totalorder %s37, 1
      %s8357 = scalar_select %p8356, %s37, 1
      %s8358 = smul.addr %s8357, 4
      %s8359 = smul.addr %s8355, 8
      %s8360 = sadd.s32 %s8358, %s8359
      %s8361 = smul.addr %s8360, 8
      %s8362 = scalar_lea.vmem %s19, %s8361
      %p8363 = scmp.lt.s32.totalorder %s36, 1
      %s8364 = scalar_select %p8363, %s36, 1
      %p8365 = scmp.lt.s32.totalorder %s37, 1
      %s8366 = scalar_select %p8365, %s37, 1
      %s8367 = smul.addr %s8366, 6
      %s8368 = smul.addr %s8364, 12
      %s8369 = sadd.s32 %s8367, %s8368
      %s8370 = smul.addr %s8369, 8
      %s8371 = scalar_lea.vmem %s20, %s8370
      // Predicated region
      $region101: #{_lambda_.1} parent=95 // pred_check
        %p8372 = pneg %p553
      $region102: #{_lambda_.1} parent=95 // pred_check_branch
        %8374 = sbr.rel (%p8372) target = $region104
      $region103: #{_lambda_.1} parent=95 // pred_region
        _
      $region104: #{_lambda_.1} parent=95 // pred_fallthru
        _
      // Predicated region
      $region105: #{_lambda_.1} parent=95 // pred_check
        %p8375 = pneg %p581
      $region106: #{_lambda_.1} parent=95 // pred_check_branch
        %8377 = sbr.rel (%p8375) target = $region108
      $region107: #{_lambda_.1} parent=95 // pred_region
        _
      $region108: #{_lambda_.1} parent=95 // pred_fallthru
        _
    $region96: #{_lambda_.1} parent=5 // pred_fallthru
      _
    %p8378 = scmp.le.s32.totalorder 2, %s27
    // Predicated region
    $region109: #{_lambda_.1} parent=5 // pred_check
      %p8379 = pneg %p8378
    $region110: #{_lambda_.1} parent=5 // pred_check_branch
      %8381 = sbr.rel (%p8379) target = $region112
    $region111: #{_lambda_.1} parent=5 // pred_region
      %s8382 = ssub.s32 %s27, 2
      // Predicated region
      $region113: #{_lambda_.1} parent=111 // pred_check
        %p8383 = pneg %p559
      $region114: #{_lambda_.1} parent=111 // pred_check_branch
        %8385 = sbr.rel (%p8383) target = $region116
      $region115: #{_lambda_.1} parent=111 // pred_region
        %p8386 = scmp.lt.s32.totalorder %s38, 1
        %s8387 = scalar_select %p8386, %s38, 1
        %p8388 = scmp.lt.s32.totalorder %s39, 1
        %s8389 = scalar_select %p8388, %s39, 1
        %s8390 = smul.addr %s8389, 4
        %s8391 = smul.addr %s8387, 8
        %s8392 = sadd.s32 %s8390, %s8391
        %s8393 = smul.addr %s8392, 8
        %s8394 = scalar_lea.vmem %s19, %s8393
      $region116: #{_lambda_.1} parent=111 // pred_fallthru
        _
      // Predicated region
      $region117: #{_lambda_.1} parent=111 // pred_check
        %p8395 = pneg %p587
      $region118: #{_lambda_.1} parent=111 // pred_check_branch
        %8397 = sbr.rel (%p8395) target = $region120
      $region119: #{_lambda_.1} parent=111 // pred_region
        %p8398 = scmp.lt.s32.totalorder %s38, 1
        %s8399 = scalar_select %p8398, %s38, 1
        %p8400 = scmp.lt.s32.totalorder %s39, 1
        %s8401 = scalar_select %p8400, %s39, 1
        %s8402 = smul.addr %s8401, 6
        %s8403 = smul.addr %s8399, 12
        %s8404 = sadd.s32 %s8402, %s8403
        %s8405 = smul.addr %s8404, 8
        %s8406 = scalar_lea.vmem %s20, %s8405
      $region120: #{_lambda_.1} parent=111 // pred_fallthru
        _
    $region112: #{_lambda_.1} parent=5 // pred_fallthru
      _
  $region6: #{_lambda_.1} parent=0 // loop_footer
    %s31 = sadd.s32 1, %s27
  $region7: #{_lambda_.1} parent=0 // loop_footer_branch
    %26 = sbr.rel target = $region3
  $region8: #{_lambda_.1} parent=0 // loop_exit
    _

</llo_original>
